<compile_context>
chip_gen: v6e
topology: v6e:2x2x1
jax: 0.10.0
libtpu: 0.0.40
codegen_flags: <defaults>
</compile_context>

<pallas_src>
import math
import functools

import jax
import jax.numpy as jnp
from jax.experimental import pallas as pl
from jax.experimental.pallas import tpu as pltpu

BN_EPS = 1e-5
_VMEM_LIMIT = 48 * 1024 * 1024          # below v7x 64 MiB physical VMEM


# ----------------------------------------------------------------------------
# PyTorch-equivalent helpers
# ----------------------------------------------------------------------------
def _make_divisible(v, divisor, min_value=None):
    if min_value is None:
        min_value = divisor
    new_v = max(min_value, int(v + divisor / 2) // divisor * divisor)
    if new_v < 0.9 * v:
        new_v += divisor
    return new_v


def _apply_act(y, act):
    if act == "relu":
        return jnp.maximum(y, 0.0)
    if act == "hswish":                       # x * relu6(x+3)/6
        return y * (jnp.clip(y + 3.0, 0.0, 6.0) / 6.0)
    return y                                   # "none"


# ----------------------------------------------------------------------------
# Tiling heuristics
# ----------------------------------------------------------------------------
def _row_tile(R, Cin, Cout):
    """Pick the pointwise row tile by bytes (~1 MiB bf16 block), multiple of 8."""
    target = 1 << 20
    width = max(Cin, Cout) * 2                 # bf16 bytes per row
    tr = max(8, target // width)
    if tr >= R:
        return R
    return max(8, (tr // 8) * 8)


def _pick_row_strip(Ho, Wo, C, budget=256 * 1024):
    """Largest divisor of Ho whose f32 accumulator strip fits in `budget`."""
    max_th = max(1, budget // max(1, Wo * C * 4))
    if Ho <= max_th:
        return Ho
    th = 1
    for d in range(1, max_th + 1):
        if Ho % d == 0:
            th = d
    return th


# ----------------------------------------------------------------------------
# Pointwise (1x1) conv kernel: bf16 in / bf16 weights / f32 acc, fused
# SE-scale multiply, post-SE activation, BN bias, activation, residual add.
# ----------------------------------------------------------------------------
def _pw_kernel(*refs, has_scale, has_res, pre_act, act):
    # refs: x (1,TR,Cin) bf16 [, se_scale (1,1,Cin) f32], w (Cin,Cout) bf16,
    #       bias (1,Cout) f32 [, residual (1,TR,Cout) bf16], out (1,TR,Cout)
    i = 0
    x_ref = refs[i]; i += 1
    s_ref = None
    if has_scale:
        s_ref = refs[i]; i += 1
    w_ref = refs[i]; i += 1
    b_ref = refs[i]; i += 1
    id_ref = None
    if has_res:
        id_ref = refs[i]; i += 1
    o_ref = refs[i]

    x = x_ref[0]                                   # (TR, Cin)
    if has_scale or pre_act != "none":
        xf = x.astype(jnp.float32)
        if has_scale:
            xf = xf * s_ref[0]                     # per-(batch,channel) SE scale
        xf = _apply_act(xf, pre_act)               # post-SE activation (fused)
        xmm = xf.astype(jnp.bfloat16)
    else:
        xmm = x if x.dtype == jnp.bfloat16 else x.astype(jnp.bfloat16)

    y = jnp.dot(xmm, w_ref[...], preferred_element_type=jnp.float32)
    y = y + b_ref[...]                             # folded-BN bias
    y = _apply_act(y, act)
    if has_res:
        y = y + id_ref[0].astype(jnp.float32)      # fused residual add
    o_ref[0] = y.astype(o_ref.dtype)


def pointwise_conv(x, w, bias, *, act="none", pre_act="none",
                   se_scale=None, residual=None, out_dtype=jnp.bfloat16):
    """x: (B, R, Cin) bf16; w: (Cin, Cout) bf16 (BN folded); bias: (1, Cout) f32.
    Optional se_scale (B,1,Cin) f32 and residual (B,R,Cout) bf16."""
    B, R, Cin = x.shape
    Cout = w.shape[1]
    TR = _row_tile(R, Cin, Cout)
    nR = pl.cdiv(R, TR)
    has_scale = se_scale is not None
    has_res = residual is not None

    kernel = functools.partial(_pw_kernel, has_scale=has_scale, has_res=has_res,
                               pre_act=pre_act, act=act)

    in_specs = [pl.BlockSpec((1, TR, Cin), lambda b, r: (b, r, 0))]
    args = [x]
    if has_scale:
        in_specs.append(pl.BlockSpec((1, 1, Cin), lambda b, r: (b, 0, 0)))
        args.append(se_scale)
    in_specs += [pl.BlockSpec((Cin, Cout), lambda b, r: (0, 0)),   # VMEM-resident
                 pl.BlockSpec((1, Cout), lambda b, r: (0, 0))]
    args += [w, bias]
    if has_res:
        in_specs.append(pl.BlockSpec((1, TR, Cout), lambda b, r: (b, r, 0)))
        args.append(residual)

    return pl.pallas_call(
        kernel,
        out_shape=jax.ShapeDtypeStruct((B, R, Cout), out_dtype),
        grid=(B, nR),
        in_specs=in_specs,
        out_specs=pl.BlockSpec((1, TR, Cout), lambda b, r: (b, r, 0)),
        compiler_params=pltpu.CompilerParams(
            dimension_semantics=("parallel", "parallel"),
            vmem_limit_bytes=_VMEM_LIMIT),
    )(*args)


# ----------------------------------------------------------------------------
# Depthwise k x k conv kernel, tiled over output-row strips, with the SE MLP
# fused into the epilogue of the last strip (no separate se_fc kernel).
# ----------------------------------------------------------------------------
def _dw_kernel(*refs, k, stride, Hph, Ho, Wo, TH, act, has_se):
    # refs: phases (1, s*s*Hph, Wph, C) bf16, w (k*k, C) f32, bias (1, C) f32,
    #       [se: w1 (C,Cr), b1 (1,Cr), w2 (Cr,C), b2 (1,C)  all f32],
    #       out y (1, TH, Wo, C), [scale (1, 1, C) f32 accumulator+result]
    i = 0
    ph_ref = refs[i]; i += 1
    w_ref = refs[i]; i += 1
    b_ref = refs[i]; i += 1
    if has_se:
        w1_ref = refs[i]; i += 1
        b1_ref = refs[i]; i += 1
        w2_ref = refs[i]; i += 1
        b2_ref = refs[i]; i += 1
    o_ref = refs[i]; i += 1
    s_ref = refs[i] if has_se else None

    C = o_ref.shape[3]
    h = pl.program_id(1)
    r0 = h * TH
    if TH % 8 == 0:
        r0 = pl.multiple_of(r0, 8)

    w = w_ref[...]                                 # (k*k, C) f32, BN scale folded
    acc = jnp.zeros((TH, Wo, C), jnp.float32)
    for kh in range(k):                            # unrolled lane-aligned FMAs
        dh, a = kh // stride, kh % stride
        for kw in range(k):
            dw_, c2 = kw // stride, kw % stride
            p = a * stride + c2
            win = ph_ref[0, pl.ds(p * Hph + dh + r0, TH), dw_:dw_ + Wo, :]
            acc = acc + win.astype(jnp.float32) * w[kh * k + kw].reshape(1, 1, C)
    y = acc + b_ref[...].reshape(1, 1, C)
    y = _apply_act(y, act)
    o_ref[0] = y.astype(o_ref.dtype)

    if has_se:
        @pl.when(h == 0)
        def _():
            s_ref[...] = jnp.zeros_like(s_ref)
        s_ref[...] += jnp.sum(y, axis=(0, 1)).reshape(1, 1, C)

        @pl.when(h == pl.num_programs(1) - 1)
        def _():
            mean = s_ref[...].reshape(1, C) * (1.0 / float(Ho * Wo))
            hid = jnp.dot(mean, w1_ref[...],
                          preferred_element_type=jnp.float32) + b1_ref[...]
            hid = jnp.maximum(hid, 0.0)                          # ReLU
            sc = jnp.dot(hid, w2_ref[...],
                         preferred_element_type=jnp.float32) + b2_ref[...]
            s_ref[...] = (jnp.clip(sc + 3.0, 0.0, 6.0) / 6.0     # h_sigmoid
                          ).reshape(1, 1, C)


def depthwise_conv(x, w, bias, k, stride, act, se=None):
    """Depthwise k x k conv (+BN-bias+act) without HBM im2col blow-up.
    x: (B,H,W,C) bf16 -> (out (B,Ho,Wo,C) bf16, SE scale (B,1,C) f32 or None)."""
    B, H, W, C = x.shape
    assert k % 2 == 1, "depthwise kernel assumes odd k with pad=(k-1)//2"
    pad = (k - 1) // 2
    Ho = (H + 2 * pad - k) // stride + 1
    Wo = (W + 2 * pad - k) // stride + 1
    halo = (k - 1) // stride
    Hph, Wph = Ho + halo, Wo + halo
    Hp2, Wp2 = stride * Hph, stride * Wph

    pb = max(0, Hp2 - H - pad)
    pr = max(0, Wp2 - W - pad)
    xp = jnp.pad(x, ((0, 0), (pad, pb), (pad, pr), (0, 0)))[:, :Hp2, :Wp2, :]
    if stride == 1:
        phases = xp                                # phase split is the identity
    else:
        # phase split: xp[b, i*s+a, j*s+c, ch] -> phases[b, (a*s+c)*Hph + i, j, ch]
        phases = xp.reshape(B, Hph, stride, Wph, stride, C)
        phases = phases.transpose(0, 2, 4, 1, 3, 5).reshape(
            B, stride * stride * Hph, Wph, C)
    PH = stride * stride * Hph

    TH = _pick_row_strip(Ho, Wo, C)
    nH = Ho // TH
    has_se = se is not None

    kernel = functools.partial(_dw_kernel, k=k, stride=stride, Hph=Hph,
                               Ho=Ho, Wo=Wo, TH=TH, act=act, has_se=has_se)

    in_specs = [
        pl.BlockSpec((1, PH, Wph, C), lambda b, h: (b, 0, 0, 0)),  # resident per b
        pl.BlockSpec((k * k, C), lambda b, h: (0, 0)),
        pl.BlockSpec((1, C), lambda b, h: (0, 0)),
    ]
    args = [phases, w, bias]
    out_shapes = [jax.ShapeDtypeStruct((B, Ho, Wo, C), jnp.bfloat16)]
    out_specs = [pl.BlockSpec((1, TH, Wo, C), lambda b, h: (b, h, 0, 0))]
    if has_se:
        Cr = se["w1"].shape[1]
        in_specs += [pl.BlockSpec((C, Cr), lambda b, h: (0, 0)),
                     pl.BlockSpec((1, Cr), lambda b, h: (0, 0)),
                     pl.BlockSpec((Cr, C), lambda b, h: (0, 0)),
                     pl.BlockSpec((1, C), lambda b, h: (0, 0))]
        args += [se["w1"], se["b1"], se["w2"], se["b2"]]
        out_shapes.append(jax.ShapeDtypeStruct((B, 1, C), jnp.float32))
        out_specs.append(pl.BlockSpec((1, 1, C), lambda b, h: (b, 0, 0)))

    cp = pltpu.CompilerParams(dimension_semantics=("parallel", "arbitrary"),
                              vmem_limit_bytes=_VMEM_LIMIT)
    if has_se:
        y, scale = pl.pallas_call(
            kernel, out_shape=tuple(out_shapes), grid=(B, nH),
            in_specs=in_specs, out_specs=tuple(out_specs),
            compiler_params=cp)(*args)
        return y, scale
    y = pl.pallas_call(
        kernel, out_shape=out_shapes[0], grid=(B, nH),
        in_specs=in_specs, out_specs=out_specs[0],
        compiler_params=cp)(*args)
    return y, None


# ----------------------------------------------------------------------------
# Plain-JAX glue (layout plumbing only)
# ----------------------------------------------------------------------------
def _extract_patches(xp, k, stride):
    # only used for the 3-channel stem conv (im2col is cheap there)
    B, Hp, Wp, C = xp.shape
    Ho = (Hp - k) // stride + 1
    Wo = (Wp - k) // stride + 1
    cols = []
    for kh in range(k):
        for kw in range(k):
            cols.append(xp[:, kh:kh + (Ho - 1) * stride + 1:stride,
                              kw:kw + (Wo - 1) * stride + 1:stride, :])
    return jnp.stack(cols, axis=3)                 # (B, Ho, Wo, k*k, C)


def stem_conv(x, p, stride=2):
    k, pad = 3, 1
    xp = jnp.pad(x, ((0, 0), (pad, pad), (pad, pad), (0, 0)))
    patches = _extract_patches(xp, k, stride)      # (B, Ho, Wo, 9, 3) bf16
    B, Ho, Wo, KK, Cin = patches.shape
    xm = patches.reshape(B, Ho * Wo, KK * Cin)
    y = pointwise_conv(xm, p["w"], p["b"], act="hswish")
    return y.reshape(B, Ho, Wo, -1)


def pw_conv_nhwc(x, w, b, act):
    B, H, W, C = x.shape
    y = pointwise_conv(x.reshape(B, H * W, C), w, b, act=act)
    return y.reshape(B, H, W, -1)


# ----------------------------------------------------------------------------
# Parameter init (deterministic, mirrors MobileNetV3._initialize_weights;
# BatchNorm evaluated with fresh running stats and folded into conv weights)
# ----------------------------------------------------------------------------
def _conv_w(key, cout, cin, k):
    n = k * k * cout
    return jax.random.normal(key, (cout, cin, k, k), jnp.float32) * math.sqrt(2.0 / n)


def _bn_fold(c):
    gamma = jnp.ones((c,), jnp.float32)
    beta = jnp.zeros((c,), jnp.float32)
    mean = jnp.zeros((c,), jnp.float32)
    var = jnp.ones((c,), jnp.float32)
    scale = gamma / jnp.sqrt(var + BN_EPS)
    bias = beta - mean * scale
    return scale, bias


def init_params(key, cfgs, width_mult=1.0):
    keys = iter(jax.random.split(key, 128))
    params = {}
    input_channel = _make_divisible(16 * width_mult, 8)

    # features[0]: Conv2d(3, C, 3, stride=2, pad=1) + BN + h_swish
    w = _conv_w(next(keys), input_channel, 3, 3)
    wm = jnp.transpose(w, (2, 3, 1, 0)).reshape(9 * 3, input_channel)
    sc, bi = _bn_fold(input_channel)
    params["stem"] = {"w": (wm * sc[None, :]).astype(jnp.bfloat16),
                      "b": bi.reshape(1, -1)}

    blocks = []
    exp_size = input_channel
    for k_sz, t, c, use_se, use_hs, s in cfgs:
        oup = _make_divisible(c * width_mult, 8)
        hidden = _make_divisible(input_channel * t, 8)
        blk = {"meta": (input_channel, hidden, oup, k_sz, s, use_se, use_hs)}

        if input_channel != hidden:
            w1 = _conv_w(next(keys), hidden, input_channel, 1)
            w1 = w1.reshape(hidden, input_channel).T
            sc, bi = _bn_fold(hidden)
            blk["pw1_w"] = (w1 * sc[None, :]).astype(jnp.bfloat16)
            blk["pw1_b"] = bi.reshape(1, -1)

        # depthwise Conv2d(hidden, hidden, k, stride, groups=hidden)
        wd = jax.random.normal(next(keys), (hidden, 1, k_sz, k_sz), jnp.float32) \
            * math.sqrt(2.0 / (k_sz * k_sz * hidden))
        wdm = jnp.transpose(wd[:, 0], (1, 2, 0)).reshape(k_sz * k_sz, hidden)
        sc, bi = _bn_fold(hidden)
        blk["dw_w"] = wdm * sc[None, :]            # f32 taps (v5e-safe VPU path)
        blk["dw_b"] = bi.reshape(1, -1)

        if use_se:
            cr = _make_divisible(hidden // 4, 8)
            wl1 = jax.random.normal(next(keys), (cr, hidden), jnp.float32) * 0.01
            wl2 = jax.random.normal(next(keys), (hidden, cr), jnp.float32) * 0.01
            blk["se"] = {"w1": wl1.T, "b1": jnp.zeros((1, cr), jnp.float32),
                         "w2": wl2.T, "b2": jnp.zeros((1, hidden), jnp.float32)}

        w2 = _conv_w(next(keys), oup, hidden, 1).reshape(oup, hidden).T
        sc, bi = _bn_fold(oup)
        blk["pw2_w"] = (w2 * sc[None, :]).astype(jnp.bfloat16)
        blk["pw2_b"] = bi.reshape(1, -1)

        blocks.append(blk)
        input_channel = oup
        exp_size = hidden
    params["blocks"] = blocks

    # self.conv = conv_1x1_bn(input_channel, exp_size)
    wf = _conv_w(next(keys), exp_size, input_channel, 1).reshape(exp_size, input_channel).T
    sc, bi = _bn_fold(exp_size)
    params["final"] = {"w": (wf * sc[None, :]).astype(jnp.bfloat16),
                       "b": bi.reshape(1, -1)}
    return params


# ----------------------------------------------------------------------------
# Model forward
# ----------------------------------------------------------------------------
def inverted_residual(x, blk):
    inp, hidden, oup, k, s, use_se, use_hs = blk["meta"]
    act = "hswish" if use_hs else "relu"
    identity = (s == 1 and inp == oup)
    B, H, W, _ = x.shape
    se = blk.get("se") if use_se else None

    if inp == hidden:
        # dw + BN + act, [SE], pw2 + BN       (act BEFORE SE in this branch)
        y, se_scale = depthwise_conv(x, blk["dw_w"], blk["dw_b"], k, s, act, se=se)
        pre_act = "none"
    else:
        # pw1 + BN + act, dw + BN, [SE], act, pw2 + BN
        y = pw_conv_nhwc(x, blk["pw1_w"], blk["pw1_b"], act)
        if use_se:
            y, se_scale = depthwise_conv(y, blk["dw_w"], blk["dw_b"], k, s,
                                         "none", se=se)
            pre_act = act                      # activation after SE, fused in pw2
        else:
            y, se_scale = depthwise_conv(y, blk["dw_w"], blk["dw_b"], k, s, act)
            pre_act = "none"

    Bo, Ho, Wo, C = y.shape
    res = x.reshape(B, H * W, inp) if identity else None
    out = pointwise_conv(y.reshape(Bo, Ho * Wo, C), blk["pw2_w"], blk["pw2_b"],
                         act="none", pre_act=pre_act,
                         se_scale=se_scale, residual=res)
    return out.reshape(Bo, Ho, Wo, oup)


def mobilenetv3_forward(x_nchw, params):
    # NCHW (PyTorch) -> NHWC (kernel layout), bf16 activation storage
    x = jnp.transpose(x_nchw, (0, 2, 3, 1)).astype(jnp.bfloat16)
    # NOTE: PyTorch forward also computes x_prime = self.input_layer(x) and
    # discards it; it has no effect on the returned value so it is skipped.
    x = stem_conv(x, params["stem"], stride=2)                 # features[0]
    for blk in params["blocks"]:                               # features[1:]
        x = inverted_residual(x, blk)
    B, H, W, C = x.shape
    y = pointwise_conv(x.reshape(B, H * W, C),
                       params["final"]["w"], params["final"]["b"],
                       act="hswish", out_dtype=jnp.float32)    # self.conv
    y = y.reshape(B, H, W, -1)
    return jnp.transpose(y, (0, 3, 1, 2))                      # back to NCHW, f32


# ----------------------------------------------------------------------------
if __name__ == "__main__":
    # small mobilenetv3-"small"-style config: k, t, c, use_se, use_hs, s
    cfgs = [
        [3, 1,   16, 1, 0, 2],
        [3, 4.5, 24, 0, 0, 2],
        [5, 3,   24, 1, 1, 1],
    ]
    key = jax.random.PRNGKey(0)
    pkey, xkey = jax.random.split(key)
    params = init_params(pkey, cfgs, width_mult=1.0)

    x = jax.random.normal(xkey, (2, 3, 16, 16), jnp.float32)   # NCHW, like PyTorch
    fwd = jax.jit(lambda inp: mobilenetv3_forward(inp, params))
    y = fwd(x)
    jax.block_until_ready(y)
    assert y.shape == (2, 72, 2, 2), y.shape
    assert y.dtype == jnp.float32
    print("KERNEL_OK")
</pallas_src>

<mosaic_0001>
module attributes {stable_mosaic.version = 11 : i64} {
  func.func @_pw_kernel(%arg0: i32, %arg1: i32, %arg2: memref<1x64x27xbf16, #tpu.memory_space<vmem>>, %arg3: memref<27x16xbf16, #tpu.memory_space<vmem>>, %arg4: memref<1x16xf32, #tpu.memory_space<vmem>>, %arg5: memref<1x64x16xbf16, #tpu.memory_space<vmem>>) attributes {dimension_semantics = [#tpu.dimension_semantics<parallel>, #tpu.dimension_semantics<parallel>], iteration_bounds = array<i64: 2, 1>, scalar_prefetch = 0 : i64, scratch_operands = 0 : i64, tpu.core_type = #tpu.core_type<tc>, window_params = [{transform_indices = @transform_0, window_bounds = array<i64: 1, 64, 27>}, {pipeline_mode = #tpu.pipeline_mode<synchronous>, transform_indices = @transform_1, window_bounds = array<i64: 27, 16>}, {pipeline_mode = #tpu.pipeline_mode<synchronous>, transform_indices = @transform_2, window_bounds = array<i64: 1, 16>}, {transform_indices = @transform_3, window_bounds = array<i64: 1, 64, 16>}]} {
    %c0 = arith.constant 0 : index
    %c0_0 = arith.constant 0 : index
    %c0_1 = arith.constant 0 : index
    %0 = vector.load %arg2[%c0, %c0_0, %c0_1] : memref<1x64x27xbf16, #tpu.memory_space<vmem>>, vector<1x64x27xbf16>
    %1 = vector.shape_cast %0 : vector<1x64x27xbf16> to vector<64x27xbf16>
    %c0_2 = arith.constant 0 : index
    %c0_3 = arith.constant 0 : index
    %2 = vector.load %arg3[%c0_2, %c0_3] : memref<27x16xbf16, #tpu.memory_space<vmem>>, vector<27x16xbf16>
    %cst = arith.constant dense<0.000000e+00> : vector<64x16xf32>
    %3 = tpu.matmul %1, %2, %cst {dimension_numbers = #tpu.dot_dimension_numbers<[1], [0], [0], [1], [0, 0, 1, 1], [], []>} : vector<64x27xbf16>, vector<27x16xbf16>, vector<64x16xf32> -> vector<64x16xf32>
    %c0_4 = arith.constant 0 : index
    %c0_5 = arith.constant 0 : index
    %4 = vector.load %arg4[%c0_4, %c0_5] : memref<1x16xf32, #tpu.memory_space<vmem>>, vector<1x16xf32>
    %5 = vector.broadcast %4 : vector<1x16xf32> to vector<64x16xf32>
    %6 = arith.addf %3, %5 : vector<64x16xf32>
    %cst_6 = arith.constant 3.000000e+00 : f32
    %7 = vector.broadcast %cst_6 : f32 to vector<64x16xf32>
    %8 = arith.addf %6, %7 : vector<64x16xf32>
    %cst_7 = arith.constant 0.000000e+00 : f32
    %cst_8 = arith.constant 6.000000e+00 : f32
    %9 = vector.broadcast %cst_7 : f32 to vector<64x16xf32>
    %10 = arith.maximumf %9, %8 : vector<64x16xf32>
    %11 = vector.broadcast %cst_8 : f32 to vector<64x16xf32>
    %12 = arith.minimumf %11, %10 : vector<64x16xf32>
    %cst_9 = arith.constant 6.000000e+00 : f32
    %13 = vector.broadcast %cst_9 : f32 to vector<64x16xf32>
    %14 = arith.divf %12, %13 : vector<64x16xf32>
    %15 = arith.mulf %6, %14 : vector<64x16xf32>
    %16 = arith.truncf %15 : vector<64x16xf32> to vector<64x16xbf16>
    %c0_10 = arith.constant 0 : index
    %c0_11 = arith.constant 0 : index
    %c0_12 = arith.constant 0 : index
    %17 = vector.load %arg5[%c0_10, %c0_11, %c0_12] : memref<1x64x16xbf16, #tpu.memory_space<vmem>>, vector<1x64x16xbf16>
    %18 = vector.shape_cast %17 : vector<1x64x16xbf16> to vector<64x16xbf16>
    %19 = vector.shape_cast %16 : vector<64x16xbf16> to vector<1x64x16xbf16>
    tpu.vector_store %arg5[%c0_10, %c0_11, %c0_12], %19 {strides = array<i32>} : memref<1x64x16xbf16, #tpu.memory_space<vmem>>, vector<1x64x16xbf16>,
    return
  }
  func.func @transform_0(%arg0: i32, %arg1: i32) -> (i32, i32, i32) {
    %c0_i32 = arith.constant 0 : i32
    %c0_i32_0 = arith.constant 0 : i32
    return %arg0, %arg1, %c0_i32 : i32, i32, i32
  }
  func.func @transform_1(%arg0: i32, %arg1: i32) -> (i32, i32) {
    %c0_i32 = arith.constant 0 : i32
    %c0_i32_0 = arith.constant 0 : i32
    %c0_i32_1 = arith.constant 0 : i32
    return %c0_i32, %c0_i32_0 : i32, i32
  }
  func.func @transform_2(%arg0: i32, %arg1: i32) -> (i32, i32) {
    %c0_i32 = arith.constant 0 : i32
    %c0_i32_0 = arith.constant 0 : i32
    %c0_i32_1 = arith.constant 0 : i32
    return %c0_i32, %c0_i32_0 : i32, i32
  }
  func.func @transform_3(%arg0: i32, %arg1: i32) -> (i32, i32, i32) {
    %c0_i32 = arith.constant 0 : i32
    %c0_i32_0 = arith.constant 0 : i32
    return %arg0, %arg1, %c0_i32 : i32, i32, i32
  }
}

module attributes {stable_mosaic.version = 11 : i64} {
  func.func @_pw_kernel(%arg0: i32, %arg1: i32, %arg2: memref<1x16x16xbf16, #tpu.memory_space<vmem>>, %arg3: memref<1x1x16xf32, #tpu.memory_space<vmem>>, %arg4: memref<16x16xbf16, #tpu.memory_space<vmem>>, %arg5: memref<1x16xf32, #tpu.memory_space<vmem>>, %arg6: memref<1x16x16xbf16, #tpu.memory_space<vmem>>) attributes {dimension_semantics = [#tpu.dimension_semantics<parallel>, #tpu.dimension_semantics<parallel>], iteration_bounds = array<i64: 2, 1>, scalar_prefetch = 0 : i64, scratch_operands = 0 : i64, tpu.core_type = #tpu.core_type<tc>, window_params = [{transform_indices = @transform_0, window_bounds = array<i64: 1, 16, 16>}, {transform_indices = @transform_1, window_bounds = array<i64: 1, 1, 16>}, {pipeline_mode = #tpu.pipeline_mode<synchronous>, transform_indices = @transform_2, window_bounds = array<i64: 16, 16>}, {pipeline_mode = #tpu.pipeline_mode<synchronous>, transform_indices = @transform_3, window_bounds = array<i64: 1, 16>}, {transform_indices = @transform_4, window_bounds = array<i64: 1, 16, 16>}]} {
    %c0 = arith.constant 0 : index
    %c0_0 = arith.constant 0 : index
    %c0_1 = arith.constant 0 : index
    %0 = vector.load %arg2[%c0, %c0_0, %c0_1] : memref<1x16x16xbf16, #tpu.memory_space<vmem>>, vector<1x16x16xbf16>
    %1 = vector.shape_cast %0 : vector<1x16x16xbf16> to vector<16x16xbf16>
    %2 = arith.extf %1 : vector<16x16xbf16> to vector<16x16xf32>
    %c0_2 = arith.constant 0 : index
    %c0_3 = arith.constant 0 : index
    %c0_4 = arith.constant 0 : index
    %3 = vector.load %arg3[%c0_2, %c0_3, %c0_4] : memref<1x1x16xf32, #tpu.memory_space<vmem>>, vector<1x1x16xf32>
    %4 = vector.shape_cast %3 : vector<1x1x16xf32> to vector<1x16xf32>
    %5 = vector.broadcast %4 : vector<1x16xf32> to vector<16x16xf32>
    %6 = arith.mulf %2, %5 : vector<16x16xf32>
    %7 = arith.truncf %6 : vector<16x16xf32> to vector<16x16xbf16>
    %c0_5 = arith.constant 0 : index
    %c0_6 = arith.constant 0 : index
    %8 = vector.load %arg4[%c0_5, %c0_6] : memref<16x16xbf16, #tpu.memory_space<vmem>>, vector<16x16xbf16>
    %cst = arith.constant dense<0.000000e+00> : vector<16x16xf32>
    %9 = tpu.matmul %7, %8, %cst {dimension_numbers = #tpu.dot_dimension_numbers<[1], [0], [0], [1], [0, 0, 1, 1], [], []>} : vector<16x16xbf16>, vector<16x16xbf16>, vector<16x16xf32> -> vector<16x16xf32>
    %c0_7 = arith.constant 0 : index
    %c0_8 = arith.constant 0 : index
    %10 = vector.load %arg5[%c0_7, %c0_8] : memref<1x16xf32, #tpu.memory_space<vmem>>, vector<1x16xf32>
    %11 = vector.broadcast %10 : vector<1x16xf32> to vector<16x16xf32>
    %12 = arith.addf %9, %11 : vector<16x16xf32>
    %13 = arith.truncf %12 : vector<16x16xf32> to vector<16x16xbf16>
    %c0_9 = arith.constant 0 : index
    %c0_10 = arith.constant 0 : index
    %c0_11 = arith.constant 0 : index
    %14 = vector.load %arg6[%c0_9, %c0_10, %c0_11] : memref<1x16x16xbf16, #tpu.memory_space<vmem>>, vector<1x16x16xbf16>
    %15 = vector.shape_cast %14 : vector<1x16x16xbf16> to vector<16x16xbf16>
    %16 = vector.shape_cast %13 : vector<16x16xbf16> to vector<1x16x16xbf16>
    tpu.vector_store %arg6[%c0_9, %c0_10, %c0_11], %16 {strides = array<i32>} : memref<1x16x16xbf16, #tpu.memory_space<vmem>>, vector<1x16x16xbf16>,
    return
  }
  func.func @transform_0(%arg0: i32, %arg1: i32) -> (i32, i32, i32) {
    %c0_i32 = arith.constant 0 : i32
    %c0_i32_0 = arith.constant 0 : i32
    return %arg0, %arg1, %c0_i32 : i32, i32, i32
  }
  func.func @transform_1(%arg0: i32, %arg1: i32) -> (i32, i32, i32) {
    %c0_i32 = arith.constant 0 : i32
    %c0_i32_0 = arith.constant 0 : i32
    %c0_i32_1 = arith.constant 0 : i32
    return %arg0, %c0_i32, %c0_i32_0 : i32, i32, i32
  }
  func.func @transform_2(%arg0: i32, %arg1: i32) -> (i32, i32) {
    %c0_i32 = arith.constant 0 : i32
    %c0_i32_0 = arith.constant 0 : i32
    %c0_i32_1 = arith.constant 0 : i32
    return %c0_i32, %c0_i32_0 : i32, i32
  }
  func.func @transform_3(%arg0: i32, %arg1: i32) -> (i32, i32) {
    %c0_i32 = arith.constant 0 : i32
    %c0_i32_0 = arith.constant 0 : i32
    %c0_i32_1 = arith.constant 0 : i32
    return %c0_i32, %c0_i32_0 : i32, i32
  }
  func.func @transform_4(%arg0: i32, %arg1: i32) -> (i32, i32, i32) {
    %c0_i32 = arith.constant 0 : i32
    %c0_i32_0 = arith.constant 0 : i32
    return %arg0, %arg1, %c0_i32 : i32, i32, i32
  }
}

module attributes {stable_mosaic.version = 11 : i64} {
  func.func @_pw_kernel(%arg0: i32, %arg1: i32, %arg2: memref<1x16x16xbf16, #tpu.memory_space<vmem>>, %arg3: memref<16x72xbf16, #tpu.memory_space<vmem>>, %arg4: memref<1x72xf32, #tpu.memory_space<vmem>>, %arg5: memref<1x16x72xbf16, #tpu.memory_space<vmem>>) attributes {dimension_semantics = [#tpu.dimension_semantics<parallel>, #tpu.dimension_semantics<parallel>], iteration_bounds = array<i64: 2, 1>, scalar_prefetch = 0 : i64, scratch_operands = 0 : i64, tpu.core_type = #tpu.core_type<tc>, window_params = [{transform_indices = @transform_0, window_bounds = array<i64: 1, 16, 16>}, {pipeline_mode = #tpu.pipeline_mode<synchronous>, transform_indices = @transform_1, window_bounds = array<i64: 16, 72>}, {pipeline_mode = #tpu.pipeline_mode<synchronous>, transform_indices = @transform_2, window_bounds = array<i64: 1, 72>}, {transform_indices = @transform_3, window_bounds = array<i64: 1, 16, 72>}]} {
    %c0 = arith.constant 0 : index
    %c0_0 = arith.constant 0 : index
    %c0_1 = arith.constant 0 : index
    %0 = vector.load %arg2[%c0, %c0_0, %c0_1] : memref<1x16x16xbf16, #tpu.memory_space<vmem>>, vector<1x16x16xbf16>
    %1 = vector.shape_cast %0 : vector<1x16x16xbf16> to vector<16x16xbf16>
    %c0_2 = arith.constant 0 : index
    %c0_3 = arith.constant 0 : index
    %2 = vector.load %arg3[%c0_2, %c0_3] : memref<16x72xbf16, #tpu.memory_space<vmem>>, vector<16x72xbf16>
    %cst = arith.constant dense<0.000000e+00> : vector<16x72xf32>
    %3 = tpu.matmul %1, %2, %cst {dimension_numbers = #tpu.dot_dimension_numbers<[1], [0], [0], [1], [0, 0, 1, 1], [], []>} : vector<16x16xbf16>, vector<16x72xbf16>, vector<16x72xf32> -> vector<16x72xf32>
    %c0_4 = arith.constant 0 : index
    %c0_5 = arith.constant 0 : index
    %4 = vector.load %arg4[%c0_4, %c0_5] : memref<1x72xf32, #tpu.memory_space<vmem>>, vector<1x72xf32>
    %5 = vector.broadcast %4 : vector<1x72xf32> to vector<16x72xf32>
    %6 = arith.addf %3, %5 : vector<16x72xf32>
    %cst_6 = arith.constant 0.000000e+00 : f32
    %7 = vector.broadcast %cst_6 : f32 to vector<16x72xf32>
    %8 = arith.maximumf %6, %7 : vector<16x72xf32>
    %9 = arith.truncf %8 : vector<16x72xf32> to vector<16x72xbf16>
    %c0_7 = arith.constant 0 : index
    %c0_8 = arith.constant 0 : index
    %c0_9 = arith.constant 0 : index
    %10 = vector.load %arg5[%c0_7, %c0_8, %c0_9] : memref<1x16x72xbf16, #tpu.memory_space<vmem>>, vector<1x16x72xbf16>
    %11 = vector.shape_cast %10 : vector<1x16x72xbf16> to vector<16x72xbf16>
    %12 = vector.shape_cast %9 : vector<16x72xbf16> to vector<1x16x72xbf16>
    tpu.vector_store %arg5[%c0_7, %c0_8, %c0_9], %12 {strides = array<i32>} : memref<1x16x72xbf16, #tpu.memory_space<vmem>>, vector<1x16x72xbf16>,
    return
  }
  func.func @transform_0(%arg0: i32, %arg1: i32) -> (i32, i32, i32) {
    %c0_i32 = arith.constant 0 : i32
    %c0_i32_0 = arith.constant 0 : i32
    return %arg0, %arg1, %c0_i32 : i32, i32, i32
  }
  func.func @transform_1(%arg0: i32, %arg1: i32) -> (i32, i32) {
    %c0_i32 = arith.constant 0 : i32
    %c0_i32_0 = arith.constant 0 : i32
    %c0_i32_1 = arith.constant 0 : i32
    return %c0_i32, %c0_i32_0 : i32, i32
  }
  func.func @transform_2(%arg0: i32, %arg1: i32) -> (i32, i32) {
    %c0_i32 = arith.constant 0 : i32
    %c0_i32_0 = arith.constant 0 : i32
    %c0_i32_1 = arith.constant 0 : i32
    return %c0_i32, %c0_i32_0 : i32, i32
  }
  func.func @transform_3(%arg0: i32, %arg1: i32) -> (i32, i32, i32) {
    %c0_i32 = arith.constant 0 : i32
    %c0_i32_0 = arith.constant 0 : i32
    return %arg0, %arg1, %c0_i32 : i32, i32, i32
  }
}

module attributes {stable_mosaic.version = 11 : i64} {
  func.func @_dw_kernel(%arg0: i32, %arg1: i32, %arg2: memref<1x20x5x16xbf16, #tpu.memory_space<vmem>>, %arg3: memref<9x16xf32, #tpu.memory_space<vmem>>, %arg4: memref<1x16xf32, #tpu.memory_space<vmem>>, %arg5: memref<16x8xf32, #tpu.memory_space<vmem>>, %arg6: memref<1x8xf32, #tpu.memory_space<vmem>>, %arg7: memref<8x16xf32, #tpu.memory_space<vmem>>, %arg8: memref<1x16xf32, #tpu.memory_space<vmem>>, %arg9: memref<1x4x4x16xbf16, #tpu.memory_space<vmem>>, %arg10: memref<1x1x16xf32, #tpu.memory_space<vmem>>) attributes {dimension_semantics = [#tpu.dimension_semantics<parallel>, #tpu.dimension_semantics<arbitrary>], iteration_bounds = array<i64: 2, 1>, scalar_prefetch = 0 : i64, scratch_operands = 0 : i64, tpu.core_type = #tpu.core_type<tc>, window_params = [{transform_indices = @transform_0, window_bounds = array<i64: 1, 20, 5, 16>}, {pipeline_mode = #tpu.pipeline_mode<synchronous>, transform_indices = @transform_1, window_bounds = array<i64: 9, 16>}, {pipeline_mode = #tpu.pipeline_mode<synchronous>, transform_indices = @transform_2, window_bounds = array<i64: 1, 16>}, {pipeline_mode = #tpu.pipeline_mode<synchronous>, transform_indices = @transform_3, window_bounds = array<i64: 16, 8>}, {pipeline_mode = #tpu.pipeline_mode<synchronous>, transform_indices = @transform_4, window_bounds = array<i64: 1, 8>}, {pipeline_mode = #tpu.pipeline_mode<synchronous>, transform_indices = @transform_5, window_bounds = array<i64: 8, 16>}, {pipeline_mode = #tpu.pipeline_mode<synchronous>, transform_indices = @transform_6, window_bounds = array<i64: 1, 16>}, {transform_indices = @transform_7, window_bounds = array<i64: 1, 4, 4, 16>}, {transform_indices = @transform_8, window_bounds = array<i64: 1, 1, 16>}]} {
    %c4_i32 = arith.constant 4 : i32
    %0 = arith.muli %arg1, %c4_i32 : i32
    %c0 = arith.constant 0 : index
    %c0_0 = arith.constant 0 : index
    %1 = vector.load %arg3[%c0, %c0_0] : memref<9x16xf32, #tpu.memory_space<vmem>>, vector<9x16xf32>
    %cst = arith.constant 0.000000e+00 : f32
    %2 = vector.broadcast %cst : f32 to vector<4x4x16xf32>
    %c0_i32 = arith.constant 0 : i32
    %3 = arith.addi %c0_i32, %0 : i32
    %c0_1 = arith.constant 0 : index
    %4 = arith.index_cast %3 : i32 to index
    %c0_2 = arith.constant 0 : index
    %c0_3 = arith.constant 0 : index
    %5 = vector.load %arg2[%c0_1, %4, %c0_2, %c0_3] : memref<1x20x5x16xbf16, #tpu.memory_space<vmem>>, vector<1x4x4x16xbf16>
    %6 = vector.shape_cast %5 : vector<1x4x4x16xbf16> to vector<4x4x16xbf16>
    %7 = arith.extf %6 : vector<4x4x16xbf16> to vector<4x4x16xf32>
    %8 = vector.extract_strided_slice %1 {offsets = [0, 0], sizes = [1, 16], strides = [1, 1]} : vector<9x16xf32> to vector<1x16xf32>
    %9 = vector.shape_cast %8 : vector<1x16xf32> to vector<16xf32>
    %10 = vector.shape_cast %9 : vector<16xf32> to vector<1x1x16xf32>
    %11 = vector.broadcast %10 : vector<1x1x16xf32> to vector<4x4x16xf32>
    %12 = arith.mulf %7, %11 : vector<4x4x16xf32>
    %13 = arith.addf %2, %12 : vector<4x4x16xf32>
    %c5_i32 = arith.constant 5 : i32
    %14 = arith.addi %c5_i32, %0 : i32
    %c0_4 = arith.constant 0 : index
    %15 = arith.index_cast %14 : i32 to index
    %c0_5 = arith.constant 0 : index
    %c0_6 = arith.constant 0 : index
    %16 = vector.load %arg2[%c0_4, %15, %c0_5, %c0_6] : memref<1x20x5x16xbf16, #tpu.memory_space<vmem>>, vector<1x4x4x16xbf16>
    %17 = vector.shape_cast %16 : vector<1x4x4x16xbf16> to vector<4x4x16xbf16>
    %18 = arith.extf %17 : vector<4x4x16xbf16> to vector<4x4x16xf32>
    %19 = vector.extract_strided_slice %1 {offsets = [1, 0], sizes = [1, 16], strides = [1, 1]} : vector<9x16xf32> to vector<1x16xf32>
    %20 = vector.shape_cast %19 : vector<1x16xf32> to vector<16xf32>
    %21 = vector.shape_cast %20 : vector<16xf32> to vector<1x1x16xf32>
    %22 = vector.broadcast %21 : vector<1x1x16xf32> to vector<4x4x16xf32>
    %23 = arith.mulf %18, %22 : vector<4x4x16xf32>
    %24 = arith.addf %13, %23 : vector<4x4x16xf32>
    %c0_i32_7 = arith.constant 0 : i32
    %25 = arith.addi %c0_i32_7, %0 : i32
    %c0_8 = arith.constant 0 : index
    %26 = arith.index_cast %25 : i32 to index
    %c1 = arith.constant 1 : index
    %c0_9 = arith.constant 0 : index
    %27 = vector.load %arg2[%c0_8, %26, %c1, %c0_9] : memref<1x20x5x16xbf16, #tpu.memory_space<vmem>>, vector<1x4x4x16xbf16>
    %28 = vector.shape_cast %27 : vector<1x4x4x16xbf16> to vector<4x4x16xbf16>
    %29 = arith.extf %28 : vector<4x4x16xbf16> to vector<4x4x16xf32>
    %30 = vector.extract_strided_slice %1 {offsets = [2, 0], sizes = [1, 16], strides = [1, 1]} : vector<9x16xf32> to vector<1x16xf32>
    %31 = vector.shape_cast %30 : vector<1x16xf32> to vector<16xf32>
    %32 = vector.shape_cast %31 : vector<16xf32> to vector<1x1x16xf32>
    %33 = vector.broadcast %32 : vector<1x1x16xf32> to vector<4x4x16xf32>
    %34 = arith.mulf %29, %33 : vector<4x4x16xf32>
    %35 = arith.addf %24, %34 : vector<4x4x16xf32>
    %c10_i32 = arith.constant 10 : i32
    %36 = arith.addi %c10_i32, %0 : i32
    %c0_10 = arith.constant 0 : index
    %37 = arith.index_cast %36 : i32 to index
    %c0_11 = arith.constant 0 : index
    %c0_12 = arith.constant 0 : index
    %38 = vector.load %arg2[%c0_10, %37, %c0_11, %c0_12] : memref<1x20x5x16xbf16, #tpu.memory_space<vmem>>, vector<1x4x4x16xbf16>
    %39 = vector.shape_cast %38 : vector<1x4x4x16xbf16> to vector<4x4x16xbf16>
    %40 = arith.extf %39 : vector<4x4x16xbf16> to vector<4x4x16xf32>
    %41 = vector.extract_strided_slice %1 {offsets = [3, 0], sizes = [1, 16], strides = [1, 1]} : vector<9x16xf32> to vector<1x16xf32>
    %42 = vector.shape_cast %41 : vector<1x16xf32> to vector<16xf32>
    %43 = vector.shape_cast %42 : vector<16xf32> to vector<1x1x16xf32>
    %44 = vector.broadcast %43 : vector<1x1x16xf32> to vector<4x4x16xf32>
    %45 = arith.mulf %40, %44 : vector<4x4x16xf32>
    %46 = arith.addf %35, %45 : vector<4x4x16xf32>
    %c15_i32 = arith.constant 15 : i32
    %47 = arith.addi %c15_i32, %0 : i32
    %c0_13 = arith.constant 0 : index
    %48 = arith.index_cast %47 : i32 to index
    %c0_14 = arith.constant 0 : index
    %c0_15 = arith.constant 0 : index
    %49 = vector.load %arg2[%c0_13, %48, %c0_14, %c0_15] : memref<1x20x5x16xbf16, #tpu.memory_space<vmem>>, vector<1x4x4x16xbf16>
    %50 = vector.shape_cast %49 : vector<1x4x4x16xbf16> to vector<4x4x16xbf16>
    %51 = arith.extf %50 : vector<4x4x16xbf16> to vector<4x4x16xf32>
    %52 = vector.extract_strided_slice %1 {offsets = [4, 0], sizes = [1, 16], strides = [1, 1]} : vector<9x16xf32> to vector<1x16xf32>
    %53 = vector.shape_cast %52 : vector<1x16xf32> to vector<16xf32>
    %54 = vector.shape_cast %53 : vector<16xf32> to vector<1x1x16xf32>
    %55 = vector.broadcast %54 : vector<1x1x16xf32> to vector<4x4x16xf32>
    %56 = arith.mulf %51, %55 : vector<4x4x16xf32>
    %57 = arith.addf %46, %56 : vector<4x4x16xf32>
    %c10_i32_16 = arith.constant 10 : i32
    %58 = arith.addi %c10_i32_16, %0 : i32
    %c0_17 = arith.constant 0 : index
    %59 = arith.index_cast %58 : i32 to index
    %c1_18 = arith.constant 1 : index
    %c0_19 = arith.constant 0 : index
    %60 = vector.load %arg2[%c0_17, %59, %c1_18, %c0_19] : memref<1x20x5x16xbf16, #tpu.memory_space<vmem>>, vector<1x4x4x16xbf16>
    %61 = vector.shape_cast %60 : vector<1x4x4x16xbf16> to vector<4x4x16xbf16>
    %62 = arith.extf %61 : vector<4x4x16xbf16> to vector<4x4x16xf32>
    %63 = vector.extract_strided_slice %1 {offsets = [5, 0], sizes = [1, 16], strides = [1, 1]} : vector<9x16xf32> to vector<1x16xf32>
    %64 = vector.shape_cast %63 : vector<1x16xf32> to vector<16xf32>
    %65 = vector.shape_cast %64 : vector<16xf32> to vector<1x1x16xf32>
    %66 = vector.broadcast %65 : vector<1x1x16xf32> to vector<4x4x16xf32>
    %67 = arith.mulf %62, %66 : vector<4x4x16xf32>
    %68 = arith.addf %57, %67 : vector<4x4x16xf32>
    %c1_i32 = arith.constant 1 : i32
    %69 = arith.addi %c1_i32, %0 : i32
    %c0_20 = arith.constant 0 : index
    %70 = arith.index_cast %69 : i32 to index
    %c0_21 = arith.constant 0 : index
    %c0_22 = arith.constant 0 : index
    %71 = vector.load %arg2[%c0_20, %70, %c0_21, %c0_22] : memref<1x20x5x16xbf16, #tpu.memory_space<vmem>>, vector<1x4x4x16xbf16>
    %72 = vector.shape_cast %71 : vector<1x4x4x16xbf16> to vector<4x4x16xbf16>
    %73 = arith.extf %72 : vector<4x4x16xbf16> to vector<4x4x16xf32>
    %74 = vector.extract_strided_slice %1 {offsets = [6, 0], sizes = [1, 16], strides = [1, 1]} : vector<9x16xf32> to vector<1x16xf32>
    %75 = vector.shape_cast %74 : vector<1x16xf32> to vector<16xf32>
    %76 = vector.shape_cast %75 : vector<16xf32> to vector<1x1x16xf32>
    %77 = vector.broadcast %76 : vector<1x1x16xf32> to vector<4x4x16xf32>
    %78 = arith.mulf %73, %77 : vector<4x4x16xf32>
    %79 = arith.addf %68, %78 : vector<4x4x16xf32>
    %c6_i32 = arith.constant 6 : i32
    %80 = arith.addi %c6_i32, %0 : i32
    %c0_23 = arith.constant 0 : index
    %81 = arith.index_cast %80 : i32 to index
    %c0_24 = arith.constant 0 : index
    %c0_25 = arith.constant 0 : index
    %82 = vector.load %arg2[%c0_23, %81, %c0_24, %c0_25] : memref<1x20x5x16xbf16, #tpu.memory_space<vmem>>, vector<1x4x4x16xbf16>
    %83 = vector.shape_cast %82 : vector<1x4x4x16xbf16> to vector<4x4x16xbf16>
    %84 = arith.extf %83 : vector<4x4x16xbf16> to vector<4x4x16xf32>
    %85 = vector.extract_strided_slice %1 {offsets = [7, 0], sizes = [1, 16], strides = [1, 1]} : vector<9x16xf32> to vector<1x16xf32>
    %86 = vector.shape_cast %85 : vector<1x16xf32> to vector<16xf32>
    %87 = vector.shape_cast %86 : vector<16xf32> to vector<1x1x16xf32>
    %88 = vector.broadcast %87 : vector<1x1x16xf32> to vector<4x4x16xf32>
    %89 = arith.mulf %84, %88 : vector<4x4x16xf32>
    %90 = arith.addf %79, %89 : vector<4x4x16xf32>
    %c1_i32_26 = arith.constant 1 : i32
    %91 = arith.addi %c1_i32_26, %0 : i32
    %c0_27 = arith.constant 0 : index
    %92 = arith.index_cast %91 : i32 to index
    %c1_28 = arith.constant 1 : index
    %c0_29 = arith.constant 0 : index
    %93 = vector.load %arg2[%c0_27, %92, %c1_28, %c0_29] : memref<1x20x5x16xbf16, #tpu.memory_space<vmem>>, vector<1x4x4x16xbf16>
    %94 = vector.shape_cast %93 : vector<1x4x4x16xbf16> to vector<4x4x16xbf16>
    %95 = arith.extf %94 : vector<4x4x16xbf16> to vector<4x4x16xf32>
    %96 = vector.extract_strided_slice %1 {offsets = [8, 0], sizes = [1, 16], strides = [1, 1]} : vector<9x16xf32> to vector<1x16xf32>
    %97 = vector.shape_cast %96 : vector<1x16xf32> to vector<16xf32>
    %98 = vector.shape_cast %97 : vector<16xf32> to vector<1x1x16xf32>
    %99 = vector.broadcast %98 : vector<1x1x16xf32> to vector<4x4x16xf32>
    %100 = arith.mulf %95, %99 : vector<4x4x16xf32>
    %101 = arith.addf %90, %100 : vector<4x4x16xf32>
    %c0_30 = arith.constant 0 : index
    %c0_31 = arith.constant 0 : index
    %102 = vector.load %arg4[%c0_30, %c0_31] : memref<1x16xf32, #tpu.memory_space<vmem>>, vector<1x16xf32>
    %103 = vector.shape_cast %102 : vector<1x16xf32> to vector<1x1x16xf32>
    %104 = vector.broadcast %103 : vector<1x1x16xf32> to vector<4x4x16xf32>
    %105 = arith.addf %101, %104 : vector<4x4x16xf32>
    %cst_32 = arith.constant 0.000000e+00 : f32
    %106 = vector.broadcast %cst_32 : f32 to vector<4x4x16xf32>
    %107 = arith.maximumf %105, %106 : vector<4x4x16xf32>
    %108 = arith.truncf %107 : vector<4x4x16xf32> to vector<4x4x16xbf16>
    %c0_33 = arith.constant 0 : index
    %c0_34 = arith.constant 0 : index
    %c0_35 = arith.constant 0 : index
    %c0_36 = arith.constant 0 : index
    %109 = vector.load %arg9[%c0_33, %c0_34, %c0_35, %c0_36] : memref<1x4x4x16xbf16, #tpu.memory_space<vmem>>, vector<1x4x4x16xbf16>
    %110 = vector.shape_cast %109 : vector<1x4x4x16xbf16> to vector<4x4x16xbf16>
    %111 = vector.shape_cast %108 : vector<4x4x16xbf16> to vector<1x4x4x16xbf16>
    tpu.vector_store %arg9[%c0_33, %c0_34, %c0_35, %c0_36], %111 {strides = array<i32>} : memref<1x4x4x16xbf16, #tpu.memory_space<vmem>>, vector<1x4x4x16xbf16>,
    %c0_i32_37 = arith.constant 0 : i32
    %112 = arith.cmpi eq, %arg1, %c0_i32_37 : i32
    %113 = arith.extui %112 : i1 to i32
    %c0_i32_38 = arith.constant 0 : i32
    %114 = arith.cmpi ne, %113, %c0_i32_38 : i32
    scf.if %114 {
      %cst_48 = arith.constant 0.000000e+00 : f32
      %123 = vector.broadcast %cst_48 : f32 to vector<1x1x16xf32>
      %c0_49 = arith.constant 0 : index
      %c0_50 = arith.constant 0 : index
      %c0_51 = arith.constant 0 : index
      %124 = vector.load %arg10[%c0_49, %c0_50, %c0_51] : memref<1x1x16xf32, #tpu.memory_space<vmem>>, vector<1x1x16xf32>
      tpu.vector_store %arg10[%c0_49, %c0_50, %c0_51], %123 {strides = array<i32>} : memref<1x1x16xf32, #tpu.memory_space<vmem>>, vector<1x1x16xf32>,
    } else {
    }
    %c0_39 = arith.constant 0 : index
    %c0_40 = arith.constant 0 : index
    %c0_41 = arith.constant 0 : index
    %115 = vector.load %arg10[%c0_39, %c0_40, %c0_41] : memref<1x1x16xf32, #tpu.memory_space<vmem>>, vector<1x1x16xf32>
    %cst_42 = arith.constant dense<0.000000e+00> : vector<16xf32>
    %116 = vector.multi_reduction <add>, %107, %cst_42 [0, 1] : vector<4x4x16xf32> to vector<16xf32>
    %117 = vector.shape_cast %116 : vector<16xf32> to vector<1x1x16xf32>
    %118 = arith.addf %115, %117 : vector<1x1x16xf32>
    %c0_43 = arith.constant 0 : index
    %c0_44 = arith.constant 0 : index
    %c0_45 = arith.constant 0 : index
    %119 = vector.load %arg10[%c0_43, %c0_44, %c0_45] : memref<1x1x16xf32, #tpu.memory_space<vmem>>, vector<1x1x16xf32>
    tpu.vector_store %arg10[%c0_43, %c0_44, %c0_45], %118 {strides = array<i32>} : memref<1x1x16xf32, #tpu.memory_space<vmem>>, vector<1x1x16xf32>,
    %c0_i32_46 = arith.constant 0 : i32
    %120 = arith.cmpi eq, %arg1, %c0_i32_46 : i32
    %121 = arith.extui %120 : i1 to i32
    %c0_i32_47 = arith.constant 0 : i32
    %122 = arith.cmpi ne, %121, %c0_i32_47 : i32
    scf.if %122 {
      %c0_48 = arith.constant 0 : index
      %c0_49 = arith.constant 0 : index
      %c0_50 = arith.constant 0 : index
      %123 = vector.load %arg10[%c0_48, %c0_49, %c0_50] : memref<1x1x16xf32, #tpu.memory_space<vmem>>, vector<1x1x16xf32>
      %124 = vector.shape_cast %123 : vector<1x1x16xf32> to vector<1x16xf32>
      %cst_51 = arith.constant 6.250000e-02 : f32
      %125 = vector.broadcast %cst_51 : f32 to vector<1x16xf32>
      %126 = arith.mulf %124, %125 : vector<1x16xf32>
      %c0_52 = arith.constant 0 : index
      %c0_53 = arith.constant 0 : index
      %127 = vector.load %arg5[%c0_52, %c0_53] : memref<16x8xf32, #tpu.memory_space<vmem>>, vector<16x8xf32>
      %cst_54 = arith.constant dense<0.000000e+00> : vector<1x8xf32>
      %128 = tpu.matmul %126, %127, %cst_54 {dimension_numbers = #tpu.dot_dimension_numbers<[1], [0], [0], [1], [0, 0, 1, 1], [], []>} : vector<1x16xf32>, vector<16x8xf32>, vector<1x8xf32> -> vector<1x8xf32>
      %c0_55 = arith.constant 0 : index
      %c0_56 = arith.constant 0 : index
      %129 = vector.load %arg6[%c0_55, %c0_56] : memref<1x8xf32, #tpu.memory_space<vmem>>, vector<1x8xf32>
      %130 = arith.addf %128, %129 : vector<1x8xf32>
      %cst_57 = arith.constant 0.000000e+00 : f32
      %131 = vector.broadcast %cst_57 : f32 to vector<1x8xf32>
      %132 = arith.maximumf %130, %131 : vector<1x8xf32>
      %c0_58 = arith.constant 0 : index
      %c0_59 = arith.constant 0 : index
      %133 = vector.load %arg7[%c0_58, %c0_59] : memref<8x16xf32, #tpu.memory_space<vmem>>, vector<8x16xf32>
      %cst_60 = arith.constant dense<0.000000e+00> : vector<1x16xf32>
      %134 = tpu.matmul %132, %133, %cst_60 {dimension_numbers = #tpu.dot_dimension_numbers<[1], [0], [0], [1], [0, 0, 1, 1], [], []>} : vector<1x8xf32>, vector<8x16xf32>, vector<1x16xf32> -> vector<1x16xf32>
      %c0_61 = arith.constant 0 : index
      %c0_62 = arith.constant 0 : index
      %135 = vector.load %arg8[%c0_61, %c0_62] : memref<1x16xf32, #tpu.memory_space<vmem>>, vector<1x16xf32>
      %136 = arith.addf %134, %135 : vector<1x16xf32>
      %cst_63 = arith.constant 3.000000e+00 : f32
      %137 = vector.broadcast %cst_63 : f32 to vector<1x16xf32>
      %138 = arith.addf %136, %137 : vector<1x16xf32>
      %cst_64 = arith.constant 0.000000e+00 : f32
      %cst_65 = arith.constant 6.000000e+00 : f32
      %139 = vector.broadcast %cst_64 : f32 to vector<1x16xf32>
      %140 = arith.maximumf %139, %138 : vector<1x16xf32>
      %141 = vector.broadcast %cst_65 : f32 to vector<1x16xf32>
      %142 = arith.minimumf %141, %140 : vector<1x16xf32>
      %cst_66 = arith.constant 6.000000e+00 : f32
      %143 = vector.broadcast %cst_66 : f32 to vector<1x16xf32>
      %144 = arith.divf %142, %143 : vector<1x16xf32>
      %145 = vector.shape_cast %144 : vector<1x16xf32> to vector<1x1x16xf32>
      %c0_67 = arith.constant 0 : index
      %c0_68 = arith.constant 0 : index
      %c0_69 = arith.constant 0 : index
      %146 = vector.load %arg10[%c0_67, %c0_68, %c0_69] : memref<1x1x16xf32, #tpu.memory_space<vmem>>, vector<1x1x16xf32>
      tpu.vector_store %arg10[%c0_67, %c0_68, %c0_69], %145 {strides = array<i32>} : memref<1x1x16xf32, #tpu.memory_space<vmem>>, vector<1x1x16xf32>,
    } else {
    }
    return
  }
  func.func @transform_0(%arg0: i32, %arg1: i32) -> (i32, i32, i32, i32) {
    %c0_i32 = arith.constant 0 : i32
    %c0_i32_0 = arith.constant 0 : i32
    %c0_i32_1 = arith.constant 0 : i32
    %c0_i32_2 = arith.constant 0 : i32
    return %arg0, %c0_i32, %c0_i32_0, %c0_i32_1 : i32, i32, i32, i32
  }
  func.func @transform_1(%arg0: i32, %arg1: i32) -> (i32, i32) {
    %c0_i32 = arith.constant 0 : i32
    %c0_i32_0 = arith.constant 0 : i32
    %c0_i32_1 = arith.constant 0 : i32
    return %c0_i32, %c0_i32_0 : i32, i32
  }
  func.func @transform_2(%arg0: i32, %arg1: i32) -> (i32, i32) {
    %c0_i32 = arith.constant 0 : i32
    %c0_i32_0 = arith.constant 0 : i32
    %c0_i32_1 = arith.constant 0 : i32
    return %c0_i32, %c0_i32_0 : i32, i32
  }
  func.func @transform_3(%arg0: i32, %arg1: i32) -> (i32, i32) {
    %c0_i32 = arith.constant 0 : i32
    %c0_i32_0 = arith.constant 0 : i32
    %c0_i32_1 = arith.constant 0 : i32
    return %c0_i32, %c0_i32_0 : i32, i32
  }
  func.func @transform_4(%arg0: i32, %arg1: i32) -> (i32, i32) {
    %c0_i32 = arith.constant 0 : i32
    %c0_i32_0 = arith.constant 0 : i32
    %c0_i32_1 = arith.constant 0 : i32
    return %c0_i32, %c0_i32_0 : i32, i32
  }
  func.func @transform_5(%arg0: i32, %arg1: i32) -> (i32, i32) {
    %c0_i32 = arith.constant 0 : i32
    %c0_i32_0 = arith.constant 0 : i32
    %c0_i32_1 = arith.constant 0 : i32
    return %c0_i32, %c0_i32_0 : i32, i32
  }
  func.func @transform_6(%arg0: i32, %arg1: i32) -> (i32, i32) {
    %c0_i32 = arith.constant 0 : i32
    %c0_i32_0 = arith.constant 0 : i32
    %c0_i32_1 = arith.constant 0 : i32
    return %c0_i32, %c0_i32_0 : i32, i32
  }
  func.func @transform_7(%arg0: i32, %arg1: i32) -> (i32, i32, i32, i32) {
    %c0_i32 = arith.constant 0 : i32
    %c0_i32_0 = arith.constant 0 : i32
    %c0_i32_1 = arith.constant 0 : i32
    return %arg0, %arg1, %c0_i32, %c0_i32_0 : i32, i32, i32, i32
  }
  func.func @transform_8(%arg0: i32, %arg1: i32) -> (i32, i32, i32) {
    %c0_i32 = arith.constant 0 : i32
    %c0_i32_0 = arith.constant 0 : i32
    %c0_i32_1 = arith.constant 0 : i32
    return %arg0, %c0_i32, %c0_i32_0 : i32, i32, i32
  }
}

module attributes {stable_mosaic.version = 11 : i64} {
  func.func @_dw_kernel(%arg0: i32, %arg1: i32, %arg2: memref<1x12x3x72xbf16, #tpu.memory_space<vmem>>, %arg3: memref<9x72xf32, #tpu.memory_space<vmem>>, %arg4: memref<1x72xf32, #tpu.memory_space<vmem>>, %arg5: memref<1x2x2x72xbf16, #tpu.memory_space<vmem>>) attributes {dimension_semantics = [#tpu.dimension_semantics<parallel>, #tpu.dimension_semantics<arbitrary>], iteration_bounds = array<i64: 2, 1>, scalar_prefetch = 0 : i64, scratch_operands = 0 : i64, tpu.core_type = #tpu.core_type<tc>, window_params = [{transform_indices = @transform_0, window_bounds = array<i64: 1, 12, 3, 72>}, {pipeline_mode = #tpu.pipeline_mode<synchronous>, transform_indices = @transform_1, window_bounds = array<i64: 9, 72>}, {pipeline_mode = #tpu.pipeline_mode<synchronous>, transform_indices = @transform_2, window_bounds = array<i64: 1, 72>}, {transform_indices = @transform_3, window_bounds = array<i64: 1, 2, 2, 72>}]} {
    %c2_i32 = arith.constant 2 : i32
    %0 = arith.muli %arg1, %c2_i32 : i32
    %c0 = arith.constant 0 : index
    %c0_0 = arith.constant 0 : index
    %1 = vector.load %arg3[%c0, %c0_0] : memref<9x72xf32, #tpu.memory_space<vmem>>, vector<9x72xf32>
    %cst = arith.constant 0.000000e+00 : f32
    %2 = vector.broadcast %cst : f32 to vector<2x2x72xf32>
    %c0_i32 = arith.constant 0 : i32
    %3 = arith.addi %c0_i32, %0 : i32
    %c0_1 = arith.constant 0 : index
    %4 = arith.index_cast %3 : i32 to index
    %c0_2 = arith.constant 0 : index
    %c0_3 = arith.constant 0 : index
    %5 = vector.load %arg2[%c0_1, %4, %c0_2, %c0_3] : memref<1x12x3x72xbf16, #tpu.memory_space<vmem>>, vector<1x2x2x72xbf16>
    %6 = vector.shape_cast %5 : vector<1x2x2x72xbf16> to vector<2x2x72xbf16>
    %7 = arith.extf %6 : vector<2x2x72xbf16> to vector<2x2x72xf32>
    %8 = vector.extract_strided_slice %1 {offsets = [0, 0], sizes = [1, 72], strides = [1, 1]} : vector<9x72xf32> to vector<1x72xf32>
    %9 = vector.shape_cast %8 : vector<1x72xf32> to vector<72xf32>
    %10 = vector.shape_cast %9 : vector<72xf32> to vector<1x1x72xf32>
    %11 = vector.broadcast %10 : vector<1x1x72xf32> to vector<2x2x72xf32>
    %12 = arith.mulf %7, %11 : vector<2x2x72xf32>
    %13 = arith.addf %2, %12 : vector<2x2x72xf32>
    %c3_i32 = arith.constant 3 : i32
    %14 = arith.addi %c3_i32, %0 : i32
    %c0_4 = arith.constant 0 : index
    %15 = arith.index_cast %14 : i32 to index
    %c0_5 = arith.constant 0 : index
    %c0_6 = arith.constant 0 : index
    %16 = vector.load %arg2[%c0_4, %15, %c0_5, %c0_6] : memref<1x12x3x72xbf16, #tpu.memory_space<vmem>>, vector<1x2x2x72xbf16>
    %17 = vector.shape_cast %16 : vector<1x2x2x72xbf16> to vector<2x2x72xbf16>
    %18 = arith.extf %17 : vector<2x2x72xbf16> to vector<2x2x72xf32>
    %19 = vector.extract_strided_slice %1 {offsets = [1, 0], sizes = [1, 72], strides = [1, 1]} : vector<9x72xf32> to vector<1x72xf32>
    %20 = vector.shape_cast %19 : vector<1x72xf32> to vector<72xf32>
    %21 = vector.shape_cast %20 : vector<72xf32> to vector<1x1x72xf32>
    %22 = vector.broadcast %21 : vector<1x1x72xf32> to vector<2x2x72xf32>
    %23 = arith.mulf %18, %22 : vector<2x2x72xf32>
    %24 = arith.addf %13, %23 : vector<2x2x72xf32>
    %c0_i32_7 = arith.constant 0 : i32
    %25 = arith.addi %c0_i32_7, %0 : i32
    %c0_8 = arith.constant 0 : index
    %26 = arith.index_cast %25 : i32 to index
    %c1 = arith.constant 1 : index
    %c0_9 = arith.constant 0 : index
    %27 = vector.load %arg2[%c0_8, %26, %c1, %c0_9] : memref<1x12x3x72xbf16, #tpu.memory_space<vmem>>, vector<1x2x2x72xbf16>
    %28 = vector.shape_cast %27 : vector<1x2x2x72xbf16> to vector<2x2x72xbf16>
    %29 = arith.extf %28 : vector<2x2x72xbf16> to vector<2x2x72xf32>
    %30 = vector.extract_strided_slice %1 {offsets = [2, 0], sizes = [1, 72], strides = [1, 1]} : vector<9x72xf32> to vector<1x72xf32>
    %31 = vector.shape_cast %30 : vector<1x72xf32> to vector<72xf32>
    %32 = vector.shape_cast %31 : vector<72xf32> to vector<1x1x72xf32>
    %33 = vector.broadcast %32 : vector<1x1x72xf32> to vector<2x2x72xf32>
    %34 = arith.mulf %29, %33 : vector<2x2x72xf32>
    %35 = arith.addf %24, %34 : vector<2x2x72xf32>
    %c6_i32 = arith.constant 6 : i32
    %36 = arith.addi %c6_i32, %0 : i32
    %c0_10 = arith.constant 0 : index
    %37 = arith.index_cast %36 : i32 to index
    %c0_11 = arith.constant 0 : index
    %c0_12 = arith.constant 0 : index
    %38 = vector.load %arg2[%c0_10, %37, %c0_11, %c0_12] : memref<1x12x3x72xbf16, #tpu.memory_space<vmem>>, vector<1x2x2x72xbf16>
    %39 = vector.shape_cast %38 : vector<1x2x2x72xbf16> to vector<2x2x72xbf16>
    %40 = arith.extf %39 : vector<2x2x72xbf16> to vector<2x2x72xf32>
    %41 = vector.extract_strided_slice %1 {offsets = [3, 0], sizes = [1, 72], strides = [1, 1]} : vector<9x72xf32> to vector<1x72xf32>
    %42 = vector.shape_cast %41 : vector<1x72xf32> to vector<72xf32>
    %43 = vector.shape_cast %42 : vector<72xf32> to vector<1x1x72xf32>
    %44 = vector.broadcast %43 : vector<1x1x72xf32> to vector<2x2x72xf32>
    %45 = arith.mulf %40, %44 : vector<2x2x72xf32>
    %46 = arith.addf %35, %45 : vector<2x2x72xf32>
    %c9_i32 = arith.constant 9 : i32
    %47 = arith.addi %c9_i32, %0 : i32
    %c0_13 = arith.constant 0 : index
    %48 = arith.index_cast %47 : i32 to index
    %c0_14 = arith.constant 0 : index
    %c0_15 = arith.constant 0 : index
    %49 = vector.load %arg2[%c0_13, %48, %c0_14, %c0_15] : memref<1x12x3x72xbf16, #tpu.memory_space<vmem>>, vector<1x2x2x72xbf16>
    %50 = vector.shape_cast %49 : vector<1x2x2x72xbf16> to vector<2x2x72xbf16>
    %51 = arith.extf %50 : vector<2x2x72xbf16> to vector<2x2x72xf32>
    %52 = vector.extract_strided_slice %1 {offsets = [4, 0], sizes = [1, 72], strides = [1, 1]} : vector<9x72xf32> to vector<1x72xf32>
    %53 = vector.shape_cast %52 : vector<1x72xf32> to vector<72xf32>
    %54 = vector.shape_cast %53 : vector<72xf32> to vector<1x1x72xf32>
    %55 = vector.broadcast %54 : vector<1x1x72xf32> to vector<2x2x72xf32>
    %56 = arith.mulf %51, %55 : vector<2x2x72xf32>
    %57 = arith.addf %46, %56 : vector<2x2x72xf32>
    %c6_i32_16 = arith.constant 6 : i32
    %58 = arith.addi %c6_i32_16, %0 : i32
    %c0_17 = arith.constant 0 : index
    %59 = arith.index_cast %58 : i32 to index
    %c1_18 = arith.constant 1 : index
    %c0_19 = arith.constant 0 : index
    %60 = vector.load %arg2[%c0_17, %59, %c1_18, %c0_19] : memref<1x12x3x72xbf16, #tpu.memory_space<vmem>>, vector<1x2x2x72xbf16>
    %61 = vector.shape_cast %60 : vector<1x2x2x72xbf16> to vector<2x2x72xbf16>
    %62 = arith.extf %61 : vector<2x2x72xbf16> to vector<2x2x72xf32>
    %63 = vector.extract_strided_slice %1 {offsets = [5, 0], sizes = [1, 72], strides = [1, 1]} : vector<9x72xf32> to vector<1x72xf32>
    %64 = vector.shape_cast %63 : vector<1x72xf32> to vector<72xf32>
    %65 = vector.shape_cast %64 : vector<72xf32> to vector<1x1x72xf32>
    %66 = vector.broadcast %65 : vector<1x1x72xf32> to vector<2x2x72xf32>
    %67 = arith.mulf %62, %66 : vector<2x2x72xf32>
    %68 = arith.addf %57, %67 : vector<2x2x72xf32>
    %c1_i32 = arith.constant 1 : i32
    %69 = arith.addi %c1_i32, %0 : i32
    %c0_20 = arith.constant 0 : index
    %70 = arith.index_cast %69 : i32 to index
    %c0_21 = arith.constant 0 : index
    %c0_22 = arith.constant 0 : index
    %71 = vector.load %arg2[%c0_20, %70, %c0_21, %c0_22] : memref<1x12x3x72xbf16, #tpu.memory_space<vmem>>, vector<1x2x2x72xbf16>
    %72 = vector.shape_cast %71 : vector<1x2x2x72xbf16> to vector<2x2x72xbf16>
    %73 = arith.extf %72 : vector<2x2x72xbf16> to vector<2x2x72xf32>
    %74 = vector.extract_strided_slice %1 {offsets = [6, 0], sizes = [1, 72], strides = [1, 1]} : vector<9x72xf32> to vector<1x72xf32>
    %75 = vector.shape_cast %74 : vector<1x72xf32> to vector<72xf32>
    %76 = vector.shape_cast %75 : vector<72xf32> to vector<1x1x72xf32>
    %77 = vector.broadcast %76 : vector<1x1x72xf32> to vector<2x2x72xf32>
    %78 = arith.mulf %73, %77 : vector<2x2x72xf32>
    %79 = arith.addf %68, %78 : vector<2x2x72xf32>
    %c4_i32 = arith.constant 4 : i32
    %80 = arith.addi %c4_i32, %0 : i32
    %c0_23 = arith.constant 0 : index
    %81 = arith.index_cast %80 : i32 to index
    %c0_24 = arith.constant 0 : index
    %c0_25 = arith.constant 0 : index
    %82 = vector.load %arg2[%c0_23, %81, %c0_24, %c0_25] : memref<1x12x3x72xbf16, #tpu.memory_space<vmem>>, vector<1x2x2x72xbf16>
    %83 = vector.shape_cast %82 : vector<1x2x2x72xbf16> to vector<2x2x72xbf16>
    %84 = arith.extf %83 : vector<2x2x72xbf16> to vector<2x2x72xf32>
    %85 = vector.extract_strided_slice %1 {offsets = [7, 0], sizes = [1, 72], strides = [1, 1]} : vector<9x72xf32> to vector<1x72xf32>
    %86 = vector.shape_cast %85 : vector<1x72xf32> to vector<72xf32>
    %87 = vector.shape_cast %86 : vector<72xf32> to vector<1x1x72xf32>
    %88 = vector.broadcast %87 : vector<1x1x72xf32> to vector<2x2x72xf32>
    %89 = arith.mulf %84, %88 : vector<2x2x72xf32>
    %90 = arith.addf %79, %89 : vector<2x2x72xf32>
    %c1_i32_26 = arith.constant 1 : i32
    %91 = arith.addi %c1_i32_26, %0 : i32
    %c0_27 = arith.constant 0 : index
    %92 = arith.index_cast %91 : i32 to index
    %c1_28 = arith.constant 1 : index
    %c0_29 = arith.constant 0 : index
    %93 = vector.load %arg2[%c0_27, %92, %c1_28, %c0_29] : memref<1x12x3x72xbf16, #tpu.memory_space<vmem>>, vector<1x2x2x72xbf16>
    %94 = vector.shape_cast %93 : vector<1x2x2x72xbf16> to vector<2x2x72xbf16>
    %95 = arith.extf %94 : vector<2x2x72xbf16> to vector<2x2x72xf32>
    %96 = vector.extract_strided_slice %1 {offsets = [8, 0], sizes = [1, 72], strides = [1, 1]} : vector<9x72xf32> to vector<1x72xf32>
    %97 = vector.shape_cast %96 : vector<1x72xf32> to vector<72xf32>
    %98 = vector.shape_cast %97 : vector<72xf32> to vector<1x1x72xf32>
    %99 = vector.broadcast %98 : vector<1x1x72xf32> to vector<2x2x72xf32>
    %100 = arith.mulf %95, %99 : vector<2x2x72xf32>
    %101 = arith.addf %90, %100 : vector<2x2x72xf32>
    %c0_30 = arith.constant 0 : index
    %c0_31 = arith.constant 0 : index
    %102 = vector.load %arg4[%c0_30, %c0_31] : memref<1x72xf32, #tpu.memory_space<vmem>>, vector<1x72xf32>
    %103 = vector.shape_cast %102 : vector<1x72xf32> to vector<1x1x72xf32>
    %104 = vector.broadcast %103 : vector<1x1x72xf32> to vector<2x2x72xf32>
    %105 = arith.addf %101, %104 : vector<2x2x72xf32>
    %cst_32 = arith.constant 0.000000e+00 : f32
    %106 = vector.broadcast %cst_32 : f32 to vector<2x2x72xf32>
    %107 = arith.maximumf %105, %106 : vector<2x2x72xf32>
    %108 = arith.truncf %107 : vector<2x2x72xf32> to vector<2x2x72xbf16>
    %c0_33 = arith.constant 0 : index
    %c0_34 = arith.constant 0 : index
    %c0_35 = arith.constant 0 : index
    %c0_36 = arith.constant 0 : index
    %109 = vector.load %arg5[%c0_33, %c0_34, %c0_35, %c0_36] : memref<1x2x2x72xbf16, #tpu.memory_space<vmem>>, vector<1x2x2x72xbf16>
    %110 = vector.shape_cast %109 : vector<1x2x2x72xbf16> to vector<2x2x72xbf16>
    %111 = vector.shape_cast %108 : vector<2x2x72xbf16> to vector<1x2x2x72xbf16>
    tpu.vector_store %arg5[%c0_33, %c0_34, %c0_35, %c0_36], %111 {strides = array<i32>} : memref<1x2x2x72xbf16, #tpu.memory_space<vmem>>, vector<1x2x2x72xbf16>,
    return
  }
  func.func @transform_0(%arg0: i32, %arg1: i32) -> (i32, i32, i32, i32) {
    %c0_i32 = arith.constant 0 : i32
    %c0_i32_0 = arith.constant 0 : i32
    %c0_i32_1 = arith.constant 0 : i32
    %c0_i32_2 = arith.constant 0 : i32
    return %arg0, %c0_i32, %c0_i32_0, %c0_i32_1 : i32, i32, i32, i32
  }
  func.func @transform_1(%arg0: i32, %arg1: i32) -> (i32, i32) {
    %c0_i32 = arith.constant 0 : i32
    %c0_i32_0 = arith.constant 0 : i32
    %c0_i32_1 = arith.constant 0 : i32
    return %c0_i32, %c0_i32_0 : i32, i32
  }
  func.func @transform_2(%arg0: i32, %arg1: i32) -> (i32, i32) {
    %c0_i32 = arith.constant 0 : i32
    %c0_i32_0 = arith.constant 0 : i32
    %c0_i32_1 = arith.constant 0 : i32
    return %c0_i32, %c0_i32_0 : i32, i32
  }
  func.func @transform_3(%arg0: i32, %arg1: i32) -> (i32, i32, i32, i32) {
    %c0_i32 = arith.constant 0 : i32
    %c0_i32_0 = arith.constant 0 : i32
    %c0_i32_1 = arith.constant 0 : i32
    return %arg0, %arg1, %c0_i32, %c0_i32_0 : i32, i32, i32, i32
  }
}

module attributes {stable_mosaic.version = 11 : i64} {
  func.func @_pw_kernel(%arg0: i32, %arg1: i32, %arg2: memref<1x4x72xbf16, #tpu.memory_space<vmem>>, %arg3: memref<72x24xbf16, #tpu.memory_space<vmem>>, %arg4: memref<1x24xf32, #tpu.memory_space<vmem>>, %arg5: memref<1x4x24xbf16, #tpu.memory_space<vmem>>) attributes {dimension_semantics = [#tpu.dimension_semantics<parallel>, #tpu.dimension_semantics<parallel>], iteration_bounds = array<i64: 2, 1>, scalar_prefetch = 0 : i64, scratch_operands = 0 : i64, tpu.core_type = #tpu.core_type<tc>, window_params = [{transform_indices = @transform_0, window_bounds = array<i64: 1, 4, 72>}, {pipeline_mode = #tpu.pipeline_mode<synchronous>, transform_indices = @transform_1, window_bounds = array<i64: 72, 24>}, {pipeline_mode = #tpu.pipeline_mode<synchronous>, transform_indices = @transform_2, window_bounds = array<i64: 1, 24>}, {transform_indices = @transform_3, window_bounds = array<i64: 1, 4, 24>}]} {
    %c0 = arith.constant 0 : index
    %c0_0 = arith.constant 0 : index
    %c0_1 = arith.constant 0 : index
    %0 = vector.load %arg2[%c0, %c0_0, %c0_1] : memref<1x4x72xbf16, #tpu.memory_space<vmem>>, vector<1x4x72xbf16>
    %1 = vector.shape_cast %0 : vector<1x4x72xbf16> to vector<4x72xbf16>
    %c0_2 = arith.constant 0 : index
    %c0_3 = arith.constant 0 : index
    %2 = vector.load %arg3[%c0_2, %c0_3] : memref<72x24xbf16, #tpu.memory_space<vmem>>, vector<72x24xbf16>
    %cst = arith.constant dense<0.000000e+00> : vector<4x24xf32>
    %3 = tpu.matmul %1, %2, %cst {dimension_numbers = #tpu.dot_dimension_numbers<[1], [0], [0], [1], [0, 0, 1, 1], [], []>} : vector<4x72xbf16>, vector<72x24xbf16>, vector<4x24xf32> -> vector<4x24xf32>
    %c0_4 = arith.constant 0 : index
    %c0_5 = arith.constant 0 : index
    %4 = vector.load %arg4[%c0_4, %c0_5] : memref<1x24xf32, #tpu.memory_space<vmem>>, vector<1x24xf32>
    %5 = vector.broadcast %4 : vector<1x24xf32> to vector<4x24xf32>
    %6 = arith.addf %3, %5 : vector<4x24xf32>
    %7 = arith.truncf %6 : vector<4x24xf32> to vector<4x24xbf16>
    %c0_6 = arith.constant 0 : index
    %c0_7 = arith.constant 0 : index
    %c0_8 = arith.constant 0 : index
    %8 = vector.load %arg5[%c0_6, %c0_7, %c0_8] : memref<1x4x24xbf16, #tpu.memory_space<vmem>>, vector<1x4x24xbf16>
    %9 = vector.shape_cast %8 : vector<1x4x24xbf16> to vector<4x24xbf16>
    %10 = vector.shape_cast %7 : vector<4x24xbf16> to vector<1x4x24xbf16>
    tpu.vector_store %arg5[%c0_6, %c0_7, %c0_8], %10 {strides = array<i32>} : memref<1x4x24xbf16, #tpu.memory_space<vmem>>, vector<1x4x24xbf16>,
    return
  }
  func.func @transform_0(%arg0: i32, %arg1: i32) -> (i32, i32, i32) {
    %c0_i32 = arith.constant 0 : i32
    %c0_i32_0 = arith.constant 0 : i32
    return %arg0, %arg1, %c0_i32 : i32, i32, i32
  }
  func.func @transform_1(%arg0: i32, %arg1: i32) -> (i32, i32) {
    %c0_i32 = arith.constant 0 : i32
    %c0_i32_0 = arith.constant 0 : i32
    %c0_i32_1 = arith.constant 0 : i32
    return %c0_i32, %c0_i32_0 : i32, i32
  }
  func.func @transform_2(%arg0: i32, %arg1: i32) -> (i32, i32) {
    %c0_i32 = arith.constant 0 : i32
    %c0_i32_0 = arith.constant 0 : i32
    %c0_i32_1 = arith.constant 0 : i32
    return %c0_i32, %c0_i32_0 : i32, i32
  }
  func.func @transform_3(%arg0: i32, %arg1: i32) -> (i32, i32, i32) {
    %c0_i32 = arith.constant 0 : i32
    %c0_i32_0 = arith.constant 0 : i32
    return %arg0, %arg1, %c0_i32 : i32, i32, i32
  }
}

module attributes {stable_mosaic.version = 11 : i64} {
  func.func @_pw_kernel(%arg0: i32, %arg1: i32, %arg2: memref<1x4x24xbf16, #tpu.memory_space<vmem>>, %arg3: memref<24x72xbf16, #tpu.memory_space<vmem>>, %arg4: memref<1x72xf32, #tpu.memory_space<vmem>>, %arg5: memref<1x4x72xbf16, #tpu.memory_space<vmem>>) attributes {dimension_semantics = [#tpu.dimension_semantics<parallel>, #tpu.dimension_semantics<parallel>], iteration_bounds = array<i64: 2, 1>, scalar_prefetch = 0 : i64, scratch_operands = 0 : i64, tpu.core_type = #tpu.core_type<tc>, window_params = [{transform_indices = @transform_0, window_bounds = array<i64: 1, 4, 24>}, {pipeline_mode = #tpu.pipeline_mode<synchronous>, transform_indices = @transform_1, window_bounds = array<i64: 24, 72>}, {pipeline_mode = #tpu.pipeline_mode<synchronous>, transform_indices = @transform_2, window_bounds = array<i64: 1, 72>}, {transform_indices = @transform_3, window_bounds = array<i64: 1, 4, 72>}]} {
    %c0 = arith.constant 0 : index
    %c0_0 = arith.constant 0 : index
    %c0_1 = arith.constant 0 : index
    %0 = vector.load %arg2[%c0, %c0_0, %c0_1] : memref<1x4x24xbf16, #tpu.memory_space<vmem>>, vector<1x4x24xbf16>
    %1 = vector.shape_cast %0 : vector<1x4x24xbf16> to vector<4x24xbf16>
    %c0_2 = arith.constant 0 : index
    %c0_3 = arith.constant 0 : index
    %2 = vector.load %arg3[%c0_2, %c0_3] : memref<24x72xbf16, #tpu.memory_space<vmem>>, vector<24x72xbf16>
    %cst = arith.constant dense<0.000000e+00> : vector<4x72xf32>
    %3 = tpu.matmul %1, %2, %cst {dimension_numbers = #tpu.dot_dimension_numbers<[1], [0], [0], [1], [0, 0, 1, 1], [], []>} : vector<4x24xbf16>, vector<24x72xbf16>, vector<4x72xf32> -> vector<4x72xf32>
    %c0_4 = arith.constant 0 : index
    %c0_5 = arith.constant 0 : index
    %4 = vector.load %arg4[%c0_4, %c0_5] : memref<1x72xf32, #tpu.memory_space<vmem>>, vector<1x72xf32>
    %5 = vector.broadcast %4 : vector<1x72xf32> to vector<4x72xf32>
    %6 = arith.addf %3, %5 : vector<4x72xf32>
    %cst_6 = arith.constant 3.000000e+00 : f32
    %7 = vector.broadcast %cst_6 : f32 to vector<4x72xf32>
    %8 = arith.addf %6, %7 : vector<4x72xf32>
    %cst_7 = arith.constant 0.000000e+00 : f32
    %cst_8 = arith.constant 6.000000e+00 : f32
    %9 = vector.broadcast %cst_7 : f32 to vector<4x72xf32>
    %10 = arith.maximumf %9, %8 : vector<4x72xf32>
    %11 = vector.broadcast %cst_8 : f32 to vector<4x72xf32>
    %12 = arith.minimumf %11, %10 : vector<4x72xf32>
    %cst_9 = arith.constant 6.000000e+00 : f32
    %13 = vector.broadcast %cst_9 : f32 to vector<4x72xf32>
    %14 = arith.divf %12, %13 : vector<4x72xf32>
    %15 = arith.mulf %6, %14 : vector<4x72xf32>
    %16 = arith.truncf %15 : vector<4x72xf32> to vector<4x72xbf16>
    %c0_10 = arith.constant 0 : index
    %c0_11 = arith.constant 0 : index
    %c0_12 = arith.constant 0 : index
    %17 = vector.load %arg5[%c0_10, %c0_11, %c0_12] : memref<1x4x72xbf16, #tpu.memory_space<vmem>>, vector<1x4x72xbf16>
    %18 = vector.shape_cast %17 : vector<1x4x72xbf16> to vector<4x72xbf16>
    %19 = vector.shape_cast %16 : vector<4x72xbf16> to vector<1x4x72xbf16>
    tpu.vector_store %arg5[%c0_10, %c0_11, %c0_12], %19 {strides = array<i32>} : memref<1x4x72xbf16, #tpu.memory_space<vmem>>, vector<1x4x72xbf16>,
    return
  }
  func.func @transform_0(%arg0: i32, %arg1: i32) -> (i32, i32, i32) {
    %c0_i32 = arith.constant 0 : i32
    %c0_i32_0 = arith.constant 0 : i32
    return %arg0, %arg1, %c0_i32 : i32, i32, i32
  }
  func.func @transform_1(%arg0: i32, %arg1: i32) -> (i32, i32) {
    %c0_i32 = arith.constant 0 : i32
    %c0_i32_0 = arith.constant 0 : i32
    %c0_i32_1 = arith.constant 0 : i32
    return %c0_i32, %c0_i32_0 : i32, i32
  }
  func.func @transform_2(%arg0: i32, %arg1: i32) -> (i32, i32) {
    %c0_i32 = arith.constant 0 : i32
    %c0_i32_0 = arith.constant 0 : i32
    %c0_i32_1 = arith.constant 0 : i32
    return %c0_i32, %c0_i32_0 : i32, i32
  }
  func.func @transform_3(%arg0: i32, %arg1: i32) -> (i32, i32, i32) {
    %c0_i32 = arith.constant 0 : i32
    %c0_i32_0 = arith.constant 0 : i32
    return %arg0, %arg1, %c0_i32 : i32, i32, i32
  }
}

module attributes {stable_mosaic.version = 11 : i64} {
  func.func @_dw_kernel(%arg0: i32, %arg1: i32, %arg2: memref<1x6x6x72xbf16, #tpu.memory_space<vmem>>, %arg3: memref<25x72xf32, #tpu.memory_space<vmem>>, %arg4: memref<1x72xf32, #tpu.memory_space<vmem>>, %arg5: memref<72x24xf32, #tpu.memory_space<vmem>>, %arg6: memref<1x24xf32, #tpu.memory_space<vmem>>, %arg7: memref<24x72xf32, #tpu.memory_space<vmem>>, %arg8: memref<1x72xf32, #tpu.memory_space<vmem>>, %arg9: memref<1x2x2x72xbf16, #tpu.memory_space<vmem>>, %arg10: memref<1x1x72xf32, #tpu.memory_space<vmem>>) attributes {dimension_semantics = [#tpu.dimension_semantics<parallel>, #tpu.dimension_semantics<arbitrary>], iteration_bounds = array<i64: 2, 1>, scalar_prefetch = 0 : i64, scratch_operands = 0 : i64, tpu.core_type = #tpu.core_type<tc>, window_params = [{transform_indices = @transform_0, window_bounds = array<i64: 1, 6, 6, 72>}, {pipeline_mode = #tpu.pipeline_mode<synchronous>, transform_indices = @transform_1, window_bounds = array<i64: 25, 72>}, {pipeline_mode = #tpu.pipeline_mode<synchronous>, transform_indices = @transform_2, window_bounds = array<i64: 1, 72>}, {pipeline_mode = #tpu.pipeline_mode<synchronous>, transform_indices = @transform_3, window_bounds = array<i64: 72, 24>}, {pipeline_mode = #tpu.pipeline_mode<synchronous>, transform_indices = @transform_4, window_bounds = array<i64: 1, 24>}, {pipeline_mode = #tpu.pipeline_mode<synchronous>, transform_indices = @transform_5, window_bounds = array<i64: 24, 72>}, {pipeline_mode = #tpu.pipeline_mode<synchronous>, transform_indices = @transform_6, window_bounds = array<i64: 1, 72>}, {transform_indices = @transform_7, window_bounds = array<i64: 1, 2, 2, 72>}, {transform_indices = @transform_8, window_bounds = array<i64: 1, 1, 72>}]} {
    %c2_i32 = arith.constant 2 : i32
    %0 = arith.muli %arg1, %c2_i32 : i32
    %c0 = arith.constant 0 : index
    %c0_0 = arith.constant 0 : index
    %1 = vector.load %arg3[%c0, %c0_0] : memref<25x72xf32, #tpu.memory_space<vmem>>, vector<25x72xf32>
    %cst = arith.constant 0.000000e+00 : f32
    %2 = vector.broadcast %cst : f32 to vector<2x2x72xf32>
    %c0_i32 = arith.constant 0 : i32
    %3 = arith.addi %c0_i32, %0 : i32
    %c0_1 = arith.constant 0 : index
    %4 = arith.index_cast %3 : i32 to index
    %c0_2 = arith.constant 0 : index
    %c0_3 = arith.constant 0 : index
    %5 = vector.load %arg2[%c0_1, %4, %c0_2, %c0_3] : memref<1x6x6x72xbf16, #tpu.memory_space<vmem>>, vector<1x2x2x72xbf16>
    %6 = vector.shape_cast %5 : vector<1x2x2x72xbf16> to vector<2x2x72xbf16>
    %7 = arith.extf %6 : vector<2x2x72xbf16> to vector<2x2x72xf32>
    %8 = vector.extract_strided_slice %1 {offsets = [0, 0], sizes = [1, 72], strides = [1, 1]} : vector<25x72xf32> to vector<1x72xf32>
    %9 = vector.shape_cast %8 : vector<1x72xf32> to vector<72xf32>
    %10 = vector.shape_cast %9 : vector<72xf32> to vector<1x1x72xf32>
    %11 = vector.broadcast %10 : vector<1x1x72xf32> to vector<2x2x72xf32>
    %12 = arith.mulf %7, %11 : vector<2x2x72xf32>
    %13 = arith.addf %2, %12 : vector<2x2x72xf32>
    %c0_i32_4 = arith.constant 0 : i32
    %14 = arith.addi %c0_i32_4, %0 : i32
    %c0_5 = arith.constant 0 : index
    %15 = arith.index_cast %14 : i32 to index
    %c1 = arith.constant 1 : index
    %c0_6 = arith.constant 0 : index
    %16 = vector.load %arg2[%c0_5, %15, %c1, %c0_6] : memref<1x6x6x72xbf16, #tpu.memory_space<vmem>>, vector<1x2x2x72xbf16>
    %17 = vector.shape_cast %16 : vector<1x2x2x72xbf16> to vector<2x2x72xbf16>
    %18 = arith.extf %17 : vector<2x2x72xbf16> to vector<2x2x72xf32>
    %19 = vector.extract_strided_slice %1 {offsets = [1, 0], sizes = [1, 72], strides = [1, 1]} : vector<25x72xf32> to vector<1x72xf32>
    %20 = vector.shape_cast %19 : vector<1x72xf32> to vector<72xf32>
    %21 = vector.shape_cast %20 : vector<72xf32> to vector<1x1x72xf32>
    %22 = vector.broadcast %21 : vector<1x1x72xf32> to vector<2x2x72xf32>
    %23 = arith.mulf %18, %22 : vector<2x2x72xf32>
    %24 = arith.addf %13, %23 : vector<2x2x72xf32>
    %c0_i32_7 = arith.constant 0 : i32
    %25 = arith.addi %c0_i32_7, %0 : i32
    %c0_8 = arith.constant 0 : index
    %26 = arith.index_cast %25 : i32 to index
    %c2 = arith.constant 2 : index
    %c0_9 = arith.constant 0 : index
    %27 = vector.load %arg2[%c0_8, %26, %c2, %c0_9] : memref<1x6x6x72xbf16, #tpu.memory_space<vmem>>, vector<1x2x2x72xbf16>
    %28 = vector.shape_cast %27 : vector<1x2x2x72xbf16> to vector<2x2x72xbf16>
    %29 = arith.extf %28 : vector<2x2x72xbf16> to vector<2x2x72xf32>
    %30 = vector.extract_strided_slice %1 {offsets = [2, 0], sizes = [1, 72], strides = [1, 1]} : vector<25x72xf32> to vector<1x72xf32>
    %31 = vector.shape_cast %30 : vector<1x72xf32> to vector<72xf32>
    %32 = vector.shape_cast %31 : vector<72xf32> to vector<1x1x72xf32>
    %33 = vector.broadcast %32 : vector<1x1x72xf32> to vector<2x2x72xf32>
    %34 = arith.mulf %29, %33 : vector<2x2x72xf32>
    %35 = arith.addf %24, %34 : vector<2x2x72xf32>
    %c0_i32_10 = arith.constant 0 : i32
    %36 = arith.addi %c0_i32_10, %0 : i32
    %c0_11 = arith.constant 0 : index
    %37 = arith.index_cast %36 : i32 to index
    %c3 = arith.constant 3 : index
    %c0_12 = arith.constant 0 : index
    %38 = vector.load %arg2[%c0_11, %37, %c3, %c0_12] : memref<1x6x6x72xbf16, #tpu.memory_space<vmem>>, vector<1x2x2x72xbf16>
    %39 = vector.shape_cast %38 : vector<1x2x2x72xbf16> to vector<2x2x72xbf16>
    %40 = arith.extf %39 : vector<2x2x72xbf16> to vector<2x2x72xf32>
    %41 = vector.extract_strided_slice %1 {offsets = [3, 0], sizes = [1, 72], strides = [1, 1]} : vector<25x72xf32> to vector<1x72xf32>
    %42 = vector.shape_cast %41 : vector<1x72xf32> to vector<72xf32>
    %43 = vector.shape_cast %42 : vector<72xf32> to vector<1x1x72xf32>
    %44 = vector.broadcast %43 : vector<1x1x72xf32> to vector<2x2x72xf32>
    %45 = arith.mulf %40, %44 : vector<2x2x72xf32>
    %46 = arith.addf %35, %45 : vector<2x2x72xf32>
    %c0_i32_13 = arith.constant 0 : i32
    %47 = arith.addi %c0_i32_13, %0 : i32
    %c0_14 = arith.constant 0 : index
    %48 = arith.index_cast %47 : i32 to index
    %c4 = arith.constant 4 : index
    %c0_15 = arith.constant 0 : index
    %49 = vector.load %arg2[%c0_14, %48, %c4, %c0_15] : memref<1x6x6x72xbf16, #tpu.memory_space<vmem>>, vector<1x2x2x72xbf16>
    %50 = vector.shape_cast %49 : vector<1x2x2x72xbf16> to vector<2x2x72xbf16>
    %51 = arith.extf %50 : vector<2x2x72xbf16> to vector<2x2x72xf32>
    %52 = vector.extract_strided_slice %1 {offsets = [4, 0], sizes = [1, 72], strides = [1, 1]} : vector<25x72xf32> to vector<1x72xf32>
    %53 = vector.shape_cast %52 : vector<1x72xf32> to vector<72xf32>
    %54 = vector.shape_cast %53 : vector<72xf32> to vector<1x1x72xf32>
    %55 = vector.broadcast %54 : vector<1x1x72xf32> to vector<2x2x72xf32>
    %56 = arith.mulf %51, %55 : vector<2x2x72xf32>
    %57 = arith.addf %46, %56 : vector<2x2x72xf32>
    %c1_i32 = arith.constant 1 : i32
    %58 = arith.addi %c1_i32, %0 : i32
    %c0_16 = arith.constant 0 : index
    %59 = arith.index_cast %58 : i32 to index
    %c0_17 = arith.constant 0 : index
    %c0_18 = arith.constant 0 : index
    %60 = vector.load %arg2[%c0_16, %59, %c0_17, %c0_18] : memref<1x6x6x72xbf16, #tpu.memory_space<vmem>>, vector<1x2x2x72xbf16>
    %61 = vector.shape_cast %60 : vector<1x2x2x72xbf16> to vector<2x2x72xbf16>
    %62 = arith.extf %61 : vector<2x2x72xbf16> to vector<2x2x72xf32>
    %63 = vector.extract_strided_slice %1 {offsets = [5, 0], sizes = [1, 72], strides = [1, 1]} : vector<25x72xf32> to vector<1x72xf32>
    %64 = vector.shape_cast %63 : vector<1x72xf32> to vector<72xf32>
    %65 = vector.shape_cast %64 : vector<72xf32> to vector<1x1x72xf32>
    %66 = vector.broadcast %65 : vector<1x1x72xf32> to vector<2x2x72xf32>
    %67 = arith.mulf %62, %66 : vector<2x2x72xf32>
    %68 = arith.addf %57, %67 : vector<2x2x72xf32>
    %c1_i32_19 = arith.constant 1 : i32
    %69 = arith.addi %c1_i32_19, %0 : i32
    %c0_20 = arith.constant 0 : index
    %70 = arith.index_cast %69 : i32 to index
    %c1_21 = arith.constant 1 : index
    %c0_22 = arith.constant 0 : index
    %71 = vector.load %arg2[%c0_20, %70, %c1_21, %c0_22] : memref<1x6x6x72xbf16, #tpu.memory_space<vmem>>, vector<1x2x2x72xbf16>
    %72 = vector.shape_cast %71 : vector<1x2x2x72xbf16> to vector<2x2x72xbf16>
    %73 = arith.extf %72 : vector<2x2x72xbf16> to vector<2x2x72xf32>
    %74 = vector.extract_strided_slice %1 {offsets = [6, 0], sizes = [1, 72], strides = [1, 1]} : vector<25x72xf32> to vector<1x72xf32>
    %75 = vector.shape_cast %74 : vector<1x72xf32> to vector<72xf32>
    %76 = vector.shape_cast %75 : vector<72xf32> to vector<1x1x72xf32>
    %77 = vector.broadcast %76 : vector<1x1x72xf32> to vector<2x2x72xf32>
    %78 = arith.mulf %73, %77 : vector<2x2x72xf32>
    %79 = arith.addf %68, %78 : vector<2x2x72xf32>
    %c1_i32_23 = arith.constant 1 : i32
    %80 = arith.addi %c1_i32_23, %0 : i32
    %c0_24 = arith.constant 0 : index
    %81 = arith.index_cast %80 : i32 to index
    %c2_25 = arith.constant 2 : index
    %c0_26 = arith.constant 0 : index
    %82 = vector.load %arg2[%c0_24, %81, %c2_25, %c0_26] : memref<1x6x6x72xbf16, #tpu.memory_space<vmem>>, vector<1x2x2x72xbf16>
    %83 = vector.shape_cast %82 : vector<1x2x2x72xbf16> to vector<2x2x72xbf16>
    %84 = arith.extf %83 : vector<2x2x72xbf16> to vector<2x2x72xf32>
    %85 = vector.extract_strided_slice %1 {offsets = [7, 0], sizes = [1, 72], strides = [1, 1]} : vector<25x72xf32> to vector<1x72xf32>
    %86 = vector.shape_cast %85 : vector<1x72xf32> to vector<72xf32>
    %87 = vector.shape_cast %86 : vector<72xf32> to vector<1x1x72xf32>
    %88 = vector.broadcast %87 : vector<1x1x72xf32> to vector<2x2x72xf32>
    %89 = arith.mulf %84, %88 : vector<2x2x72xf32>
    %90 = arith.addf %79, %89 : vector<2x2x72xf32>
    %c1_i32_27 = arith.constant 1 : i32
    %91 = arith.addi %c1_i32_27, %0 : i32
    %c0_28 = arith.constant 0 : index
    %92 = arith.index_cast %91 : i32 to index
    %c3_29 = arith.constant 3 : index
    %c0_30 = arith.constant 0 : index
    %93 = vector.load %arg2[%c0_28, %92, %c3_29, %c0_30] : memref<1x6x6x72xbf16, #tpu.memory_space<vmem>>, vector<1x2x2x72xbf16>
    %94 = vector.shape_cast %93 : vector<1x2x2x72xbf16> to vector<2x2x72xbf16>
    %95 = arith.extf %94 : vector<2x2x72xbf16> to vector<2x2x72xf32>
    %96 = vector.extract_strided_slice %1 {offsets = [8, 0], sizes = [1, 72], strides = [1, 1]} : vector<25x72xf32> to vector<1x72xf32>
    %97 = vector.shape_cast %96 : vector<1x72xf32> to vector<72xf32>
    %98 = vector.shape_cast %97 : vector<72xf32> to vector<1x1x72xf32>
    %99 = vector.broadcast %98 : vector<1x1x72xf32> to vector<2x2x72xf32>
    %100 = arith.mulf %95, %99 : vector<2x2x72xf32>
    %101 = arith.addf %90, %100 : vector<2x2x72xf32>
    %c1_i32_31 = arith.constant 1 : i32
    %102 = arith.addi %c1_i32_31, %0 : i32
    %c0_32 = arith.constant 0 : index
    %103 = arith.index_cast %102 : i32 to index
    %c4_33 = arith.constant 4 : index
    %c0_34 = arith.constant 0 : index
    %104 = vector.load %arg2[%c0_32, %103, %c4_33, %c0_34] : memref<1x6x6x72xbf16, #tpu.memory_space<vmem>>, vector<1x2x2x72xbf16>
    %105 = vector.shape_cast %104 : vector<1x2x2x72xbf16> to vector<2x2x72xbf16>
    %106 = arith.extf %105 : vector<2x2x72xbf16> to vector<2x2x72xf32>
    %107 = vector.extract_strided_slice %1 {offsets = [9, 0], sizes = [1, 72], strides = [1, 1]} : vector<25x72xf32> to vector<1x72xf32>
    %108 = vector.shape_cast %107 : vector<1x72xf32> to vector<72xf32>
    %109 = vector.shape_cast %108 : vector<72xf32> to vector<1x1x72xf32>
    %110 = vector.broadcast %109 : vector<1x1x72xf32> to vector<2x2x72xf32>
    %111 = arith.mulf %106, %110 : vector<2x2x72xf32>
    %112 = arith.addf %101, %111 : vector<2x2x72xf32>
    %c2_i32_35 = arith.constant 2 : i32
    %113 = arith.addi %c2_i32_35, %0 : i32
    %c0_36 = arith.constant 0 : index
    %114 = arith.index_cast %113 : i32 to index
    %c0_37 = arith.constant 0 : index
    %c0_38 = arith.constant 0 : index
    %115 = vector.load %arg2[%c0_36, %114, %c0_37, %c0_38] : memref<1x6x6x72xbf16, #tpu.memory_space<vmem>>, vector<1x2x2x72xbf16>
    %116 = vector.shape_cast %115 : vector<1x2x2x72xbf16> to vector<2x2x72xbf16>
    %117 = arith.extf %116 : vector<2x2x72xbf16> to vector<2x2x72xf32>
    %118 = vector.extract_strided_slice %1 {offsets = [10, 0], sizes = [1, 72], strides = [1, 1]} : vector<25x72xf32> to vector<1x72xf32>
    %119 = vector.shape_cast %118 : vector<1x72xf32> to vector<72xf32>
    %120 = vector.shape_cast %119 : vector<72xf32> to vector<1x1x72xf32>
    %121 = vector.broadcast %120 : vector<1x1x72xf32> to vector<2x2x72xf32>
    %122 = arith.mulf %117, %121 : vector<2x2x72xf32>
    %123 = arith.addf %112, %122 : vector<2x2x72xf32>
    %c2_i32_39 = arith.constant 2 : i32
    %124 = arith.addi %c2_i32_39, %0 : i32
    %c0_40 = arith.constant 0 : index
    %125 = arith.index_cast %124 : i32 to index
    %c1_41 = arith.constant 1 : index
    %c0_42 = arith.constant 0 : index
    %126 = vector.load %arg2[%c0_40, %125, %c1_41, %c0_42] : memref<1x6x6x72xbf16, #tpu.memory_space<vmem>>, vector<1x2x2x72xbf16>
    %127 = vector.shape_cast %126 : vector<1x2x2x72xbf16> to vector<2x2x72xbf16>
    %128 = arith.extf %127 : vector<2x2x72xbf16> to vector<2x2x72xf32>
    %129 = vector.extract_strided_slice %1 {offsets = [11, 0], sizes = [1, 72], strides = [1, 1]} : vector<25x72xf32> to vector<1x72xf32>
    %130 = vector.shape_cast %129 : vector<1x72xf32> to vector<72xf32>
    %131 = vector.shape_cast %130 : vector<72xf32> to vector<1x1x72xf32>
    %132 = vector.broadcast %131 : vector<1x1x72xf32> to vector<2x2x72xf32>
    %133 = arith.mulf %128, %132 : vector<2x2x72xf32>
    %134 = arith.addf %123, %133 : vector<2x2x72xf32>
    %c2_i32_43 = arith.constant 2 : i32
    %135 = arith.addi %c2_i32_43, %0 : i32
    %c0_44 = arith.constant 0 : index
    %136 = arith.index_cast %135 : i32 to index
    %c2_45 = arith.constant 2 : index
    %c0_46 = arith.constant 0 : index
    %137 = vector.load %arg2[%c0_44, %136, %c2_45, %c0_46] : memref<1x6x6x72xbf16, #tpu.memory_space<vmem>>, vector<1x2x2x72xbf16>
    %138 = vector.shape_cast %137 : vector<1x2x2x72xbf16> to vector<2x2x72xbf16>
    %139 = arith.extf %138 : vector<2x2x72xbf16> to vector<2x2x72xf32>
    %140 = vector.extract_strided_slice %1 {offsets = [12, 0], sizes = [1, 72], strides = [1, 1]} : vector<25x72xf32> to vector<1x72xf32>
    %141 = vector.shape_cast %140 : vector<1x72xf32> to vector<72xf32>
    %142 = vector.shape_cast %141 : vector<72xf32> to vector<1x1x72xf32>
    %143 = vector.broadcast %142 : vector<1x1x72xf32> to vector<2x2x72xf32>
    %144 = arith.mulf %139, %143 : vector<2x2x72xf32>
    %145 = arith.addf %134, %144 : vector<2x2x72xf32>
    %c2_i32_47 = arith.constant 2 : i32
    %146 = arith.addi %c2_i32_47, %0 : i32
    %c0_48 = arith.constant 0 : index
    %147 = arith.index_cast %146 : i32 to index
    %c3_49 = arith.constant 3 : index
    %c0_50 = arith.constant 0 : index
    %148 = vector.load %arg2[%c0_48, %147, %c3_49, %c0_50] : memref<1x6x6x72xbf16, #tpu.memory_space<vmem>>, vector<1x2x2x72xbf16>
    %149 = vector.shape_cast %148 : vector<1x2x2x72xbf16> to vector<2x2x72xbf16>
    %150 = arith.extf %149 : vector<2x2x72xbf16> to vector<2x2x72xf32>
    %151 = vector.extract_strided_slice %1 {offsets = [13, 0], sizes = [1, 72], strides = [1, 1]} : vector<25x72xf32> to vector<1x72xf32>
    %152 = vector.shape_cast %151 : vector<1x72xf32> to vector<72xf32>
    %153 = vector.shape_cast %152 : vector<72xf32> to vector<1x1x72xf32>
    %154 = vector.broadcast %153 : vector<1x1x72xf32> to vector<2x2x72xf32>
    %155 = arith.mulf %150, %154 : vector<2x2x72xf32>
    %156 = arith.addf %145, %155 : vector<2x2x72xf32>
    %c2_i32_51 = arith.constant 2 : i32
    %157 = arith.addi %c2_i32_51, %0 : i32
    %c0_52 = arith.constant 0 : index
    %158 = arith.index_cast %157 : i32 to index
    %c4_53 = arith.constant 4 : index
    %c0_54 = arith.constant 0 : index
    %159 = vector.load %arg2[%c0_52, %158, %c4_53, %c0_54] : memref<1x6x6x72xbf16, #tpu.memory_space<vmem>>, vector<1x2x2x72xbf16>
    %160 = vector.shape_cast %159 : vector<1x2x2x72xbf16> to vector<2x2x72xbf16>
    %161 = arith.extf %160 : vector<2x2x72xbf16> to vector<2x2x72xf32>
    %162 = vector.extract_strided_slice %1 {offsets = [14, 0], sizes = [1, 72], strides = [1, 1]} : vector<25x72xf32> to vector<1x72xf32>
    %163 = vector.shape_cast %162 : vector<1x72xf32> to vector<72xf32>
    %164 = vector.shape_cast %163 : vector<72xf32> to vector<1x1x72xf32>
    %165 = vector.broadcast %164 : vector<1x1x72xf32> to vector<2x2x72xf32>
    %166 = arith.mulf %161, %165 : vector<2x2x72xf32>
    %167 = arith.addf %156, %166 : vector<2x2x72xf32>
    %c3_i32 = arith.constant 3 : i32
    %168 = arith.addi %c3_i32, %0 : i32
    %c0_55 = arith.constant 0 : index
    %169 = arith.index_cast %168 : i32 to index
    %c0_56 = arith.constant 0 : index
    %c0_57 = arith.constant 0 : index
    %170 = vector.load %arg2[%c0_55, %169, %c0_56, %c0_57] : memref<1x6x6x72xbf16, #tpu.memory_space<vmem>>, vector<1x2x2x72xbf16>
    %171 = vector.shape_cast %170 : vector<1x2x2x72xbf16> to vector<2x2x72xbf16>
    %172 = arith.extf %171 : vector<2x2x72xbf16> to vector<2x2x72xf32>
    %173 = vector.extract_strided_slice %1 {offsets = [15, 0], sizes = [1, 72], strides = [1, 1]} : vector<25x72xf32> to vector<1x72xf32>
    %174 = vector.shape_cast %173 : vector<1x72xf32> to vector<72xf32>
    %175 = vector.shape_cast %174 : vector<72xf32> to vector<1x1x72xf32>
    %176 = vector.broadcast %175 : vector<1x1x72xf32> to vector<2x2x72xf32>
    %177 = arith.mulf %172, %176 : vector<2x2x72xf32>
    %178 = arith.addf %167, %177 : vector<2x2x72xf32>
    %c3_i32_58 = arith.constant 3 : i32
    %179 = arith.addi %c3_i32_58, %0 : i32
    %c0_59 = arith.constant 0 : index
    %180 = arith.index_cast %179 : i32 to index
    %c1_60 = arith.constant 1 : index
    %c0_61 = arith.constant 0 : index
    %181 = vector.load %arg2[%c0_59, %180, %c1_60, %c0_61] : memref<1x6x6x72xbf16, #tpu.memory_space<vmem>>, vector<1x2x2x72xbf16>
    %182 = vector.shape_cast %181 : vector<1x2x2x72xbf16> to vector<2x2x72xbf16>
    %183 = arith.extf %182 : vector<2x2x72xbf16> to vector<2x2x72xf32>
    %184 = vector.extract_strided_slice %1 {offsets = [16, 0], sizes = [1, 72], strides = [1, 1]} : vector<25x72xf32> to vector<1x72xf32>
    %185 = vector.shape_cast %184 : vector<1x72xf32> to vector<72xf32>
    %186 = vector.shape_cast %185 : vector<72xf32> to vector<1x1x72xf32>
    %187 = vector.broadcast %186 : vector<1x1x72xf32> to vector<2x2x72xf32>
    %188 = arith.mulf %183, %187 : vector<2x2x72xf32>
    %189 = arith.addf %178, %188 : vector<2x2x72xf32>
    %c3_i32_62 = arith.constant 3 : i32
    %190 = arith.addi %c3_i32_62, %0 : i32
    %c0_63 = arith.constant 0 : index
    %191 = arith.index_cast %190 : i32 to index
    %c2_64 = arith.constant 2 : index
    %c0_65 = arith.constant 0 : index
    %192 = vector.load %arg2[%c0_63, %191, %c2_64, %c0_65] : memref<1x6x6x72xbf16, #tpu.memory_space<vmem>>, vector<1x2x2x72xbf16>
    %193 = vector.shape_cast %192 : vector<1x2x2x72xbf16> to vector<2x2x72xbf16>
    %194 = arith.extf %193 : vector<2x2x72xbf16> to vector<2x2x72xf32>
    %195 = vector.extract_strided_slice %1 {offsets = [17, 0], sizes = [1, 72], strides = [1, 1]} : vector<25x72xf32> to vector<1x72xf32>
    %196 = vector.shape_cast %195 : vector<1x72xf32> to vector<72xf32>
    %197 = vector.shape_cast %196 : vector<72xf32> to vector<1x1x72xf32>
    %198 = vector.broadcast %197 : vector<1x1x72xf32> to vector<2x2x72xf32>
    %199 = arith.mulf %194, %198 : vector<2x2x72xf32>
    %200 = arith.addf %189, %199 : vector<2x2x72xf32>
    %c3_i32_66 = arith.constant 3 : i32
    %201 = arith.addi %c3_i32_66, %0 : i32
    %c0_67 = arith.constant 0 : index
    %202 = arith.index_cast %201 : i32 to index
    %c3_68 = arith.constant 3 : index
    %c0_69 = arith.constant 0 : index
    %203 = vector.load %arg2[%c0_67, %202, %c3_68, %c0_69] : memref<1x6x6x72xbf16, #tpu.memory_space<vmem>>, vector<1x2x2x72xbf16>
    %204 = vector.shape_cast %203 : vector<1x2x2x72xbf16> to vector<2x2x72xbf16>
    %205 = arith.extf %204 : vector<2x2x72xbf16> to vector<2x2x72xf32>
    %206 = vector.extract_strided_slice %1 {offsets = [18, 0], sizes = [1, 72], strides = [1, 1]} : vector<25x72xf32> to vector<1x72xf32>
    %207 = vector.shape_cast %206 : vector<1x72xf32> to vector<72xf32>
    %208 = vector.shape_cast %207 : vector<72xf32> to vector<1x1x72xf32>
    %209 = vector.broadcast %208 : vector<1x1x72xf32> to vector<2x2x72xf32>
    %210 = arith.mulf %205, %209 : vector<2x2x72xf32>
    %211 = arith.addf %200, %210 : vector<2x2x72xf32>
    %c3_i32_70 = arith.constant 3 : i32
    %212 = arith.addi %c3_i32_70, %0 : i32
    %c0_71 = arith.constant 0 : index
    %213 = arith.index_cast %212 : i32 to index
    %c4_72 = arith.constant 4 : index
    %c0_73 = arith.constant 0 : index
    %214 = vector.load %arg2[%c0_71, %213, %c4_72, %c0_73] : memref<1x6x6x72xbf16, #tpu.memory_space<vmem>>, vector<1x2x2x72xbf16>
    %215 = vector.shape_cast %214 : vector<1x2x2x72xbf16> to vector<2x2x72xbf16>
    %216 = arith.extf %215 : vector<2x2x72xbf16> to vector<2x2x72xf32>
    %217 = vector.extract_strided_slice %1 {offsets = [19, 0], sizes = [1, 72], strides = [1, 1]} : vector<25x72xf32> to vector<1x72xf32>
    %218 = vector.shape_cast %217 : vector<1x72xf32> to vector<72xf32>
    %219 = vector.shape_cast %218 : vector<72xf32> to vector<1x1x72xf32>
    %220 = vector.broadcast %219 : vector<1x1x72xf32> to vector<2x2x72xf32>
    %221 = arith.mulf %216, %220 : vector<2x2x72xf32>
    %222 = arith.addf %211, %221 : vector<2x2x72xf32>
    %c4_i32 = arith.constant 4 : i32
    %223 = arith.addi %c4_i32, %0 : i32
    %c0_74 = arith.constant 0 : index
    %224 = arith.index_cast %223 : i32 to index
    %c0_75 = arith.constant 0 : index
    %c0_76 = arith.constant 0 : index
    %225 = vector.load %arg2[%c0_74, %224, %c0_75, %c0_76] : memref<1x6x6x72xbf16, #tpu.memory_space<vmem>>, vector<1x2x2x72xbf16>
    %226 = vector.shape_cast %225 : vector<1x2x2x72xbf16> to vector<2x2x72xbf16>
    %227 = arith.extf %226 : vector<2x2x72xbf16> to vector<2x2x72xf32>
    %228 = vector.extract_strided_slice %1 {offsets = [20, 0], sizes = [1, 72], strides = [1, 1]} : vector<25x72xf32> to vector<1x72xf32>
    %229 = vector.shape_cast %228 : vector<1x72xf32> to vector<72xf32>
    %230 = vector.shape_cast %229 : vector<72xf32> to vector<1x1x72xf32>
    %231 = vector.broadcast %230 : vector<1x1x72xf32> to vector<2x2x72xf32>
    %232 = arith.mulf %227, %231 : vector<2x2x72xf32>
    %233 = arith.addf %222, %232 : vector<2x2x72xf32>
    %c4_i32_77 = arith.constant 4 : i32
    %234 = arith.addi %c4_i32_77, %0 : i32
    %c0_78 = arith.constant 0 : index
    %235 = arith.index_cast %234 : i32 to index
    %c1_79 = arith.constant 1 : index
    %c0_80 = arith.constant 0 : index
    %236 = vector.load %arg2[%c0_78, %235, %c1_79, %c0_80] : memref<1x6x6x72xbf16, #tpu.memory_space<vmem>>, vector<1x2x2x72xbf16>
    %237 = vector.shape_cast %236 : vector<1x2x2x72xbf16> to vector<2x2x72xbf16>
    %238 = arith.extf %237 : vector<2x2x72xbf16> to vector<2x2x72xf32>
    %239 = vector.extract_strided_slice %1 {offsets = [21, 0], sizes = [1, 72], strides = [1, 1]} : vector<25x72xf32> to vector<1x72xf32>
    %240 = vector.shape_cast %239 : vector<1x72xf32> to vector<72xf32>
    %241 = vector.shape_cast %240 : vector<72xf32> to vector<1x1x72xf32>
    %242 = vector.broadcast %241 : vector<1x1x72xf32> to vector<2x2x72xf32>
    %243 = arith.mulf %238, %242 : vector<2x2x72xf32>
    %244 = arith.addf %233, %243 : vector<2x2x72xf32>
    %c4_i32_81 = arith.constant 4 : i32
    %245 = arith.addi %c4_i32_81, %0 : i32
    %c0_82 = arith.constant 0 : index
    %246 = arith.index_cast %245 : i32 to index
    %c2_83 = arith.constant 2 : index
    %c0_84 = arith.constant 0 : index
    %247 = vector.load %arg2[%c0_82, %246, %c2_83, %c0_84] : memref<1x6x6x72xbf16, #tpu.memory_space<vmem>>, vector<1x2x2x72xbf16>
    %248 = vector.shape_cast %247 : vector<1x2x2x72xbf16> to vector<2x2x72xbf16>
    %249 = arith.extf %248 : vector<2x2x72xbf16> to vector<2x2x72xf32>
    %250 = vector.extract_strided_slice %1 {offsets = [22, 0], sizes = [1, 72], strides = [1, 1]} : vector<25x72xf32> to vector<1x72xf32>
    %251 = vector.shape_cast %250 : vector<1x72xf32> to vector<72xf32>
    %252 = vector.shape_cast %251 : vector<72xf32> to vector<1x1x72xf32>
    %253 = vector.broadcast %252 : vector<1x1x72xf32> to vector<2x2x72xf32>
    %254 = arith.mulf %249, %253 : vector<2x2x72xf32>
    %255 = arith.addf %244, %254 : vector<2x2x72xf32>
    %c4_i32_85 = arith.constant 4 : i32
    %256 = arith.addi %c4_i32_85, %0 : i32
    %c0_86 = arith.constant 0 : index
    %257 = arith.index_cast %256 : i32 to index
    %c3_87 = arith.constant 3 : index
    %c0_88 = arith.constant 0 : index
    %258 = vector.load %arg2[%c0_86, %257, %c3_87, %c0_88] : memref<1x6x6x72xbf16, #tpu.memory_space<vmem>>, vector<1x2x2x72xbf16>
    %259 = vector.shape_cast %258 : vector<1x2x2x72xbf16> to vector<2x2x72xbf16>
    %260 = arith.extf %259 : vector<2x2x72xbf16> to vector<2x2x72xf32>
    %261 = vector.extract_strided_slice %1 {offsets = [23, 0], sizes = [1, 72], strides = [1, 1]} : vector<25x72xf32> to vector<1x72xf32>
    %262 = vector.shape_cast %261 : vector<1x72xf32> to vector<72xf32>
    %263 = vector.shape_cast %262 : vector<72xf32> to vector<1x1x72xf32>
    %264 = vector.broadcast %263 : vector<1x1x72xf32> to vector<2x2x72xf32>
    %265 = arith.mulf %260, %264 : vector<2x2x72xf32>
    %266 = arith.addf %255, %265 : vector<2x2x72xf32>
    %c4_i32_89 = arith.constant 4 : i32
    %267 = arith.addi %c4_i32_89, %0 : i32
    %c0_90 = arith.constant 0 : index
    %268 = arith.index_cast %267 : i32 to index
    %c4_91 = arith.constant 4 : index
    %c0_92 = arith.constant 0 : index
    %269 = vector.load %arg2[%c0_90, %268, %c4_91, %c0_92] : memref<1x6x6x72xbf16, #tpu.memory_space<vmem>>, vector<1x2x2x72xbf16>
    %270 = vector.shape_cast %269 : vector<1x2x2x72xbf16> to vector<2x2x72xbf16>
    %271 = arith.extf %270 : vector<2x2x72xbf16> to vector<2x2x72xf32>
    %272 = vector.extract_strided_slice %1 {offsets = [24, 0], sizes = [1, 72], strides = [1, 1]} : vector<25x72xf32> to vector<1x72xf32>
    %273 = vector.shape_cast %272 : vector<1x72xf32> to vector<72xf32>
    %274 = vector.shape_cast %273 : vector<72xf32> to vector<1x1x72xf32>
    %275 = vector.broadcast %274 : vector<1x1x72xf32> to vector<2x2x72xf32>
    %276 = arith.mulf %271, %275 : vector<2x2x72xf32>
    %277 = arith.addf %266, %276 : vector<2x2x72xf32>
    %c0_93 = arith.constant 0 : index
    %c0_94 = arith.constant 0 : index
    %278 = vector.load %arg4[%c0_93, %c0_94] : memref<1x72xf32, #tpu.memory_space<vmem>>, vector<1x72xf32>
    %279 = vector.shape_cast %278 : vector<1x72xf32> to vector<1x1x72xf32>
    %280 = vector.broadcast %279 : vector<1x1x72xf32> to vector<2x2x72xf32>
    %281 = arith.addf %277, %280 : vector<2x2x72xf32>
    %282 = arith.truncf %281 : vector<2x2x72xf32> to vector<2x2x72xbf16>
    %c0_95 = arith.constant 0 : index
    %c0_96 = arith.constant 0 : index
    %c0_97 = arith.constant 0 : index
    %c0_98 = arith.constant 0 : index
    %283 = vector.load %arg9[%c0_95, %c0_96, %c0_97, %c0_98] : memref<1x2x2x72xbf16, #tpu.memory_space<vmem>>, vector<1x2x2x72xbf16>
    %284 = vector.shape_cast %283 : vector<1x2x2x72xbf16> to vector<2x2x72xbf16>
    %285 = vector.shape_cast %282 : vector<2x2x72xbf16> to vector<1x2x2x72xbf16>
    tpu.vector_store %arg9[%c0_95, %c0_96, %c0_97, %c0_98], %285 {strides = array<i32>} : memref<1x2x2x72xbf16, #tpu.memory_space<vmem>>, vector<1x2x2x72xbf16>,
    %c0_i32_99 = arith.constant 0 : i32
    %286 = arith.cmpi eq, %arg1, %c0_i32_99 : i32
    %287 = arith.extui %286 : i1 to i32
    %c0_i32_100 = arith.constant 0 : i32
    %288 = arith.cmpi ne, %287, %c0_i32_100 : i32
    scf.if %288 {
      %cst_110 = arith.constant 0.000000e+00 : f32
      %297 = vector.broadcast %cst_110 : f32 to vector<1x1x72xf32>
      %c0_111 = arith.constant 0 : index
      %c0_112 = arith.constant 0 : index
      %c0_113 = arith.constant 0 : index
      %298 = vector.load %arg10[%c0_111, %c0_112, %c0_113] : memref<1x1x72xf32, #tpu.memory_space<vmem>>, vector<1x1x72xf32>
      tpu.vector_store %arg10[%c0_111, %c0_112, %c0_113], %297 {strides = array<i32>} : memref<1x1x72xf32, #tpu.memory_space<vmem>>, vector<1x1x72xf32>,
    } else {
    }
    %c0_101 = arith.constant 0 : index
    %c0_102 = arith.constant 0 : index
    %c0_103 = arith.constant 0 : index
    %289 = vector.load %arg10[%c0_101, %c0_102, %c0_103] : memref<1x1x72xf32, #tpu.memory_space<vmem>>, vector<1x1x72xf32>
    %cst_104 = arith.constant dense<0.000000e+00> : vector<72xf32>
    %290 = vector.multi_reduction <add>, %281, %cst_104 [0, 1] : vector<2x2x72xf32> to vector<72xf32>
    %291 = vector.shape_cast %290 : vector<72xf32> to vector<1x1x72xf32>
    %292 = arith.addf %289, %291 : vector<1x1x72xf32>
    %c0_105 = arith.constant 0 : index
    %c0_106 = arith.constant 0 : index
    %c0_107 = arith.constant 0 : index
    %293 = vector.load %arg10[%c0_105, %c0_106, %c0_107] : memref<1x1x72xf32, #tpu.memory_space<vmem>>, vector<1x1x72xf32>
    tpu.vector_store %arg10[%c0_105, %c0_106, %c0_107], %292 {strides = array<i32>} : memref<1x1x72xf32, #tpu.memory_space<vmem>>, vector<1x1x72xf32>,
    %c0_i32_108 = arith.constant 0 : i32
    %294 = arith.cmpi eq, %arg1, %c0_i32_108 : i32
    %295 = arith.extui %294 : i1 to i32
    %c0_i32_109 = arith.constant 0 : i32
    %296 = arith.cmpi ne, %295, %c0_i32_109 : i32
    scf.if %296 {
      %c0_110 = arith.constant 0 : index
      %c0_111 = arith.constant 0 : index
      %c0_112 = arith.constant 0 : index
      %297 = vector.load %arg10[%c0_110, %c0_111, %c0_112] : memref<1x1x72xf32, #tpu.memory_space<vmem>>, vector<1x1x72xf32>
      %298 = vector.shape_cast %297 : vector<1x1x72xf32> to vector<1x72xf32>
      %cst_113 = arith.constant 2.500000e-01 : f32
      %299 = vector.broadcast %cst_113 : f32 to vector<1x72xf32>
      %300 = arith.mulf %298, %299 : vector<1x72xf32>
      %c0_114 = arith.constant 0 : index
      %c0_115 = arith.constant 0 : index
      %301 = vector.load %arg5[%c0_114, %c0_115] : memref<72x24xf32, #tpu.memory_space<vmem>>, vector<72x24xf32>
      %cst_116 = arith.constant dense<0.000000e+00> : vector<1x24xf32>
      %302 = tpu.matmul %300, %301, %cst_116 {dimension_numbers = #tpu.dot_dimension_numbers<[1], [0], [0], [1], [0, 0, 1, 1], [], []>} : vector<1x72xf32>, vector<72x24xf32>, vector<1x24xf32> -> vector<1x24xf32>
      %c0_117 = arith.constant 0 : index
      %c0_118 = arith.constant 0 : index
      %303 = vector.load %arg6[%c0_117, %c0_118] : memref<1x24xf32, #tpu.memory_space<vmem>>, vector<1x24xf32>
      %304 = arith.addf %302, %303 : vector<1x24xf32>
      %cst_119 = arith.constant 0.000000e+00 : f32
      %305 = vector.broadcast %cst_119 : f32 to vector<1x24xf32>
      %306 = arith.maximumf %304, %305 : vector<1x24xf32>
      %c0_120 = arith.constant 0 : index
      %c0_121 = arith.constant 0 : index
      %307 = vector.load %arg7[%c0_120, %c0_121] : memref<24x72xf32, #tpu.memory_space<vmem>>, vector<24x72xf32>
      %cst_122 = arith.constant dense<0.000000e+00> : vector<1x72xf32>
      %308 = tpu.matmul %306, %307, %cst_122 {dimension_numbers = #tpu.dot_dimension_numbers<[1], [0], [0], [1], [0, 0, 1, 1], [], []>} : vector<1x24xf32>, vector<24x72xf32>, vector<1x72xf32> -> vector<1x72xf32>
      %c0_123 = arith.constant 0 : index
      %c0_124 = arith.constant 0 : index
      %309 = vector.load %arg8[%c0_123, %c0_124] : memref<1x72xf32, #tpu.memory_space<vmem>>, vector<1x72xf32>
      %310 = arith.addf %308, %309 : vector<1x72xf32>
      %cst_125 = arith.constant 3.000000e+00 : f32
      %311 = vector.broadcast %cst_125 : f32 to vector<1x72xf32>
      %312 = arith.addf %310, %311 : vector<1x72xf32>
      %cst_126 = arith.constant 0.000000e+00 : f32
      %cst_127 = arith.constant 6.000000e+00 : f32
      %313 = vector.broadcast %cst_126 : f32 to vector<1x72xf32>
      %314 = arith.maximumf %313, %312 : vector<1x72xf32>
      %315 = vector.broadcast %cst_127 : f32 to vector<1x72xf32>
      %316 = arith.minimumf %315, %314 : vector<1x72xf32>
      %cst_128 = arith.constant 6.000000e+00 : f32
      %317 = vector.broadcast %cst_128 : f32 to vector<1x72xf32>
      %318 = arith.divf %316, %317 : vector<1x72xf32>
      %319 = vector.shape_cast %318 : vector<1x72xf32> to vector<1x1x72xf32>
      %c0_129 = arith.constant 0 : index
      %c0_130 = arith.constant 0 : index
      %c0_131 = arith.constant 0 : index
      %320 = vector.load %arg10[%c0_129, %c0_130, %c0_131] : memref<1x1x72xf32, #tpu.memory_space<vmem>>, vector<1x1x72xf32>
      tpu.vector_store %arg10[%c0_129, %c0_130, %c0_131], %319 {strides = array<i32>} : memref<1x1x72xf32, #tpu.memory_space<vmem>>, vector<1x1x72xf32>,
    } else {
    }
    return
  }
  func.func @transform_0(%arg0: i32, %arg1: i32) -> (i32, i32, i32, i32) {
    %c0_i32 = arith.constant 0 : i32
    %c0_i32_0 = arith.constant 0 : i32
    %c0_i32_1 = arith.constant 0 : i32
    %c0_i32_2 = arith.constant 0 : i32
    return %arg0, %c0_i32, %c0_i32_0, %c0_i32_1 : i32, i32, i32, i32
  }
  func.func @transform_1(%arg0: i32, %arg1: i32) -> (i32, i32) {
    %c0_i32 = arith.constant 0 : i32
    %c0_i32_0 = arith.constant 0 : i32
    %c0_i32_1 = arith.constant 0 : i32
    return %c0_i32, %c0_i32_0 : i32, i32
  }
  func.func @transform_2(%arg0: i32, %arg1: i32) -> (i32, i32) {
    %c0_i32 = arith.constant 0 : i32
    %c0_i32_0 = arith.constant 0 : i32
    %c0_i32_1 = arith.constant 0 : i32
    return %c0_i32, %c0_i32_0 : i32, i32
  }
  func.func @transform_3(%arg0: i32, %arg1: i32) -> (i32, i32) {
    %c0_i32 = arith.constant 0 : i32
    %c0_i32_0 = arith.constant 0 : i32
    %c0_i32_1 = arith.constant 0 : i32
    return %c0_i32, %c0_i32_0 : i32, i32
  }
  func.func @transform_4(%arg0: i32, %arg1: i32) -> (i32, i32) {
    %c0_i32 = arith.constant 0 : i32
    %c0_i32_0 = arith.constant 0 : i32
    %c0_i32_1 = arith.constant 0 : i32
    return %c0_i32, %c0_i32_0 : i32, i32
  }
  func.func @transform_5(%arg0: i32, %arg1: i32) -> (i32, i32) {
    %c0_i32 = arith.constant 0 : i32
    %c0_i32_0 = arith.constant 0 : i32
    %c0_i32_1 = arith.constant 0 : i32
    return %c0_i32, %c0_i32_0 : i32, i32
  }
  func.func @transform_6(%arg0: i32, %arg1: i32) -> (i32, i32) {
    %c0_i32 = arith.constant 0 : i32
    %c0_i32_0 = arith.constant 0 : i32
    %c0_i32_1 = arith.constant 0 : i32
    return %c0_i32, %c0_i32_0 : i32, i32
  }
  func.func @transform_7(%arg0: i32, %arg1: i32) -> (i32, i32, i32, i32) {
    %c0_i32 = arith.constant 0 : i32
    %c0_i32_0 = arith.constant 0 : i32
    %c0_i32_1 = arith.constant 0 : i32
    return %arg0, %arg1, %c0_i32, %c0_i32_0 : i32, i32, i32, i32
  }
  func.func @transform_8(%arg0: i32, %arg1: i32) -> (i32, i32, i32) {
    %c0_i32 = arith.constant 0 : i32
    %c0_i32_0 = arith.constant 0 : i32
    %c0_i32_1 = arith.constant 0 : i32
    return %arg0, %c0_i32, %c0_i32_0 : i32, i32, i32
  }
}

module attributes {stable_mosaic.version = 11 : i64} {
  func.func @_pw_kernel(%arg0: i32, %arg1: i32, %arg2: memref<1x4x24xbf16, #tpu.memory_space<vmem>>, %arg3: memref<24x72xbf16, #tpu.memory_space<vmem>>, %arg4: memref<1x72xf32, #tpu.memory_space<vmem>>, %arg5: memref<1x4x72xf32, #tpu.memory_space<vmem>>) attributes {dimension_semantics = [#tpu.dimension_semantics<parallel>, #tpu.dimension_semantics<parallel>], iteration_bounds = array<i64: 2, 1>, scalar_prefetch = 0 : i64, scratch_operands = 0 : i64, tpu.core_type = #tpu.core_type<tc>, window_params = [{transform_indices = @transform_0, window_bounds = array<i64: 1, 4, 24>}, {pipeline_mode = #tpu.pipeline_mode<synchronous>, transform_indices = @transform_1, window_bounds = array<i64: 24, 72>}, {pipeline_mode = #tpu.pipeline_mode<synchronous>, transform_indices = @transform_2, window_bounds = array<i64: 1, 72>}, {transform_indices = @transform_3, window_bounds = array<i64: 1, 4, 72>}]} {
    %c0 = arith.constant 0 : index
    %c0_0 = arith.constant 0 : index
    %c0_1 = arith.constant 0 : index
    %0 = vector.load %arg2[%c0, %c0_0, %c0_1] : memref<1x4x24xbf16, #tpu.memory_space<vmem>>, vector<1x4x24xbf16>
    %1 = vector.shape_cast %0 : vector<1x4x24xbf16> to vector<4x24xbf16>
    %c0_2 = arith.constant 0 : index
    %c0_3 = arith.constant 0 : index
    %2 = vector.load %arg3[%c0_2, %c0_3] : memref<24x72xbf16, #tpu.memory_space<vmem>>, vector<24x72xbf16>
    %cst = arith.constant dense<0.000000e+00> : vector<4x72xf32>
    %3 = tpu.matmul %1, %2, %cst {dimension_numbers = #tpu.dot_dimension_numbers<[1], [0], [0], [1], [0, 0, 1, 1], [], []>} : vector<4x24xbf16>, vector<24x72xbf16>, vector<4x72xf32> -> vector<4x72xf32>
    %c0_4 = arith.constant 0 : index
    %c0_5 = arith.constant 0 : index
    %4 = vector.load %arg4[%c0_4, %c0_5] : memref<1x72xf32, #tpu.memory_space<vmem>>, vector<1x72xf32>
    %5 = vector.broadcast %4 : vector<1x72xf32> to vector<4x72xf32>
    %6 = arith.addf %3, %5 : vector<4x72xf32>
    %cst_6 = arith.constant 3.000000e+00 : f32
    %7 = vector.broadcast %cst_6 : f32 to vector<4x72xf32>
    %8 = arith.addf %6, %7 : vector<4x72xf32>
    %cst_7 = arith.constant 0.000000e+00 : f32
    %cst_8 = arith.constant 6.000000e+00 : f32
    %9 = vector.broadcast %cst_7 : f32 to vector<4x72xf32>
    %10 = arith.maximumf %9, %8 : vector<4x72xf32>
    %11 = vector.broadcast %cst_8 : f32 to vector<4x72xf32>
    %12 = arith.minimumf %11, %10 : vector<4x72xf32>
    %cst_9 = arith.constant 6.000000e+00 : f32
    %13 = vector.broadcast %cst_9 : f32 to vector<4x72xf32>
    %14 = arith.divf %12, %13 : vector<4x72xf32>
    %15 = arith.mulf %6, %14 : vector<4x72xf32>
    %c0_10 = arith.constant 0 : index
    %c0_11 = arith.constant 0 : index
    %c0_12 = arith.constant 0 : index
    %16 = vector.load %arg5[%c0_10, %c0_11, %c0_12] : memref<1x4x72xf32, #tpu.memory_space<vmem>>, vector<1x4x72xf32>
    %17 = vector.shape_cast %16 : vector<1x4x72xf32> to vector<4x72xf32>
    %18 = vector.shape_cast %15 : vector<4x72xf32> to vector<1x4x72xf32>
    tpu.vector_store %arg5[%c0_10, %c0_11, %c0_12], %18 {strides = array<i32>} : memref<1x4x72xf32, #tpu.memory_space<vmem>>, vector<1x4x72xf32>,
    return
  }
  func.func @transform_0(%arg0: i32, %arg1: i32) -> (i32, i32, i32) {
    %c0_i32 = arith.constant 0 : i32
    %c0_i32_0 = arith.constant 0 : i32
    return %arg0, %arg1, %c0_i32 : i32, i32, i32
  }
  func.func @transform_1(%arg0: i32, %arg1: i32) -> (i32, i32) {
    %c0_i32 = arith.constant 0 : i32
    %c0_i32_0 = arith.constant 0 : i32
    %c0_i32_1 = arith.constant 0 : i32
    return %c0_i32, %c0_i32_0 : i32, i32
  }
  func.func @transform_2(%arg0: i32, %arg1: i32) -> (i32, i32) {
    %c0_i32 = arith.constant 0 : i32
    %c0_i32_0 = arith.constant 0 : i32
    %c0_i32_1 = arith.constant 0 : i32
    return %c0_i32, %c0_i32_0 : i32, i32
  }
  func.func @transform_3(%arg0: i32, %arg1: i32) -> (i32, i32, i32) {
    %c0_i32 = arith.constant 0 : i32
    %c0_i32_0 = arith.constant 0 : i32
    return %arg0, %arg1, %c0_i32 : i32, i32, i32
  }
}

module attributes {stable_mosaic.version = 11 : i64} {
  func.func @_pw_kernel(%arg0: i32, %arg1: i32, %arg2: memref<1x4x72xbf16, #tpu.memory_space<vmem>>, %arg3: memref<1x1x72xf32, #tpu.memory_space<vmem>>, %arg4: memref<72x24xbf16, #tpu.memory_space<vmem>>, %arg5: memref<1x24xf32, #tpu.memory_space<vmem>>, %arg6: memref<1x4x24xbf16, #tpu.memory_space<vmem>>, %arg7: memref<1x4x24xbf16, #tpu.memory_space<vmem>>) attributes {dimension_semantics = [#tpu.dimension_semantics<parallel>, #tpu.dimension_semantics<parallel>], iteration_bounds = array<i64: 2, 1>, scalar_prefetch = 0 : i64, scratch_operands = 0 : i64, tpu.core_type = #tpu.core_type<tc>, window_params = [{transform_indices = @transform_0, window_bounds = array<i64: 1, 4, 72>}, {transform_indices = @transform_1, window_bounds = array<i64: 1, 1, 72>}, {pipeline_mode = #tpu.pipeline_mode<synchronous>, transform_indices = @transform_2, window_bounds = array<i64: 72, 24>}, {pipeline_mode = #tpu.pipeline_mode<synchronous>, transform_indices = @transform_3, window_bounds = array<i64: 1, 24>}, {transform_indices = @transform_4, window_bounds = array<i64: 1, 4, 24>}, {transform_indices = @transform_5, window_bounds = array<i64: 1, 4, 24>}]} {
    %c0 = arith.constant 0 : index
    %c0_0 = arith.constant 0 : index
    %c0_1 = arith.constant 0 : index
    %0 = vector.load %arg2[%c0, %c0_0, %c0_1] : memref<1x4x72xbf16, #tpu.memory_space<vmem>>, vector<1x4x72xbf16>
    %1 = vector.shape_cast %0 : vector<1x4x72xbf16> to vector<4x72xbf16>
    %2 = arith.extf %1 : vector<4x72xbf16> to vector<4x72xf32>
    %c0_2 = arith.constant 0 : index
    %c0_3 = arith.constant 0 : index
    %c0_4 = arith.constant 0 : index
    %3 = vector.load %arg3[%c0_2, %c0_3, %c0_4] : memref<1x1x72xf32, #tpu.memory_space<vmem>>, vector<1x1x72xf32>
    %4 = vector.shape_cast %3 : vector<1x1x72xf32> to vector<1x72xf32>
    %5 = vector.broadcast %4 : vector<1x72xf32> to vector<4x72xf32>
    %6 = arith.mulf %2, %5 : vector<4x72xf32>
    %cst = arith.constant 3.000000e+00 : f32
    %7 = vector.broadcast %cst : f32 to vector<4x72xf32>
    %8 = arith.addf %6, %7 : vector<4x72xf32>
    %cst_5 = arith.constant 0.000000e+00 : f32
    %cst_6 = arith.constant 6.000000e+00 : f32
    %9 = vector.broadcast %cst_5 : f32 to vector<4x72xf32>
    %10 = arith.maximumf %9, %8 : vector<4x72xf32>
    %11 = vector.broadcast %cst_6 : f32 to vector<4x72xf32>
    %12 = arith.minimumf %11, %10 : vector<4x72xf32>
    %cst_7 = arith.constant 6.000000e+00 : f32
    %13 = vector.broadcast %cst_7 : f32 to vector<4x72xf32>
    %14 = arith.divf %12, %13 : vector<4x72xf32>
    %15 = arith.mulf %6, %14 : vector<4x72xf32>
    %16 = arith.truncf %15 : vector<4x72xf32> to vector<4x72xbf16>
    %c0_8 = arith.constant 0 : index
    %c0_9 = arith.constant 0 : index
    %17 = vector.load %arg4[%c0_8, %c0_9] : memref<72x24xbf16, #tpu.memory_space<vmem>>, vector<72x24xbf16>
    %cst_10 = arith.constant dense<0.000000e+00> : vector<4x24xf32>
    %18 = tpu.matmul %16, %17, %cst_10 {dimension_numbers = #tpu.dot_dimension_numbers<[1], [0], [0], [1], [0, 0, 1, 1], [], []>} : vector<4x72xbf16>, vector<72x24xbf16>, vector<4x24xf32> -> vector<4x24xf32>
    %c0_11 = arith.constant 0 : index
    %c0_12 = arith.constant 0 : index
    %19 = vector.load %arg5[%c0_11, %c0_12] : memref<1x24xf32, #tpu.memory_space<vmem>>, vector<1x24xf32>
    %20 = vector.broadcast %19 : vector<1x24xf32> to vector<4x24xf32>
    %21 = arith.addf %18, %20 : vector<4x24xf32>
    %c0_13 = arith.constant 0 : index
    %c0_14 = arith.constant 0 : index
    %c0_15 = arith.constant 0 : index
    %22 = vector.load %arg6[%c0_13, %c0_14, %c0_15] : memref<1x4x24xbf16, #tpu.memory_space<vmem>>, vector<1x4x24xbf16>
    %23 = vector.shape_cast %22 : vector<1x4x24xbf16> to vector<4x24xbf16>
    %24 = arith.extf %23 : vector<4x24xbf16> to vector<4x24xf32>
    %25 = arith.addf %21, %24 : vector<4x24xf32>
    %26 = arith.truncf %25 : vector<4x24xf32> to vector<4x24xbf16>
    %c0_16 = arith.constant 0 : index
    %c0_17 = arith.constant 0 : index
    %c0_18 = arith.constant 0 : index
    %27 = vector.load %arg7[%c0_16, %c0_17, %c0_18] : memref<1x4x24xbf16, #tpu.memory_space<vmem>>, vector<1x4x24xbf16>
    %28 = vector.shape_cast %27 : vector<1x4x24xbf16> to vector<4x24xbf16>
    %29 = vector.shape_cast %26 : vector<4x24xbf16> to vector<1x4x24xbf16>
    tpu.vector_store %arg7[%c0_16, %c0_17, %c0_18], %29 {strides = array<i32>} : memref<1x4x24xbf16, #tpu.memory_space<vmem>>, vector<1x4x24xbf16>,
    return
  }
  func.func @transform_0(%arg0: i32, %arg1: i32) -> (i32, i32, i32) {
    %c0_i32 = arith.constant 0 : i32
    %c0_i32_0 = arith.constant 0 : i32
    return %arg0, %arg1, %c0_i32 : i32, i32, i32
  }
  func.func @transform_1(%arg0: i32, %arg1: i32) -> (i32, i32, i32) {
    %c0_i32 = arith.constant 0 : i32
    %c0_i32_0 = arith.constant 0 : i32
    %c0_i32_1 = arith.constant 0 : i32
    return %arg0, %c0_i32, %c0_i32_0 : i32, i32, i32
  }
  func.func @transform_2(%arg0: i32, %arg1: i32) -> (i32, i32) {
    %c0_i32 = arith.constant 0 : i32
    %c0_i32_0 = arith.constant 0 : i32
    %c0_i32_1 = arith.constant 0 : i32
    return %c0_i32, %c0_i32_0 : i32, i32
  }
  func.func @transform_3(%arg0: i32, %arg1: i32) -> (i32, i32) {
    %c0_i32 = arith.constant 0 : i32
    %c0_i32_0 = arith.constant 0 : i32
    %c0_i32_1 = arith.constant 0 : i32
    return %c0_i32, %c0_i32_0 : i32, i32
  }
  func.func @transform_4(%arg0: i32, %arg1: i32) -> (i32, i32, i32) {
    %c0_i32 = arith.constant 0 : i32
    %c0_i32_0 = arith.constant 0 : i32
    return %arg0, %arg1, %c0_i32 : i32, i32, i32
  }
  func.func @transform_5(%arg0: i32, %arg1: i32) -> (i32, i32, i32) {
    %c0_i32 = arith.constant 0 : i32
    %c0_i32_0 = arith.constant 0 : i32
    return %arg0, %arg1, %c0_i32 : i32, i32, i32
  }
}

</mosaic_0001>

<llo_original>
// kernel: _lambda_.10
$region0: #{_lambda_.10}
  #allocation0 [shape = 'u32[]', space=smem, size = 0x4, offset = 0x4, fixed_abs, tag = 'smem constant byte address 0x4 - core index']
  #allocation1 [shape = 'u32[144,128]{1,0:T(1,128)}', space=vmem, size = 0x12000, scoped, tag = 'internal scratch']
  %s0 = inlined_call_operand.vmem [shape: bf16[2,64,27], index: 0, kind: input, shape index: {}]
  %s1 = inlined_call_operand.vmem [shape: bf16[27,16], index: 1, kind: input, shape index: {}]
  %s2 = inlined_call_operand.vmem [shape: f32[1,16], index: 2, kind: input, shape index: {}]
  %s3 = inlined_call_operand.vmem [shape: bf16[2,64,16], index: 3, kind: output, shape index: {}]
  %s4 = sld [smem:[#allocation0]]
  $region45: #{_lambda_.10} parent=0
    _
  %s6 = ssub.s32 1, %s4
  %s7 = scalar_select 0, %s6, %s4
  loop: start=0, step=1, limit=4
  $region2: #{_lambda_.10} parent=0 // loop_pre_header
    _
  $region3: #{_lambda_.10} parent=0 // loop_header
    %s9 = sphi 0, %s13
    %p10 = scmp.ge.s32.totalorder %s9, 4
    %s16 = sphi 0, %s28
    %s17 = sphi 0, %s24
    %s18 = sphi 0, %s16
    %s19 = sphi 0, %s17
    %s20 = sphi 0, %s18
    %s21 = sphi 0, %s19
    %s33 = sphi 0, %s35
    %s36 = sphi 0, %s33
    %s37 = sphi 0, %s36
    %s53 = sphi 0, %s37
    %s57 = sphi 0, %s57
    %s59 = sphi 0, %s57
    %s60 = sphi 0, %s59
    %s74 = sphi 0, %s60
    %s78 = sphi 0, %s78
    %s80 = sphi 0, %s78
    %s81 = sphi 0, %s80
    %s95 = sphi 0, %s81
    %s103 = sphi 0, %s105
    %s106 = sphi 0, %s103
    %s107 = sphi 0, %s106
    %s123 = sphi 0, %s107
  $region4: #{_lambda_.10} parent=0 // loop_header_branch
    %12 = sbr.rel (%p10) target = $region8
  $region5: #{_lambda_.10} parent=0 // loop_body
    %s14 = ssub.s32 %s9, 1
    %s15 = ssub.s32 %s9, 2
    %s22 = sadd.s32 1, %s17
    %p23 = scmp.ge.s32.totalorder %s22, 1
    %s24 = scalar_select %p23, 0, %s22
    %s25 = sadd.s32 1, %s16
    %s26 = scalar_select %p23, %s25, %s16
    %p27 = scmp.ge.s32.totalorder %s26, 2
    %s28 = scalar_select %p27, 0, %s26
    %s29 = ssub.s32 %s16, %s28
    %s30 = ssub.s32 %s17, %s24
    %s31 = sor.u32 %s29, %s30
    %p32 = scmp.eq.s32.totalorder %s31, 0
    %s34 = sadd.s32 %s33, 1
    %s35 = scalar_select %p32, %s33, %s34
    %p38 = pneg %p32
    %p39 = scmp.eq.s32.totalorder %s9, 1
    %p40 = por %p38, %p39
    %p41 = scmp.ne.s32.totalorder %s33, %s36
    %p42 = scmp.eq.s32.totalorder %s9, 0
    %p43 = por %p41, %p42
    %p44 = scmp.ne.s32.totalorder %s33, %s36
    %p45 = scmp.eq.s32.totalorder %s14, 1
    %p46 = por %p44, %p45
    %p47 = scmp.ne.s32.totalorder %s36, %s37
    %p48 = scmp.eq.s32.totalorder %s14, 0
    %p49 = por %p47, %p48
    %p50 = scmp.ne.s32.totalorder %s36, %s37
    %p51 = scmp.eq.s32.totalorder %s15, 1
    %p52 = por %p50, %p51
    %p54 = scmp.ne.s32.totalorder %s37, %s53
    %p55 = scmp.eq.s32.totalorder %s15, 0
    %p56 = por %p54, %p55
    %s58 = sadd.s32 %s57, 1
    %p61 = scmp.eq.s32.totalorder %s9, 1
    %p62 = scmp.ne.s32.totalorder %s57, %s59
    %p63 = scmp.eq.s32.totalorder %s9, 0
    %p64 = por %p62, %p63
    %p65 = scmp.ne.s32.totalorder %s57, %s59
    %p66 = scmp.eq.s32.totalorder %s14, 1
    %p67 = por %p65, %p66
    %p68 = scmp.ne.s32.totalorder %s59, %s60
    %p69 = scmp.eq.s32.totalorder %s14, 0
    %p70 = por %p68, %p69
    %p71 = scmp.ne.s32.totalorder %s59, %s60
    %p72 = scmp.eq.s32.totalorder %s15, 1
    %p73 = por %p71, %p72
    %p75 = scmp.ne.s32.totalorder %s60, %s74
    %p76 = scmp.eq.s32.totalorder %s15, 0
    %p77 = por %p75, %p76
    %s79 = sadd.s32 %s78, 1
    %p82 = scmp.eq.s32.totalorder %s9, 1
    %p83 = scmp.ne.s32.totalorder %s78, %s80
    %p84 = scmp.eq.s32.totalorder %s9, 0
    %p85 = por %p83, %p84
    %p86 = scmp.ne.s32.totalorder %s78, %s80
    %p87 = scmp.eq.s32.totalorder %s14, 1
    %p88 = por %p86, %p87
    %p89 = scmp.ne.s32.totalorder %s80, %s81
    %p90 = scmp.eq.s32.totalorder %s14, 0
    %p91 = por %p89, %p90
    %p92 = scmp.ne.s32.totalorder %s80, %s81
    %p93 = scmp.eq.s32.totalorder %s15, 1
    %p94 = por %p92, %p93
    %p96 = scmp.ne.s32.totalorder %s81, %s95
    %p97 = scmp.eq.s32.totalorder %s15, 0
    %p98 = por %p96, %p97
    %s99 = ssub.s32 %s16, %s28
    %s100 = ssub.s32 %s17, %s24
    %s101 = sor.u32 %s99, %s100
    %p102 = scmp.eq.s32.totalorder %s101, 0
    %s104 = sadd.s32 %s103, 1
    %s105 = scalar_select %p102, %s103, %s104
    %p108 = pneg %p102
    %p109 = scmp.eq.s32.totalorder %s9, 1
    %p110 = por %p108, %p109
    %p111 = scmp.ne.s32.totalorder %s103, %s106
    %p112 = scmp.eq.s32.totalorder %s9, 0
    %p113 = por %p111, %p112
    %p114 = scmp.ne.s32.totalorder %s103, %s106
    %p115 = scmp.eq.s32.totalorder %s14, 1
    %p116 = por %p114, %p115
    %p117 = scmp.ne.s32.totalorder %s106, %s107
    %p118 = scmp.eq.s32.totalorder %s14, 0
    %p119 = por %p117, %p118
    %p120 = scmp.ne.s32.totalorder %s106, %s107
    %p121 = scmp.eq.s32.totalorder %s15, 1
    %p122 = por %p120, %p121
    %p124 = scmp.ne.s32.totalorder %s107, %s123
    %p125 = scmp.eq.s32.totalorder %s15, 0
    %p126 = por %p124, %p125
    %p127 = scmp.le.s32.totalorder 1, %s9
    %p128 = scmp.lt.s32.totalorder %s9, 3
    %p129 = pnand %p127, %p128
    %p130 = pneg %p129
    // Predicated region
    $region9: #{_lambda_.10} parent=5 // pred_check
      _
    $region10: #{_lambda_.10} parent=5 // pred_check_branch
      %132 = sbr.rel (%p129) target = $region12
    $region11: #{_lambda_.10} parent=5 // pred_region
      %s133 = ssub.s32 %s9, 1
      // Predicated region
      $region13: #{_lambda_.10} parent=11 // pred_check
        %p134 = pneg %p70
      $region14: #{_lambda_.10} parent=11 // pred_check_branch
        %136 = sbr.rel (%p134) target = $region16
      $region15: #{_lambda_.10} parent=11 // pred_region
        _
      $region16: #{_lambda_.10} parent=11 // pred_fallthru
        _
      // Predicated region
      $region17: #{_lambda_.10} parent=11 // pred_check
        %p137 = pneg %p91
      $region18: #{_lambda_.10} parent=11 // pred_check_branch
        %139 = sbr.rel (%p137) target = $region20
      $region19: #{_lambda_.10} parent=11 // pred_region
        _
      $region20: #{_lambda_.10} parent=11 // pred_fallthru
        _
    $region12: #{_lambda_.10} parent=5 // pred_fallthru
      _
    %p140 = scmp.lt.s32.totalorder %s9, 2
    // Predicated region
    $region21: #{_lambda_.10} parent=5 // pred_check
      %p141 = pneg %p140
    $region22: #{_lambda_.10} parent=5 // pred_check_branch
      %143 = sbr.rel (%p141) target = $region24
    $region23: #{_lambda_.10} parent=5 // pred_region
      // Predicated region
      $region25: #{_lambda_.10} parent=23 // pred_check
        %p144 = pneg %p43
      $region26: #{_lambda_.10} parent=23 // pred_check_branch
        %146 = sbr.rel (%p144) target = $region28
      $region27: #{_lambda_.10} parent=23 // pred_region
        %s147 = smul.u32 8, %s17
        %p148 = scmp.lt.s32.totalorder %s16, 1
        %s149 = scalar_select %p148, %s16, 1
        %p150 = scmp.lt.s32.totalorder %s147, 7
        %s151 = scalar_select %p150, %s147, 7
        %s152 = smul.addr %s149, 8
        %s153 = sadd.s32 %s151, %s152
        %s154 = smul.addr %s153, 4
        %s155 = scalar_lea.vmem %s0, %s154
        %s156 = smul.u32 8, %s17
      $region28: #{_lambda_.10} parent=23 // pred_fallthru
        _
    $region24: #{_lambda_.10} parent=5 // pred_fallthru
      _
    %p157 = scmp.le.s32.totalorder 1, %s9
    %p158 = scmp.lt.s32.totalorder %s9, 3
    %p159 = pnand %p157, %p158
    %p160 = pneg %p159
    // Predicated region
    $region29: #{_lambda_.10} parent=5 // pred_check
      _
    $region30: #{_lambda_.10} parent=5 // pred_check_branch
      %162 = sbr.rel (%p159) target = $region32
    $region31: #{_lambda_.10} parent=5 // pred_region
      %s163 = ssub.s32 %s9, 1
      %s164 = smul.u32 8, %s19
      %p165 = scmp.lt.s32.totalorder %s18, 1
      %s166 = scalar_select %p165, %s18, 1
      %p167 = scmp.lt.s32.totalorder %s164, 7
      %s168 = scalar_select %p167, %s164, 7
      %s169 = smul.addr %s166, 8
      %s170 = sadd.s32 %s168, %s169
      %s171 = smul.addr %s170, 4
      %s172 = scalar_lea.vmem %s0, %s171
      %p173 = pneg %p49
      %p174 = pneg %p46
      %p175 = pneg %p70
      %p176 = pneg %p67
      %p177 = pneg %p91
      %p178 = pneg %p88
      %p179 = pneg %p119
      %p180 = pneg %p116
      %s181 = smul.u32 8, %s19
      %p182 = scmp.lt.s32.totalorder %s18, 1
      %s183 = scalar_select %p182, %s18, 1
      %p184 = scmp.lt.s32.totalorder %s181, 7
      %s185 = scalar_select %p184, %s181, 7
      %s186 = smul.addr %s183, 8
      %s187 = sadd.s32 %s185, %s186
      %s188 = smul.addr %s187, 4
      %s189 = scalar_lea.vmem %s3, %s188
      %s190 = smul.u32 8, %s19
      %p191 = scmp.lt.s32.totalorder %s18, 1
      %s192 = scalar_select %p191, %s18, 1
      %p193 = scmp.lt.s32.totalorder %s190, 7
      %s194 = scalar_select %p193, %s190, 7
      %s195 = smul.addr %s192, 8
      %s196 = sadd.s32 %s194, %s195
      %s197 = smul.addr %s196, 4
      %s198 = scalar_lea.vmem %s0, %s197
      %s199 = smul.u32 8, %s19
      %s200 = smul.u32 8, %s19
      %p201 = scmp.lt.s32.totalorder %s18, 1
      %s202 = scalar_select %p201, %s18, 1
      %p203 = scmp.lt.s32.totalorder %s200, 7
      %s204 = scalar_select %p203, %s200, 7
      %s205 = smul.addr %s202, 8
      %s206 = sadd.s32 %s204, %s205
      %s207 = smul.addr %s206, 4
      %s208 = scalar_lea.vmem %s3, %s207
      %s209 = smul.u32 8, %s19
      %v211 = vld [vmem:[%s198] sm:$0xf]
      %v212 = vld [vmem:[%s198 + $0x4] sm:$0xf]
      %v213 = vld [vmem:[%s198 + $0x8] sm:$0xf]
      %v214 = vld [vmem:[%s198 + $0xc] sm:$0xf]
      %v215 = vld [vmem:[%s198 + $0x10] sm:$0xf]
      %v216 = vld [vmem:[%s198 + $0x14] sm:$0xf]
      %v217 = vld [vmem:[%s198 + $0x18] sm:$0xf]
      %v218 = vld [vmem:[%s198 + $0x1c] sm:$0xf]
      %v219 = vld [vmem:[%s1] sm:$0xf]
      %v220 = vld [vmem:[%s1 + $0x4] sm:$0xf]
      %v221 = vld [vmem:[%s1 + $0x8] sm:$0xf]
      %v222 = vld [vmem:[%s1 + $0xc] sm:$0x3]
      %v223 = vld [vmem:[%s2] sm:$0x1]
      %v225 = vlaneseq
      %v226 = vshrl.u32 %v225, 7
      %v227 = vsub.s32 0, %v226
      %v228 = vrot.slane %v223, %v227
      %v238 = vunpack.c.l.b16 %v211
      %v239 = vunpack.c.l.b16 %v212
      %v240 = vunpack.c.l.b16 %v213
      %v241 = vunpack.c.l.b16 %v214
      %v242 = vunpack.c.l.b16 %v215
      %v243 = vunpack.c.l.b16 %v216
      %v244 = vunpack.c.l.b16 %v217
      %v245 = vunpack.c.l.b16 %v218
      %v246 = vpack.c.b16 %v239, %v238
      %v247 = vpack.c.b16 %v241, %v240
      %v248 = vpack.c.b16 %v243, %v242
      %v249 = vpack.c.b16 %v245, %v244
      %v254 = vunpack.c.l.b16 %v219
      %v255 = vunpack.c.l.b16 %v220
      %v256 = vunpack.c.l.b16 %v221
      %v257 = vunpack.c.l.b16 %v222
      %v258 = vpack.c.b16 %v255, %v254
      %v259 = vpack.c.b16 %v257, %v256
      %vm261 = vcmask 220160
      %v263 = vsel %vm261, %v246, 0
      %v266 = vsel %vm261, %v247, 0
      %v269 = vsel %vm261, %v248, 0
      %v272 = vsel %vm261, %v249, 0
      %vm274 = vcmask 1044480
      %vm275 = vcmask 1045504
      %v276 = vsel %vm274, 4294967295, 65535
      %v277 = vsel %vm275, %v276, 0
      %v279 = vand.u32 %v259, %v277
      %281 = vmatprep.subr.bf16.mxu0 0
      %282 = vmatpush1.bf16.msra.mxu0 0
      %283 = vmatprep.subr.bf16.mxu0 0
      %284 = vmatpush1.bf16.msra.mxu0 0
      %285 = vmatprep.subr.bf16.mxu0 0
      %286 = vmatpush1.bf16.msra.mxu0 0
      %287 = vmatprep.subr.bf16.mxu0 0
      %288 = vmatpush1.bf16.msra.mxu0 0
      %289 = vmatprep.subr.bf16.mxu0 0
      %290 = vmatpush1.bf16.msra.mxu0 0
      %291 = vmatprep.subr.bf16.mxu0 0
      %292 = vmatpush1.bf16.msra.mxu0 0
      %293 = vmatprep.subr.bf16.mxu0 0
      %294 = vmatpush1.bf16.msra.mxu0 %v279
      %295 = vmatprep.subr.bf16.mxu0 0
      %296 = vmatpush1.bf16.msra.mxu0 %v258
      %297 = vmatprep.subr.bf16.mxu0 0
      %298 = vmatpush2.bf16.msra.mxu0 0
      %299 = vmatprep.subr.bf16.mxu0 0
      %300 = vmatpush2.bf16.msra.mxu0 0
      %301 = vmatprep.subr.bf16.mxu0 0
      %302 = vmatpush2.bf16.msra.mxu0 0
      %303 = vmatprep.subr.bf16.mxu0 0
      %304 = vmatpush2.bf16.msra.mxu0 0
      %305 = vmatprep.subr.bf16.mxu0 0
      %306 = vmatpush2.bf16.msra.mxu0 0
      %307 = vmatprep.subr.bf16.mxu0 0
      %308 = vmatpush2.bf16.msra.mxu0 0
      %309 = vmatprep.subr.bf16.mxu0 0
      %310 = vmatpush2.bf16.msra.mxu0 0
      %311 = vmatprep.subr.bf16.mxu0 0
      %312 = vmatpush2.bf16.msra.mxu0 0
      %313 = vmatprep.mubr.bf16.mxu0 0
      %314 = vmatmul.mubr.bf16.gmra.mxu0 %v263
      %v315 = vpop.f32.mrf.mxu0
      %v316 = vadd.f32 %v228, %v315
      %v317 = vpop.f32.mrf.mxu0
      %v318 = vpop.f32.mrf.mxu0
      %v319 = vadd.f32 %v228, %v318
      %v320 = vpop.f32.mrf.mxu0
      %321 = vmatprep.mubr.bf16.mxu0 0
      %322 = vmatmul.mubr.bf16.gmra.mxu0 %v266
      %v323 = vpop.f32.mrf.mxu0
      %v324 = vadd.f32 %v228, %v323
      %v325 = vpop.f32.mrf.mxu0
      %v326 = vpop.f32.mrf.mxu0
      %v327 = vadd.f32 %v228, %v326
      %v328 = vpop.f32.mrf.mxu0
      %329 = vmatprep.mubr.bf16.mxu0 0
      %330 = vmatmul.mubr.bf16.gmra.mxu0 %v269
      %v331 = vpop.f32.mrf.mxu0
      %v332 = vadd.f32 %v228, %v331
      %v333 = vpop.f32.mrf.mxu0
      %v334 = vpop.f32.mrf.mxu0
      %v335 = vadd.f32 %v228, %v334
      %v336 = vpop.f32.mrf.mxu0
      %337 = vmatprep.mubr.bf16.mxu0 0
      %338 = vmatmul.mubr.bf16.gmra.mxu0 %v272
      %v339 = vpop.f32.mrf.mxu0
      %v340 = vadd.f32 %v228, %v339
      %v341 = vpop.f32.mrf.mxu0
      %v342 = vpop.f32.mrf.mxu0
      %v343 = vadd.f32 %v228, %v342
      %v344 = vpop.f32.mrf.mxu0
      %345 = vdwg.mxu0
      %v346 = vadd.f32 %v316, 3.0
      %v347 = vadd.f32 %v319, 3.0
      %v348 = vadd.f32 %v324, 3.0
      %v349 = vadd.f32 %v327, 3.0
      %v350 = vadd.f32 %v332, 3.0
      %v351 = vadd.f32 %v335, 3.0
      %v352 = vadd.f32 %v340, 3.0
      %v353 = vadd.f32 %v343, 3.0
      %v354 = vmax.f32 %v346, 0.0
      %v355 = vmax.f32 %v347, 0.0
      %v356 = vmax.f32 %v348, 0.0
      %v357 = vmax.f32 %v349, 0.0
      %v358 = vmax.f32 %v350, 0.0
      %v359 = vmax.f32 %v351, 0.0
      %v360 = vmax.f32 %v352, 0.0
      %v361 = vmax.f32 %v353, 0.0
      %v362 = vmin.f32 %v354, 6.0
      %v363 = vmin.f32 %v355, 6.0
      %v364 = vmin.f32 %v356, 6.0
      %v365 = vmin.f32 %v357, 6.0
      %v366 = vmin.f32 %v358, 6.0
      %v367 = vmin.f32 %v359, 6.0
      %v368 = vmin.f32 %v360, 6.0
      %v369 = vmin.f32 %v361, 6.0
      %v370 = vrcp.pop 6.0
      %v371 = vmul.f32 %v362, %v370
      %v372 = vmul.f32 %v363, %v370
      %v373 = vmul.f32 %v364, %v370
      %v374 = vmul.f32 %v365, %v370
      %v375 = vmul.f32 %v366, %v370
      %v376 = vmul.f32 %v367, %v370
      %v377 = vmul.f32 %v368, %v370
      %v378 = vmul.f32 %v369, %v370
      %v379 = vmul.f32 %v316, %v371
      %v380 = vmul.f32 %v319, %v372
      %v381 = vmul.f32 %v324, %v373
      %v382 = vmul.f32 %v327, %v374
      %v383 = vmul.f32 %v332, %v375
      %v384 = vmul.f32 %v335, %v376
      %v385 = vmul.f32 %v340, %v377
      %v386 = vmul.f32 %v343, %v378
      %v387 = vpack.c.bf16 %v380, %v379
      %v388 = vpack.c.bf16 %v382, %v381
      %v389 = vpack.c.bf16 %v384, %v383
      %v390 = vpack.c.bf16 %v386, %v385
      %v395 = vunpack.c.l.b16 %v387
      %v396 = vunpack.c.h.b16 %v387
      %v397 = vunpack.c.l.b16 %v388
      %v398 = vunpack.c.h.b16 %v388
      %v399 = vunpack.c.l.b16 %v389
      %v400 = vunpack.c.h.b16 %v389
      %v401 = vunpack.c.l.b16 %v390
      %v402 = vunpack.c.h.b16 %v390
      %v403 = vpack.c.b16 %v395, %v395
      %v404 = vpack.c.b16 %v396, %v396
      %v405 = vpack.c.b16 %v397, %v397
      %v406 = vpack.c.b16 %v398, %v398
      %v407 = vpack.c.b16 %v399, %v399
      %v408 = vpack.c.b16 %v400, %v400
      %v409 = vpack.c.b16 %v401, %v401
      %v410 = vpack.c.b16 %v402, %v402
      %vm419 = vcmask 125952
      %420 = vst.msk [vmem:[%s208] sm:$0xf] %vm419, %v403
      %421 = vst.msk [vmem:[%s208 + $0x4] sm:$0xf] %vm419, %v404
      %422 = vst.msk [vmem:[%s208 + $0x8] sm:$0xf] %vm419, %v405
      %423 = vst.msk [vmem:[%s208 + $0xc] sm:$0xf] %vm419, %v406
      %424 = vst.msk [vmem:[%s208 + $0x10] sm:$0xf] %vm419, %v407
      %425 = vst.msk [vmem:[%s208 + $0x14] sm:$0xf] %vm419, %v408
      %426 = vst.msk [vmem:[%s208 + $0x18] sm:$0xf] %vm419, %v409
      %427 = vst.msk [vmem:[%s208 + $0x1c] sm:$0xf] %vm419, %v410
      %s428 = smul.u32 8, %s19
      %p429 = scmp.lt.s32.totalorder %s18, 1
      %s430 = scalar_select %p429, %s18, 1
      %p431 = scmp.lt.s32.totalorder %s428, 7
      %s432 = scalar_select %p431, %s428, 7
      %s433 = smul.addr %s430, 8
      %s434 = sadd.s32 %s432, %s433
      %s435 = smul.addr %s434, 4
      %s436 = scalar_lea.vmem %s3, %s435
      // Predicated region
      $region33: #{_lambda_.10} parent=31 // pred_check
        %p437 = pneg %p116
      $region34: #{_lambda_.10} parent=31 // pred_check_branch
        %439 = sbr.rel (%p437) target = $region36
      $region35: #{_lambda_.10} parent=31 // pred_region
        %s440 = smul.u32 8, %s19
      $region36: #{_lambda_.10} parent=31 // pred_fallthru
        _
    $region32: #{_lambda_.10} parent=5 // pred_fallthru
      _
    %p441 = scmp.le.s32.totalorder 2, %s9
    // Predicated region
    $region37: #{_lambda_.10} parent=5 // pred_check
      %p442 = pneg %p441
    $region38: #{_lambda_.10} parent=5 // pred_check_branch
      %444 = sbr.rel (%p442) target = $region40
    $region39: #{_lambda_.10} parent=5 // pred_region
      %s445 = ssub.s32 %s9, 2
      // Predicated region
      $region41: #{_lambda_.10} parent=39 // pred_check
        %p446 = pneg %p122
      $region42: #{_lambda_.10} parent=39 // pred_check_branch
        %448 = sbr.rel (%p446) target = $region44
      $region43: #{_lambda_.10} parent=39 // pred_region
        %s449 = smul.u32 8, %s21
        %p450 = scmp.lt.s32.totalorder %s20, 1
        %s451 = scalar_select %p450, %s20, 1
        %p452 = scmp.lt.s32.totalorder %s449, 7
        %s453 = scalar_select %p452, %s449, 7
        %s454 = smul.addr %s451, 8
        %s455 = sadd.s32 %s453, %s454
        %s456 = smul.addr %s455, 4
        %s457 = scalar_lea.vmem %s3, %s456
      $region44: #{_lambda_.10} parent=39 // pred_fallthru
        _
    $region40: #{_lambda_.10} parent=5 // pred_fallthru
      _
  $region6: #{_lambda_.10} parent=0 // loop_footer
    %s13 = sadd.s32 1, %s9
  $region7: #{_lambda_.10} parent=0 // loop_footer_branch
    %8 = sbr.rel target = $region3
  $region8: #{_lambda_.10} parent=0 // loop_exit
    _

// kernel: _lambda_.12
$region0: #{_lambda_.12}
  #allocation0 [shape = 'u32[]', space=smem, size = 0x4, offset = 0x4, fixed_abs, tag = 'smem constant byte address 0x4 - core index']
  #allocation1 [shape = 'u32[144,128]{1,0:T(1,128)}', space=vmem, size = 0x12000, scoped, tag = 'internal scratch']
  %s0 = inlined_call_operand.vmem [shape: bf16[2,16,16], index: 0, kind: input, shape index: {}]
  %s1 = inlined_call_operand.vmem [shape: f32[2,1,16], index: 1, kind: input, shape index: {}]
  %s2 = inlined_call_operand.vmem [shape: bf16[16,16], index: 2, kind: input, shape index: {}]
  %s3 = inlined_call_operand.vmem [shape: f32[1,16], index: 3, kind: input, shape index: {}]
  %s4 = inlined_call_operand.vmem [shape: bf16[2,16,16], index: 4, kind: output, shape index: {}]
  %s5 = sld [smem:[#allocation0]]
  $region49: #{_lambda_.12} parent=0
    _
  %s7 = ssub.s32 1, %s5
  %s8 = scalar_select 0, %s7, %s5
  loop: start=0, step=1, limit=4
  $region2: #{_lambda_.12} parent=0 // loop_pre_header
    _
  $region3: #{_lambda_.12} parent=0 // loop_header
    %s10 = sphi 0, %s14
    %p11 = scmp.ge.s32.totalorder %s10, 4
    %s17 = sphi 0, %s29
    %s18 = sphi 0, %s25
    %s19 = sphi 0, %s17
    %s20 = sphi 0, %s18
    %s21 = sphi 0, %s19
    %s22 = sphi 0, %s20
    %s34 = sphi 0, %s36
    %s37 = sphi 0, %s34
    %s38 = sphi 0, %s37
    %s54 = sphi 0, %s38
    %s60 = sphi 0, %s62
    %s63 = sphi 0, %s60
    %s64 = sphi 0, %s63
    %s80 = sphi 0, %s64
    %s84 = sphi 0, %s84
    %s86 = sphi 0, %s84
    %s87 = sphi 0, %s86
    %s101 = sphi 0, %s87
    %s105 = sphi 0, %s105
    %s107 = sphi 0, %s105
    %s108 = sphi 0, %s107
    %s122 = sphi 0, %s108
    %s130 = sphi 0, %s132
    %s133 = sphi 0, %s130
    %s134 = sphi 0, %s133
    %s150 = sphi 0, %s134
  $region4: #{_lambda_.12} parent=0 // loop_header_branch
    %13 = sbr.rel (%p11) target = $region8
  $region5: #{_lambda_.12} parent=0 // loop_body
    %s15 = ssub.s32 %s10, 1
    %s16 = ssub.s32 %s10, 2
    %s23 = sadd.s32 1, %s18
    %p24 = scmp.ge.s32.totalorder %s23, 1
    %s25 = scalar_select %p24, 0, %s23
    %s26 = sadd.s32 1, %s17
    %s27 = scalar_select %p24, %s26, %s17
    %p28 = scmp.ge.s32.totalorder %s27, 2
    %s29 = scalar_select %p28, 0, %s27
    %s30 = ssub.s32 %s17, %s29
    %s31 = ssub.s32 %s18, %s25
    %s32 = sor.u32 %s30, %s31
    %p33 = scmp.eq.s32.totalorder %s32, 0
    %s35 = sadd.s32 %s34, 1
    %s36 = scalar_select %p33, %s34, %s35
    %p39 = pneg %p33
    %p40 = scmp.eq.s32.totalorder %s10, 1
    %p41 = por %p39, %p40
    %p42 = scmp.ne.s32.totalorder %s34, %s37
    %p43 = scmp.eq.s32.totalorder %s10, 0
    %p44 = por %p42, %p43
    %p45 = scmp.ne.s32.totalorder %s34, %s37
    %p46 = scmp.eq.s32.totalorder %s15, 1
    %p47 = por %p45, %p46
    %p48 = scmp.ne.s32.totalorder %s37, %s38
    %p49 = scmp.eq.s32.totalorder %s15, 0
    %p50 = por %p48, %p49
    %p51 = scmp.ne.s32.totalorder %s37, %s38
    %p52 = scmp.eq.s32.totalorder %s16, 1
    %p53 = por %p51, %p52
    %p55 = scmp.ne.s32.totalorder %s38, %s54
    %p56 = scmp.eq.s32.totalorder %s16, 0
    %p57 = por %p55, %p56
    %s58 = ssub.s32 %s17, %s29
    %p59 = scmp.eq.s32.totalorder %s58, 0
    %s61 = sadd.s32 %s60, 1
    %s62 = scalar_select %p59, %s60, %s61
    %p65 = pneg %p59
    %p66 = scmp.eq.s32.totalorder %s10, 1
    %p67 = por %p65, %p66
    %p68 = scmp.ne.s32.totalorder %s60, %s63
    %p69 = scmp.eq.s32.totalorder %s10, 0
    %p70 = por %p68, %p69
    %p71 = scmp.ne.s32.totalorder %s60, %s63
    %p72 = scmp.eq.s32.totalorder %s15, 1
    %p73 = por %p71, %p72
    %p74 = scmp.ne.s32.totalorder %s63, %s64
    %p75 = scmp.eq.s32.totalorder %s15, 0
    %p76 = por %p74, %p75
    %p77 = scmp.ne.s32.totalorder %s63, %s64
    %p78 = scmp.eq.s32.totalorder %s16, 1
    %p79 = por %p77, %p78
    %p81 = scmp.ne.s32.totalorder %s64, %s80
    %p82 = scmp.eq.s32.totalorder %s16, 0
    %p83 = por %p81, %p82
    %s85 = sadd.s32 %s84, 1
    %p88 = scmp.eq.s32.totalorder %s10, 1
    %p89 = scmp.ne.s32.totalorder %s84, %s86
    %p90 = scmp.eq.s32.totalorder %s10, 0
    %p91 = por %p89, %p90
    %p92 = scmp.ne.s32.totalorder %s84, %s86
    %p93 = scmp.eq.s32.totalorder %s15, 1
    %p94 = por %p92, %p93
    %p95 = scmp.ne.s32.totalorder %s86, %s87
    %p96 = scmp.eq.s32.totalorder %s15, 0
    %p97 = por %p95, %p96
    %p98 = scmp.ne.s32.totalorder %s86, %s87
    %p99 = scmp.eq.s32.totalorder %s16, 1
    %p100 = por %p98, %p99
    %p102 = scmp.ne.s32.totalorder %s87, %s101
    %p103 = scmp.eq.s32.totalorder %s16, 0
    %p104 = por %p102, %p103
    %s106 = sadd.s32 %s105, 1
    %p109 = scmp.eq.s32.totalorder %s10, 1
    %p110 = scmp.ne.s32.totalorder %s105, %s107
    %p111 = scmp.eq.s32.totalorder %s10, 0
    %p112 = por %p110, %p111
    %p113 = scmp.ne.s32.totalorder %s105, %s107
    %p114 = scmp.eq.s32.totalorder %s15, 1
    %p115 = por %p113, %p114
    %p116 = scmp.ne.s32.totalorder %s107, %s108
    %p117 = scmp.eq.s32.totalorder %s15, 0
    %p118 = por %p116, %p117
    %p119 = scmp.ne.s32.totalorder %s107, %s108
    %p120 = scmp.eq.s32.totalorder %s16, 1
    %p121 = por %p119, %p120
    %p123 = scmp.ne.s32.totalorder %s108, %s122
    %p124 = scmp.eq.s32.totalorder %s16, 0
    %p125 = por %p123, %p124
    %s126 = ssub.s32 %s17, %s29
    %s127 = ssub.s32 %s18, %s25
    %s128 = sor.u32 %s126, %s127
    %p129 = scmp.eq.s32.totalorder %s128, 0
    %s131 = sadd.s32 %s130, 1
    %s132 = scalar_select %p129, %s130, %s131
    %p135 = pneg %p129
    %p136 = scmp.eq.s32.totalorder %s10, 1
    %p137 = por %p135, %p136
    %p138 = scmp.ne.s32.totalorder %s130, %s133
    %p139 = scmp.eq.s32.totalorder %s10, 0
    %p140 = por %p138, %p139
    %p141 = scmp.ne.s32.totalorder %s130, %s133
    %p142 = scmp.eq.s32.totalorder %s15, 1
    %p143 = por %p141, %p142
    %p144 = scmp.ne.s32.totalorder %s133, %s134
    %p145 = scmp.eq.s32.totalorder %s15, 0
    %p146 = por %p144, %p145
    %p147 = scmp.ne.s32.totalorder %s133, %s134
    %p148 = scmp.eq.s32.totalorder %s16, 1
    %p149 = por %p147, %p148
    %p151 = scmp.ne.s32.totalorder %s134, %s150
    %p152 = scmp.eq.s32.totalorder %s16, 0
    %p153 = por %p151, %p152
    %p154 = scmp.le.s32.totalorder 1, %s10
    %p155 = scmp.lt.s32.totalorder %s10, 3
    %p156 = pnand %p154, %p155
    %p157 = pneg %p156
    // Predicated region
    $region9: #{_lambda_.12} parent=5 // pred_check
      _
    $region10: #{_lambda_.12} parent=5 // pred_check_branch
      %159 = sbr.rel (%p156) target = $region12
    $region11: #{_lambda_.12} parent=5 // pred_region
      %s160 = ssub.s32 %s10, 1
      // Predicated region
      $region13: #{_lambda_.12} parent=11 // pred_check
        %p161 = pneg %p97
      $region14: #{_lambda_.12} parent=11 // pred_check_branch
        %163 = sbr.rel (%p161) target = $region16
      $region15: #{_lambda_.12} parent=11 // pred_region
        _
      $region16: #{_lambda_.12} parent=11 // pred_fallthru
        _
      // Predicated region
      $region17: #{_lambda_.12} parent=11 // pred_check
        %p164 = pneg %p118
      $region18: #{_lambda_.12} parent=11 // pred_check_branch
        %166 = sbr.rel (%p164) target = $region20
      $region19: #{_lambda_.12} parent=11 // pred_region
        _
      $region20: #{_lambda_.12} parent=11 // pred_fallthru
        _
    $region12: #{_lambda_.12} parent=5 // pred_fallthru
      _
    %p167 = scmp.lt.s32.totalorder %s10, 2
    // Predicated region
    $region21: #{_lambda_.12} parent=5 // pred_check
      %p168 = pneg %p167
    $region22: #{_lambda_.12} parent=5 // pred_check_branch
      %170 = sbr.rel (%p168) target = $region24
    $region23: #{_lambda_.12} parent=5 // pred_region
      // Predicated region
      $region25: #{_lambda_.12} parent=23 // pred_check
        %p171 = pneg %p44
      $region26: #{_lambda_.12} parent=23 // pred_check_branch
        %173 = sbr.rel (%p171) target = $region28
      $region27: #{_lambda_.12} parent=23 // pred_region
        %s174 = smul.u32 2, %s18
        %p175 = scmp.lt.s32.totalorder %s17, 1
        %s176 = scalar_select %p175, %s17, 1
        %p177 = scmp.lt.s32.totalorder %s174, 1
        %s178 = scalar_select %p177, %s174, 1
        %s179 = smul.addr %s176, 2
        %s180 = sadd.s32 %s178, %s179
        %s181 = smul.addr %s180, 4
        %s182 = scalar_lea.vmem %s0, %s181
        %s183 = smul.u32 2, %s18
      $region28: #{_lambda_.12} parent=23 // pred_fallthru
        _
      // Predicated region
      $region29: #{_lambda_.12} parent=23 // pred_check
        %p184 = pneg %p70
      $region30: #{_lambda_.12} parent=23 // pred_check_branch
        %186 = sbr.rel (%p184) target = $region32
      $region31: #{_lambda_.12} parent=23 // pred_region
        %p187 = scmp.lt.s32.totalorder %s17, 1
        %s188 = scalar_select %p187, %s17, 1
        %s189 = scalar_lea.vmem %s1, %s188
      $region32: #{_lambda_.12} parent=23 // pred_fallthru
        _
    $region24: #{_lambda_.12} parent=5 // pred_fallthru
      _
    %p190 = scmp.le.s32.totalorder 1, %s10
    %p191 = scmp.lt.s32.totalorder %s10, 3
    %p192 = pnand %p190, %p191
    %p193 = pneg %p192
    // Predicated region
    $region33: #{_lambda_.12} parent=5 // pred_check
      _
    $region34: #{_lambda_.12} parent=5 // pred_check_branch
      %195 = sbr.rel (%p192) target = $region36
    $region35: #{_lambda_.12} parent=5 // pred_region
      %s196 = ssub.s32 %s10, 1
      %s197 = smul.u32 2, %s20
      %p198 = scmp.lt.s32.totalorder %s19, 1
      %s199 = scalar_select %p198, %s19, 1
      %p200 = scmp.lt.s32.totalorder %s197, 1
      %s201 = scalar_select %p200, %s197, 1
      %s202 = smul.addr %s199, 2
      %s203 = sadd.s32 %s201, %s202
      %s204 = smul.addr %s203, 4
      %s205 = scalar_lea.vmem %s0, %s204
      %p206 = pneg %p50
      %p207 = pneg %p47
      %p208 = scmp.lt.s32.totalorder %s19, 1
      %s209 = scalar_select %p208, %s19, 1
      %s210 = scalar_lea.vmem %s1, %s209
      %p211 = pneg %p76
      %p212 = pneg %p73
      %p213 = pneg %p97
      %p214 = pneg %p94
      %p215 = pneg %p118
      %p216 = pneg %p115
      %p217 = pneg %p146
      %p218 = pneg %p143
      %s219 = smul.u32 2, %s20
      %p220 = scmp.lt.s32.totalorder %s19, 1
      %s221 = scalar_select %p220, %s19, 1
      %p222 = scmp.lt.s32.totalorder %s219, 1
      %s223 = scalar_select %p222, %s219, 1
      %s224 = smul.addr %s221, 2
      %s225 = sadd.s32 %s223, %s224
      %s226 = smul.addr %s225, 4
      %s227 = scalar_lea.vmem %s4, %s226
      %s228 = smul.u32 2, %s20
      %p229 = scmp.lt.s32.totalorder %s19, 1
      %s230 = scalar_select %p229, %s19, 1
      %p231 = scmp.lt.s32.totalorder %s228, 1
      %s232 = scalar_select %p231, %s228, 1
      %s233 = smul.addr %s230, 2
      %s234 = sadd.s32 %s232, %s233
      %s235 = smul.addr %s234, 4
      %s236 = scalar_lea.vmem %s0, %s235
      %s237 = smul.u32 2, %s20
      %p238 = scmp.lt.s32.totalorder %s19, 1
      %s239 = scalar_select %p238, %s19, 1
      %s240 = scalar_lea.vmem %s1, %s239
      %s241 = smul.u32 2, %s20
      %p242 = scmp.lt.s32.totalorder %s19, 1
      %s243 = scalar_select %p242, %s19, 1
      %p244 = scmp.lt.s32.totalorder %s241, 1
      %s245 = scalar_select %p244, %s241, 1
      %s246 = smul.addr %s243, 2
      %s247 = sadd.s32 %s245, %s246
      %s248 = smul.addr %s247, 4
      %s249 = scalar_lea.vmem %s4, %s248
      %s250 = smul.u32 2, %s20
      %v252 = vld [vmem:[%s236] sm:$0xf]
      %v253 = vld [vmem:[%s236 + $0x4] sm:$0xf]
      %v254 = vunpack.c.l.bf16 %v252
      %v255 = vunpack.c.l.bf16 %v253
      %v256 = vld [vmem:[%s240] sm:$0x1]
      %v258 = vlaneseq
      %v259 = vshrl.u32 %v258, 7
      %v260 = vsub.s32 0, %v259
      %v261 = vrot.slane %v256, %v260
      %v263 = vmul.f32 %v254, %v261
      %v264 = vmul.f32 %v255, %v261
      %v265 = vpack.c.bf16 %v264, %v263
      %v266 = vld [vmem:[%s2] sm:$0xf]
      %v267 = vld [vmem:[%s2 + $0x4] sm:$0xf]
      %v268 = vld [vmem:[%s3] sm:$0x1]
      %v270 = vlaneseq
      %v271 = vshrl.u32 %v270, 7
      %v272 = vsub.s32 0, %v271
      %v273 = vrot.slane %v268, %v272
      %v277 = vunpack.c.l.b16 %v266
      %v278 = vunpack.c.l.b16 %v267
      %v279 = vpack.c.b16 %v278, %v277
      %vm281 = vcmask 130048
      %v283 = vsel %vm281, %v265, 0
      %285 = vmatprep.subr.bf16.mxu0 0
      %286 = vmatpush1.bf16.msra.mxu0 0
      %287 = vmatprep.subr.bf16.mxu0 0
      %288 = vmatpush1.bf16.msra.mxu0 0
      %289 = vmatprep.subr.bf16.mxu0 0
      %290 = vmatpush1.bf16.msra.mxu0 0
      %291 = vmatprep.subr.bf16.mxu0 0
      %292 = vmatpush1.bf16.msra.mxu0 0
      %293 = vmatprep.subr.bf16.mxu0 0
      %294 = vmatpush1.bf16.msra.mxu0 0
      %295 = vmatprep.subr.bf16.mxu0 0
      %296 = vmatpush1.bf16.msra.mxu0 0
      %297 = vmatprep.subr.bf16.mxu0 0
      %298 = vmatpush1.bf16.msra.mxu0 0
      %299 = vmatprep.subr.bf16.mxu0 0
      %300 = vmatpush1.bf16.msra.mxu0 %v279
      %301 = vmatprep.subr.bf16.mxu0 0
      %302 = vmatpush2.bf16.msra.mxu0 0
      %303 = vmatprep.subr.bf16.mxu0 0
      %304 = vmatpush2.bf16.msra.mxu0 0
      %305 = vmatprep.subr.bf16.mxu0 0
      %306 = vmatpush2.bf16.msra.mxu0 0
      %307 = vmatprep.subr.bf16.mxu0 0
      %308 = vmatpush2.bf16.msra.mxu0 0
      %309 = vmatprep.subr.bf16.mxu0 0
      %310 = vmatpush2.bf16.msra.mxu0 0
      %311 = vmatprep.subr.bf16.mxu0 0
      %312 = vmatpush2.bf16.msra.mxu0 0
      %313 = vmatprep.subr.bf16.mxu0 0
      %314 = vmatpush2.bf16.msra.mxu0 0
      %315 = vmatprep.subr.bf16.mxu0 0
      %316 = vmatpush2.bf16.msra.mxu0 0
      %317 = vmatprep.mubr.bf16.mxu0 0
      %318 = vmatmul.mubr.bf16.gmra.mxu0 %v283
      %v319 = vpop.f32.mrf.mxu0
      %v320 = vadd.f32 %v273, %v319
      %v321 = vpop.f32.mrf.mxu0
      %v322 = vpop.f32.mrf.mxu0
      %v323 = vadd.f32 %v273, %v322
      %v324 = vpop.f32.mrf.mxu0
      %325 = vdwg.mxu0
      %v326 = vpack.c.bf16 %v323, %v320
      %v328 = vunpack.c.l.b16 %v326
      %v329 = vunpack.c.h.b16 %v326
      %v330 = vpack.c.b16 %v328, %v328
      %v331 = vpack.c.b16 %v329, %v329
      %vm334 = vcmask 125952
      %335 = vst.msk [vmem:[%s249] sm:$0xf] %vm334, %v330
      %336 = vst.msk [vmem:[%s249 + $0x4] sm:$0xf] %vm334, %v331
      %s337 = smul.u32 2, %s20
      %p338 = scmp.lt.s32.totalorder %s19, 1
      %s339 = scalar_select %p338, %s19, 1
      %p340 = scmp.lt.s32.totalorder %s337, 1
      %s341 = scalar_select %p340, %s337, 1
      %s342 = smul.addr %s339, 2
      %s343 = sadd.s32 %s341, %s342
      %s344 = smul.addr %s343, 4
      %s345 = scalar_lea.vmem %s4, %s344
      // Predicated region
      $region37: #{_lambda_.12} parent=35 // pred_check
        %p346 = pneg %p143
      $region38: #{_lambda_.12} parent=35 // pred_check_branch
        %348 = sbr.rel (%p346) target = $region40
      $region39: #{_lambda_.12} parent=35 // pred_region
        %s349 = smul.u32 2, %s20
      $region40: #{_lambda_.12} parent=35 // pred_fallthru
        _
    $region36: #{_lambda_.12} parent=5 // pred_fallthru
      _
    %p350 = scmp.le.s32.totalorder 2, %s10
    // Predicated region
    $region41: #{_lambda_.12} parent=5 // pred_check
      %p351 = pneg %p350
    $region42: #{_lambda_.12} parent=5 // pred_check_branch
      %353 = sbr.rel (%p351) target = $region44
    $region43: #{_lambda_.12} parent=5 // pred_region
      %s354 = ssub.s32 %s10, 2
      // Predicated region
      $region45: #{_lambda_.12} parent=43 // pred_check
        %p355 = pneg %p149
      $region46: #{_lambda_.12} parent=43 // pred_check_branch
        %357 = sbr.rel (%p355) target = $region48
      $region47: #{_lambda_.12} parent=43 // pred_region
        %s358 = smul.u32 2, %s22
        %p359 = scmp.lt.s32.totalorder %s21, 1
        %s360 = scalar_select %p359, %s21, 1
        %p361 = scmp.lt.s32.totalorder %s358, 1
        %s362 = scalar_select %p361, %s358, 1
        %s363 = smul.addr %s360, 2
        %s364 = sadd.s32 %s362, %s363
        %s365 = smul.addr %s364, 4
        %s366 = scalar_lea.vmem %s4, %s365
      $region48: #{_lambda_.12} parent=43 // pred_fallthru
        _
    $region44: #{_lambda_.12} parent=5 // pred_fallthru
      _
  $region6: #{_lambda_.12} parent=0 // loop_footer
    %s14 = sadd.s32 1, %s10
  $region7: #{_lambda_.12} parent=0 // loop_footer_branch
    %9 = sbr.rel target = $region3
  $region8: #{_lambda_.12} parent=0 // loop_exit
    _

// kernel: _lambda_.13
$region0: #{_lambda_.13}
  #allocation0 [shape = 'u32[]', space=smem, size = 0x4, offset = 0x4, fixed_abs, tag = 'smem constant byte address 0x4 - core index']
  #allocation1 [shape = 'u32[144,128]{1,0:T(1,128)}', space=vmem, size = 0x12000, scoped, tag = 'internal scratch']
  %s0 = inlined_call_operand.vmem [shape: bf16[2,16,16], index: 0, kind: input, shape index: {}]
  %s1 = inlined_call_operand.vmem [shape: bf16[16,72], index: 1, kind: input, shape index: {}]
  %s2 = inlined_call_operand.vmem [shape: f32[1,72], index: 2, kind: input, shape index: {}]
  %s3 = inlined_call_operand.vmem [shape: bf16[2,16,72], index: 3, kind: output, shape index: {}]
  %s4 = sld [smem:[#allocation0]]
  $region45: #{_lambda_.13} parent=0
    _
  %s6 = ssub.s32 1, %s4
  %s7 = scalar_select 0, %s6, %s4
  loop: start=0, step=1, limit=4
  $region2: #{_lambda_.13} parent=0 // loop_pre_header
    _
  $region3: #{_lambda_.13} parent=0 // loop_header
    %s9 = sphi 0, %s13
    %p10 = scmp.ge.s32.totalorder %s9, 4
    %s16 = sphi 0, %s28
    %s17 = sphi 0, %s24
    %s18 = sphi 0, %s16
    %s19 = sphi 0, %s17
    %s20 = sphi 0, %s18
    %s21 = sphi 0, %s19
    %s33 = sphi 0, %s35
    %s36 = sphi 0, %s33
    %s37 = sphi 0, %s36
    %s53 = sphi 0, %s37
    %s57 = sphi 0, %s57
    %s59 = sphi 0, %s57
    %s60 = sphi 0, %s59
    %s74 = sphi 0, %s60
    %s78 = sphi 0, %s78
    %s80 = sphi 0, %s78
    %s81 = sphi 0, %s80
    %s95 = sphi 0, %s81
    %s103 = sphi 0, %s105
    %s106 = sphi 0, %s103
    %s107 = sphi 0, %s106
    %s123 = sphi 0, %s107
  $region4: #{_lambda_.13} parent=0 // loop_header_branch
    %12 = sbr.rel (%p10) target = $region8
  $region5: #{_lambda_.13} parent=0 // loop_body
    %s14 = ssub.s32 %s9, 1
    %s15 = ssub.s32 %s9, 2
    %s22 = sadd.s32 1, %s17
    %p23 = scmp.ge.s32.totalorder %s22, 1
    %s24 = scalar_select %p23, 0, %s22
    %s25 = sadd.s32 1, %s16
    %s26 = scalar_select %p23, %s25, %s16
    %p27 = scmp.ge.s32.totalorder %s26, 2
    %s28 = scalar_select %p27, 0, %s26
    %s29 = ssub.s32 %s16, %s28
    %s30 = ssub.s32 %s17, %s24
    %s31 = sor.u32 %s29, %s30
    %p32 = scmp.eq.s32.totalorder %s31, 0
    %s34 = sadd.s32 %s33, 1
    %s35 = scalar_select %p32, %s33, %s34
    %p38 = pneg %p32
    %p39 = scmp.eq.s32.totalorder %s9, 1
    %p40 = por %p38, %p39
    %p41 = scmp.ne.s32.totalorder %s33, %s36
    %p42 = scmp.eq.s32.totalorder %s9, 0
    %p43 = por %p41, %p42
    %p44 = scmp.ne.s32.totalorder %s33, %s36
    %p45 = scmp.eq.s32.totalorder %s14, 1
    %p46 = por %p44, %p45
    %p47 = scmp.ne.s32.totalorder %s36, %s37
    %p48 = scmp.eq.s32.totalorder %s14, 0
    %p49 = por %p47, %p48
    %p50 = scmp.ne.s32.totalorder %s36, %s37
    %p51 = scmp.eq.s32.totalorder %s15, 1
    %p52 = por %p50, %p51
    %p54 = scmp.ne.s32.totalorder %s37, %s53
    %p55 = scmp.eq.s32.totalorder %s15, 0
    %p56 = por %p54, %p55
    %s58 = sadd.s32 %s57, 1
    %p61 = scmp.eq.s32.totalorder %s9, 1
    %p62 = scmp.ne.s32.totalorder %s57, %s59
    %p63 = scmp.eq.s32.totalorder %s9, 0
    %p64 = por %p62, %p63
    %p65 = scmp.ne.s32.totalorder %s57, %s59
    %p66 = scmp.eq.s32.totalorder %s14, 1
    %p67 = por %p65, %p66
    %p68 = scmp.ne.s32.totalorder %s59, %s60
    %p69 = scmp.eq.s32.totalorder %s14, 0
    %p70 = por %p68, %p69
    %p71 = scmp.ne.s32.totalorder %s59, %s60
    %p72 = scmp.eq.s32.totalorder %s15, 1
    %p73 = por %p71, %p72
    %p75 = scmp.ne.s32.totalorder %s60, %s74
    %p76 = scmp.eq.s32.totalorder %s15, 0
    %p77 = por %p75, %p76
    %s79 = sadd.s32 %s78, 1
    %p82 = scmp.eq.s32.totalorder %s9, 1
    %p83 = scmp.ne.s32.totalorder %s78, %s80
    %p84 = scmp.eq.s32.totalorder %s9, 0
    %p85 = por %p83, %p84
    %p86 = scmp.ne.s32.totalorder %s78, %s80
    %p87 = scmp.eq.s32.totalorder %s14, 1
    %p88 = por %p86, %p87
    %p89 = scmp.ne.s32.totalorder %s80, %s81
    %p90 = scmp.eq.s32.totalorder %s14, 0
    %p91 = por %p89, %p90
    %p92 = scmp.ne.s32.totalorder %s80, %s81
    %p93 = scmp.eq.s32.totalorder %s15, 1
    %p94 = por %p92, %p93
    %p96 = scmp.ne.s32.totalorder %s81, %s95
    %p97 = scmp.eq.s32.totalorder %s15, 0
    %p98 = por %p96, %p97
    %s99 = ssub.s32 %s16, %s28
    %s100 = ssub.s32 %s17, %s24
    %s101 = sor.u32 %s99, %s100
    %p102 = scmp.eq.s32.totalorder %s101, 0
    %s104 = sadd.s32 %s103, 1
    %s105 = scalar_select %p102, %s103, %s104
    %p108 = pneg %p102
    %p109 = scmp.eq.s32.totalorder %s9, 1
    %p110 = por %p108, %p109
    %p111 = scmp.ne.s32.totalorder %s103, %s106
    %p112 = scmp.eq.s32.totalorder %s9, 0
    %p113 = por %p111, %p112
    %p114 = scmp.ne.s32.totalorder %s103, %s106
    %p115 = scmp.eq.s32.totalorder %s14, 1
    %p116 = por %p114, %p115
    %p117 = scmp.ne.s32.totalorder %s106, %s107
    %p118 = scmp.eq.s32.totalorder %s14, 0
    %p119 = por %p117, %p118
    %p120 = scmp.ne.s32.totalorder %s106, %s107
    %p121 = scmp.eq.s32.totalorder %s15, 1
    %p122 = por %p120, %p121
    %p124 = scmp.ne.s32.totalorder %s107, %s123
    %p125 = scmp.eq.s32.totalorder %s15, 0
    %p126 = por %p124, %p125
    %p127 = scmp.le.s32.totalorder 1, %s9
    %p128 = scmp.lt.s32.totalorder %s9, 3
    %p129 = pnand %p127, %p128
    %p130 = pneg %p129
    // Predicated region
    $region9: #{_lambda_.13} parent=5 // pred_check
      _
    $region10: #{_lambda_.13} parent=5 // pred_check_branch
      %132 = sbr.rel (%p129) target = $region12
    $region11: #{_lambda_.13} parent=5 // pred_region
      %s133 = ssub.s32 %s9, 1
      // Predicated region
      $region13: #{_lambda_.13} parent=11 // pred_check
        %p134 = pneg %p70
      $region14: #{_lambda_.13} parent=11 // pred_check_branch
        %136 = sbr.rel (%p134) target = $region16
      $region15: #{_lambda_.13} parent=11 // pred_region
        _
      $region16: #{_lambda_.13} parent=11 // pred_fallthru
        _
      // Predicated region
      $region17: #{_lambda_.13} parent=11 // pred_check
        %p137 = pneg %p91
      $region18: #{_lambda_.13} parent=11 // pred_check_branch
        %139 = sbr.rel (%p137) target = $region20
      $region19: #{_lambda_.13} parent=11 // pred_region
        _
      $region20: #{_lambda_.13} parent=11 // pred_fallthru
        _
    $region12: #{_lambda_.13} parent=5 // pred_fallthru
      _
    %p140 = scmp.lt.s32.totalorder %s9, 2
    // Predicated region
    $region21: #{_lambda_.13} parent=5 // pred_check
      %p141 = pneg %p140
    $region22: #{_lambda_.13} parent=5 // pred_check_branch
      %143 = sbr.rel (%p141) target = $region24
    $region23: #{_lambda_.13} parent=5 // pred_region
      // Predicated region
      $region25: #{_lambda_.13} parent=23 // pred_check
        %p144 = pneg %p43
      $region26: #{_lambda_.13} parent=23 // pred_check_branch
        %146 = sbr.rel (%p144) target = $region28
      $region27: #{_lambda_.13} parent=23 // pred_region
        %s147 = smul.u32 2, %s17
        %p148 = scmp.lt.s32.totalorder %s16, 1
        %s149 = scalar_select %p148, %s16, 1
        %p150 = scmp.lt.s32.totalorder %s147, 1
        %s151 = scalar_select %p150, %s147, 1
        %s152 = smul.addr %s149, 2
        %s153 = sadd.s32 %s151, %s152
        %s154 = smul.addr %s153, 4
        %s155 = scalar_lea.vmem %s0, %s154
        %s156 = smul.u32 2, %s17
      $region28: #{_lambda_.13} parent=23 // pred_fallthru
        _
    $region24: #{_lambda_.13} parent=5 // pred_fallthru
      _
    %p157 = scmp.le.s32.totalorder 1, %s9
    %p158 = scmp.lt.s32.totalorder %s9, 3
    %p159 = pnand %p157, %p158
    %p160 = pneg %p159
    // Predicated region
    $region29: #{_lambda_.13} parent=5 // pred_check
      _
    $region30: #{_lambda_.13} parent=5 // pred_check_branch
      %162 = sbr.rel (%p159) target = $region32
    $region31: #{_lambda_.13} parent=5 // pred_region
      %s163 = ssub.s32 %s9, 1
      %s164 = smul.u32 2, %s19
      %p165 = scmp.lt.s32.totalorder %s18, 1
      %s166 = scalar_select %p165, %s18, 1
      %p167 = scmp.lt.s32.totalorder %s164, 1
      %s168 = scalar_select %p167, %s164, 1
      %s169 = smul.addr %s166, 2
      %s170 = sadd.s32 %s168, %s169
      %s171 = smul.addr %s170, 4
      %s172 = scalar_lea.vmem %s0, %s171
      %p173 = pneg %p49
      %p174 = pneg %p46
      %p175 = pneg %p70
      %p176 = pneg %p67
      %p177 = pneg %p91
      %p178 = pneg %p88
      %p179 = pneg %p119
      %p180 = pneg %p116
      %s181 = smul.u32 2, %s19
      %p182 = scmp.lt.s32.totalorder %s18, 1
      %s183 = scalar_select %p182, %s18, 1
      %p184 = scmp.lt.s32.totalorder %s181, 1
      %s185 = scalar_select %p184, %s181, 1
      %s186 = smul.addr %s183, 2
      %s187 = sadd.s32 %s185, %s186
      %s188 = smul.addr %s187, 4
      %s189 = scalar_lea.vmem %s3, %s188
      %s190 = smul.u32 2, %s19
      %p191 = scmp.lt.s32.totalorder %s18, 1
      %s192 = scalar_select %p191, %s18, 1
      %p193 = scmp.lt.s32.totalorder %s190, 1
      %s194 = scalar_select %p193, %s190, 1
      %s195 = smul.addr %s192, 2
      %s196 = sadd.s32 %s194, %s195
      %s197 = smul.addr %s196, 4
      %s198 = scalar_lea.vmem %s0, %s197
      %s199 = smul.u32 2, %s19
      %s200 = smul.u32 2, %s19
      %p201 = scmp.lt.s32.totalorder %s18, 1
      %s202 = scalar_select %p201, %s18, 1
      %p203 = scmp.lt.s32.totalorder %s200, 1
      %s204 = scalar_select %p203, %s200, 1
      %s205 = smul.addr %s202, 2
      %s206 = sadd.s32 %s204, %s205
      %s207 = smul.addr %s206, 4
      %s208 = scalar_lea.vmem %s3, %s207
      %s209 = smul.u32 2, %s19
      %v211 = vld [vmem:[%s198] sm:$0xf]
      %v212 = vld [vmem:[%s198 + $0x4] sm:$0xf]
      %v213 = vld [vmem:[%s1] sm:$0xf]
      %v214 = vld [vmem:[%s1 + $0x4] sm:$0xf]
      %v215 = vld [vmem:[%s2] sm:$0x1]
      %v217 = vlaneseq
      %v218 = vshrl.u32 %v217, 7
      %v219 = vsub.s32 0, %v218
      %v220 = vrot.slane %v215, %v219
      %v224 = vunpack.c.l.b16 %v211
      %v225 = vunpack.c.l.b16 %v212
      %v226 = vpack.c.b16 %v225, %v224
      %v229 = vunpack.c.l.b16 %v213
      %v230 = vunpack.c.l.b16 %v214
      %v231 = vpack.c.b16 %v230, %v229
      %vm233 = vcmask 130048
      %v235 = vsel %vm233, %v226, 0
      %237 = vmatprep.subr.bf16.mxu0 0
      %238 = vmatpush1.bf16.msra.mxu0 0
      %239 = vmatprep.subr.bf16.mxu0 0
      %240 = vmatpush1.bf16.msra.mxu0 0
      %241 = vmatprep.subr.bf16.mxu0 0
      %242 = vmatpush1.bf16.msra.mxu0 0
      %243 = vmatprep.subr.bf16.mxu0 0
      %244 = vmatpush1.bf16.msra.mxu0 0
      %245 = vmatprep.subr.bf16.mxu0 0
      %246 = vmatpush1.bf16.msra.mxu0 0
      %247 = vmatprep.subr.bf16.mxu0 0
      %248 = vmatpush1.bf16.msra.mxu0 0
      %249 = vmatprep.subr.bf16.mxu0 0
      %250 = vmatpush1.bf16.msra.mxu0 0
      %251 = vmatprep.subr.bf16.mxu0 0
      %252 = vmatpush1.bf16.msra.mxu0 %v231
      %253 = vmatprep.subr.bf16.mxu0 0
      %254 = vmatpush2.bf16.msra.mxu0 0
      %255 = vmatprep.subr.bf16.mxu0 0
      %256 = vmatpush2.bf16.msra.mxu0 0
      %257 = vmatprep.subr.bf16.mxu0 0
      %258 = vmatpush2.bf16.msra.mxu0 0
      %259 = vmatprep.subr.bf16.mxu0 0
      %260 = vmatpush2.bf16.msra.mxu0 0
      %261 = vmatprep.subr.bf16.mxu0 0
      %262 = vmatpush2.bf16.msra.mxu0 0
      %263 = vmatprep.subr.bf16.mxu0 0
      %264 = vmatpush2.bf16.msra.mxu0 0
      %265 = vmatprep.subr.bf16.mxu0 0
      %266 = vmatpush2.bf16.msra.mxu0 0
      %267 = vmatprep.subr.bf16.mxu0 0
      %268 = vmatpush2.bf16.msra.mxu0 0
      %269 = vmatprep.mubr.bf16.mxu0 0
      %270 = vmatmul.mubr.bf16.gmra.mxu0 %v235
      %v271 = vpop.f32.mrf.mxu0
      %v272 = vadd.f32 %v220, %v271
      %v273 = vpop.f32.mrf.mxu0
      %v274 = vpop.f32.mrf.mxu0
      %v275 = vadd.f32 %v220, %v274
      %v276 = vpop.f32.mrf.mxu0
      %277 = vdwg.mxu0
      %v278 = vmax.f32 %v272, 0.0
      %v279 = vmax.f32 %v275, 0.0
      %v280 = vpack.c.bf16 %v279, %v278
      %v282 = vunpack.c.l.b16 %v280
      %v283 = vunpack.c.h.b16 %v280
      %v284 = vpack.c.b16 %v282, %v282
      %v285 = vpack.c.b16 %v283, %v283
      %vm288 = vcmask 584704
      %289 = vst.msk [vmem:[%s208] sm:$0xf] %vm288, %v284
      %290 = vst.msk [vmem:[%s208 + $0x4] sm:$0xf] %vm288, %v285
      %s291 = smul.u32 2, %s19
      %p292 = scmp.lt.s32.totalorder %s18, 1
      %s293 = scalar_select %p292, %s18, 1
      %p294 = scmp.lt.s32.totalorder %s291, 1
      %s295 = scalar_select %p294, %s291, 1
      %s296 = smul.addr %s293, 2
      %s297 = sadd.s32 %s295, %s296
      %s298 = smul.addr %s297, 4
      %s299 = scalar_lea.vmem %s3, %s298
      // Predicated region
      $region33: #{_lambda_.13} parent=31 // pred_check
        %p300 = pneg %p116
      $region34: #{_lambda_.13} parent=31 // pred_check_branch
        %302 = sbr.rel (%p300) target = $region36
      $region35: #{_lambda_.13} parent=31 // pred_region
        %s303 = smul.u32 2, %s19
      $region36: #{_lambda_.13} parent=31 // pred_fallthru
        _
    $region32: #{_lambda_.13} parent=5 // pred_fallthru
      _
    %p304 = scmp.le.s32.totalorder 2, %s9
    // Predicated region
    $region37: #{_lambda_.13} parent=5 // pred_check
      %p305 = pneg %p304
    $region38: #{_lambda_.13} parent=5 // pred_check_branch
      %307 = sbr.rel (%p305) target = $region40
    $region39: #{_lambda_.13} parent=5 // pred_region
      %s308 = ssub.s32 %s9, 2
      // Predicated region
      $region41: #{_lambda_.13} parent=39 // pred_check
        %p309 = pneg %p122
      $region42: #{_lambda_.13} parent=39 // pred_check_branch
        %311 = sbr.rel (%p309) target = $region44
      $region43: #{_lambda_.13} parent=39 // pred_region
        %s312 = smul.u32 2, %s21
        %p313 = scmp.lt.s32.totalorder %s20, 1
        %s314 = scalar_select %p313, %s20, 1
        %p315 = scmp.lt.s32.totalorder %s312, 1
        %s316 = scalar_select %p315, %s312, 1
        %s317 = smul.addr %s314, 2
        %s318 = sadd.s32 %s316, %s317
        %s319 = smul.addr %s318, 4
        %s320 = scalar_lea.vmem %s3, %s319
      $region44: #{_lambda_.13} parent=39 // pred_fallthru
        _
    $region40: #{_lambda_.13} parent=5 // pred_fallthru
      _
  $region6: #{_lambda_.13} parent=0 // loop_footer
    %s13 = sadd.s32 1, %s9
  $region7: #{_lambda_.13} parent=0 // loop_footer_branch
    %8 = sbr.rel target = $region3
  $region8: #{_lambda_.13} parent=0 // loop_exit
    _

// kernel: _lambda_.11
$region0: #{_lambda_.11}
  #allocation0 [shape = 'u32[]', space=smem, size = 0x4, offset = 0x4, fixed_abs, tag = 'smem constant byte address 0x4 - core index']
  #allocation1 [shape = 'u32[144,128]{1,0:T(1,128)}', space=vmem, size = 0x12000, scoped, tag = 'internal scratch']
  %s0 = inlined_call_operand.vmem [shape: bf16[2,20,5,16], index: 0, kind: input, shape index: {}]
  %s1 = inlined_call_operand.vmem [shape: f32[9,16], index: 1, kind: input, shape index: {}]
  %s2 = inlined_call_operand.vmem [shape: f32[1,16], index: 2, kind: input, shape index: {}, may-alias: {2,6}]
  %s3 = inlined_call_operand.vmem [shape: f32[16,8], index: 3, kind: input, shape index: {}]
  %s4 = inlined_call_operand.vmem [shape: f32[1,8], index: 4, kind: input, shape index: {}]
  %s5 = inlined_call_operand.vmem [shape: f32[8,16], index: 5, kind: input, shape index: {}]
  %s6 = inlined_call_operand.vmem [shape: f32[1,16], index: 6, kind: input, shape index: {}, may-alias: {2,6}]
  %s7 = inlined_call_operand.vmem [shape: bf16[2,4,4,16], index: 7, kind: output, shape index: {0}]
  %s8 = inlined_call_operand.vmem [shape: f32[2,1,16], index: 8, kind: output, shape index: {1}]
  %9 = xla_tuple %s7, %s8
  %s10 = sld [smem:[#allocation0]]
  $region77: #{_lambda_.11} parent=0
    _
  %s12 = ssub.s32 1, %s10
  %s13 = scalar_select 0, %s12, %s10
  loop: start=0, step=1, limit=4
  $region2: #{_lambda_.11} parent=0 // loop_pre_header
    _
  $region3: #{_lambda_.11} parent=0 // loop_header
    %s15 = sphi 0, %s19
    %p16 = scmp.ge.s32.totalorder %s15, 4
    %s22 = sphi 0, %s34
    %s23 = sphi 0, %s30
    %s24 = sphi 0, %s22
    %s25 = sphi 0, %s23
    %s26 = sphi 0, %s24
    %s27 = sphi 0, %s25
    %s37 = sphi 0, %s39
    %s40 = sphi 0, %s37
    %s41 = sphi 0, %s40
    %s57 = sphi 0, %s41
    %s61 = sphi 0, %s61
    %s63 = sphi 0, %s61
    %s64 = sphi 0, %s63
    %s78 = sphi 0, %s64
    %s82 = sphi 0, %s82
    %s84 = sphi 0, %s82
    %s85 = sphi 0, %s84
    %s99 = sphi 0, %s85
    %s103 = sphi 0, %s103
    %s105 = sphi 0, %s103
    %s106 = sphi 0, %s105
    %s120 = sphi 0, %s106
    %s124 = sphi 0, %s124
    %s126 = sphi 0, %s124
    %s127 = sphi 0, %s126
    %s141 = sphi 0, %s127
    %s145 = sphi 0, %s145
    %s147 = sphi 0, %s145
    %s148 = sphi 0, %s147
    %s162 = sphi 0, %s148
    %s166 = sphi 0, %s166
    %s168 = sphi 0, %s166
    %s169 = sphi 0, %s168
    %s183 = sphi 0, %s169
    %s191 = sphi 0, %s193
    %s194 = sphi 0, %s191
    %s195 = sphi 0, %s194
    %s211 = sphi 0, %s195
    %s217 = sphi 0, %s219
    %s220 = sphi 0, %s217
    %s221 = sphi 0, %s220
    %s237 = sphi 0, %s221
  $region4: #{_lambda_.11} parent=0 // loop_header_branch
    %18 = sbr.rel (%p16) target = $region8
  $region5: #{_lambda_.11} parent=0 // loop_body
    %s20 = ssub.s32 %s15, 1
    %s21 = ssub.s32 %s15, 2
    %s28 = sadd.s32 1, %s23
    %p29 = scmp.ge.s32.totalorder %s28, 1
    %s30 = scalar_select %p29, 0, %s28
    %s31 = sadd.s32 1, %s22
    %s32 = scalar_select %p29, %s31, %s22
    %p33 = scmp.ge.s32.totalorder %s32, 2
    %s34 = scalar_select %p33, 0, %s32
    %s35 = ssub.s32 %s22, %s34
    %p36 = scmp.eq.s32.totalorder %s35, 0
    %s38 = sadd.s32 %s37, 1
    %s39 = scalar_select %p36, %s37, %s38
    %p42 = pneg %p36
    %p43 = scmp.eq.s32.totalorder %s15, 1
    %p44 = por %p42, %p43
    %p45 = scmp.ne.s32.totalorder %s37, %s40
    %p46 = scmp.eq.s32.totalorder %s15, 0
    %p47 = por %p45, %p46
    %p48 = scmp.ne.s32.totalorder %s37, %s40
    %p49 = scmp.eq.s32.totalorder %s20, 1
    %p50 = por %p48, %p49
    %p51 = scmp.ne.s32.totalorder %s40, %s41
    %p52 = scmp.eq.s32.totalorder %s20, 0
    %p53 = por %p51, %p52
    %p54 = scmp.ne.s32.totalorder %s40, %s41
    %p55 = scmp.eq.s32.totalorder %s21, 1
    %p56 = por %p54, %p55
    %p58 = scmp.ne.s32.totalorder %s41, %s57
    %p59 = scmp.eq.s32.totalorder %s21, 0
    %p60 = por %p58, %p59
    %s62 = sadd.s32 %s61, 1
    %p65 = scmp.eq.s32.totalorder %s15, 1
    %p66 = scmp.ne.s32.totalorder %s61, %s63
    %p67 = scmp.eq.s32.totalorder %s15, 0
    %p68 = por %p66, %p67
    %p69 = scmp.ne.s32.totalorder %s61, %s63
    %p70 = scmp.eq.s32.totalorder %s20, 1
    %p71 = por %p69, %p70
    %p72 = scmp.ne.s32.totalorder %s63, %s64
    %p73 = scmp.eq.s32.totalorder %s20, 0
    %p74 = por %p72, %p73
    %p75 = scmp.ne.s32.totalorder %s63, %s64
    %p76 = scmp.eq.s32.totalorder %s21, 1
    %p77 = por %p75, %p76
    %p79 = scmp.ne.s32.totalorder %s64, %s78
    %p80 = scmp.eq.s32.totalorder %s21, 0
    %p81 = por %p79, %p80
    %s83 = sadd.s32 %s82, 1
    %p86 = scmp.eq.s32.totalorder %s15, 1
    %p87 = scmp.ne.s32.totalorder %s82, %s84
    %p88 = scmp.eq.s32.totalorder %s15, 0
    %p89 = por %p87, %p88
    %p90 = scmp.ne.s32.totalorder %s82, %s84
    %p91 = scmp.eq.s32.totalorder %s20, 1
    %p92 = por %p90, %p91
    %p93 = scmp.ne.s32.totalorder %s84, %s85
    %p94 = scmp.eq.s32.totalorder %s20, 0
    %p95 = por %p93, %p94
    %p96 = scmp.ne.s32.totalorder %s84, %s85
    %p97 = scmp.eq.s32.totalorder %s21, 1
    %p98 = por %p96, %p97
    %p100 = scmp.ne.s32.totalorder %s85, %s99
    %p101 = scmp.eq.s32.totalorder %s21, 0
    %p102 = por %p100, %p101
    %s104 = sadd.s32 %s103, 1
    %p107 = scmp.eq.s32.totalorder %s15, 1
    %p108 = scmp.ne.s32.totalorder %s103, %s105
    %p109 = scmp.eq.s32.totalorder %s15, 0
    %p110 = por %p108, %p109
    %p111 = scmp.ne.s32.totalorder %s103, %s105
    %p112 = scmp.eq.s32.totalorder %s20, 1
    %p113 = por %p111, %p112
    %p114 = scmp.ne.s32.totalorder %s105, %s106
    %p115 = scmp.eq.s32.totalorder %s20, 0
    %p116 = por %p114, %p115
    %p117 = scmp.ne.s32.totalorder %s105, %s106
    %p118 = scmp.eq.s32.totalorder %s21, 1
    %p119 = por %p117, %p118
    %p121 = scmp.ne.s32.totalorder %s106, %s120
    %p122 = scmp.eq.s32.totalorder %s21, 0
    %p123 = por %p121, %p122
    %s125 = sadd.s32 %s124, 1
    %p128 = scmp.eq.s32.totalorder %s15, 1
    %p129 = scmp.ne.s32.totalorder %s124, %s126
    %p130 = scmp.eq.s32.totalorder %s15, 0
    %p131 = por %p129, %p130
    %p132 = scmp.ne.s32.totalorder %s124, %s126
    %p133 = scmp.eq.s32.totalorder %s20, 1
    %p134 = por %p132, %p133
    %p135 = scmp.ne.s32.totalorder %s126, %s127
    %p136 = scmp.eq.s32.totalorder %s20, 0
    %p137 = por %p135, %p136
    %p138 = scmp.ne.s32.totalorder %s126, %s127
    %p139 = scmp.eq.s32.totalorder %s21, 1
    %p140 = por %p138, %p139
    %p142 = scmp.ne.s32.totalorder %s127, %s141
    %p143 = scmp.eq.s32.totalorder %s21, 0
    %p144 = por %p142, %p143
    %s146 = sadd.s32 %s145, 1
    %p149 = scmp.eq.s32.totalorder %s15, 1
    %p150 = scmp.ne.s32.totalorder %s145, %s147
    %p151 = scmp.eq.s32.totalorder %s15, 0
    %p152 = por %p150, %p151
    %p153 = scmp.ne.s32.totalorder %s145, %s147
    %p154 = scmp.eq.s32.totalorder %s20, 1
    %p155 = por %p153, %p154
    %p156 = scmp.ne.s32.totalorder %s147, %s148
    %p157 = scmp.eq.s32.totalorder %s20, 0
    %p158 = por %p156, %p157
    %p159 = scmp.ne.s32.totalorder %s147, %s148
    %p160 = scmp.eq.s32.totalorder %s21, 1
    %p161 = por %p159, %p160
    %p163 = scmp.ne.s32.totalorder %s148, %s162
    %p164 = scmp.eq.s32.totalorder %s21, 0
    %p165 = por %p163, %p164
    %s167 = sadd.s32 %s166, 1
    %p170 = scmp.eq.s32.totalorder %s15, 1
    %p171 = scmp.ne.s32.totalorder %s166, %s168
    %p172 = scmp.eq.s32.totalorder %s15, 0
    %p173 = por %p171, %p172
    %p174 = scmp.ne.s32.totalorder %s166, %s168
    %p175 = scmp.eq.s32.totalorder %s20, 1
    %p176 = por %p174, %p175
    %p177 = scmp.ne.s32.totalorder %s168, %s169
    %p178 = scmp.eq.s32.totalorder %s20, 0
    %p179 = por %p177, %p178
    %p180 = scmp.ne.s32.totalorder %s168, %s169
    %p181 = scmp.eq.s32.totalorder %s21, 1
    %p182 = por %p180, %p181
    %p184 = scmp.ne.s32.totalorder %s169, %s183
    %p185 = scmp.eq.s32.totalorder %s21, 0
    %p186 = por %p184, %p185
    %s187 = ssub.s32 %s22, %s34
    %s188 = ssub.s32 %s23, %s30
    %s189 = sor.u32 %s187, %s188
    %p190 = scmp.eq.s32.totalorder %s189, 0
    %s192 = sadd.s32 %s191, 1
    %s193 = scalar_select %p190, %s191, %s192
    %p196 = pneg %p190
    %p197 = scmp.eq.s32.totalorder %s15, 1
    %p198 = por %p196, %p197
    %p199 = scmp.ne.s32.totalorder %s191, %s194
    %p200 = scmp.eq.s32.totalorder %s15, 0
    %p201 = por %p199, %p200
    %p202 = scmp.ne.s32.totalorder %s191, %s194
    %p203 = scmp.eq.s32.totalorder %s20, 1
    %p204 = por %p202, %p203
    %p205 = scmp.ne.s32.totalorder %s194, %s195
    %p206 = scmp.eq.s32.totalorder %s20, 0
    %p207 = por %p205, %p206
    %p208 = scmp.ne.s32.totalorder %s194, %s195
    %p209 = scmp.eq.s32.totalorder %s21, 1
    %p210 = por %p208, %p209
    %p212 = scmp.ne.s32.totalorder %s195, %s211
    %p213 = scmp.eq.s32.totalorder %s21, 0
    %p214 = por %p212, %p213
    %s215 = ssub.s32 %s22, %s34
    %p216 = scmp.eq.s32.totalorder %s215, 0
    %s218 = sadd.s32 %s217, 1
    %s219 = scalar_select %p216, %s217, %s218
    %p222 = pneg %p216
    %p223 = scmp.eq.s32.totalorder %s15, 1
    %p224 = por %p222, %p223
    %p225 = scmp.ne.s32.totalorder %s217, %s220
    %p226 = scmp.eq.s32.totalorder %s15, 0
    %p227 = por %p225, %p226
    %p228 = scmp.ne.s32.totalorder %s217, %s220
    %p229 = scmp.eq.s32.totalorder %s20, 1
    %p230 = por %p228, %p229
    %p231 = scmp.ne.s32.totalorder %s220, %s221
    %p232 = scmp.eq.s32.totalorder %s20, 0
    %p233 = por %p231, %p232
    %p234 = scmp.ne.s32.totalorder %s220, %s221
    %p235 = scmp.eq.s32.totalorder %s21, 1
    %p236 = por %p234, %p235
    %p238 = scmp.ne.s32.totalorder %s221, %s237
    %p239 = scmp.eq.s32.totalorder %s21, 0
    %p240 = por %p238, %p239
    %p241 = scmp.le.s32.totalorder 1, %s15
    %p242 = scmp.lt.s32.totalorder %s15, 3
    %p243 = pnand %p241, %p242
    %p244 = pneg %p243
    // Predicated region
    $region9: #{_lambda_.11} parent=5 // pred_check
      _
    $region10: #{_lambda_.11} parent=5 // pred_check_branch
      %246 = sbr.rel (%p243) target = $region12
    $region11: #{_lambda_.11} parent=5 // pred_region
      %s247 = ssub.s32 %s15, 1
      // Predicated region
      $region13: #{_lambda_.11} parent=11 // pred_check
        %p248 = pneg %p74
      $region14: #{_lambda_.11} parent=11 // pred_check_branch
        %250 = sbr.rel (%p248) target = $region16
      $region15: #{_lambda_.11} parent=11 // pred_region
        _
      $region16: #{_lambda_.11} parent=11 // pred_fallthru
        _
      // Predicated region
      $region17: #{_lambda_.11} parent=11 // pred_check
        %p251 = pneg %p95
      $region18: #{_lambda_.11} parent=11 // pred_check_branch
        %253 = sbr.rel (%p251) target = $region20
      $region19: #{_lambda_.11} parent=11 // pred_region
        _
      $region20: #{_lambda_.11} parent=11 // pred_fallthru
        _
      // Predicated region
      $region21: #{_lambda_.11} parent=11 // pred_check
        %p254 = pneg %p116
      $region22: #{_lambda_.11} parent=11 // pred_check_branch
        %256 = sbr.rel (%p254) target = $region24
      $region23: #{_lambda_.11} parent=11 // pred_region
        _
      $region24: #{_lambda_.11} parent=11 // pred_fallthru
        _
      // Predicated region
      $region25: #{_lambda_.11} parent=11 // pred_check
        %p257 = pneg %p137
      $region26: #{_lambda_.11} parent=11 // pred_check_branch
        %259 = sbr.rel (%p257) target = $region28
      $region27: #{_lambda_.11} parent=11 // pred_region
        _
      $region28: #{_lambda_.11} parent=11 // pred_fallthru
        _
      // Predicated region
      $region29: #{_lambda_.11} parent=11 // pred_check
        %p260 = pneg %p158
      $region30: #{_lambda_.11} parent=11 // pred_check_branch
        %262 = sbr.rel (%p260) target = $region32
      $region31: #{_lambda_.11} parent=11 // pred_region
        _
      $region32: #{_lambda_.11} parent=11 // pred_fallthru
        _
      // Predicated region
      $region33: #{_lambda_.11} parent=11 // pred_check
        %p263 = pneg %p179
      $region34: #{_lambda_.11} parent=11 // pred_check_branch
        %265 = sbr.rel (%p263) target = $region36
      $region35: #{_lambda_.11} parent=11 // pred_region
        _
      $region36: #{_lambda_.11} parent=11 // pred_fallthru
        _
    $region12: #{_lambda_.11} parent=5 // pred_fallthru
      _
    %p266 = scmp.lt.s32.totalorder %s15, 2
    // Predicated region
    $region37: #{_lambda_.11} parent=5 // pred_check
      %p267 = pneg %p266
    $region38: #{_lambda_.11} parent=5 // pred_check_branch
      %269 = sbr.rel (%p267) target = $region40
    $region39: #{_lambda_.11} parent=5 // pred_region
      // Predicated region
      $region41: #{_lambda_.11} parent=39 // pred_check
        %p270 = pneg %p47
      $region42: #{_lambda_.11} parent=39 // pred_check_branch
        %272 = sbr.rel (%p270) target = $region44
      $region43: #{_lambda_.11} parent=39 // pred_region
        %p273 = scmp.lt.s32.totalorder %s22, 1
        %s274 = scalar_select %p273, %s22, 1
        %s275 = smul.addr %s274, 20
        %s276 = smul.addr %s275, 4
        %s277 = scalar_lea.vmem %s0, %s276
      $region44: #{_lambda_.11} parent=39 // pred_fallthru
        _
    $region40: #{_lambda_.11} parent=5 // pred_fallthru
      _
    %p278 = scmp.le.s32.totalorder 1, %s15
    %p279 = scmp.lt.s32.totalorder %s15, 3
    %p280 = pnand %p278, %p279
    %p281 = pneg %p280
    // Predicated region
    $region45: #{_lambda_.11} parent=5 // pred_check
      _
    $region46: #{_lambda_.11} parent=5 // pred_check_branch
      %283 = sbr.rel (%p280) target = $region48
    $region47: #{_lambda_.11} parent=5 // pred_region
      %s284 = ssub.s32 %s15, 1
      %p285 = scmp.lt.s32.totalorder %s24, 1
      %s286 = scalar_select %p285, %s24, 1
      %s287 = smul.addr %s286, 20
      %s288 = smul.addr %s287, 4
      %s289 = scalar_lea.vmem %s0, %s288
      %p290 = pneg %p53
      %p291 = pneg %p50
      %p292 = pneg %p74
      %p293 = pneg %p71
      %p294 = pneg %p95
      %p295 = pneg %p92
      %p296 = pneg %p116
      %p297 = pneg %p113
      %p298 = pneg %p137
      %p299 = pneg %p134
      %p300 = pneg %p158
      %p301 = pneg %p155
      %p302 = pneg %p179
      %p303 = pneg %p176
      %p304 = pneg %p207
      %p305 = pneg %p204
      %s306 = smul.u32 4, %s25
      %p307 = scmp.lt.s32.totalorder %s24, 1
      %s308 = scalar_select %p307, %s24, 1
      %p309 = scmp.lt.s32.totalorder %s306, 3
      %s310 = scalar_select %p309, %s306, 3
      %s311 = smul.addr %s308, 4
      %s312 = sadd.s32 %s310, %s311
      %s313 = smul.addr %s312, 2
      %s314 = scalar_lea.vmem %s7, %s313
      %p315 = pneg %p233
      %p316 = pneg %p230
      %p317 = scmp.lt.s32.totalorder %s24, 1
      %s318 = scalar_select %p317, %s24, 1
      %s319 = scalar_lea.vmem %s8, %s318
      %p320 = scmp.lt.s32.totalorder %s24, 1
      %s321 = scalar_select %p320, %s24, 1
      %s322 = smul.addr %s321, 20
      %s323 = smul.addr %s322, 4
      %s324 = scalar_lea.vmem %s0, %s323
      %s325 = smul.u32 4, %s25
      %p326 = scmp.lt.s32.totalorder %s24, 1
      %s327 = scalar_select %p326, %s24, 1
      %p328 = scmp.lt.s32.totalorder %s325, 3
      %s329 = scalar_select %p328, %s325, 3
      %s330 = smul.addr %s327, 4
      %s331 = sadd.s32 %s329, %s330
      %s332 = smul.addr %s331, 2
      %s333 = scalar_lea.vmem %s7, %s332
      %s334 = smul.u32 4, %s25
      %p335 = scmp.lt.s32.totalorder %s24, 1
      %s336 = scalar_select %p335, %s24, 1
      %s337 = scalar_lea.vmem %s8, %s336
      %s338 = smul.u32 %s25, 4
      %v339 = vld [vmem:[%s1] sm:$0xff]
      %v340 = vld [vmem:[%s1 + $0x8] sm:$0x1]
      %s341 = smul.addr %s338, 4
      %s342 = scalar_lea.vmem %s324, %s341
      %v343 = vld [vmem:[%s342] sm:$0x3]
      %v344 = vld [vmem:[%s342 + $0x4] sm:$0x3]
      %v345 = vld [vmem:[%s342 + $0x8] sm:$0x3]
      %v346 = vld [vmem:[%s342 + $0xc] sm:$0x3]
      %v347 = vunpack.c.l.bf16 %v343
      %v348 = vunpack.c.l.bf16 %v344
      %v349 = vunpack.c.l.bf16 %v345
      %v350 = vunpack.c.l.bf16 %v346
      %v351 = vlaneseq
      %v352 = vshrl.u32 %v351, 7
      %v353 = vsub.s32 0, %v352
      %v354 = vrot.slane %v339, %v353
      %v355 = vmul.f32 %v347, %v354
      %v356 = vmul.f32 %v348, %v354
      %v357 = vmul.f32 %v349, %v354
      %v358 = vmul.f32 %v350, %v354
      %v359 = vadd.f32 %v355, 0.0
      %v360 = vadd.f32 %v356, 0.0
      %v361 = vadd.f32 %v357, 0.0
      %v362 = vadd.f32 %v358, 0.0
      %s363 = sadd.s32 %s338, 5
      %s364 = smul.addr %s363, 4
      %s365 = scalar_lea.vmem %s324, %s364
      %v366 = vld [vmem:[%s365] sm:$0x3]
      %v367 = vld [vmem:[%s365 + $0x4] sm:$0x3]
      %v368 = vld [vmem:[%s365 + $0x8] sm:$0x3]
      %v369 = vld [vmem:[%s365 + $0xc] sm:$0x3]
      %v370 = vunpack.c.l.bf16 %v366
      %v371 = vunpack.c.l.bf16 %v367
      %v372 = vunpack.c.l.bf16 %v368
      %v373 = vunpack.c.l.bf16 %v369
      %v374 = vlaneseq
      %v375 = vshrl.u32 %v374, 7
      %v376 = vsub.s32 1, %v375
      %v377 = vrot.slane %v339, %v376
      %v378 = vmul.f32 %v370, %v377
      %v379 = vmul.f32 %v371, %v377
      %v380 = vmul.f32 %v372, %v377
      %v381 = vmul.f32 %v373, %v377
      %v382 = vadd.f32 %v359, %v378
      %v383 = vadd.f32 %v360, %v379
      %v384 = vadd.f32 %v361, %v380
      %v385 = vadd.f32 %v362, %v381
      %v386 = vld [vmem:[%s342] sm:$0x7]
      %v387 = vld [vmem:[%s342 + $0x4] sm:$0x7]
      %v388 = vld [vmem:[%s342 + $0x8] sm:$0x7]
      %v389 = vld [vmem:[%s342 + $0xc] sm:$0x7]
      %v390 = vunpack.c.l.bf16 %v386
      %v391 = vunpack.c.l.bf16 %v387
      %v392 = vunpack.c.l.bf16 %v388
      %v393 = vunpack.c.l.bf16 %v389
      %v394 = vlaneseq
      %v395 = vshrl.u32 %v394, 7
      %v396 = vsub.s32 2, %v395
      %v397 = vrot.slane %v339, %v396
      %v398 = vmul.f32 %v390, %v397
      %v399 = vmul.f32 %v391, %v397
      %v400 = vmul.f32 %v392, %v397
      %v401 = vmul.f32 %v393, %v397
      %v406 = vrot.slane %v398, 1
      %v407 = vrot.slane %v399, 1
      %v408 = vrot.slane %v400, 1
      %v409 = vrot.slane %v401, 1
      %v414 = vadd.f32 %v382, %v406
      %v415 = vadd.f32 %v383, %v407
      %v416 = vadd.f32 %v384, %v408
      %v417 = vadd.f32 %v385, %v409
      %s418 = sadd.s32 %s338, 10
      %s419 = smul.addr %s418, 4
      %s420 = scalar_lea.vmem %s324, %s419
      %v421 = vld [vmem:[%s420] sm:$0x3]
      %v422 = vld [vmem:[%s420 + $0x4] sm:$0x3]
      %v423 = vld [vmem:[%s420 + $0x8] sm:$0x3]
      %v424 = vld [vmem:[%s420 + $0xc] sm:$0x3]
      %v425 = vunpack.c.l.bf16 %v421
      %v426 = vunpack.c.l.bf16 %v422
      %v427 = vunpack.c.l.bf16 %v423
      %v428 = vunpack.c.l.bf16 %v424
      %v429 = vlaneseq
      %v430 = vshrl.u32 %v429, 7
      %v431 = vsub.s32 3, %v430
      %v432 = vrot.slane %v339, %v431
      %v433 = vmul.f32 %v425, %v432
      %v434 = vmul.f32 %v426, %v432
      %v435 = vmul.f32 %v427, %v432
      %v436 = vmul.f32 %v428, %v432
      %v437 = vadd.f32 %v414, %v433
      %v438 = vadd.f32 %v415, %v434
      %v439 = vadd.f32 %v416, %v435
      %v440 = vadd.f32 %v417, %v436
      %s441 = sadd.s32 %s338, 15
      %s442 = smul.addr %s441, 4
      %s443 = scalar_lea.vmem %s324, %s442
      %v444 = vld [vmem:[%s443] sm:$0x3]
      %v445 = vld [vmem:[%s443 + $0x4] sm:$0x3]
      %v446 = vld [vmem:[%s443 + $0x8] sm:$0x3]
      %v447 = vld [vmem:[%s443 + $0xc] sm:$0x3]
      %v448 = vunpack.c.l.bf16 %v444
      %v449 = vunpack.c.l.bf16 %v445
      %v450 = vunpack.c.l.bf16 %v446
      %v451 = vunpack.c.l.bf16 %v447
      %v452 = vlaneseq
      %v453 = vshrl.u32 %v452, 7
      %v454 = vsub.s32 4, %v453
      %v455 = vrot.slane %v339, %v454
      %v456 = vmul.f32 %v448, %v455
      %v457 = vmul.f32 %v449, %v455
      %v458 = vmul.f32 %v450, %v455
      %v459 = vmul.f32 %v451, %v455
      %v460 = vadd.f32 %v437, %v456
      %v461 = vadd.f32 %v438, %v457
      %v462 = vadd.f32 %v439, %v458
      %v463 = vadd.f32 %v440, %v459
      %v464 = vld [vmem:[%s420] sm:$0x7]
      %v465 = vld [vmem:[%s420 + $0x4] sm:$0x7]
      %v466 = vld [vmem:[%s420 + $0x8] sm:$0x7]
      %v467 = vld [vmem:[%s420 + $0xc] sm:$0x7]
      %v468 = vunpack.c.l.bf16 %v464
      %v469 = vunpack.c.l.bf16 %v465
      %v470 = vunpack.c.l.bf16 %v466
      %v471 = vunpack.c.l.bf16 %v467
      %v472 = vlaneseq
      %v473 = vshrl.u32 %v472, 7
      %v474 = vsub.s32 5, %v473
      %v475 = vrot.slane %v339, %v474
      %v476 = vmul.f32 %v468, %v475
      %v477 = vmul.f32 %v469, %v475
      %v478 = vmul.f32 %v470, %v475
      %v479 = vmul.f32 %v471, %v475
      %v484 = vrot.slane %v476, 1
      %v485 = vrot.slane %v477, 1
      %v486 = vrot.slane %v478, 1
      %v487 = vrot.slane %v479, 1
      %v492 = vadd.f32 %v460, %v484
      %v493 = vadd.f32 %v461, %v485
      %v494 = vadd.f32 %v462, %v486
      %v495 = vadd.f32 %v463, %v487
      %s496 = sadd.s32 %s338, 1
      %s497 = smul.addr %s496, 4
      %s498 = scalar_lea.vmem %s324, %s497
      %v499 = vld [vmem:[%s498] sm:$0x3]
      %v500 = vld [vmem:[%s498 + $0x4] sm:$0x3]
      %v501 = vld [vmem:[%s498 + $0x8] sm:$0x3]
      %v502 = vld [vmem:[%s498 + $0xc] sm:$0x3]
      %v503 = vunpack.c.l.bf16 %v499
      %v504 = vunpack.c.l.bf16 %v500
      %v505 = vunpack.c.l.bf16 %v501
      %v506 = vunpack.c.l.bf16 %v502
      %v507 = vlaneseq
      %v508 = vshrl.u32 %v507, 7
      %v509 = vsub.s32 6, %v508
      %v510 = vrot.slane %v339, %v509
      %v511 = vmul.f32 %v503, %v510
      %v512 = vmul.f32 %v504, %v510
      %v513 = vmul.f32 %v505, %v510
      %v514 = vmul.f32 %v506, %v510
      %v515 = vadd.f32 %v492, %v511
      %v516 = vadd.f32 %v493, %v512
      %v517 = vadd.f32 %v494, %v513
      %v518 = vadd.f32 %v495, %v514
      %s519 = sadd.s32 %s338, 6
      %s520 = smul.addr %s519, 4
      %s521 = scalar_lea.vmem %s324, %s520
      %v522 = vld [vmem:[%s521] sm:$0x3]
      %v523 = vld [vmem:[%s521 + $0x4] sm:$0x3]
      %v524 = vld [vmem:[%s521 + $0x8] sm:$0x3]
      %v525 = vld [vmem:[%s521 + $0xc] sm:$0x3]
      %v526 = vunpack.c.l.bf16 %v522
      %v527 = vunpack.c.l.bf16 %v523
      %v528 = vunpack.c.l.bf16 %v524
      %v529 = vunpack.c.l.bf16 %v525
      %v530 = vlaneseq
      %v531 = vshrl.u32 %v530, 7
      %v532 = vsub.s32 7, %v531
      %v533 = vrot.slane %v339, %v532
      %v534 = vmul.f32 %v526, %v533
      %v535 = vmul.f32 %v527, %v533
      %v536 = vmul.f32 %v528, %v533
      %v537 = vmul.f32 %v529, %v533
      %v538 = vadd.f32 %v515, %v534
      %v539 = vadd.f32 %v516, %v535
      %v540 = vadd.f32 %v517, %v536
      %v541 = vadd.f32 %v518, %v537
      %v542 = vld [vmem:[%s498] sm:$0x7]
      %v543 = vld [vmem:[%s498 + $0x4] sm:$0x7]
      %v544 = vld [vmem:[%s498 + $0x8] sm:$0x7]
      %v545 = vld [vmem:[%s498 + $0xc] sm:$0x7]
      %v546 = vunpack.c.l.bf16 %v542
      %v547 = vunpack.c.l.bf16 %v543
      %v548 = vunpack.c.l.bf16 %v544
      %v549 = vunpack.c.l.bf16 %v545
      %v550 = vlaneseq
      %v551 = vshrl.u32 %v550, 7
      %v552 = vsub.s32 0, %v551
      %v553 = vrot.slane %v340, %v552
      %v554 = vmul.f32 %v546, %v553
      %v555 = vmul.f32 %v547, %v553
      %v556 = vmul.f32 %v548, %v553
      %v557 = vmul.f32 %v549, %v553
      %v562 = vrot.slane %v554, 1
      %v563 = vrot.slane %v555, 1
      %v564 = vrot.slane %v556, 1
      %v565 = vrot.slane %v557, 1
      %v570 = vadd.f32 %v538, %v562
      %v571 = vadd.f32 %v539, %v563
      %v572 = vadd.f32 %v540, %v564
      %v573 = vadd.f32 %v541, %v565
      %v574 = vld [vmem:[%s2] sm:$0x1]
      %v576 = vlaneseq
      %v577 = vshrl.u32 %v576, 7
      %v578 = vsub.s32 0, %v577
      %v579 = vrot.slane %v574, %v578
      %v581 = vadd.f32 %v570, %v579
      %v582 = vadd.f32 %v571, %v579
      %v583 = vadd.f32 %v572, %v579
      %v584 = vadd.f32 %v573, %v579
      %v585 = vmax.f32 %v581, 0.0
      %v586 = vmax.f32 %v582, 0.0
      %v587 = vmax.f32 %v583, 0.0
      %v588 = vmax.f32 %v584, 0.0
      %v589 = vpack.c.bf16 %v585, %v585
      %v590 = vpack.c.bf16 %v586, %v586
      %v591 = vpack.c.bf16 %v587, %v587
      %v592 = vpack.c.bf16 %v588, %v588
      %vm593 = vcmask 123904
      %594 = vst.msk [vmem:[%s333] sm:$0x3] %vm593, %v589
      %595 = vst.msk [vmem:[%s333 + $0x2] sm:$0x3] %vm593, %v590
      %596 = vst.msk [vmem:[%s333 + $0x4] sm:$0x3] %vm593, %v591
      %597 = vst.msk [vmem:[%s333 + $0x6] sm:$0x3] %vm593, %v592
      %p598 = scmp.eq.s32.totalorder %s25, 0
      // Predicated region
      $region49: #{_lambda_.11} parent=47 // pred_check
        %p599 = pneg %p598
      $region50: #{_lambda_.11} parent=47 // pred_check_branch
        %601 = sbr.rel (%p599) target = $region52
      $region51: #{_lambda_.11} parent=47 // pred_region
        %vm602 = vcmask 122880
        %603 = vst.msk [vmem:[%s337] sm:$0x1] %vm602, 0.0
      $region52: #{_lambda_.11} parent=47 // pred_fallthru
        _
      %v604 = vld [vmem:[%s337] sm:$0x1]
      %vm605 = vcmask 125952
      %v606 = vsel %vm605, %v585, 0.0
      %v607 = vsel %vm605, %v586, 0.0
      %v608 = vadd.f32 %v606, %v607
      %v609 = vsel %vm605, %v587, 0.0
      %v610 = vadd.f32 %v608, %v609
      %v611 = vsel %vm605, %v588, 0.0
      %v612 = vadd.f32 %v610, %v611
      %v613 = vrot.slane %v612, 4
      %v614 = vadd.f32 %v612, %v613
      %v615 = vrot.slane %v614, 2
      %v616 = vadd.f32 %v614, %v615
      %v617 = vrot.slane %v616, 1
      %v618 = vadd.f32 %v616, %v617
      %v619 = vadd.f32 %v604, %v618
      %vm620 = vcmask 122880
      %621 = vst.msk [vmem:[%s337] sm:$0x1] %vm620, %v619
      // Predicated region
      $region53: #{_lambda_.11} parent=47 // pred_check
        %p622 = pneg %p598
      $region54: #{_lambda_.11} parent=47 // pred_check_branch
        %624 = sbr.rel (%p622) target = $region56
      $region55: #{_lambda_.11} parent=47 // pred_region
        %v625 = vld [vmem:[%s337] sm:$0x1]
        %v626 = vmul.f32 %v625, 0.0625
        %v627 = vld [vmem:[%s3] sm:$0xff]
        %v628 = vld [vmem:[%s3 + $0x8] sm:$0xff]
        %v629 = vld [vmem:[%s4] sm:$0x1]
        %vm630 = vcmask 130048
        %v632 = vsel %vm630, %v626, 0
        %634 = vmatprep.subr.mxu0 0.0
        %635 = vmatpush1.msra.mxu0 0.0
        %636 = vmatprep.subr.mxu0 0.0
        %637 = vmatpush1.msra.mxu0 0.0
        %638 = vmatprep.subr.mxu0 0.0
        %639 = vmatpush1.msra.mxu0 0.0
        %640 = vmatprep.subr.mxu0 0.0
        %641 = vmatpush1.msra.mxu0 0.0
        %642 = vmatprep.subr.mxu0 0.0
        %643 = vmatpush1.msra.mxu0 0.0
        %644 = vmatprep.subr.mxu0 0.0
        %645 = vmatpush1.msra.mxu0 0.0
        %646 = vmatprep.subr.mxu0 0.0
        %647 = vmatpush1.msra.mxu0 0.0
        %648 = vmatprep.subr.mxu0 0.0
        %649 = vmatpush1.msra.mxu0 0.0
        %650 = vmatprep.subr.mxu0 0.0
        %651 = vmatpush1.msra.mxu0 0.0
        %652 = vmatprep.subr.mxu0 0.0
        %653 = vmatpush1.msra.mxu0 0.0
        %654 = vmatprep.subr.mxu0 0.0
        %655 = vmatpush1.msra.mxu0 0.0
        %656 = vmatprep.subr.mxu0 0.0
        %657 = vmatpush1.msra.mxu0 0.0
        %658 = vmatprep.subr.mxu0 0.0
        %659 = vmatpush1.msra.mxu0 0.0
        %660 = vmatprep.subr.mxu0 0.0
        %661 = vmatpush1.msra.mxu0 0.0
        %662 = vmatprep.subr.mxu0 0.0
        %663 = vmatpush1.msra.mxu0 %v628
        %664 = vmatprep.subr.mxu0 0.0
        %665 = vmatpush1.msra.mxu0 %v627
        %666 = vmatprep.subr.mxu0 0.0
        %667 = vmatpush2.msra.mxu0 0.0
        %668 = vmatprep.subr.mxu0 0.0
        %669 = vmatpush2.msra.mxu0 0.0
        %670 = vmatprep.subr.mxu0 0.0
        %671 = vmatpush2.msra.mxu0 0.0
        %672 = vmatprep.subr.mxu0 0.0
        %673 = vmatpush2.msra.mxu0 0.0
        %674 = vmatprep.subr.mxu0 0.0
        %675 = vmatpush2.msra.mxu0 0.0
        %676 = vmatprep.subr.mxu0 0.0
        %677 = vmatpush2.msra.mxu0 0.0
        %678 = vmatprep.subr.mxu0 0.0
        %679 = vmatpush2.msra.mxu0 0.0
        %680 = vmatprep.subr.mxu0 0.0
        %681 = vmatpush2.msra.mxu0 0.0
        %682 = vmatprep.subr.mxu0 0.0
        %683 = vmatpush2.msra.mxu0 0.0
        %684 = vmatprep.subr.mxu0 0.0
        %685 = vmatpush2.msra.mxu0 0.0
        %686 = vmatprep.subr.mxu0 0.0
        %687 = vmatpush2.msra.mxu0 0.0
        %688 = vmatprep.subr.mxu0 0.0
        %689 = vmatpush2.msra.mxu0 0.0
        %690 = vmatprep.subr.mxu0 0.0
        %691 = vmatpush2.msra.mxu0 0.0
        %692 = vmatprep.subr.mxu0 0.0
        %693 = vmatpush2.msra.mxu0 0.0
        %694 = vmatprep.subr.mxu0 0.0
        %695 = vmatpush2.msra.mxu0 0.0
        %696 = vmatprep.subr.mxu0 0.0
        %697 = vmatpush2.msra.mxu0 0.0
        %698 = vmatprep.mubr.f32.mxu0 0.0
        %699 = vmatmul.mubr.f32.gmra.mxu0 %v632
        %v700 = vpop.f32.mrf.mxu0
        %v701 = vadd.f32 %v629, %v700
        %v702 = vpop.f32.mrf.mxu0
        %703 = vdwg.mxu0
        %v704 = vmax.f32 %v701, 0.0
        %v705 = vld [vmem:[%s5] sm:$0xff]
        %v706 = vld [vmem:[%s6] sm:$0x1]
        %vm707 = vcmask 64512
        %v709 = vsel %vm707, %v704, 0
        %711 = vmatprep.subr.mxu0 0.0
        %712 = vmatpush1.msra.mxu0 0.0
        %713 = vmatprep.subr.mxu0 0.0
        %714 = vmatpush1.msra.mxu0 0.0
        %715 = vmatprep.subr.mxu0 0.0
        %716 = vmatpush1.msra.mxu0 0.0
        %717 = vmatprep.subr.mxu0 0.0
        %718 = vmatpush1.msra.mxu0 0.0
        %719 = vmatprep.subr.mxu0 0.0
        %720 = vmatpush1.msra.mxu0 0.0
        %721 = vmatprep.subr.mxu0 0.0
        %722 = vmatpush1.msra.mxu0 0.0
        %723 = vmatprep.subr.mxu0 0.0
        %724 = vmatpush1.msra.mxu0 0.0
        %725 = vmatprep.subr.mxu0 0.0
        %726 = vmatpush1.msra.mxu0 0.0
        %727 = vmatprep.subr.mxu0 0.0
        %728 = vmatpush1.msra.mxu0 0.0
        %729 = vmatprep.subr.mxu0 0.0
        %730 = vmatpush1.msra.mxu0 0.0
        %731 = vmatprep.subr.mxu0 0.0
        %732 = vmatpush1.msra.mxu0 0.0
        %733 = vmatprep.subr.mxu0 0.0
        %734 = vmatpush1.msra.mxu0 0.0
        %735 = vmatprep.subr.mxu0 0.0
        %736 = vmatpush1.msra.mxu0 0.0
        %737 = vmatprep.subr.mxu0 0.0
        %738 = vmatpush1.msra.mxu0 0.0
        %739 = vmatprep.subr.mxu0 0.0
        %740 = vmatpush1.msra.mxu0 0.0
        %741 = vmatprep.subr.mxu0 0.0
        %742 = vmatpush1.msra.mxu0 %v705
        %743 = vmatprep.subr.mxu0 0.0
        %744 = vmatpush2.msra.mxu0 0.0
        %745 = vmatprep.subr.mxu0 0.0
        %746 = vmatpush2.msra.mxu0 0.0
        %747 = vmatprep.subr.mxu0 0.0
        %748 = vmatpush2.msra.mxu0 0.0
        %749 = vmatprep.subr.mxu0 0.0
        %750 = vmatpush2.msra.mxu0 0.0
        %751 = vmatprep.subr.mxu0 0.0
        %752 = vmatpush2.msra.mxu0 0.0
        %753 = vmatprep.subr.mxu0 0.0
        %754 = vmatpush2.msra.mxu0 0.0
        %755 = vmatprep.subr.mxu0 0.0
        %756 = vmatpush2.msra.mxu0 0.0
        %757 = vmatprep.subr.mxu0 0.0
        %758 = vmatpush2.msra.mxu0 0.0
        %759 = vmatprep.subr.mxu0 0.0
        %760 = vmatpush2.msra.mxu0 0.0
        %761 = vmatprep.subr.mxu0 0.0
        %762 = vmatpush2.msra.mxu0 0.0
        %763 = vmatprep.subr.mxu0 0.0
        %764 = vmatpush2.msra.mxu0 0.0
        %765 = vmatprep.subr.mxu0 0.0
        %766 = vmatpush2.msra.mxu0 0.0
        %767 = vmatprep.subr.mxu0 0.0
        %768 = vmatpush2.msra.mxu0 0.0
        %769 = vmatprep.subr.mxu0 0.0
        %770 = vmatpush2.msra.mxu0 0.0
        %771 = vmatprep.subr.mxu0 0.0
        %772 = vmatpush2.msra.mxu0 0.0
        %773 = vmatprep.subr.mxu0 0.0
        %774 = vmatpush2.msra.mxu0 0.0
        %775 = vmatprep.mubr.f32.mxu0 0.0
        %776 = vmatmul.mubr.f32.gmra.mxu0 %v709
        %v777 = vpop.f32.mrf.mxu0
        %v778 = vadd.f32 %v706, %v777
        %v779 = vpop.f32.mrf.mxu0
        %780 = vdwg.mxu0
        %v781 = vadd.f32 %v778, 3.0
        %v782 = vmax.f32 %v781, 0.0
        %v783 = vmin.f32 %v782, 6.0
        %v784 = vrcp.pop 6.0
        %v785 = vmul.f32 %v783, %v784
        %786 = vst.msk [vmem:[%s337] sm:$0x1] %vm620, %v785
      $region56: #{_lambda_.11} parent=47 // pred_fallthru
        _
      %s787 = smul.u32 4, %s25
      %p788 = scmp.lt.s32.totalorder %s24, 1
      %s789 = scalar_select %p788, %s24, 1
      %p790 = scmp.lt.s32.totalorder %s787, 3
      %s791 = scalar_select %p790, %s787, 3
      %s792 = smul.addr %s789, 4
      %s793 = sadd.s32 %s791, %s792
      %s794 = smul.addr %s793, 2
      %s795 = scalar_lea.vmem %s7, %s794
      %p796 = scmp.lt.s32.totalorder %s24, 1
      %s797 = scalar_select %p796, %s24, 1
      %s798 = scalar_lea.vmem %s8, %s797
      // Predicated region
      $region57: #{_lambda_.11} parent=47 // pred_check
        %p799 = pneg %p204
      $region58: #{_lambda_.11} parent=47 // pred_check_branch
        %801 = sbr.rel (%p799) target = $region60
      $region59: #{_lambda_.11} parent=47 // pred_region
        %s802 = smul.u32 4, %s25
      $region60: #{_lambda_.11} parent=47 // pred_fallthru
        _
      // Predicated region
      $region61: #{_lambda_.11} parent=47 // pred_check
        %p803 = pneg %p230
      $region62: #{_lambda_.11} parent=47 // pred_check_branch
        %805 = sbr.rel (%p803) target = $region64
      $region63: #{_lambda_.11} parent=47 // pred_region
        _
      $region64: #{_lambda_.11} parent=47 // pred_fallthru
        _
    $region48: #{_lambda_.11} parent=5 // pred_fallthru
      _
    %p806 = scmp.le.s32.totalorder 2, %s15
    // Predicated region
    $region65: #{_lambda_.11} parent=5 // pred_check
      %p807 = pneg %p806
    $region66: #{_lambda_.11} parent=5 // pred_check_branch
      %809 = sbr.rel (%p807) target = $region68
    $region67: #{_lambda_.11} parent=5 // pred_region
      %s810 = ssub.s32 %s15, 2
      // Predicated region
      $region69: #{_lambda_.11} parent=67 // pred_check
        %p811 = pneg %p210
      $region70: #{_lambda_.11} parent=67 // pred_check_branch
        %813 = sbr.rel (%p811) target = $region72
      $region71: #{_lambda_.11} parent=67 // pred_region
        %s814 = smul.u32 4, %s27
        %p815 = scmp.lt.s32.totalorder %s26, 1
        %s816 = scalar_select %p815, %s26, 1
        %p817 = scmp.lt.s32.totalorder %s814, 3
        %s818 = scalar_select %p817, %s814, 3
        %s819 = smul.addr %s816, 4
        %s820 = sadd.s32 %s818, %s819
        %s821 = smul.addr %s820, 2
        %s822 = scalar_lea.vmem %s7, %s821
      $region72: #{_lambda_.11} parent=67 // pred_fallthru
        _
      // Predicated region
      $region73: #{_lambda_.11} parent=67 // pred_check
        %p823 = pneg %p236
      $region74: #{_lambda_.11} parent=67 // pred_check_branch
        %825 = sbr.rel (%p823) target = $region76
      $region75: #{_lambda_.11} parent=67 // pred_region
        %p826 = scmp.lt.s32.totalorder %s26, 1
        %s827 = scalar_select %p826, %s26, 1
        %s828 = scalar_lea.vmem %s8, %s827
      $region76: #{_lambda_.11} parent=67 // pred_fallthru
        _
    $region68: #{_lambda_.11} parent=5 // pred_fallthru
      _
  $region6: #{_lambda_.11} parent=0 // loop_footer
    %s19 = sadd.s32 1, %s15
  $region7: #{_lambda_.11} parent=0 // loop_footer_branch
    %14 = sbr.rel target = $region3
  $region8: #{_lambda_.11} parent=0 // loop_exit
    _

// kernel: _lambda_.15
$region0: #{_lambda_.15}
  #allocation0 [shape = 'u32[]', space=smem, size = 0x4, offset = 0x4, fixed_abs, tag = 'smem constant byte address 0x4 - core index']
  #allocation1 [shape = 'u32[144,128]{1,0:T(1,128)}', space=vmem, size = 0x12000, scoped, tag = 'internal scratch']
  %s0 = inlined_call_operand.vmem [shape: bf16[2,4,72], index: 0, kind: input, shape index: {}]
  %s1 = inlined_call_operand.vmem [shape: bf16[72,24], index: 1, kind: input, shape index: {}]
  %s2 = inlined_call_operand.vmem [shape: f32[1,24], index: 2, kind: input, shape index: {}]
  %s3 = inlined_call_operand.vmem [shape: bf16[2,4,24], index: 3, kind: output, shape index: {}]
  %s4 = sld [smem:[#allocation0]]
  $region45: #{_lambda_.15} parent=0
    _
  %s6 = ssub.s32 1, %s4
  %s7 = scalar_select 0, %s6, %s4
  loop: start=0, step=1, limit=4
  $region2: #{_lambda_.15} parent=0 // loop_pre_header
    _
  $region3: #{_lambda_.15} parent=0 // loop_header
    %s9 = sphi 0, %s13
    %p10 = scmp.ge.s32.totalorder %s9, 4
    %s16 = sphi 0, %s28
    %s17 = sphi 0, %s24
    %s18 = sphi 0, %s16
    %s19 = sphi 0, %s17
    %s20 = sphi 0, %s18
    %s21 = sphi 0, %s19
    %s33 = sphi 0, %s35
    %s36 = sphi 0, %s33
    %s37 = sphi 0, %s36
    %s53 = sphi 0, %s37
    %s57 = sphi 0, %s57
    %s59 = sphi 0, %s57
    %s60 = sphi 0, %s59
    %s74 = sphi 0, %s60
    %s78 = sphi 0, %s78
    %s80 = sphi 0, %s78
    %s81 = sphi 0, %s80
    %s95 = sphi 0, %s81
    %s103 = sphi 0, %s105
    %s106 = sphi 0, %s103
    %s107 = sphi 0, %s106
    %s123 = sphi 0, %s107
  $region4: #{_lambda_.15} parent=0 // loop_header_branch
    %12 = sbr.rel (%p10) target = $region8
  $region5: #{_lambda_.15} parent=0 // loop_body
    %s14 = ssub.s32 %s9, 1
    %s15 = ssub.s32 %s9, 2
    %s22 = sadd.s32 1, %s17
    %p23 = scmp.ge.s32.totalorder %s22, 1
    %s24 = scalar_select %p23, 0, %s22
    %s25 = sadd.s32 1, %s16
    %s26 = scalar_select %p23, %s25, %s16
    %p27 = scmp.ge.s32.totalorder %s26, 2
    %s28 = scalar_select %p27, 0, %s26
    %s29 = ssub.s32 %s16, %s28
    %s30 = ssub.s32 %s17, %s24
    %s31 = sor.u32 %s29, %s30
    %p32 = scmp.eq.s32.totalorder %s31, 0
    %s34 = sadd.s32 %s33, 1
    %s35 = scalar_select %p32, %s33, %s34
    %p38 = pneg %p32
    %p39 = scmp.eq.s32.totalorder %s9, 1
    %p40 = por %p38, %p39
    %p41 = scmp.ne.s32.totalorder %s33, %s36
    %p42 = scmp.eq.s32.totalorder %s9, 0
    %p43 = por %p41, %p42
    %p44 = scmp.ne.s32.totalorder %s33, %s36
    %p45 = scmp.eq.s32.totalorder %s14, 1
    %p46 = por %p44, %p45
    %p47 = scmp.ne.s32.totalorder %s36, %s37
    %p48 = scmp.eq.s32.totalorder %s14, 0
    %p49 = por %p47, %p48
    %p50 = scmp.ne.s32.totalorder %s36, %s37
    %p51 = scmp.eq.s32.totalorder %s15, 1
    %p52 = por %p50, %p51
    %p54 = scmp.ne.s32.totalorder %s37, %s53
    %p55 = scmp.eq.s32.totalorder %s15, 0
    %p56 = por %p54, %p55
    %s58 = sadd.s32 %s57, 1
    %p61 = scmp.eq.s32.totalorder %s9, 1
    %p62 = scmp.ne.s32.totalorder %s57, %s59
    %p63 = scmp.eq.s32.totalorder %s9, 0
    %p64 = por %p62, %p63
    %p65 = scmp.ne.s32.totalorder %s57, %s59
    %p66 = scmp.eq.s32.totalorder %s14, 1
    %p67 = por %p65, %p66
    %p68 = scmp.ne.s32.totalorder %s59, %s60
    %p69 = scmp.eq.s32.totalorder %s14, 0
    %p70 = por %p68, %p69
    %p71 = scmp.ne.s32.totalorder %s59, %s60
    %p72 = scmp.eq.s32.totalorder %s15, 1
    %p73 = por %p71, %p72
    %p75 = scmp.ne.s32.totalorder %s60, %s74
    %p76 = scmp.eq.s32.totalorder %s15, 0
    %p77 = por %p75, %p76
    %s79 = sadd.s32 %s78, 1
    %p82 = scmp.eq.s32.totalorder %s9, 1
    %p83 = scmp.ne.s32.totalorder %s78, %s80
    %p84 = scmp.eq.s32.totalorder %s9, 0
    %p85 = por %p83, %p84
    %p86 = scmp.ne.s32.totalorder %s78, %s80
    %p87 = scmp.eq.s32.totalorder %s14, 1
    %p88 = por %p86, %p87
    %p89 = scmp.ne.s32.totalorder %s80, %s81
    %p90 = scmp.eq.s32.totalorder %s14, 0
    %p91 = por %p89, %p90
    %p92 = scmp.ne.s32.totalorder %s80, %s81
    %p93 = scmp.eq.s32.totalorder %s15, 1
    %p94 = por %p92, %p93
    %p96 = scmp.ne.s32.totalorder %s81, %s95
    %p97 = scmp.eq.s32.totalorder %s15, 0
    %p98 = por %p96, %p97
    %s99 = ssub.s32 %s16, %s28
    %s100 = ssub.s32 %s17, %s24
    %s101 = sor.u32 %s99, %s100
    %p102 = scmp.eq.s32.totalorder %s101, 0
    %s104 = sadd.s32 %s103, 1
    %s105 = scalar_select %p102, %s103, %s104
    %p108 = pneg %p102
    %p109 = scmp.eq.s32.totalorder %s9, 1
    %p110 = por %p108, %p109
    %p111 = scmp.ne.s32.totalorder %s103, %s106
    %p112 = scmp.eq.s32.totalorder %s9, 0
    %p113 = por %p111, %p112
    %p114 = scmp.ne.s32.totalorder %s103, %s106
    %p115 = scmp.eq.s32.totalorder %s14, 1
    %p116 = por %p114, %p115
    %p117 = scmp.ne.s32.totalorder %s106, %s107
    %p118 = scmp.eq.s32.totalorder %s14, 0
    %p119 = por %p117, %p118
    %p120 = scmp.ne.s32.totalorder %s106, %s107
    %p121 = scmp.eq.s32.totalorder %s15, 1
    %p122 = por %p120, %p121
    %p124 = scmp.ne.s32.totalorder %s107, %s123
    %p125 = scmp.eq.s32.totalorder %s15, 0
    %p126 = por %p124, %p125
    %p127 = scmp.le.s32.totalorder 1, %s9
    %p128 = scmp.lt.s32.totalorder %s9, 3
    %p129 = pnand %p127, %p128
    %p130 = pneg %p129
    // Predicated region
    $region9: #{_lambda_.15} parent=5 // pred_check
      _
    $region10: #{_lambda_.15} parent=5 // pred_check_branch
      %132 = sbr.rel (%p129) target = $region12
    $region11: #{_lambda_.15} parent=5 // pred_region
      %s133 = ssub.s32 %s9, 1
      // Predicated region
      $region13: #{_lambda_.15} parent=11 // pred_check
        %p134 = pneg %p70
      $region14: #{_lambda_.15} parent=11 // pred_check_branch
        %136 = sbr.rel (%p134) target = $region16
      $region15: #{_lambda_.15} parent=11 // pred_region
        _
      $region16: #{_lambda_.15} parent=11 // pred_fallthru
        _
      // Predicated region
      $region17: #{_lambda_.15} parent=11 // pred_check
        %p137 = pneg %p91
      $region18: #{_lambda_.15} parent=11 // pred_check_branch
        %139 = sbr.rel (%p137) target = $region20
      $region19: #{_lambda_.15} parent=11 // pred_region
        _
      $region20: #{_lambda_.15} parent=11 // pred_fallthru
        _
    $region12: #{_lambda_.15} parent=5 // pred_fallthru
      _
    %p140 = scmp.lt.s32.totalorder %s9, 2
    // Predicated region
    $region21: #{_lambda_.15} parent=5 // pred_check
      %p141 = pneg %p140
    $region22: #{_lambda_.15} parent=5 // pred_check_branch
      %143 = sbr.rel (%p141) target = $region24
    $region23: #{_lambda_.15} parent=5 // pred_region
      // Predicated region
      $region25: #{_lambda_.15} parent=23 // pred_check
        %p144 = pneg %p43
      $region26: #{_lambda_.15} parent=23 // pred_check_branch
        %146 = sbr.rel (%p144) target = $region28
      $region27: #{_lambda_.15} parent=23 // pred_region
        %p147 = scmp.lt.s32.totalorder %s16, 1
        %s148 = scalar_select %p147, %s16, 1
        %p149 = scmp.lt.s32.totalorder %s17, 0
        %s150 = scalar_select %p149, %s17, 0
        %s151 = sadd.s32 %s150, %s148
        %s152 = smul.addr %s151, 2
        %s153 = scalar_lea.vmem %s0, %s152
      $region28: #{_lambda_.15} parent=23 // pred_fallthru
        _
    $region24: #{_lambda_.15} parent=5 // pred_fallthru
      _
    %p154 = scmp.le.s32.totalorder 1, %s9
    %p155 = scmp.lt.s32.totalorder %s9, 3
    %p156 = pnand %p154, %p155
    %p157 = pneg %p156
    // Predicated region
    $region29: #{_lambda_.15} parent=5 // pred_check
      _
    $region30: #{_lambda_.15} parent=5 // pred_check_branch
      %159 = sbr.rel (%p156) target = $region32
    $region31: #{_lambda_.15} parent=5 // pred_region
      %s160 = ssub.s32 %s9, 1
      %p161 = scmp.lt.s32.totalorder %s18, 1
      %s162 = scalar_select %p161, %s18, 1
      %p163 = scmp.lt.s32.totalorder %s19, 0
      %s164 = scalar_select %p163, %s19, 0
      %s165 = sadd.s32 %s164, %s162
      %s166 = smul.addr %s165, 2
      %s167 = scalar_lea.vmem %s0, %s166
      %p168 = pneg %p49
      %p169 = pneg %p46
      %p170 = pneg %p70
      %p171 = pneg %p67
      %p172 = pneg %p91
      %p173 = pneg %p88
      %p174 = pneg %p119
      %p175 = pneg %p116
      %p176 = scmp.lt.s32.totalorder %s18, 1
      %s177 = scalar_select %p176, %s18, 1
      %p178 = scmp.lt.s32.totalorder %s19, 0
      %s179 = scalar_select %p178, %s19, 0
      %s180 = sadd.s32 %s179, %s177
      %s181 = smul.addr %s180, 2
      %s182 = scalar_lea.vmem %s3, %s181
      %p183 = scmp.lt.s32.totalorder %s18, 1
      %s184 = scalar_select %p183, %s18, 1
      %p185 = scmp.lt.s32.totalorder %s19, 0
      %s186 = scalar_select %p185, %s19, 0
      %s187 = sadd.s32 %s186, %s184
      %s188 = smul.addr %s187, 2
      %s189 = scalar_lea.vmem %s0, %s188
      %p190 = scmp.lt.s32.totalorder %s18, 1
      %s191 = scalar_select %p190, %s18, 1
      %p192 = scmp.lt.s32.totalorder %s19, 0
      %s193 = scalar_select %p192, %s19, 0
      %s194 = sadd.s32 %s193, %s191
      %s195 = smul.addr %s194, 2
      %s196 = scalar_lea.vmem %s3, %s195
      %v198 = vld [vmem:[%s189] sm:$0x3]
      %v199 = vld [vmem:[%s1] sm:$0xf]
      %v200 = vld [vmem:[%s1 + $0x4] sm:$0xf]
      %v201 = vld [vmem:[%s1 + $0x8] sm:$0xf]
      %v202 = vld [vmem:[%s1 + $0xc] sm:$0xf]
      %v203 = vld [vmem:[%s1 + $0x10] sm:$0xf]
      %v204 = vld [vmem:[%s1 + $0x14] sm:$0xf]
      %v205 = vld [vmem:[%s1 + $0x18] sm:$0xf]
      %v206 = vld [vmem:[%s1 + $0x1c] sm:$0xf]
      %v207 = vld [vmem:[%s1 + $0x20] sm:$0xf]
      %v208 = vld [vmem:[%s2] sm:$0x1]
      %v210 = vlaneseq
      %v211 = vshrl.u32 %v210, 7
      %v212 = vsub.s32 0, %v211
      %v213 = vrot.slane %v208, %v212
      %v224 = vunpack.c.l.b16 %v199
      %v225 = vunpack.c.l.b16 %v200
      %v226 = vunpack.c.l.b16 %v201
      %v227 = vunpack.c.l.b16 %v202
      %v228 = vunpack.c.l.b16 %v203
      %v229 = vunpack.c.l.b16 %v204
      %v230 = vunpack.c.l.b16 %v205
      %v231 = vunpack.c.l.b16 %v206
      %v232 = vunpack.c.l.b16 %v207
      %v233 = vpack.c.b16 %v225, %v224
      %v234 = vpack.c.b16 %v227, %v226
      %v235 = vpack.c.b16 %v229, %v228
      %v236 = vpack.c.b16 %v231, %v230
      %v237 = vpack.c.b16 %v232, %v232
      %vm242 = vcmask 588800
      %v244 = vsel %vm242, %v198, 0
      %vm246 = vcmask 1043456
      %v248 = vsel %vm246, %v237, 0
      %250 = vmatprep.subr.bf16.mxu0 0
      %251 = vmatpush1.bf16.msra.mxu0 0
      %252 = vmatprep.subr.bf16.mxu0 0
      %253 = vmatpush1.bf16.msra.mxu0 0
      %254 = vmatprep.subr.bf16.mxu0 0
      %255 = vmatpush1.bf16.msra.mxu0 0
      %256 = vmatprep.subr.bf16.mxu0 0
      %257 = vmatpush1.bf16.msra.mxu0 %v248
      %258 = vmatprep.subr.bf16.mxu0 0
      %259 = vmatpush1.bf16.msra.mxu0 %v236
      %260 = vmatprep.subr.bf16.mxu0 0
      %261 = vmatpush1.bf16.msra.mxu0 %v235
      %262 = vmatprep.subr.bf16.mxu0 0
      %263 = vmatpush1.bf16.msra.mxu0 %v234
      %264 = vmatprep.subr.bf16.mxu0 0
      %265 = vmatpush1.bf16.msra.mxu0 %v233
      %266 = vmatprep.subr.bf16.mxu0 0
      %267 = vmatpush2.bf16.msra.mxu0 0
      %268 = vmatprep.subr.bf16.mxu0 0
      %269 = vmatpush2.bf16.msra.mxu0 0
      %270 = vmatprep.subr.bf16.mxu0 0
      %271 = vmatpush2.bf16.msra.mxu0 0
      %272 = vmatprep.subr.bf16.mxu0 0
      %273 = vmatpush2.bf16.msra.mxu0 0
      %274 = vmatprep.subr.bf16.mxu0 0
      %275 = vmatpush2.bf16.msra.mxu0 0
      %276 = vmatprep.subr.bf16.mxu0 0
      %277 = vmatpush2.bf16.msra.mxu0 0
      %278 = vmatprep.subr.bf16.mxu0 0
      %279 = vmatpush2.bf16.msra.mxu0 0
      %280 = vmatprep.subr.bf16.mxu0 0
      %281 = vmatpush2.bf16.msra.mxu0 0
      %282 = vmatprep.mubr.bf16.mxu0 0
      %283 = vmatmul.mubr.bf16.gmra.mxu0 %v244
      %v284 = vpop.f32.mrf.mxu0
      %v285 = vadd.f32 %v213, %v284
      %v286 = vpop.f32.mrf.mxu0
      %v287 = vpop.f32.mrf.mxu0
      %v288 = vpop.f32.mrf.mxu0
      %289 = vdwg.mxu0
      %v290 = vpack.c.bf16 %v285, %v285
      %vm291 = vcmask 189440
      %292 = vst.msk [vmem:[%s196] sm:$0x3] %vm291, %v290
      %p293 = scmp.lt.s32.totalorder %s18, 1
      %s294 = scalar_select %p293, %s18, 1
      %p295 = scmp.lt.s32.totalorder %s19, 0
      %s296 = scalar_select %p295, %s19, 0
      %s297 = sadd.s32 %s296, %s294
      %s298 = smul.addr %s297, 2
      %s299 = scalar_lea.vmem %s3, %s298
      // Predicated region
      $region33: #{_lambda_.15} parent=31 // pred_check
        %p300 = pneg %p116
      $region34: #{_lambda_.15} parent=31 // pred_check_branch
        %302 = sbr.rel (%p300) target = $region36
      $region35: #{_lambda_.15} parent=31 // pred_region
        _
      $region36: #{_lambda_.15} parent=31 // pred_fallthru
        _
    $region32: #{_lambda_.15} parent=5 // pred_fallthru
      _
    %p303 = scmp.le.s32.totalorder 2, %s9
    // Predicated region
    $region37: #{_lambda_.15} parent=5 // pred_check
      %p304 = pneg %p303
    $region38: #{_lambda_.15} parent=5 // pred_check_branch
      %306 = sbr.rel (%p304) target = $region40
    $region39: #{_lambda_.15} parent=5 // pred_region
      %s307 = ssub.s32 %s9, 2
      // Predicated region
      $region41: #{_lambda_.15} parent=39 // pred_check
        %p308 = pneg %p122
      $region42: #{_lambda_.15} parent=39 // pred_check_branch
        %310 = sbr.rel (%p308) target = $region44
      $region43: #{_lambda_.15} parent=39 // pred_region
        %p311 = scmp.lt.s32.totalorder %s20, 1
        %s312 = scalar_select %p311, %s20, 1
        %p313 = scmp.lt.s32.totalorder %s21, 0
        %s314 = scalar_select %p313, %s21, 0
        %s315 = sadd.s32 %s314, %s312
        %s316 = smul.addr %s315, 2
        %s317 = scalar_lea.vmem %s3, %s316
      $region44: #{_lambda_.15} parent=39 // pred_fallthru
        _
    $region40: #{_lambda_.15} parent=5 // pred_fallthru
      _
  $region6: #{_lambda_.15} parent=0 // loop_footer
    %s13 = sadd.s32 1, %s9
  $region7: #{_lambda_.15} parent=0 // loop_footer_branch
    %8 = sbr.rel target = $region3
  $region8: #{_lambda_.15} parent=0 // loop_exit
    _

// kernel: _lambda_.16
$region0: #{_lambda_.16}
  #allocation0 [shape = 'u32[]', space=smem, size = 0x4, offset = 0x4, fixed_abs, tag = 'smem constant byte address 0x4 - core index']
  #allocation1 [shape = 'u32[144,128]{1,0:T(1,128)}', space=vmem, size = 0x12000, scoped, tag = 'internal scratch']
  %s0 = inlined_call_operand.vmem [shape: bf16[2,4,24], index: 0, kind: input, shape index: {}]
  %s1 = inlined_call_operand.vmem [shape: bf16[24,72], index: 1, kind: input, shape index: {}]
  %s2 = inlined_call_operand.vmem [shape: f32[1,72], index: 2, kind: input, shape index: {}]
  %s3 = inlined_call_operand.vmem [shape: bf16[2,4,72], index: 3, kind: output, shape index: {}]
  %s4 = sld [smem:[#allocation0]]
  $region45: #{_lambda_.16} parent=0
    _
  %s6 = ssub.s32 1, %s4
  %s7 = scalar_select 0, %s6, %s4
  loop: start=0, step=1, limit=4
  $region2: #{_lambda_.16} parent=0 // loop_pre_header
    _
  $region3: #{_lambda_.16} parent=0 // loop_header
    %s9 = sphi 0, %s13
    %p10 = scmp.ge.s32.totalorder %s9, 4
    %s16 = sphi 0, %s28
    %s17 = sphi 0, %s24
    %s18 = sphi 0, %s16
    %s19 = sphi 0, %s17
    %s20 = sphi 0, %s18
    %s21 = sphi 0, %s19
    %s33 = sphi 0, %s35
    %s36 = sphi 0, %s33
    %s37 = sphi 0, %s36
    %s53 = sphi 0, %s37
    %s57 = sphi 0, %s57
    %s59 = sphi 0, %s57
    %s60 = sphi 0, %s59
    %s74 = sphi 0, %s60
    %s78 = sphi 0, %s78
    %s80 = sphi 0, %s78
    %s81 = sphi 0, %s80
    %s95 = sphi 0, %s81
    %s103 = sphi 0, %s105
    %s106 = sphi 0, %s103
    %s107 = sphi 0, %s106
    %s123 = sphi 0, %s107
  $region4: #{_lambda_.16} parent=0 // loop_header_branch
    %12 = sbr.rel (%p10) target = $region8
  $region5: #{_lambda_.16} parent=0 // loop_body
    %s14 = ssub.s32 %s9, 1
    %s15 = ssub.s32 %s9, 2
    %s22 = sadd.s32 1, %s17
    %p23 = scmp.ge.s32.totalorder %s22, 1
    %s24 = scalar_select %p23, 0, %s22
    %s25 = sadd.s32 1, %s16
    %s26 = scalar_select %p23, %s25, %s16
    %p27 = scmp.ge.s32.totalorder %s26, 2
    %s28 = scalar_select %p27, 0, %s26
    %s29 = ssub.s32 %s16, %s28
    %s30 = ssub.s32 %s17, %s24
    %s31 = sor.u32 %s29, %s30
    %p32 = scmp.eq.s32.totalorder %s31, 0
    %s34 = sadd.s32 %s33, 1
    %s35 = scalar_select %p32, %s33, %s34
    %p38 = pneg %p32
    %p39 = scmp.eq.s32.totalorder %s9, 1
    %p40 = por %p38, %p39
    %p41 = scmp.ne.s32.totalorder %s33, %s36
    %p42 = scmp.eq.s32.totalorder %s9, 0
    %p43 = por %p41, %p42
    %p44 = scmp.ne.s32.totalorder %s33, %s36
    %p45 = scmp.eq.s32.totalorder %s14, 1
    %p46 = por %p44, %p45
    %p47 = scmp.ne.s32.totalorder %s36, %s37
    %p48 = scmp.eq.s32.totalorder %s14, 0
    %p49 = por %p47, %p48
    %p50 = scmp.ne.s32.totalorder %s36, %s37
    %p51 = scmp.eq.s32.totalorder %s15, 1
    %p52 = por %p50, %p51
    %p54 = scmp.ne.s32.totalorder %s37, %s53
    %p55 = scmp.eq.s32.totalorder %s15, 0
    %p56 = por %p54, %p55
    %s58 = sadd.s32 %s57, 1
    %p61 = scmp.eq.s32.totalorder %s9, 1
    %p62 = scmp.ne.s32.totalorder %s57, %s59
    %p63 = scmp.eq.s32.totalorder %s9, 0
    %p64 = por %p62, %p63
    %p65 = scmp.ne.s32.totalorder %s57, %s59
    %p66 = scmp.eq.s32.totalorder %s14, 1
    %p67 = por %p65, %p66
    %p68 = scmp.ne.s32.totalorder %s59, %s60
    %p69 = scmp.eq.s32.totalorder %s14, 0
    %p70 = por %p68, %p69
    %p71 = scmp.ne.s32.totalorder %s59, %s60
    %p72 = scmp.eq.s32.totalorder %s15, 1
    %p73 = por %p71, %p72
    %p75 = scmp.ne.s32.totalorder %s60, %s74
    %p76 = scmp.eq.s32.totalorder %s15, 0
    %p77 = por %p75, %p76
    %s79 = sadd.s32 %s78, 1
    %p82 = scmp.eq.s32.totalorder %s9, 1
    %p83 = scmp.ne.s32.totalorder %s78, %s80
    %p84 = scmp.eq.s32.totalorder %s9, 0
    %p85 = por %p83, %p84
    %p86 = scmp.ne.s32.totalorder %s78, %s80
    %p87 = scmp.eq.s32.totalorder %s14, 1
    %p88 = por %p86, %p87
    %p89 = scmp.ne.s32.totalorder %s80, %s81
    %p90 = scmp.eq.s32.totalorder %s14, 0
    %p91 = por %p89, %p90
    %p92 = scmp.ne.s32.totalorder %s80, %s81
    %p93 = scmp.eq.s32.totalorder %s15, 1
    %p94 = por %p92, %p93
    %p96 = scmp.ne.s32.totalorder %s81, %s95
    %p97 = scmp.eq.s32.totalorder %s15, 0
    %p98 = por %p96, %p97
    %s99 = ssub.s32 %s16, %s28
    %s100 = ssub.s32 %s17, %s24
    %s101 = sor.u32 %s99, %s100
    %p102 = scmp.eq.s32.totalorder %s101, 0
    %s104 = sadd.s32 %s103, 1
    %s105 = scalar_select %p102, %s103, %s104
    %p108 = pneg %p102
    %p109 = scmp.eq.s32.totalorder %s9, 1
    %p110 = por %p108, %p109
    %p111 = scmp.ne.s32.totalorder %s103, %s106
    %p112 = scmp.eq.s32.totalorder %s9, 0
    %p113 = por %p111, %p112
    %p114 = scmp.ne.s32.totalorder %s103, %s106
    %p115 = scmp.eq.s32.totalorder %s14, 1
    %p116 = por %p114, %p115
    %p117 = scmp.ne.s32.totalorder %s106, %s107
    %p118 = scmp.eq.s32.totalorder %s14, 0
    %p119 = por %p117, %p118
    %p120 = scmp.ne.s32.totalorder %s106, %s107
    %p121 = scmp.eq.s32.totalorder %s15, 1
    %p122 = por %p120, %p121
    %p124 = scmp.ne.s32.totalorder %s107, %s123
    %p125 = scmp.eq.s32.totalorder %s15, 0
    %p126 = por %p124, %p125
    %p127 = scmp.le.s32.totalorder 1, %s9
    %p128 = scmp.lt.s32.totalorder %s9, 3
    %p129 = pnand %p127, %p128
    %p130 = pneg %p129
    // Predicated region
    $region9: #{_lambda_.16} parent=5 // pred_check
      _
    $region10: #{_lambda_.16} parent=5 // pred_check_branch
      %132 = sbr.rel (%p129) target = $region12
    $region11: #{_lambda_.16} parent=5 // pred_region
      %s133 = ssub.s32 %s9, 1
      // Predicated region
      $region13: #{_lambda_.16} parent=11 // pred_check
        %p134 = pneg %p70
      $region14: #{_lambda_.16} parent=11 // pred_check_branch
        %136 = sbr.rel (%p134) target = $region16
      $region15: #{_lambda_.16} parent=11 // pred_region
        _
      $region16: #{_lambda_.16} parent=11 // pred_fallthru
        _
      // Predicated region
      $region17: #{_lambda_.16} parent=11 // pred_check
        %p137 = pneg %p91
      $region18: #{_lambda_.16} parent=11 // pred_check_branch
        %139 = sbr.rel (%p137) target = $region20
      $region19: #{_lambda_.16} parent=11 // pred_region
        _
      $region20: #{_lambda_.16} parent=11 // pred_fallthru
        _
    $region12: #{_lambda_.16} parent=5 // pred_fallthru
      _
    %p140 = scmp.lt.s32.totalorder %s9, 2
    // Predicated region
    $region21: #{_lambda_.16} parent=5 // pred_check
      %p141 = pneg %p140
    $region22: #{_lambda_.16} parent=5 // pred_check_branch
      %143 = sbr.rel (%p141) target = $region24
    $region23: #{_lambda_.16} parent=5 // pred_region
      // Predicated region
      $region25: #{_lambda_.16} parent=23 // pred_check
        %p144 = pneg %p43
      $region26: #{_lambda_.16} parent=23 // pred_check_branch
        %146 = sbr.rel (%p144) target = $region28
      $region27: #{_lambda_.16} parent=23 // pred_region
        %p147 = scmp.lt.s32.totalorder %s16, 1
        %s148 = scalar_select %p147, %s16, 1
        %p149 = scmp.lt.s32.totalorder %s17, 0
        %s150 = scalar_select %p149, %s17, 0
        %s151 = sadd.s32 %s150, %s148
        %s152 = smul.addr %s151, 2
        %s153 = scalar_lea.vmem %s0, %s152
      $region28: #{_lambda_.16} parent=23 // pred_fallthru
        _
    $region24: #{_lambda_.16} parent=5 // pred_fallthru
      _
    %p154 = scmp.le.s32.totalorder 1, %s9
    %p155 = scmp.lt.s32.totalorder %s9, 3
    %p156 = pnand %p154, %p155
    %p157 = pneg %p156
    // Predicated region
    $region29: #{_lambda_.16} parent=5 // pred_check
      _
    $region30: #{_lambda_.16} parent=5 // pred_check_branch
      %159 = sbr.rel (%p156) target = $region32
    $region31: #{_lambda_.16} parent=5 // pred_region
      %s160 = ssub.s32 %s9, 1
      %p161 = scmp.lt.s32.totalorder %s18, 1
      %s162 = scalar_select %p161, %s18, 1
      %p163 = scmp.lt.s32.totalorder %s19, 0
      %s164 = scalar_select %p163, %s19, 0
      %s165 = sadd.s32 %s164, %s162
      %s166 = smul.addr %s165, 2
      %s167 = scalar_lea.vmem %s0, %s166
      %p168 = pneg %p49
      %p169 = pneg %p46
      %p170 = pneg %p70
      %p171 = pneg %p67
      %p172 = pneg %p91
      %p173 = pneg %p88
      %p174 = pneg %p119
      %p175 = pneg %p116
      %p176 = scmp.lt.s32.totalorder %s18, 1
      %s177 = scalar_select %p176, %s18, 1
      %p178 = scmp.lt.s32.totalorder %s19, 0
      %s179 = scalar_select %p178, %s19, 0
      %s180 = sadd.s32 %s179, %s177
      %s181 = smul.addr %s180, 2
      %s182 = scalar_lea.vmem %s3, %s181
      %p183 = scmp.lt.s32.totalorder %s18, 1
      %s184 = scalar_select %p183, %s18, 1
      %p185 = scmp.lt.s32.totalorder %s19, 0
      %s186 = scalar_select %p185, %s19, 0
      %s187 = sadd.s32 %s186, %s184
      %s188 = smul.addr %s187, 2
      %s189 = scalar_lea.vmem %s0, %s188
      %p190 = scmp.lt.s32.totalorder %s18, 1
      %s191 = scalar_select %p190, %s18, 1
      %p192 = scmp.lt.s32.totalorder %s19, 0
      %s193 = scalar_select %p192, %s19, 0
      %s194 = sadd.s32 %s193, %s191
      %s195 = smul.addr %s194, 2
      %s196 = scalar_lea.vmem %s3, %s195
      %v198 = vld [vmem:[%s189] sm:$0x3]
      %v199 = vld [vmem:[%s1] sm:$0xf]
      %v200 = vld [vmem:[%s1 + $0x4] sm:$0xf]
      %v201 = vld [vmem:[%s1 + $0x8] sm:$0xf]
      %v202 = vld [vmem:[%s2] sm:$0x1]
      %v204 = vlaneseq
      %v205 = vshrl.u32 %v204, 7
      %v206 = vsub.s32 0, %v205
      %v207 = vrot.slane %v202, %v206
      %v212 = vunpack.c.l.b16 %v199
      %v213 = vunpack.c.l.b16 %v200
      %v214 = vunpack.c.l.b16 %v201
      %v215 = vpack.c.b16 %v213, %v212
      %v216 = vpack.c.b16 %v214, %v214
      %vm218 = vcmask 195584
      %v220 = vsel %vm218, %v198, 0
      %vm222 = vcmask 1043456
      %v224 = vsel %vm222, %v216, 0
      %226 = vmatprep.subr.bf16.mxu0 0
      %227 = vmatpush1.bf16.msra.mxu0 0
      %228 = vmatprep.subr.bf16.mxu0 0
      %229 = vmatpush1.bf16.msra.mxu0 0
      %230 = vmatprep.subr.bf16.mxu0 0
      %231 = vmatpush1.bf16.msra.mxu0 0
      %232 = vmatprep.subr.bf16.mxu0 0
      %233 = vmatpush1.bf16.msra.mxu0 0
      %234 = vmatprep.subr.bf16.mxu0 0
      %235 = vmatpush1.bf16.msra.mxu0 0
      %236 = vmatprep.subr.bf16.mxu0 0
      %237 = vmatpush1.bf16.msra.mxu0 0
      %238 = vmatprep.subr.bf16.mxu0 0
      %239 = vmatpush1.bf16.msra.mxu0 %v224
      %240 = vmatprep.subr.bf16.mxu0 0
      %241 = vmatpush1.bf16.msra.mxu0 %v215
      %242 = vmatprep.subr.bf16.mxu0 0
      %243 = vmatpush2.bf16.msra.mxu0 0
      %244 = vmatprep.subr.bf16.mxu0 0
      %245 = vmatpush2.bf16.msra.mxu0 0
      %246 = vmatprep.subr.bf16.mxu0 0
      %247 = vmatpush2.bf16.msra.mxu0 0
      %248 = vmatprep.subr.bf16.mxu0 0
      %249 = vmatpush2.bf16.msra.mxu0 0
      %250 = vmatprep.subr.bf16.mxu0 0
      %251 = vmatpush2.bf16.msra.mxu0 0
      %252 = vmatprep.subr.bf16.mxu0 0
      %253 = vmatpush2.bf16.msra.mxu0 0
      %254 = vmatprep.subr.bf16.mxu0 0
      %255 = vmatpush2.bf16.msra.mxu0 0
      %256 = vmatprep.subr.bf16.mxu0 0
      %257 = vmatpush2.bf16.msra.mxu0 0
      %258 = vmatprep.mubr.bf16.mxu0 0
      %259 = vmatmul.mubr.bf16.gmra.mxu0 %v220
      %v260 = vpop.f32.mrf.mxu0
      %v261 = vadd.f32 %v207, %v260
      %v262 = vpop.f32.mrf.mxu0
      %v263 = vpop.f32.mrf.mxu0
      %v264 = vpop.f32.mrf.mxu0
      %265 = vdwg.mxu0
      %v266 = vadd.f32 %v261, 3.0
      %v267 = vmax.f32 %v266, 0.0
      %v268 = vmin.f32 %v267, 6.0
      %v269 = vrcp.pop 6.0
      %v270 = vmul.f32 %v268, %v269
      %v271 = vmul.f32 %v261, %v270
      %v272 = vpack.c.bf16 %v271, %v271
      %vm273 = vcmask 582656
      %274 = vst.msk [vmem:[%s196] sm:$0x3] %vm273, %v272
      %p275 = scmp.lt.s32.totalorder %s18, 1
      %s276 = scalar_select %p275, %s18, 1
      %p277 = scmp.lt.s32.totalorder %s19, 0
      %s278 = scalar_select %p277, %s19, 0
      %s279 = sadd.s32 %s278, %s276
      %s280 = smul.addr %s279, 2
      %s281 = scalar_lea.vmem %s3, %s280
      // Predicated region
      $region33: #{_lambda_.16} parent=31 // pred_check
        %p282 = pneg %p116
      $region34: #{_lambda_.16} parent=31 // pred_check_branch
        %284 = sbr.rel (%p282) target = $region36
      $region35: #{_lambda_.16} parent=31 // pred_region
        _
      $region36: #{_lambda_.16} parent=31 // pred_fallthru
        _
    $region32: #{_lambda_.16} parent=5 // pred_fallthru
      _
    %p285 = scmp.le.s32.totalorder 2, %s9
    // Predicated region
    $region37: #{_lambda_.16} parent=5 // pred_check
      %p286 = pneg %p285
    $region38: #{_lambda_.16} parent=5 // pred_check_branch
      %288 = sbr.rel (%p286) target = $region40
    $region39: #{_lambda_.16} parent=5 // pred_region
      %s289 = ssub.s32 %s9, 2
      // Predicated region
      $region41: #{_lambda_.16} parent=39 // pred_check
        %p290 = pneg %p122
      $region42: #{_lambda_.16} parent=39 // pred_check_branch
        %292 = sbr.rel (%p290) target = $region44
      $region43: #{_lambda_.16} parent=39 // pred_region
        %p293 = scmp.lt.s32.totalorder %s20, 1
        %s294 = scalar_select %p293, %s20, 1
        %p295 = scmp.lt.s32.totalorder %s21, 0
        %s296 = scalar_select %p295, %s21, 0
        %s297 = sadd.s32 %s296, %s294
        %s298 = smul.addr %s297, 2
        %s299 = scalar_lea.vmem %s3, %s298
      $region44: #{_lambda_.16} parent=39 // pred_fallthru
        _
    $region40: #{_lambda_.16} parent=5 // pred_fallthru
      _
  $region6: #{_lambda_.16} parent=0 // loop_footer
    %s13 = sadd.s32 1, %s9
  $region7: #{_lambda_.16} parent=0 // loop_footer_branch
    %8 = sbr.rel target = $region3
  $region8: #{_lambda_.16} parent=0 // loop_exit
    _

// kernel: _lambda_.14
$region0: #{_lambda_.14}
  #allocation0 [shape = 'u32[]', space=smem, size = 0x4, offset = 0x4, fixed_abs, tag = 'smem constant byte address 0x4 - core index']
  #allocation1 [shape = 'u32[144,128]{1,0:T(1,128)}', space=vmem, size = 0x12000, scoped, tag = 'internal scratch']
  %s0 = inlined_call_operand.vmem [shape: bf16[2,12,3,72], index: 0, kind: input, shape index: {}]
  %s1 = inlined_call_operand.vmem [shape: f32[9,72], index: 1, kind: input, shape index: {}]
  %s2 = inlined_call_operand.vmem [shape: f32[1,72], index: 2, kind: input, shape index: {}]
  %s3 = inlined_call_operand.vmem [shape: bf16[2,2,2,72], index: 3, kind: output, shape index: {}]
  %s4 = sld [smem:[#allocation0]]
  $region45: #{_lambda_.14} parent=0
    _
  %s6 = ssub.s32 1, %s4
  %s7 = scalar_select 0, %s6, %s4
  loop: start=0, step=1, limit=4
  $region2: #{_lambda_.14} parent=0 // loop_pre_header
    _
  $region3: #{_lambda_.14} parent=0 // loop_header
    %s9 = sphi 0, %s13
    %p10 = scmp.ge.s32.totalorder %s9, 4
    %s16 = sphi 0, %s28
    %s17 = sphi 0, %s24
    %s18 = sphi 0, %s16
    %s19 = sphi 0, %s17
    %s20 = sphi 0, %s18
    %s21 = sphi 0, %s19
    %s31 = sphi 0, %s33
    %s34 = sphi 0, %s31
    %s35 = sphi 0, %s34
    %s51 = sphi 0, %s35
    %s55 = sphi 0, %s55
    %s57 = sphi 0, %s55
    %s58 = sphi 0, %s57
    %s72 = sphi 0, %s58
    %s76 = sphi 0, %s76
    %s78 = sphi 0, %s76
    %s79 = sphi 0, %s78
    %s93 = sphi 0, %s79
    %s101 = sphi 0, %s103
    %s104 = sphi 0, %s101
    %s105 = sphi 0, %s104
    %s121 = sphi 0, %s105
  $region4: #{_lambda_.14} parent=0 // loop_header_branch
    %12 = sbr.rel (%p10) target = $region8
  $region5: #{_lambda_.14} parent=0 // loop_body
    %s14 = ssub.s32 %s9, 1
    %s15 = ssub.s32 %s9, 2
    %s22 = sadd.s32 1, %s17
    %p23 = scmp.ge.s32.totalorder %s22, 1
    %s24 = scalar_select %p23, 0, %s22
    %s25 = sadd.s32 1, %s16
    %s26 = scalar_select %p23, %s25, %s16
    %p27 = scmp.ge.s32.totalorder %s26, 2
    %s28 = scalar_select %p27, 0, %s26
    %s29 = ssub.s32 %s16, %s28
    %p30 = scmp.eq.s32.totalorder %s29, 0
    %s32 = sadd.s32 %s31, 1
    %s33 = scalar_select %p30, %s31, %s32
    %p36 = pneg %p30
    %p37 = scmp.eq.s32.totalorder %s9, 1
    %p38 = por %p36, %p37
    %p39 = scmp.ne.s32.totalorder %s31, %s34
    %p40 = scmp.eq.s32.totalorder %s9, 0
    %p41 = por %p39, %p40
    %p42 = scmp.ne.s32.totalorder %s31, %s34
    %p43 = scmp.eq.s32.totalorder %s14, 1
    %p44 = por %p42, %p43
    %p45 = scmp.ne.s32.totalorder %s34, %s35
    %p46 = scmp.eq.s32.totalorder %s14, 0
    %p47 = por %p45, %p46
    %p48 = scmp.ne.s32.totalorder %s34, %s35
    %p49 = scmp.eq.s32.totalorder %s15, 1
    %p50 = por %p48, %p49
    %p52 = scmp.ne.s32.totalorder %s35, %s51
    %p53 = scmp.eq.s32.totalorder %s15, 0
    %p54 = por %p52, %p53
    %s56 = sadd.s32 %s55, 1
    %p59 = scmp.eq.s32.totalorder %s9, 1
    %p60 = scmp.ne.s32.totalorder %s55, %s57
    %p61 = scmp.eq.s32.totalorder %s9, 0
    %p62 = por %p60, %p61
    %p63 = scmp.ne.s32.totalorder %s55, %s57
    %p64 = scmp.eq.s32.totalorder %s14, 1
    %p65 = por %p63, %p64
    %p66 = scmp.ne.s32.totalorder %s57, %s58
    %p67 = scmp.eq.s32.totalorder %s14, 0
    %p68 = por %p66, %p67
    %p69 = scmp.ne.s32.totalorder %s57, %s58
    %p70 = scmp.eq.s32.totalorder %s15, 1
    %p71 = por %p69, %p70
    %p73 = scmp.ne.s32.totalorder %s58, %s72
    %p74 = scmp.eq.s32.totalorder %s15, 0
    %p75 = por %p73, %p74
    %s77 = sadd.s32 %s76, 1
    %p80 = scmp.eq.s32.totalorder %s9, 1
    %p81 = scmp.ne.s32.totalorder %s76, %s78
    %p82 = scmp.eq.s32.totalorder %s9, 0
    %p83 = por %p81, %p82
    %p84 = scmp.ne.s32.totalorder %s76, %s78
    %p85 = scmp.eq.s32.totalorder %s14, 1
    %p86 = por %p84, %p85
    %p87 = scmp.ne.s32.totalorder %s78, %s79
    %p88 = scmp.eq.s32.totalorder %s14, 0
    %p89 = por %p87, %p88
    %p90 = scmp.ne.s32.totalorder %s78, %s79
    %p91 = scmp.eq.s32.totalorder %s15, 1
    %p92 = por %p90, %p91
    %p94 = scmp.ne.s32.totalorder %s79, %s93
    %p95 = scmp.eq.s32.totalorder %s15, 0
    %p96 = por %p94, %p95
    %s97 = ssub.s32 %s16, %s28
    %s98 = ssub.s32 %s17, %s24
    %s99 = sor.u32 %s97, %s98
    %p100 = scmp.eq.s32.totalorder %s99, 0
    %s102 = sadd.s32 %s101, 1
    %s103 = scalar_select %p100, %s101, %s102
    %p106 = pneg %p100
    %p107 = scmp.eq.s32.totalorder %s9, 1
    %p108 = por %p106, %p107
    %p109 = scmp.ne.s32.totalorder %s101, %s104
    %p110 = scmp.eq.s32.totalorder %s9, 0
    %p111 = por %p109, %p110
    %p112 = scmp.ne.s32.totalorder %s101, %s104
    %p113 = scmp.eq.s32.totalorder %s14, 1
    %p114 = por %p112, %p113
    %p115 = scmp.ne.s32.totalorder %s104, %s105
    %p116 = scmp.eq.s32.totalorder %s14, 0
    %p117 = por %p115, %p116
    %p118 = scmp.ne.s32.totalorder %s104, %s105
    %p119 = scmp.eq.s32.totalorder %s15, 1
    %p120 = por %p118, %p119
    %p122 = scmp.ne.s32.totalorder %s105, %s121
    %p123 = scmp.eq.s32.totalorder %s15, 0
    %p124 = por %p122, %p123
    %p125 = scmp.le.s32.totalorder 1, %s9
    %p126 = scmp.lt.s32.totalorder %s9, 3
    %p127 = pnand %p125, %p126
    %p128 = pneg %p127
    // Predicated region
    $region9: #{_lambda_.14} parent=5 // pred_check
      _
    $region10: #{_lambda_.14} parent=5 // pred_check_branch
      %130 = sbr.rel (%p127) target = $region12
    $region11: #{_lambda_.14} parent=5 // pred_region
      %s131 = ssub.s32 %s9, 1
      // Predicated region
      $region13: #{_lambda_.14} parent=11 // pred_check
        %p132 = pneg %p68
      $region14: #{_lambda_.14} parent=11 // pred_check_branch
        %134 = sbr.rel (%p132) target = $region16
      $region15: #{_lambda_.14} parent=11 // pred_region
        _
      $region16: #{_lambda_.14} parent=11 // pred_fallthru
        _
      // Predicated region
      $region17: #{_lambda_.14} parent=11 // pred_check
        %p135 = pneg %p89
      $region18: #{_lambda_.14} parent=11 // pred_check_branch
        %137 = sbr.rel (%p135) target = $region20
      $region19: #{_lambda_.14} parent=11 // pred_region
        _
      $region20: #{_lambda_.14} parent=11 // pred_fallthru
        _
    $region12: #{_lambda_.14} parent=5 // pred_fallthru
      _
    %p138 = scmp.lt.s32.totalorder %s9, 2
    // Predicated region
    $region21: #{_lambda_.14} parent=5 // pred_check
      %p139 = pneg %p138
    $region22: #{_lambda_.14} parent=5 // pred_check_branch
      %141 = sbr.rel (%p139) target = $region24
    $region23: #{_lambda_.14} parent=5 // pred_region
      // Predicated region
      $region25: #{_lambda_.14} parent=23 // pred_check
        %p142 = pneg %p41
      $region26: #{_lambda_.14} parent=23 // pred_check_branch
        %144 = sbr.rel (%p142) target = $region28
      $region27: #{_lambda_.14} parent=23 // pred_region
        %p145 = scmp.lt.s32.totalorder %s16, 1
        %s146 = scalar_select %p145, %s16, 1
        %s147 = smul.addr %s146, 12
        %s148 = smul.addr %s147, 2
        %s149 = scalar_lea.vmem %s0, %s148
      $region28: #{_lambda_.14} parent=23 // pred_fallthru
        _
    $region24: #{_lambda_.14} parent=5 // pred_fallthru
      _
    %p150 = scmp.le.s32.totalorder 1, %s9
    %p151 = scmp.lt.s32.totalorder %s9, 3
    %p152 = pnand %p150, %p151
    %p153 = pneg %p152
    // Predicated region
    $region29: #{_lambda_.14} parent=5 // pred_check
      _
    $region30: #{_lambda_.14} parent=5 // pred_check_branch
      %155 = sbr.rel (%p152) target = $region32
    $region31: #{_lambda_.14} parent=5 // pred_region
      %s156 = ssub.s32 %s9, 1
      %p157 = scmp.lt.s32.totalorder %s18, 1
      %s158 = scalar_select %p157, %s18, 1
      %s159 = smul.addr %s158, 12
      %s160 = smul.addr %s159, 2
      %s161 = scalar_lea.vmem %s0, %s160
      %p162 = pneg %p47
      %p163 = pneg %p44
      %p164 = pneg %p68
      %p165 = pneg %p65
      %p166 = pneg %p89
      %p167 = pneg %p86
      %p168 = pneg %p117
      %p169 = pneg %p114
      %s170 = smul.u32 2, %s19
      %p171 = scmp.lt.s32.totalorder %s18, 1
      %s172 = scalar_select %p171, %s18, 1
      %p173 = scmp.lt.s32.totalorder %s170, 1
      %s174 = scalar_select %p173, %s170, 1
      %s175 = smul.addr %s172, 2
      %s176 = sadd.s32 %s174, %s175
      %s177 = scalar_lea.vmem %s3, %s176
      %p178 = scmp.lt.s32.totalorder %s18, 1
      %s179 = scalar_select %p178, %s18, 1
      %s180 = smul.addr %s179, 12
      %s181 = smul.addr %s180, 2
      %s182 = scalar_lea.vmem %s0, %s181
      %s183 = smul.u32 2, %s19
      %p184 = scmp.lt.s32.totalorder %s18, 1
      %s185 = scalar_select %p184, %s18, 1
      %p186 = scmp.lt.s32.totalorder %s183, 1
      %s187 = scalar_select %p186, %s183, 1
      %s188 = smul.addr %s185, 2
      %s189 = sadd.s32 %s187, %s188
      %s190 = scalar_lea.vmem %s3, %s189
      %s191 = smul.u32 2, %s19
      %s192 = smul.u32 %s19, 2
      %v193 = vld [vmem:[%s1] sm:$0xff]
      %v194 = vld [vmem:[%s1 + $0x8] sm:$0x1]
      %s195 = smul.addr %s192, 2
      %s196 = scalar_lea.vmem %s182, %s195
      %v197 = vld [vmem:[%s196] sm:$0x1]
      %v198 = vld [vmem:[%s196 + $0x2] sm:$0x1]
      %v199 = vunpack.c.l.bf16 %v197
      %v200 = vunpack.c.l.bf16 %v198
      %v201 = vlaneseq
      %v202 = vshrl.u32 %v201, 7
      %v203 = vsub.s32 0, %v202
      %v204 = vrot.slane %v193, %v203
      %v205 = vmul.f32 %v199, %v204
      %v206 = vmul.f32 %v200, %v204
      %v207 = vadd.f32 %v205, 0.0
      %v208 = vadd.f32 %v206, 0.0
      %s209 = sadd.s32 %s192, 3
      %s210 = smul.addr %s209, 2
      %s211 = scalar_lea.vmem %s182, %s210
      %v212 = vld [vmem:[%s211] sm:$0x1]
      %v213 = vld [vmem:[%s211 + $0x2] sm:$0x1]
      %v214 = vunpack.c.l.bf16 %v212
      %v215 = vunpack.c.l.bf16 %v213
      %v216 = vlaneseq
      %v217 = vshrl.u32 %v216, 7
      %v218 = vsub.s32 1, %v217
      %v219 = vrot.slane %v193, %v218
      %v220 = vmul.f32 %v214, %v219
      %v221 = vmul.f32 %v215, %v219
      %v222 = vadd.f32 %v207, %v220
      %v223 = vadd.f32 %v208, %v221
      %v224 = vld [vmem:[%s196] sm:$0x3]
      %v225 = vld [vmem:[%s196 + $0x2] sm:$0x3]
      %v226 = vunpack.c.l.bf16 %v224
      %v227 = vunpack.c.l.bf16 %v225
      %v228 = vlaneseq
      %v229 = vshrl.u32 %v228, 7
      %v230 = vsub.s32 2, %v229
      %v231 = vrot.slane %v193, %v230
      %v232 = vmul.f32 %v226, %v231
      %v233 = vmul.f32 %v227, %v231
      %v236 = vrot.slane %v232, 5
      %v237 = vrot.slane %v236, 4
      %v238 = vrot.slane %v233, 5
      %v239 = vrot.slane %v238, 4
      %v242 = vadd.f32 %v222, %v237
      %v243 = vadd.f32 %v223, %v239
      %s244 = sadd.s32 %s192, 6
      %s245 = smul.addr %s244, 2
      %s246 = scalar_lea.vmem %s182, %s245
      %v247 = vld [vmem:[%s246] sm:$0x1]
      %v248 = vld [vmem:[%s246 + $0x2] sm:$0x1]
      %v249 = vunpack.c.l.bf16 %v247
      %v250 = vunpack.c.l.bf16 %v248
      %v251 = vlaneseq
      %v252 = vshrl.u32 %v251, 7
      %v253 = vsub.s32 3, %v252
      %v254 = vrot.slane %v193, %v253
      %v255 = vmul.f32 %v249, %v254
      %v256 = vmul.f32 %v250, %v254
      %v257 = vadd.f32 %v242, %v255
      %v258 = vadd.f32 %v243, %v256
      %s259 = sadd.s32 %s192, 9
      %s260 = smul.addr %s259, 2
      %s261 = scalar_lea.vmem %s182, %s260
      %v262 = vld [vmem:[%s261] sm:$0x1]
      %v263 = vld [vmem:[%s261 + $0x2] sm:$0x1]
      %v264 = vunpack.c.l.bf16 %v262
      %v265 = vunpack.c.l.bf16 %v263
      %v266 = vlaneseq
      %v267 = vshrl.u32 %v266, 7
      %v268 = vsub.s32 4, %v267
      %v269 = vrot.slane %v193, %v268
      %v270 = vmul.f32 %v264, %v269
      %v271 = vmul.f32 %v265, %v269
      %v272 = vadd.f32 %v257, %v270
      %v273 = vadd.f32 %v258, %v271
      %v274 = vld [vmem:[%s246] sm:$0x3]
      %v275 = vld [vmem:[%s246 + $0x2] sm:$0x3]
      %v276 = vunpack.c.l.bf16 %v274
      %v277 = vunpack.c.l.bf16 %v275
      %v278 = vlaneseq
      %v279 = vshrl.u32 %v278, 7
      %v280 = vsub.s32 5, %v279
      %v281 = vrot.slane %v193, %v280
      %v282 = vmul.f32 %v276, %v281
      %v283 = vmul.f32 %v277, %v281
      %v286 = vrot.slane %v282, 5
      %v287 = vrot.slane %v286, 4
      %v288 = vrot.slane %v283, 5
      %v289 = vrot.slane %v288, 4
      %v292 = vadd.f32 %v272, %v287
      %v293 = vadd.f32 %v273, %v289
      %s294 = sadd.s32 %s192, 1
      %s295 = smul.addr %s294, 2
      %s296 = scalar_lea.vmem %s182, %s295
      %v297 = vld [vmem:[%s296] sm:$0x1]
      %v298 = vld [vmem:[%s296 + $0x2] sm:$0x1]
      %v299 = vunpack.c.l.bf16 %v297
      %v300 = vunpack.c.l.bf16 %v298
      %v301 = vlaneseq
      %v302 = vshrl.u32 %v301, 7
      %v303 = vsub.s32 6, %v302
      %v304 = vrot.slane %v193, %v303
      %v305 = vmul.f32 %v299, %v304
      %v306 = vmul.f32 %v300, %v304
      %v307 = vadd.f32 %v292, %v305
      %v308 = vadd.f32 %v293, %v306
      %s309 = sadd.s32 %s192, 4
      %s310 = smul.addr %s309, 2
      %s311 = scalar_lea.vmem %s182, %s310
      %v312 = vld [vmem:[%s311] sm:$0x1]
      %v313 = vld [vmem:[%s311 + $0x2] sm:$0x1]
      %v314 = vunpack.c.l.bf16 %v312
      %v315 = vunpack.c.l.bf16 %v313
      %v316 = vlaneseq
      %v317 = vshrl.u32 %v316, 7
      %v318 = vsub.s32 7, %v317
      %v319 = vrot.slane %v193, %v318
      %v320 = vmul.f32 %v314, %v319
      %v321 = vmul.f32 %v315, %v319
      %v322 = vadd.f32 %v307, %v320
      %v323 = vadd.f32 %v308, %v321
      %v324 = vld [vmem:[%s296] sm:$0x3]
      %v325 = vld [vmem:[%s296 + $0x2] sm:$0x3]
      %v326 = vunpack.c.l.bf16 %v324
      %v327 = vunpack.c.l.bf16 %v325
      %v328 = vlaneseq
      %v329 = vshrl.u32 %v328, 7
      %v330 = vsub.s32 0, %v329
      %v331 = vrot.slane %v194, %v330
      %v332 = vmul.f32 %v326, %v331
      %v333 = vmul.f32 %v327, %v331
      %v336 = vrot.slane %v332, 5
      %v337 = vrot.slane %v336, 4
      %v338 = vrot.slane %v333, 5
      %v339 = vrot.slane %v338, 4
      %v342 = vadd.f32 %v322, %v337
      %v343 = vadd.f32 %v323, %v339
      %v344 = vld [vmem:[%s2] sm:$0x1]
      %v346 = vlaneseq
      %v347 = vshrl.u32 %v346, 7
      %v348 = vsub.s32 0, %v347
      %v349 = vrot.slane %v344, %v348
      %v351 = vadd.f32 %v342, %v349
      %v352 = vadd.f32 %v343, %v349
      %v353 = vmax.f32 %v351, 0.0
      %v354 = vmax.f32 %v352, 0.0
      %v355 = vpack.c.bf16 %v353, %v353
      %v356 = vpack.c.bf16 %v354, %v354
      %vm357 = vcmask 581632
      %358 = vst.msk [vmem:[%s190] sm:$0x1] %vm357, %v355
      %359 = vst.msk [vmem:[%s190 + $0x1] sm:$0x1] %vm357, %v356
      %s360 = smul.u32 2, %s19
      %p361 = scmp.lt.s32.totalorder %s18, 1
      %s362 = scalar_select %p361, %s18, 1
      %p363 = scmp.lt.s32.totalorder %s360, 1
      %s364 = scalar_select %p363, %s360, 1
      %s365 = smul.addr %s362, 2
      %s366 = sadd.s32 %s364, %s365
      %s367 = scalar_lea.vmem %s3, %s366
      // Predicated region
      $region33: #{_lambda_.14} parent=31 // pred_check
        %p368 = pneg %p114
      $region34: #{_lambda_.14} parent=31 // pred_check_branch
        %370 = sbr.rel (%p368) target = $region36
      $region35: #{_lambda_.14} parent=31 // pred_region
        %s371 = smul.u32 2, %s19
      $region36: #{_lambda_.14} parent=31 // pred_fallthru
        _
    $region32: #{_lambda_.14} parent=5 // pred_fallthru
      _
    %p372 = scmp.le.s32.totalorder 2, %s9
    // Predicated region
    $region37: #{_lambda_.14} parent=5 // pred_check
      %p373 = pneg %p372
    $region38: #{_lambda_.14} parent=5 // pred_check_branch
      %375 = sbr.rel (%p373) target = $region40
    $region39: #{_lambda_.14} parent=5 // pred_region
      %s376 = ssub.s32 %s9, 2
      // Predicated region
      $region41: #{_lambda_.14} parent=39 // pred_check
        %p377 = pneg %p120
      $region42: #{_lambda_.14} parent=39 // pred_check_branch
        %379 = sbr.rel (%p377) target = $region44
      $region43: #{_lambda_.14} parent=39 // pred_region
        %s380 = smul.u32 2, %s21
        %p381 = scmp.lt.s32.totalorder %s20, 1
        %s382 = scalar_select %p381, %s20, 1
        %p383 = scmp.lt.s32.totalorder %s380, 1
        %s384 = scalar_select %p383, %s380, 1
        %s385 = smul.addr %s382, 2
        %s386 = sadd.s32 %s384, %s385
        %s387 = scalar_lea.vmem %s3, %s386
      $region44: #{_lambda_.14} parent=39 // pred_fallthru
        _
    $region40: #{_lambda_.14} parent=5 // pred_fallthru
      _
  $region6: #{_lambda_.14} parent=0 // loop_footer
    %s13 = sadd.s32 1, %s9
  $region7: #{_lambda_.14} parent=0 // loop_footer_branch
    %8 = sbr.rel target = $region3
  $region8: #{_lambda_.14} parent=0 // loop_exit
    _

// kernel: _lambda_.19
$region0: #{_lambda_.19}
  #allocation0 [shape = 'u32[]', space=smem, size = 0x4, offset = 0x4, fixed_abs, tag = 'smem constant byte address 0x4 - core index']
  #allocation1 [shape = 'u32[144,128]{1,0:T(1,128)}', space=vmem, size = 0x12000, scoped, tag = 'internal scratch']
  %s0 = inlined_call_operand.vmem [shape: bf16[2,4,24], index: 0, kind: input, shape index: {}]
  %s1 = inlined_call_operand.vmem [shape: bf16[24,72], index: 1, kind: input, shape index: {}]
  %s2 = inlined_call_operand.vmem [shape: f32[1,72], index: 2, kind: input, shape index: {}]
  %s3 = inlined_call_operand.hbm [shape: f32[2,4,72], index: 3, kind: output, shape index: {}]
  %s4 = sld [smem:[#allocation0]]
  $region45: #{_lambda_.19} parent=0
    _
  %s6 = ssub.s32 1, %s4
  %s7 = scalar_select 0, %s6, %s4
  $region1: #{_lambda_.19} parent=0
    #allocation2 [shape = 'u8[4096]{0}', space=vmem, size = 0x1000, scoped, tag = 'output window, operand 0']
    #allocation3 [shape = 's32[2]{0}', space=sflag, size = 0x8, scoped, tag = 'scoped memory for _lambda_.19']
    %8 = vsyncpa [#allocation3], 0
    %s9 = scalar_lea.sflag [#allocation3], 1
    %10 = vsyncpa %s9, 0
    loop: start=0, step=1, limit=4
    $region2: #{_lambda_.19} parent=1 // loop_pre_header
      _
    $region3: #{_lambda_.19} parent=1 // loop_header
      %s12 = sphi 0, %s16
      %p13 = scmp.ge.s32.totalorder %s12, 4
      %s19 = sphi 0, %s31
      %s20 = sphi 0, %s27
      %s21 = sphi 0, %s19
      %s22 = sphi 0, %s20
      %s23 = sphi 0, %s21
      %s24 = sphi 0, %s22
      %s36 = sphi 0, %s38
      %s39 = sphi 0, %s36
      %s40 = sphi 0, %s39
      %s56 = sphi 0, %s40
      %s60 = sphi 0, %s60
      %s62 = sphi 0, %s60
      %s63 = sphi 0, %s62
      %s77 = sphi 0, %s63
      %s81 = sphi 0, %s81
      %s83 = sphi 0, %s81
      %s84 = sphi 0, %s83
      %s98 = sphi 0, %s84
      %s106 = sphi 0, %s108
      %s109 = sphi 0, %s106
      %s110 = sphi 0, %s109
      %s126 = sphi 0, %s110
    $region4: #{_lambda_.19} parent=1 // loop_header_branch
      %15 = sbr.rel (%p13) target = $region8
    $region5: #{_lambda_.19} parent=1 // loop_body
      %s17 = ssub.s32 %s12, 1
      %s18 = ssub.s32 %s12, 2
      %s25 = sadd.s32 1, %s20
      %p26 = scmp.ge.s32.totalorder %s25, 1
      %s27 = scalar_select %p26, 0, %s25
      %s28 = sadd.s32 1, %s19
      %s29 = scalar_select %p26, %s28, %s19
      %p30 = scmp.ge.s32.totalorder %s29, 2
      %s31 = scalar_select %p30, 0, %s29
      %s32 = ssub.s32 %s19, %s31
      %s33 = ssub.s32 %s20, %s27
      %s34 = sor.u32 %s32, %s33
      %p35 = scmp.eq.s32.totalorder %s34, 0
      %s37 = sadd.s32 %s36, 1
      %s38 = scalar_select %p35, %s36, %s37
      %p41 = pneg %p35
      %p42 = scmp.eq.s32.totalorder %s12, 1
      %p43 = por %p41, %p42
      %p44 = scmp.ne.s32.totalorder %s36, %s39
      %p45 = scmp.eq.s32.totalorder %s12, 0
      %p46 = por %p44, %p45
      %p47 = scmp.ne.s32.totalorder %s36, %s39
      %p48 = scmp.eq.s32.totalorder %s17, 1
      %p49 = por %p47, %p48
      %p50 = scmp.ne.s32.totalorder %s39, %s40
      %p51 = scmp.eq.s32.totalorder %s17, 0
      %p52 = por %p50, %p51
      %p53 = scmp.ne.s32.totalorder %s39, %s40
      %p54 = scmp.eq.s32.totalorder %s18, 1
      %p55 = por %p53, %p54
      %p57 = scmp.ne.s32.totalorder %s40, %s56
      %p58 = scmp.eq.s32.totalorder %s18, 0
      %p59 = por %p57, %p58
      %s61 = sadd.s32 %s60, 1
      %p64 = scmp.eq.s32.totalorder %s12, 1
      %p65 = scmp.ne.s32.totalorder %s60, %s62
      %p66 = scmp.eq.s32.totalorder %s12, 0
      %p67 = por %p65, %p66
      %p68 = scmp.ne.s32.totalorder %s60, %s62
      %p69 = scmp.eq.s32.totalorder %s17, 1
      %p70 = por %p68, %p69
      %p71 = scmp.ne.s32.totalorder %s62, %s63
      %p72 = scmp.eq.s32.totalorder %s17, 0
      %p73 = por %p71, %p72
      %p74 = scmp.ne.s32.totalorder %s62, %s63
      %p75 = scmp.eq.s32.totalorder %s18, 1
      %p76 = por %p74, %p75
      %p78 = scmp.ne.s32.totalorder %s63, %s77
      %p79 = scmp.eq.s32.totalorder %s18, 0
      %p80 = por %p78, %p79
      %s82 = sadd.s32 %s81, 1
      %p85 = scmp.eq.s32.totalorder %s12, 1
      %p86 = scmp.ne.s32.totalorder %s81, %s83
      %p87 = scmp.eq.s32.totalorder %s12, 0
      %p88 = por %p86, %p87
      %p89 = scmp.ne.s32.totalorder %s81, %s83
      %p90 = scmp.eq.s32.totalorder %s17, 1
      %p91 = por %p89, %p90
      %p92 = scmp.ne.s32.totalorder %s83, %s84
      %p93 = scmp.eq.s32.totalorder %s17, 0
      %p94 = por %p92, %p93
      %p95 = scmp.ne.s32.totalorder %s83, %s84
      %p96 = scmp.eq.s32.totalorder %s18, 1
      %p97 = por %p95, %p96
      %p99 = scmp.ne.s32.totalorder %s84, %s98
      %p100 = scmp.eq.s32.totalorder %s18, 0
      %p101 = por %p99, %p100
      %s102 = ssub.s32 %s19, %s31
      %s103 = ssub.s32 %s20, %s27
      %s104 = sor.u32 %s102, %s103
      %p105 = scmp.eq.s32.totalorder %s104, 0
      %s107 = sadd.s32 %s106, 1
      %s108 = scalar_select %p105, %s106, %s107
      %p111 = pneg %p105
      %p112 = scmp.eq.s32.totalorder %s12, 1
      %p113 = por %p111, %p112
      %p114 = scmp.ne.s32.totalorder %s106, %s109
      %p115 = scmp.eq.s32.totalorder %s12, 0
      %p116 = por %p114, %p115
      %p117 = scmp.ne.s32.totalorder %s106, %s109
      %p118 = scmp.eq.s32.totalorder %s17, 1
      %p119 = por %p117, %p118
      %p120 = scmp.ne.s32.totalorder %s109, %s110
      %p121 = scmp.eq.s32.totalorder %s17, 0
      %p122 = por %p120, %p121
      %p123 = scmp.ne.s32.totalorder %s109, %s110
      %p124 = scmp.eq.s32.totalorder %s18, 1
      %p125 = por %p123, %p124
      %p127 = scmp.ne.s32.totalorder %s110, %s126
      %p128 = scmp.eq.s32.totalorder %s18, 0
      %p129 = por %p127, %p128
      %p130 = scmp.le.s32.totalorder 1, %s12
      %p131 = scmp.lt.s32.totalorder %s12, 3
      %p132 = pnand %p130, %p131
      %p133 = pneg %p132
      // Predicated region
      $region9: #{_lambda_.19} parent=5 // pred_check
        _
      $region10: #{_lambda_.19} parent=5 // pred_check_branch
        %135 = sbr.rel (%p132) target = $region12
      $region11: #{_lambda_.19} parent=5 // pred_region
        %s136 = ssub.s32 %s12, 1
        // Predicated region
        $region13: #{_lambda_.19} parent=11 // pred_check
          %p137 = pneg %p73
        $region14: #{_lambda_.19} parent=11 // pred_check_branch
          %139 = sbr.rel (%p137) target = $region16
        $region15: #{_lambda_.19} parent=11 // pred_region
          _
        $region16: #{_lambda_.19} parent=11 // pred_fallthru
          _
        // Predicated region
        $region17: #{_lambda_.19} parent=11 // pred_check
          %p140 = pneg %p94
        $region18: #{_lambda_.19} parent=11 // pred_check_branch
          %142 = sbr.rel (%p140) target = $region20
        $region19: #{_lambda_.19} parent=11 // pred_region
          _
        $region20: #{_lambda_.19} parent=11 // pred_fallthru
          _
      $region12: #{_lambda_.19} parent=5 // pred_fallthru
        _
      %p143 = scmp.lt.s32.totalorder %s12, 2
      // Predicated region
      $region21: #{_lambda_.19} parent=5 // pred_check
        %p144 = pneg %p143
      $region22: #{_lambda_.19} parent=5 // pred_check_branch
        %146 = sbr.rel (%p144) target = $region24
      $region23: #{_lambda_.19} parent=5 // pred_region
        // Predicated region
        $region25: #{_lambda_.19} parent=23 // pred_check
          %p147 = pneg %p46
        $region26: #{_lambda_.19} parent=23 // pred_check_branch
          %149 = sbr.rel (%p147) target = $region28
        $region27: #{_lambda_.19} parent=23 // pred_region
          %p150 = scmp.lt.s32.totalorder %s19, 1
          %s151 = scalar_select %p150, %s19, 1
          %p152 = scmp.lt.s32.totalorder %s20, 0
          %s153 = scalar_select %p152, %s20, 0
          %s154 = sadd.s32 %s153, %s151
          %s155 = smul.addr %s154, 2
          %s156 = scalar_lea.vmem %s0, %s155
        $region28: #{_lambda_.19} parent=23 // pred_fallthru
          _
      $region24: #{_lambda_.19} parent=5 // pred_fallthru
        _
      %p157 = scmp.le.s32.totalorder 1, %s12
      %p158 = scmp.lt.s32.totalorder %s12, 3
      %p159 = pnand %p157, %p158
      %p160 = pneg %p159
      // Predicated region
      $region29: #{_lambda_.19} parent=5 // pred_check
        _
      $region30: #{_lambda_.19} parent=5 // pred_check_branch
        %162 = sbr.rel (%p159) target = $region32
      $region31: #{_lambda_.19} parent=5 // pred_region
        %s163 = ssub.s32 %s12, 1
        %p164 = scmp.lt.s32.totalorder %s21, 1
        %s165 = scalar_select %p164, %s21, 1
        %p166 = scmp.lt.s32.totalorder %s22, 0
        %s167 = scalar_select %p166, %s22, 0
        %s168 = sadd.s32 %s167, %s165
        %s169 = smul.addr %s168, 2
        %s170 = scalar_lea.vmem %s0, %s169
        %p171 = pneg %p52
        %p172 = pneg %p49
        %p173 = pneg %p73
        %p174 = pneg %p70
        %p175 = pneg %p94
        %p176 = pneg %p91
        %p177 = pneg %p122
        %p178 = pneg %p119
        %s179 = sand.u32 %s109, 1
        %s180 = scalar_lea.sflag [#allocation3], %s179
        %s181 = sand.u32 %s109, 1
        %s182 = smul.addr %s181, 4
        %s183 = scalar_lea.vmem [#allocation2], %s182
        %p184 = scmp.lt.s32.totalorder %s21, 1
        %s185 = scalar_select %p184, %s21, 1
        %p186 = scmp.lt.s32.totalorder %s22, 0
        %s187 = scalar_select %p186, %s22, 0
        %s188 = sadd.s32 %s187, %s185
        %s189 = smul.addr %s188, 2
        %s190 = scalar_lea.vmem %s0, %s189
        %v192 = vld [vmem:[%s190] sm:$0x3]
        %v193 = vld [vmem:[%s1] sm:$0xf]
        %v194 = vld [vmem:[%s1 + $0x4] sm:$0xf]
        %v195 = vld [vmem:[%s1 + $0x8] sm:$0xf]
        %v196 = vld [vmem:[%s2] sm:$0x1]
        %v198 = vlaneseq
        %v199 = vshrl.u32 %v198, 7
        %v200 = vsub.s32 0, %v199
        %v201 = vrot.slane %v196, %v200
        %v206 = vunpack.c.l.b16 %v193
        %v207 = vunpack.c.l.b16 %v194
        %v208 = vunpack.c.l.b16 %v195
        %v209 = vpack.c.b16 %v207, %v206
        %v210 = vpack.c.b16 %v208, %v208
        %vm212 = vcmask 195584
        %v214 = vsel %vm212, %v192, 0
        %vm216 = vcmask 1043456
        %v218 = vsel %vm216, %v210, 0
        %220 = vmatprep.subr.bf16.mxu0 0
        %221 = vmatpush1.bf16.msra.mxu0 0
        %222 = vmatprep.subr.bf16.mxu0 0
        %223 = vmatpush1.bf16.msra.mxu0 0
        %224 = vmatprep.subr.bf16.mxu0 0
        %225 = vmatpush1.bf16.msra.mxu0 0
        %226 = vmatprep.subr.bf16.mxu0 0
        %227 = vmatpush1.bf16.msra.mxu0 0
        %228 = vmatprep.subr.bf16.mxu0 0
        %229 = vmatpush1.bf16.msra.mxu0 0
        %230 = vmatprep.subr.bf16.mxu0 0
        %231 = vmatpush1.bf16.msra.mxu0 0
        %232 = vmatprep.subr.bf16.mxu0 0
        %233 = vmatpush1.bf16.msra.mxu0 %v218
        %234 = vmatprep.subr.bf16.mxu0 0
        %235 = vmatpush1.bf16.msra.mxu0 %v209
        %236 = vmatprep.subr.bf16.mxu0 0
        %237 = vmatpush2.bf16.msra.mxu0 0
        %238 = vmatprep.subr.bf16.mxu0 0
        %239 = vmatpush2.bf16.msra.mxu0 0
        %240 = vmatprep.subr.bf16.mxu0 0
        %241 = vmatpush2.bf16.msra.mxu0 0
        %242 = vmatprep.subr.bf16.mxu0 0
        %243 = vmatpush2.bf16.msra.mxu0 0
        %244 = vmatprep.subr.bf16.mxu0 0
        %245 = vmatpush2.bf16.msra.mxu0 0
        %246 = vmatprep.subr.bf16.mxu0 0
        %247 = vmatpush2.bf16.msra.mxu0 0
        %248 = vmatprep.subr.bf16.mxu0 0
        %249 = vmatpush2.bf16.msra.mxu0 0
        %250 = vmatprep.subr.bf16.mxu0 0
        %251 = vmatpush2.bf16.msra.mxu0 0
        %252 = vmatprep.mubr.bf16.mxu0 0
        %253 = vmatmul.mubr.bf16.gmra.mxu0 %v214
        %v254 = vpop.f32.mrf.mxu0
        %v255 = vadd.f32 %v201, %v254
        %v256 = vpop.f32.mrf.mxu0
        %v257 = vpop.f32.mrf.mxu0
        %v258 = vpop.f32.mrf.mxu0
        %259 = vdwg.mxu0
        %v260 = vadd.f32 %v255, 3.0
        %v261 = vmax.f32 %v260, 0.0
        %v262 = vmin.f32 %v261, 6.0
        %v263 = vrcp.pop 6.0
        %v264 = vmul.f32 %v262, %v263
        %v265 = vmul.f32 %v255, %v264
        %vm266 = vcmask 584704
        %267 = vst.msk [vmem:[%s183] sm:$0xf] %vm266, %v265
        %s268 = sand.u32 %s109, 1
        %s269 = scalar_lea.sflag [#allocation3], %s268
        %s270 = sand.u32 %s109, 1
        %s271 = smul.addr %s270, 4
        %s272 = scalar_lea.vmem [#allocation2], %s271
        // Predicated region
        $region33: #{_lambda_.19} parent=31 // pred_check
          %p273 = pneg %p119
        $region34: #{_lambda_.19} parent=31 // pred_check_branch
          %275 = sbr.rel (%p273) target = $region36
        $region35: #{_lambda_.19} parent=31 // pred_region
          %s277 = ssub.s32 64, 64
          %278 = vsyncadd %s269, %s277
          %s279 = sadd.s32 %s22, %s21
          %s280 = smul.addr %s279, 64
          %s281 = scalar_lea.hbm %s3, %s280
          %s283 = sshll.u32 %s272, 4
          %s284 = int_to_ptr.vmem [resolvable:$true] %s283
          %286 = dma.vmem_to_hbm [thread:$0]  %s284, 64, %s281, %s269
        $region36: #{_lambda_.19} parent=31 // pred_fallthru
          _
      $region32: #{_lambda_.19} parent=5 // pred_fallthru
        _
      %p287 = scmp.le.s32.totalorder 2, %s12
      // Predicated region
      $region37: #{_lambda_.19} parent=5 // pred_check
        %p288 = pneg %p287
      $region38: #{_lambda_.19} parent=5 // pred_check_branch
        %290 = sbr.rel (%p288) target = $region40
      $region39: #{_lambda_.19} parent=5 // pred_region
        %s291 = ssub.s32 %s12, 2
        // Predicated region
        $region41: #{_lambda_.19} parent=39 // pred_check
          %p292 = pneg %p125
        $region42: #{_lambda_.19} parent=39 // pred_check_branch
          %294 = sbr.rel (%p292) target = $region44
        $region43: #{_lambda_.19} parent=39 // pred_region
          %s295 = sand.u32 %s110, 1
          %s296 = scalar_lea.sflag [#allocation3], %s295
          %s297 = sand.u32 %s110, 1
          %s298 = smul.addr %s297, 4
          %s299 = scalar_lea.vmem [#allocation2], %s298
          %300 = dma.done %s296, 64
        $region44: #{_lambda_.19} parent=39 // pred_fallthru
          _
      $region40: #{_lambda_.19} parent=5 // pred_fallthru
        _
    $region6: #{_lambda_.19} parent=1 // loop_footer
      %s16 = sadd.s32 1, %s12
    $region7: #{_lambda_.19} parent=1 // loop_footer_branch
      %11 = sbr.rel target = $region3
    $region8: #{_lambda_.19} parent=1 // loop_exit
      _
    %301 = vsyncpa [#allocation3], 1
    %s302 = scalar_lea.sflag [#allocation3], 1
    %303 = vsyncpa %s302, 1

// kernel: _lambda_.18
$region0: #{_lambda_.18}
  #allocation0 [shape = 'u32[]', space=smem, size = 0x4, offset = 0x4, fixed_abs, tag = 'smem constant byte address 0x4 - core index']
  #allocation1 [shape = 'u32[144,128]{1,0:T(1,128)}', space=vmem, size = 0x12000, scoped, tag = 'internal scratch']
  %s0 = inlined_call_operand.vmem [shape: bf16[2,4,72], index: 0, kind: input, shape index: {}]
  %s1 = inlined_call_operand.vmem [shape: f32[2,1,72], index: 1, kind: input, shape index: {}]
  %s2 = inlined_call_operand.vmem [shape: bf16[72,24], index: 2, kind: input, shape index: {}]
  %s3 = inlined_call_operand.vmem [shape: f32[1,24], index: 3, kind: input, shape index: {}]
  %s4 = inlined_call_operand.vmem [shape: bf16[2,4,24], index: 4, kind: input, shape index: {}]
  %s5 = inlined_call_operand.vmem [shape: bf16[2,4,24], index: 5, kind: output, shape index: {}]
  %s6 = sld [smem:[#allocation0]]
  $region53: #{_lambda_.18} parent=0
    _
  %s8 = ssub.s32 1, %s6
  %s9 = scalar_select 0, %s8, %s6
  loop: start=0, step=1, limit=4
  $region2: #{_lambda_.18} parent=0 // loop_pre_header
    _
  $region3: #{_lambda_.18} parent=0 // loop_header
    %s11 = sphi 0, %s15
    %p12 = scmp.ge.s32.totalorder %s11, 4
    %s18 = sphi 0, %s30
    %s19 = sphi 0, %s26
    %s20 = sphi 0, %s18
    %s21 = sphi 0, %s19
    %s22 = sphi 0, %s20
    %s23 = sphi 0, %s21
    %s35 = sphi 0, %s37
    %s38 = sphi 0, %s35
    %s39 = sphi 0, %s38
    %s55 = sphi 0, %s39
    %s61 = sphi 0, %s63
    %s64 = sphi 0, %s61
    %s65 = sphi 0, %s64
    %s81 = sphi 0, %s65
    %s85 = sphi 0, %s85
    %s87 = sphi 0, %s85
    %s88 = sphi 0, %s87
    %s102 = sphi 0, %s88
    %s106 = sphi 0, %s106
    %s108 = sphi 0, %s106
    %s109 = sphi 0, %s108
    %s123 = sphi 0, %s109
    %s131 = sphi 0, %s133
    %s134 = sphi 0, %s131
    %s135 = sphi 0, %s134
    %s151 = sphi 0, %s135
    %s159 = sphi 0, %s161
    %s162 = sphi 0, %s159
    %s163 = sphi 0, %s162
    %s179 = sphi 0, %s163
  $region4: #{_lambda_.18} parent=0 // loop_header_branch
    %14 = sbr.rel (%p12) target = $region8
  $region5: #{_lambda_.18} parent=0 // loop_body
    %s16 = ssub.s32 %s11, 1
    %s17 = ssub.s32 %s11, 2
    %s24 = sadd.s32 1, %s19
    %p25 = scmp.ge.s32.totalorder %s24, 1
    %s26 = scalar_select %p25, 0, %s24
    %s27 = sadd.s32 1, %s18
    %s28 = scalar_select %p25, %s27, %s18
    %p29 = scmp.ge.s32.totalorder %s28, 2
    %s30 = scalar_select %p29, 0, %s28
    %s31 = ssub.s32 %s18, %s30
    %s32 = ssub.s32 %s19, %s26
    %s33 = sor.u32 %s31, %s32
    %p34 = scmp.eq.s32.totalorder %s33, 0
    %s36 = sadd.s32 %s35, 1
    %s37 = scalar_select %p34, %s35, %s36
    %p40 = pneg %p34
    %p41 = scmp.eq.s32.totalorder %s11, 1
    %p42 = por %p40, %p41
    %p43 = scmp.ne.s32.totalorder %s35, %s38
    %p44 = scmp.eq.s32.totalorder %s11, 0
    %p45 = por %p43, %p44
    %p46 = scmp.ne.s32.totalorder %s35, %s38
    %p47 = scmp.eq.s32.totalorder %s16, 1
    %p48 = por %p46, %p47
    %p49 = scmp.ne.s32.totalorder %s38, %s39
    %p50 = scmp.eq.s32.totalorder %s16, 0
    %p51 = por %p49, %p50
    %p52 = scmp.ne.s32.totalorder %s38, %s39
    %p53 = scmp.eq.s32.totalorder %s17, 1
    %p54 = por %p52, %p53
    %p56 = scmp.ne.s32.totalorder %s39, %s55
    %p57 = scmp.eq.s32.totalorder %s17, 0
    %p58 = por %p56, %p57
    %s59 = ssub.s32 %s18, %s30
    %p60 = scmp.eq.s32.totalorder %s59, 0
    %s62 = sadd.s32 %s61, 1
    %s63 = scalar_select %p60, %s61, %s62
    %p66 = pneg %p60
    %p67 = scmp.eq.s32.totalorder %s11, 1
    %p68 = por %p66, %p67
    %p69 = scmp.ne.s32.totalorder %s61, %s64
    %p70 = scmp.eq.s32.totalorder %s11, 0
    %p71 = por %p69, %p70
    %p72 = scmp.ne.s32.totalorder %s61, %s64
    %p73 = scmp.eq.s32.totalorder %s16, 1
    %p74 = por %p72, %p73
    %p75 = scmp.ne.s32.totalorder %s64, %s65
    %p76 = scmp.eq.s32.totalorder %s16, 0
    %p77 = por %p75, %p76
    %p78 = scmp.ne.s32.totalorder %s64, %s65
    %p79 = scmp.eq.s32.totalorder %s17, 1
    %p80 = por %p78, %p79
    %p82 = scmp.ne.s32.totalorder %s65, %s81
    %p83 = scmp.eq.s32.totalorder %s17, 0
    %p84 = por %p82, %p83
    %s86 = sadd.s32 %s85, 1
    %p89 = scmp.eq.s32.totalorder %s11, 1
    %p90 = scmp.ne.s32.totalorder %s85, %s87
    %p91 = scmp.eq.s32.totalorder %s11, 0
    %p92 = por %p90, %p91
    %p93 = scmp.ne.s32.totalorder %s85, %s87
    %p94 = scmp.eq.s32.totalorder %s16, 1
    %p95 = por %p93, %p94
    %p96 = scmp.ne.s32.totalorder %s87, %s88
    %p97 = scmp.eq.s32.totalorder %s16, 0
    %p98 = por %p96, %p97
    %p99 = scmp.ne.s32.totalorder %s87, %s88
    %p100 = scmp.eq.s32.totalorder %s17, 1
    %p101 = por %p99, %p100
    %p103 = scmp.ne.s32.totalorder %s88, %s102
    %p104 = scmp.eq.s32.totalorder %s17, 0
    %p105 = por %p103, %p104
    %s107 = sadd.s32 %s106, 1
    %p110 = scmp.eq.s32.totalorder %s11, 1
    %p111 = scmp.ne.s32.totalorder %s106, %s108
    %p112 = scmp.eq.s32.totalorder %s11, 0
    %p113 = por %p111, %p112
    %p114 = scmp.ne.s32.totalorder %s106, %s108
    %p115 = scmp.eq.s32.totalorder %s16, 1
    %p116 = por %p114, %p115
    %p117 = scmp.ne.s32.totalorder %s108, %s109
    %p118 = scmp.eq.s32.totalorder %s16, 0
    %p119 = por %p117, %p118
    %p120 = scmp.ne.s32.totalorder %s108, %s109
    %p121 = scmp.eq.s32.totalorder %s17, 1
    %p122 = por %p120, %p121
    %p124 = scmp.ne.s32.totalorder %s109, %s123
    %p125 = scmp.eq.s32.totalorder %s17, 0
    %p126 = por %p124, %p125
    %s127 = ssub.s32 %s18, %s30
    %s128 = ssub.s32 %s19, %s26
    %s129 = sor.u32 %s127, %s128
    %p130 = scmp.eq.s32.totalorder %s129, 0
    %s132 = sadd.s32 %s131, 1
    %s133 = scalar_select %p130, %s131, %s132
    %p136 = pneg %p130
    %p137 = scmp.eq.s32.totalorder %s11, 1
    %p138 = por %p136, %p137
    %p139 = scmp.ne.s32.totalorder %s131, %s134
    %p140 = scmp.eq.s32.totalorder %s11, 0
    %p141 = por %p139, %p140
    %p142 = scmp.ne.s32.totalorder %s131, %s134
    %p143 = scmp.eq.s32.totalorder %s16, 1
    %p144 = por %p142, %p143
    %p145 = scmp.ne.s32.totalorder %s134, %s135
    %p146 = scmp.eq.s32.totalorder %s16, 0
    %p147 = por %p145, %p146
    %p148 = scmp.ne.s32.totalorder %s134, %s135
    %p149 = scmp.eq.s32.totalorder %s17, 1
    %p150 = por %p148, %p149
    %p152 = scmp.ne.s32.totalorder %s135, %s151
    %p153 = scmp.eq.s32.totalorder %s17, 0
    %p154 = por %p152, %p153
    %s155 = ssub.s32 %s18, %s30
    %s156 = ssub.s32 %s19, %s26
    %s157 = sor.u32 %s155, %s156
    %p158 = scmp.eq.s32.totalorder %s157, 0
    %s160 = sadd.s32 %s159, 1
    %s161 = scalar_select %p158, %s159, %s160
    %p164 = pneg %p158
    %p165 = scmp.eq.s32.totalorder %s11, 1
    %p166 = por %p164, %p165
    %p167 = scmp.ne.s32.totalorder %s159, %s162
    %p168 = scmp.eq.s32.totalorder %s11, 0
    %p169 = por %p167, %p168
    %p170 = scmp.ne.s32.totalorder %s159, %s162
    %p171 = scmp.eq.s32.totalorder %s16, 1
    %p172 = por %p170, %p171
    %p173 = scmp.ne.s32.totalorder %s162, %s163
    %p174 = scmp.eq.s32.totalorder %s16, 0
    %p175 = por %p173, %p174
    %p176 = scmp.ne.s32.totalorder %s162, %s163
    %p177 = scmp.eq.s32.totalorder %s17, 1
    %p178 = por %p176, %p177
    %p180 = scmp.ne.s32.totalorder %s163, %s179
    %p181 = scmp.eq.s32.totalorder %s17, 0
    %p182 = por %p180, %p181
    %p183 = scmp.le.s32.totalorder 1, %s11
    %p184 = scmp.lt.s32.totalorder %s11, 3
    %p185 = pnand %p183, %p184
    %p186 = pneg %p185
    // Predicated region
    $region9: #{_lambda_.18} parent=5 // pred_check
      _
    $region10: #{_lambda_.18} parent=5 // pred_check_branch
      %188 = sbr.rel (%p185) target = $region12
    $region11: #{_lambda_.18} parent=5 // pred_region
      %s189 = ssub.s32 %s11, 1
      // Predicated region
      $region13: #{_lambda_.18} parent=11 // pred_check
        %p190 = pneg %p98
      $region14: #{_lambda_.18} parent=11 // pred_check_branch
        %192 = sbr.rel (%p190) target = $region16
      $region15: #{_lambda_.18} parent=11 // pred_region
        _
      $region16: #{_lambda_.18} parent=11 // pred_fallthru
        _
      // Predicated region
      $region17: #{_lambda_.18} parent=11 // pred_check
        %p193 = pneg %p119
      $region18: #{_lambda_.18} parent=11 // pred_check_branch
        %195 = sbr.rel (%p193) target = $region20
      $region19: #{_lambda_.18} parent=11 // pred_region
        _
      $region20: #{_lambda_.18} parent=11 // pred_fallthru
        _
    $region12: #{_lambda_.18} parent=5 // pred_fallthru
      _
    %p196 = scmp.lt.s32.totalorder %s11, 2
    // Predicated region
    $region21: #{_lambda_.18} parent=5 // pred_check
      %p197 = pneg %p196
    $region22: #{_lambda_.18} parent=5 // pred_check_branch
      %199 = sbr.rel (%p197) target = $region24
    $region23: #{_lambda_.18} parent=5 // pred_region
      // Predicated region
      $region25: #{_lambda_.18} parent=23 // pred_check
        %p200 = pneg %p45
      $region26: #{_lambda_.18} parent=23 // pred_check_branch
        %202 = sbr.rel (%p200) target = $region28
      $region27: #{_lambda_.18} parent=23 // pred_region
        %p203 = scmp.lt.s32.totalorder %s18, 1
        %s204 = scalar_select %p203, %s18, 1
        %p205 = scmp.lt.s32.totalorder %s19, 0
        %s206 = scalar_select %p205, %s19, 0
        %s207 = sadd.s32 %s206, %s204
        %s208 = smul.addr %s207, 2
        %s209 = scalar_lea.vmem %s0, %s208
      $region28: #{_lambda_.18} parent=23 // pred_fallthru
        _
      // Predicated region
      $region29: #{_lambda_.18} parent=23 // pred_check
        %p210 = pneg %p71
      $region30: #{_lambda_.18} parent=23 // pred_check_branch
        %212 = sbr.rel (%p210) target = $region32
      $region31: #{_lambda_.18} parent=23 // pred_region
        %p213 = scmp.lt.s32.totalorder %s18, 1
        %s214 = scalar_select %p213, %s18, 1
        %s215 = scalar_lea.vmem %s1, %s214
      $region32: #{_lambda_.18} parent=23 // pred_fallthru
        _
      // Predicated region
      $region33: #{_lambda_.18} parent=23 // pred_check
        %p216 = pneg %p141
      $region34: #{_lambda_.18} parent=23 // pred_check_branch
        %218 = sbr.rel (%p216) target = $region36
      $region35: #{_lambda_.18} parent=23 // pred_region
        %p219 = scmp.lt.s32.totalorder %s18, 1
        %s220 = scalar_select %p219, %s18, 1
        %p221 = scmp.lt.s32.totalorder %s19, 0
        %s222 = scalar_select %p221, %s19, 0
        %s223 = sadd.s32 %s222, %s220
        %s224 = smul.addr %s223, 2
        %s225 = scalar_lea.vmem %s4, %s224
      $region36: #{_lambda_.18} parent=23 // pred_fallthru
        _
    $region24: #{_lambda_.18} parent=5 // pred_fallthru
      _
    %p226 = scmp.le.s32.totalorder 1, %s11
    %p227 = scmp.lt.s32.totalorder %s11, 3
    %p228 = pnand %p226, %p227
    %p229 = pneg %p228
    // Predicated region
    $region37: #{_lambda_.18} parent=5 // pred_check
      _
    $region38: #{_lambda_.18} parent=5 // pred_check_branch
      %231 = sbr.rel (%p228) target = $region40
    $region39: #{_lambda_.18} parent=5 // pred_region
      %s232 = ssub.s32 %s11, 1
      %p233 = scmp.lt.s32.totalorder %s20, 1
      %s234 = scalar_select %p233, %s20, 1
      %p235 = scmp.lt.s32.totalorder %s21, 0
      %s236 = scalar_select %p235, %s21, 0
      %s237 = sadd.s32 %s236, %s234
      %s238 = smul.addr %s237, 2
      %s239 = scalar_lea.vmem %s0, %s238
      %p240 = pneg %p51
      %p241 = pneg %p48
      %p242 = scmp.lt.s32.totalorder %s20, 1
      %s243 = scalar_select %p242, %s20, 1
      %s244 = scalar_lea.vmem %s1, %s243
      %p245 = pneg %p77
      %p246 = pneg %p74
      %p247 = pneg %p98
      %p248 = pneg %p95
      %p249 = pneg %p119
      %p250 = pneg %p116
      %p251 = scmp.lt.s32.totalorder %s20, 1
      %s252 = scalar_select %p251, %s20, 1
      %p253 = scmp.lt.s32.totalorder %s21, 0
      %s254 = scalar_select %p253, %s21, 0
      %s255 = sadd.s32 %s254, %s252
      %s256 = smul.addr %s255, 2
      %s257 = scalar_lea.vmem %s4, %s256
      %p258 = pneg %p147
      %p259 = pneg %p144
      %p260 = pneg %p175
      %p261 = pneg %p172
      %p262 = scmp.lt.s32.totalorder %s20, 1
      %s263 = scalar_select %p262, %s20, 1
      %p264 = scmp.lt.s32.totalorder %s21, 0
      %s265 = scalar_select %p264, %s21, 0
      %s266 = sadd.s32 %s265, %s263
      %s267 = smul.addr %s266, 2
      %s268 = scalar_lea.vmem %s5, %s267
      %p269 = scmp.lt.s32.totalorder %s20, 1
      %s270 = scalar_select %p269, %s20, 1
      %p271 = scmp.lt.s32.totalorder %s21, 0
      %s272 = scalar_select %p271, %s21, 0
      %s273 = sadd.s32 %s272, %s270
      %s274 = smul.addr %s273, 2
      %s275 = scalar_lea.vmem %s0, %s274
      %p276 = scmp.lt.s32.totalorder %s20, 1
      %s277 = scalar_select %p276, %s20, 1
      %s278 = scalar_lea.vmem %s1, %s277
      %p279 = scmp.lt.s32.totalorder %s20, 1
      %s280 = scalar_select %p279, %s20, 1
      %p281 = scmp.lt.s32.totalorder %s21, 0
      %s282 = scalar_select %p281, %s21, 0
      %s283 = sadd.s32 %s282, %s280
      %s284 = smul.addr %s283, 2
      %s285 = scalar_lea.vmem %s4, %s284
      %p286 = scmp.lt.s32.totalorder %s20, 1
      %s287 = scalar_select %p286, %s20, 1
      %p288 = scmp.lt.s32.totalorder %s21, 0
      %s289 = scalar_select %p288, %s21, 0
      %s290 = sadd.s32 %s289, %s287
      %s291 = smul.addr %s290, 2
      %s292 = scalar_lea.vmem %s5, %s291
      %v294 = vld [vmem:[%s275] sm:$0x3]
      %v295 = vunpack.c.l.bf16 %v294
      %v296 = vld [vmem:[%s278] sm:$0x1]
      %v298 = vlaneseq
      %v299 = vshrl.u32 %v298, 7
      %v300 = vsub.s32 0, %v299
      %v301 = vrot.slane %v296, %v300
      %v303 = vmul.f32 %v295, %v301
      %v304 = vadd.f32 %v303, 3.0
      %v305 = vmax.f32 %v304, 0.0
      %v306 = vmin.f32 %v305, 6.0
      %v307 = vrcp.pop 6.0
      %v308 = vmul.f32 %v306, %v307
      %v309 = vmul.f32 %v303, %v308
      %v310 = vpack.c.bf16 %v309, %v309
      %v311 = vld [vmem:[%s2] sm:$0xf]
      %v312 = vld [vmem:[%s2 + $0x4] sm:$0xf]
      %v313 = vld [vmem:[%s2 + $0x8] sm:$0xf]
      %v314 = vld [vmem:[%s2 + $0xc] sm:$0xf]
      %v315 = vld [vmem:[%s2 + $0x10] sm:$0xf]
      %v316 = vld [vmem:[%s2 + $0x14] sm:$0xf]
      %v317 = vld [vmem:[%s2 + $0x18] sm:$0xf]
      %v318 = vld [vmem:[%s2 + $0x1c] sm:$0xf]
      %v319 = vld [vmem:[%s2 + $0x20] sm:$0xf]
      %v320 = vld [vmem:[%s3] sm:$0x1]
      %v322 = vlaneseq
      %v323 = vshrl.u32 %v322, 7
      %v324 = vsub.s32 0, %v323
      %v325 = vrot.slane %v320, %v324
      %v336 = vunpack.c.l.b16 %v311
      %v337 = vunpack.c.l.b16 %v312
      %v338 = vunpack.c.l.b16 %v313
      %v339 = vunpack.c.l.b16 %v314
      %v340 = vunpack.c.l.b16 %v315
      %v341 = vunpack.c.l.b16 %v316
      %v342 = vunpack.c.l.b16 %v317
      %v343 = vunpack.c.l.b16 %v318
      %v344 = vunpack.c.l.b16 %v319
      %v345 = vpack.c.b16 %v337, %v336
      %v346 = vpack.c.b16 %v339, %v338
      %v347 = vpack.c.b16 %v341, %v340
      %v348 = vpack.c.b16 %v343, %v342
      %v349 = vpack.c.b16 %v344, %v344
      %vm354 = vcmask 588800
      %v356 = vsel %vm354, %v310, 0
      %vm358 = vcmask 1043456
      %v360 = vsel %vm358, %v349, 0
      %362 = vmatprep.subr.bf16.mxu0 0
      %363 = vmatpush1.bf16.msra.mxu0 0
      %364 = vmatprep.subr.bf16.mxu0 0
      %365 = vmatpush1.bf16.msra.mxu0 0
      %366 = vmatprep.subr.bf16.mxu0 0
      %367 = vmatpush1.bf16.msra.mxu0 0
      %368 = vmatprep.subr.bf16.mxu0 0
      %369 = vmatpush1.bf16.msra.mxu0 %v360
      %370 = vmatprep.subr.bf16.mxu0 0
      %371 = vmatpush1.bf16.msra.mxu0 %v348
      %372 = vmatprep.subr.bf16.mxu0 0
      %373 = vmatpush1.bf16.msra.mxu0 %v347
      %374 = vmatprep.subr.bf16.mxu0 0
      %375 = vmatpush1.bf16.msra.mxu0 %v346
      %376 = vmatprep.subr.bf16.mxu0 0
      %377 = vmatpush1.bf16.msra.mxu0 %v345
      %378 = vmatprep.subr.bf16.mxu0 0
      %379 = vmatpush2.bf16.msra.mxu0 0
      %380 = vmatprep.subr.bf16.mxu0 0
      %381 = vmatpush2.bf16.msra.mxu0 0
      %382 = vmatprep.subr.bf16.mxu0 0
      %383 = vmatpush2.bf16.msra.mxu0 0
      %384 = vmatprep.subr.bf16.mxu0 0
      %385 = vmatpush2.bf16.msra.mxu0 0
      %386 = vmatprep.subr.bf16.mxu0 0
      %387 = vmatpush2.bf16.msra.mxu0 0
      %388 = vmatprep.subr.bf16.mxu0 0
      %389 = vmatpush2.bf16.msra.mxu0 0
      %390 = vmatprep.subr.bf16.mxu0 0
      %391 = vmatpush2.bf16.msra.mxu0 0
      %392 = vmatprep.subr.bf16.mxu0 0
      %393 = vmatpush2.bf16.msra.mxu0 0
      %394 = vmatprep.mubr.bf16.mxu0 0
      %395 = vmatmul.mubr.bf16.gmra.mxu0 %v356
      %v396 = vpop.f32.mrf.mxu0
      %v397 = vadd.f32 %v325, %v396
      %v398 = vpop.f32.mrf.mxu0
      %v399 = vpop.f32.mrf.mxu0
      %v400 = vpop.f32.mrf.mxu0
      %401 = vdwg.mxu0
      %v402 = vld [vmem:[%s285] sm:$0x3]
      %v403 = vunpack.c.l.bf16 %v402
      %v404 = vadd.f32 %v397, %v403
      %v405 = vpack.c.bf16 %v404, %v404
      %vm406 = vcmask 189440
      %407 = vst.msk [vmem:[%s292] sm:$0x3] %vm406, %v405
      %p408 = scmp.lt.s32.totalorder %s20, 1
      %s409 = scalar_select %p408, %s20, 1
      %p410 = scmp.lt.s32.totalorder %s21, 0
      %s411 = scalar_select %p410, %s21, 0
      %s412 = sadd.s32 %s411, %s409
      %s413 = smul.addr %s412, 2
      %s414 = scalar_lea.vmem %s5, %s413
      // Predicated region
      $region41: #{_lambda_.18} parent=39 // pred_check
        %p415 = pneg %p172
      $region42: #{_lambda_.18} parent=39 // pred_check_branch
        %417 = sbr.rel (%p415) target = $region44
      $region43: #{_lambda_.18} parent=39 // pred_region
        _
      $region44: #{_lambda_.18} parent=39 // pred_fallthru
        _
    $region40: #{_lambda_.18} parent=5 // pred_fallthru
      _
    %p418 = scmp.le.s32.totalorder 2, %s11
    // Predicated region
    $region45: #{_lambda_.18} parent=5 // pred_check
      %p419 = pneg %p418
    $region46: #{_lambda_.18} parent=5 // pred_check_branch
      %421 = sbr.rel (%p419) target = $region48
    $region47: #{_lambda_.18} parent=5 // pred_region
      %s422 = ssub.s32 %s11, 2
      // Predicated region
      $region49: #{_lambda_.18} parent=47 // pred_check
        %p423 = pneg %p178
      $region50: #{_lambda_.18} parent=47 // pred_check_branch
        %425 = sbr.rel (%p423) target = $region52
      $region51: #{_lambda_.18} parent=47 // pred_region
        %p426 = scmp.lt.s32.totalorder %s22, 1
        %s427 = scalar_select %p426, %s22, 1
        %p428 = scmp.lt.s32.totalorder %s23, 0
        %s429 = scalar_select %p428, %s23, 0
        %s430 = sadd.s32 %s429, %s427
        %s431 = smul.addr %s430, 2
        %s432 = scalar_lea.vmem %s5, %s431
      $region52: #{_lambda_.18} parent=47 // pred_fallthru
        _
    $region48: #{_lambda_.18} parent=5 // pred_fallthru
      _
  $region6: #{_lambda_.18} parent=0 // loop_footer
    %s15 = sadd.s32 1, %s11
  $region7: #{_lambda_.18} parent=0 // loop_footer_branch
    %10 = sbr.rel target = $region3
  $region8: #{_lambda_.18} parent=0 // loop_exit
    _

// kernel: _lambda_.17
$region0: #{_lambda_.17}
  #allocation0 [shape = 'u32[]', space=smem, size = 0x4, offset = 0x4, fixed_abs, tag = 'smem constant byte address 0x4 - core index']
  #allocation1 [shape = 'u32[144,128]{1,0:T(1,128)}', space=vmem, size = 0x12000, scoped, tag = 'internal scratch']
  %s0 = inlined_call_operand.vmem [shape: bf16[2,6,6,72], index: 0, kind: input, shape index: {}]
  %s1 = inlined_call_operand.vmem [shape: f32[25,72], index: 1, kind: input, shape index: {}]
  %s2 = inlined_call_operand.vmem [shape: f32[1,72], index: 2, kind: input, shape index: {}, may-alias: {2,6}]
  %s3 = inlined_call_operand.vmem [shape: f32[72,24], index: 3, kind: input, shape index: {}]
  %s4 = inlined_call_operand.vmem [shape: f32[1,24], index: 4, kind: input, shape index: {}]
  %s5 = inlined_call_operand.vmem [shape: f32[24,72], index: 5, kind: input, shape index: {}]
  %s6 = inlined_call_operand.vmem [shape: f32[1,72], index: 6, kind: input, shape index: {}, may-alias: {2,6}]
  %s7 = inlined_call_operand.vmem [shape: bf16[2,2,2,72], index: 7, kind: output, shape index: {0}]
  %s8 = inlined_call_operand.vmem [shape: f32[2,1,72], index: 8, kind: output, shape index: {1}]
  %9 = xla_tuple %s7, %s8
  %s10 = sld [smem:[#allocation0]]
  $region77: #{_lambda_.17} parent=0
    _
  %s12 = ssub.s32 1, %s10
  %s13 = scalar_select 0, %s12, %s10
  loop: start=0, step=1, limit=4
  $region2: #{_lambda_.17} parent=0 // loop_pre_header
    _
  $region3: #{_lambda_.17} parent=0 // loop_header
    %s15 = sphi 0, %s19
    %p16 = scmp.ge.s32.totalorder %s15, 4
    %s22 = sphi 0, %s34
    %s23 = sphi 0, %s30
    %s24 = sphi 0, %s22
    %s25 = sphi 0, %s23
    %s26 = sphi 0, %s24
    %s27 = sphi 0, %s25
    %s37 = sphi 0, %s39
    %s40 = sphi 0, %s37
    %s41 = sphi 0, %s40
    %s57 = sphi 0, %s41
    %s61 = sphi 0, %s61
    %s63 = sphi 0, %s61
    %s64 = sphi 0, %s63
    %s78 = sphi 0, %s64
    %s82 = sphi 0, %s82
    %s84 = sphi 0, %s82
    %s85 = sphi 0, %s84
    %s99 = sphi 0, %s85
    %s103 = sphi 0, %s103
    %s105 = sphi 0, %s103
    %s106 = sphi 0, %s105
    %s120 = sphi 0, %s106
    %s124 = sphi 0, %s124
    %s126 = sphi 0, %s124
    %s127 = sphi 0, %s126
    %s141 = sphi 0, %s127
    %s145 = sphi 0, %s145
    %s147 = sphi 0, %s145
    %s148 = sphi 0, %s147
    %s162 = sphi 0, %s148
    %s166 = sphi 0, %s166
    %s168 = sphi 0, %s166
    %s169 = sphi 0, %s168
    %s183 = sphi 0, %s169
    %s191 = sphi 0, %s193
    %s194 = sphi 0, %s191
    %s195 = sphi 0, %s194
    %s211 = sphi 0, %s195
    %s217 = sphi 0, %s219
    %s220 = sphi 0, %s217
    %s221 = sphi 0, %s220
    %s237 = sphi 0, %s221
  $region4: #{_lambda_.17} parent=0 // loop_header_branch
    %18 = sbr.rel (%p16) target = $region8
  $region5: #{_lambda_.17} parent=0 // loop_body
    %s20 = ssub.s32 %s15, 1
    %s21 = ssub.s32 %s15, 2
    %s28 = sadd.s32 1, %s23
    %p29 = scmp.ge.s32.totalorder %s28, 1
    %s30 = scalar_select %p29, 0, %s28
    %s31 = sadd.s32 1, %s22
    %s32 = scalar_select %p29, %s31, %s22
    %p33 = scmp.ge.s32.totalorder %s32, 2
    %s34 = scalar_select %p33, 0, %s32
    %s35 = ssub.s32 %s22, %s34
    %p36 = scmp.eq.s32.totalorder %s35, 0
    %s38 = sadd.s32 %s37, 1
    %s39 = scalar_select %p36, %s37, %s38
    %p42 = pneg %p36
    %p43 = scmp.eq.s32.totalorder %s15, 1
    %p44 = por %p42, %p43
    %p45 = scmp.ne.s32.totalorder %s37, %s40
    %p46 = scmp.eq.s32.totalorder %s15, 0
    %p47 = por %p45, %p46
    %p48 = scmp.ne.s32.totalorder %s37, %s40
    %p49 = scmp.eq.s32.totalorder %s20, 1
    %p50 = por %p48, %p49
    %p51 = scmp.ne.s32.totalorder %s40, %s41
    %p52 = scmp.eq.s32.totalorder %s20, 0
    %p53 = por %p51, %p52
    %p54 = scmp.ne.s32.totalorder %s40, %s41
    %p55 = scmp.eq.s32.totalorder %s21, 1
    %p56 = por %p54, %p55
    %p58 = scmp.ne.s32.totalorder %s41, %s57
    %p59 = scmp.eq.s32.totalorder %s21, 0
    %p60 = por %p58, %p59
    %s62 = sadd.s32 %s61, 1
    %p65 = scmp.eq.s32.totalorder %s15, 1
    %p66 = scmp.ne.s32.totalorder %s61, %s63
    %p67 = scmp.eq.s32.totalorder %s15, 0
    %p68 = por %p66, %p67
    %p69 = scmp.ne.s32.totalorder %s61, %s63
    %p70 = scmp.eq.s32.totalorder %s20, 1
    %p71 = por %p69, %p70
    %p72 = scmp.ne.s32.totalorder %s63, %s64
    %p73 = scmp.eq.s32.totalorder %s20, 0
    %p74 = por %p72, %p73
    %p75 = scmp.ne.s32.totalorder %s63, %s64
    %p76 = scmp.eq.s32.totalorder %s21, 1
    %p77 = por %p75, %p76
    %p79 = scmp.ne.s32.totalorder %s64, %s78
    %p80 = scmp.eq.s32.totalorder %s21, 0
    %p81 = por %p79, %p80
    %s83 = sadd.s32 %s82, 1
    %p86 = scmp.eq.s32.totalorder %s15, 1
    %p87 = scmp.ne.s32.totalorder %s82, %s84
    %p88 = scmp.eq.s32.totalorder %s15, 0
    %p89 = por %p87, %p88
    %p90 = scmp.ne.s32.totalorder %s82, %s84
    %p91 = scmp.eq.s32.totalorder %s20, 1
    %p92 = por %p90, %p91
    %p93 = scmp.ne.s32.totalorder %s84, %s85
    %p94 = scmp.eq.s32.totalorder %s20, 0
    %p95 = por %p93, %p94
    %p96 = scmp.ne.s32.totalorder %s84, %s85
    %p97 = scmp.eq.s32.totalorder %s21, 1
    %p98 = por %p96, %p97
    %p100 = scmp.ne.s32.totalorder %s85, %s99
    %p101 = scmp.eq.s32.totalorder %s21, 0
    %p102 = por %p100, %p101
    %s104 = sadd.s32 %s103, 1
    %p107 = scmp.eq.s32.totalorder %s15, 1
    %p108 = scmp.ne.s32.totalorder %s103, %s105
    %p109 = scmp.eq.s32.totalorder %s15, 0
    %p110 = por %p108, %p109
    %p111 = scmp.ne.s32.totalorder %s103, %s105
    %p112 = scmp.eq.s32.totalorder %s20, 1
    %p113 = por %p111, %p112
    %p114 = scmp.ne.s32.totalorder %s105, %s106
    %p115 = scmp.eq.s32.totalorder %s20, 0
    %p116 = por %p114, %p115
    %p117 = scmp.ne.s32.totalorder %s105, %s106
    %p118 = scmp.eq.s32.totalorder %s21, 1
    %p119 = por %p117, %p118
    %p121 = scmp.ne.s32.totalorder %s106, %s120
    %p122 = scmp.eq.s32.totalorder %s21, 0
    %p123 = por %p121, %p122
    %s125 = sadd.s32 %s124, 1
    %p128 = scmp.eq.s32.totalorder %s15, 1
    %p129 = scmp.ne.s32.totalorder %s124, %s126
    %p130 = scmp.eq.s32.totalorder %s15, 0
    %p131 = por %p129, %p130
    %p132 = scmp.ne.s32.totalorder %s124, %s126
    %p133 = scmp.eq.s32.totalorder %s20, 1
    %p134 = por %p132, %p133
    %p135 = scmp.ne.s32.totalorder %s126, %s127
    %p136 = scmp.eq.s32.totalorder %s20, 0
    %p137 = por %p135, %p136
    %p138 = scmp.ne.s32.totalorder %s126, %s127
    %p139 = scmp.eq.s32.totalorder %s21, 1
    %p140 = por %p138, %p139
    %p142 = scmp.ne.s32.totalorder %s127, %s141
    %p143 = scmp.eq.s32.totalorder %s21, 0
    %p144 = por %p142, %p143
    %s146 = sadd.s32 %s145, 1
    %p149 = scmp.eq.s32.totalorder %s15, 1
    %p150 = scmp.ne.s32.totalorder %s145, %s147
    %p151 = scmp.eq.s32.totalorder %s15, 0
    %p152 = por %p150, %p151
    %p153 = scmp.ne.s32.totalorder %s145, %s147
    %p154 = scmp.eq.s32.totalorder %s20, 1
    %p155 = por %p153, %p154
    %p156 = scmp.ne.s32.totalorder %s147, %s148
    %p157 = scmp.eq.s32.totalorder %s20, 0
    %p158 = por %p156, %p157
    %p159 = scmp.ne.s32.totalorder %s147, %s148
    %p160 = scmp.eq.s32.totalorder %s21, 1
    %p161 = por %p159, %p160
    %p163 = scmp.ne.s32.totalorder %s148, %s162
    %p164 = scmp.eq.s32.totalorder %s21, 0
    %p165 = por %p163, %p164
    %s167 = sadd.s32 %s166, 1
    %p170 = scmp.eq.s32.totalorder %s15, 1
    %p171 = scmp.ne.s32.totalorder %s166, %s168
    %p172 = scmp.eq.s32.totalorder %s15, 0
    %p173 = por %p171, %p172
    %p174 = scmp.ne.s32.totalorder %s166, %s168
    %p175 = scmp.eq.s32.totalorder %s20, 1
    %p176 = por %p174, %p175
    %p177 = scmp.ne.s32.totalorder %s168, %s169
    %p178 = scmp.eq.s32.totalorder %s20, 0
    %p179 = por %p177, %p178
    %p180 = scmp.ne.s32.totalorder %s168, %s169
    %p181 = scmp.eq.s32.totalorder %s21, 1
    %p182 = por %p180, %p181
    %p184 = scmp.ne.s32.totalorder %s169, %s183
    %p185 = scmp.eq.s32.totalorder %s21, 0
    %p186 = por %p184, %p185
    %s187 = ssub.s32 %s22, %s34
    %s188 = ssub.s32 %s23, %s30
    %s189 = sor.u32 %s187, %s188
    %p190 = scmp.eq.s32.totalorder %s189, 0
    %s192 = sadd.s32 %s191, 1
    %s193 = scalar_select %p190, %s191, %s192
    %p196 = pneg %p190
    %p197 = scmp.eq.s32.totalorder %s15, 1
    %p198 = por %p196, %p197
    %p199 = scmp.ne.s32.totalorder %s191, %s194
    %p200 = scmp.eq.s32.totalorder %s15, 0
    %p201 = por %p199, %p200
    %p202 = scmp.ne.s32.totalorder %s191, %s194
    %p203 = scmp.eq.s32.totalorder %s20, 1
    %p204 = por %p202, %p203
    %p205 = scmp.ne.s32.totalorder %s194, %s195
    %p206 = scmp.eq.s32.totalorder %s20, 0
    %p207 = por %p205, %p206
    %p208 = scmp.ne.s32.totalorder %s194, %s195
    %p209 = scmp.eq.s32.totalorder %s21, 1
    %p210 = por %p208, %p209
    %p212 = scmp.ne.s32.totalorder %s195, %s211
    %p213 = scmp.eq.s32.totalorder %s21, 0
    %p214 = por %p212, %p213
    %s215 = ssub.s32 %s22, %s34
    %p216 = scmp.eq.s32.totalorder %s215, 0
    %s218 = sadd.s32 %s217, 1
    %s219 = scalar_select %p216, %s217, %s218
    %p222 = pneg %p216
    %p223 = scmp.eq.s32.totalorder %s15, 1
    %p224 = por %p222, %p223
    %p225 = scmp.ne.s32.totalorder %s217, %s220
    %p226 = scmp.eq.s32.totalorder %s15, 0
    %p227 = por %p225, %p226
    %p228 = scmp.ne.s32.totalorder %s217, %s220
    %p229 = scmp.eq.s32.totalorder %s20, 1
    %p230 = por %p228, %p229
    %p231 = scmp.ne.s32.totalorder %s220, %s221
    %p232 = scmp.eq.s32.totalorder %s20, 0
    %p233 = por %p231, %p232
    %p234 = scmp.ne.s32.totalorder %s220, %s221
    %p235 = scmp.eq.s32.totalorder %s21, 1
    %p236 = por %p234, %p235
    %p238 = scmp.ne.s32.totalorder %s221, %s237
    %p239 = scmp.eq.s32.totalorder %s21, 0
    %p240 = por %p238, %p239
    %p241 = scmp.le.s32.totalorder 1, %s15
    %p242 = scmp.lt.s32.totalorder %s15, 3
    %p243 = pnand %p241, %p242
    %p244 = pneg %p243
    // Predicated region
    $region9: #{_lambda_.17} parent=5 // pred_check
      _
    $region10: #{_lambda_.17} parent=5 // pred_check_branch
      %246 = sbr.rel (%p243) target = $region12
    $region11: #{_lambda_.17} parent=5 // pred_region
      %s247 = ssub.s32 %s15, 1
      // Predicated region
      $region13: #{_lambda_.17} parent=11 // pred_check
        %p248 = pneg %p74
      $region14: #{_lambda_.17} parent=11 // pred_check_branch
        %250 = sbr.rel (%p248) target = $region16
      $region15: #{_lambda_.17} parent=11 // pred_region
        _
      $region16: #{_lambda_.17} parent=11 // pred_fallthru
        _
      // Predicated region
      $region17: #{_lambda_.17} parent=11 // pred_check
        %p251 = pneg %p95
      $region18: #{_lambda_.17} parent=11 // pred_check_branch
        %253 = sbr.rel (%p251) target = $region20
      $region19: #{_lambda_.17} parent=11 // pred_region
        _
      $region20: #{_lambda_.17} parent=11 // pred_fallthru
        _
      // Predicated region
      $region21: #{_lambda_.17} parent=11 // pred_check
        %p254 = pneg %p116
      $region22: #{_lambda_.17} parent=11 // pred_check_branch
        %256 = sbr.rel (%p254) target = $region24
      $region23: #{_lambda_.17} parent=11 // pred_region
        _
      $region24: #{_lambda_.17} parent=11 // pred_fallthru
        _
      // Predicated region
      $region25: #{_lambda_.17} parent=11 // pred_check
        %p257 = pneg %p137
      $region26: #{_lambda_.17} parent=11 // pred_check_branch
        %259 = sbr.rel (%p257) target = $region28
      $region27: #{_lambda_.17} parent=11 // pred_region
        _
      $region28: #{_lambda_.17} parent=11 // pred_fallthru
        _
      // Predicated region
      $region29: #{_lambda_.17} parent=11 // pred_check
        %p260 = pneg %p158
      $region30: #{_lambda_.17} parent=11 // pred_check_branch
        %262 = sbr.rel (%p260) target = $region32
      $region31: #{_lambda_.17} parent=11 // pred_region
        _
      $region32: #{_lambda_.17} parent=11 // pred_fallthru
        _
      // Predicated region
      $region33: #{_lambda_.17} parent=11 // pred_check
        %p263 = pneg %p179
      $region34: #{_lambda_.17} parent=11 // pred_check_branch
        %265 = sbr.rel (%p263) target = $region36
      $region35: #{_lambda_.17} parent=11 // pred_region
        _
      $region36: #{_lambda_.17} parent=11 // pred_fallthru
        _
    $region12: #{_lambda_.17} parent=5 // pred_fallthru
      _
    %p266 = scmp.lt.s32.totalorder %s15, 2
    // Predicated region
    $region37: #{_lambda_.17} parent=5 // pred_check
      %p267 = pneg %p266
    $region38: #{_lambda_.17} parent=5 // pred_check_branch
      %269 = sbr.rel (%p267) target = $region40
    $region39: #{_lambda_.17} parent=5 // pred_region
      // Predicated region
      $region41: #{_lambda_.17} parent=39 // pred_check
        %p270 = pneg %p47
      $region42: #{_lambda_.17} parent=39 // pred_check_branch
        %272 = sbr.rel (%p270) target = $region44
      $region43: #{_lambda_.17} parent=39 // pred_region
        %p273 = scmp.lt.s32.totalorder %s22, 1
        %s274 = scalar_select %p273, %s22, 1
        %s275 = smul.addr %s274, 6
        %s276 = smul.addr %s275, 4
        %s277 = scalar_lea.vmem %s0, %s276
      $region44: #{_lambda_.17} parent=39 // pred_fallthru
        _
    $region40: #{_lambda_.17} parent=5 // pred_fallthru
      _
    %p278 = scmp.le.s32.totalorder 1, %s15
    %p279 = scmp.lt.s32.totalorder %s15, 3
    %p280 = pnand %p278, %p279
    %p281 = pneg %p280
    // Predicated region
    $region45: #{_lambda_.17} parent=5 // pred_check
      _
    $region46: #{_lambda_.17} parent=5 // pred_check_branch
      %283 = sbr.rel (%p280) target = $region48
    $region47: #{_lambda_.17} parent=5 // pred_region
      %s284 = ssub.s32 %s15, 1
      %p285 = scmp.lt.s32.totalorder %s24, 1
      %s286 = scalar_select %p285, %s24, 1
      %s287 = smul.addr %s286, 6
      %s288 = smul.addr %s287, 4
      %s289 = scalar_lea.vmem %s0, %s288
      %p290 = pneg %p53
      %p291 = pneg %p50
      %p292 = pneg %p74
      %p293 = pneg %p71
      %p294 = pneg %p95
      %p295 = pneg %p92
      %p296 = pneg %p116
      %p297 = pneg %p113
      %p298 = pneg %p137
      %p299 = pneg %p134
      %p300 = pneg %p158
      %p301 = pneg %p155
      %p302 = pneg %p179
      %p303 = pneg %p176
      %p304 = pneg %p207
      %p305 = pneg %p204
      %s306 = smul.u32 2, %s25
      %p307 = scmp.lt.s32.totalorder %s24, 1
      %s308 = scalar_select %p307, %s24, 1
      %p309 = scmp.lt.s32.totalorder %s306, 1
      %s310 = scalar_select %p309, %s306, 1
      %s311 = smul.addr %s308, 2
      %s312 = sadd.s32 %s310, %s311
      %s313 = scalar_lea.vmem %s7, %s312
      %p314 = pneg %p233
      %p315 = pneg %p230
      %p316 = scmp.lt.s32.totalorder %s24, 1
      %s317 = scalar_select %p316, %s24, 1
      %s318 = scalar_lea.vmem %s8, %s317
      %p319 = scmp.lt.s32.totalorder %s24, 1
      %s320 = scalar_select %p319, %s24, 1
      %s321 = smul.addr %s320, 6
      %s322 = smul.addr %s321, 4
      %s323 = scalar_lea.vmem %s0, %s322
      %s324 = smul.u32 2, %s25
      %p325 = scmp.lt.s32.totalorder %s24, 1
      %s326 = scalar_select %p325, %s24, 1
      %p327 = scmp.lt.s32.totalorder %s324, 1
      %s328 = scalar_select %p327, %s324, 1
      %s329 = smul.addr %s326, 2
      %s330 = sadd.s32 %s328, %s329
      %s331 = scalar_lea.vmem %s7, %s330
      %s332 = smul.u32 2, %s25
      %p333 = scmp.lt.s32.totalorder %s24, 1
      %s334 = scalar_select %p333, %s24, 1
      %s335 = scalar_lea.vmem %s8, %s334
      %s336 = smul.u32 %s25, 2
      %v337 = vld [vmem:[%s1] sm:$0xff]
      %v338 = vld [vmem:[%s1 + $0x8] sm:$0xff]
      %v339 = vld [vmem:[%s1 + $0x10] sm:$0xff]
      %v340 = vld [vmem:[%s1 + $0x18] sm:$0x1]
      %s341 = smul.addr %s336, 4
      %s342 = scalar_lea.vmem %s323, %s341
      %v343 = vld [vmem:[%s342] sm:$0x1]
      %v344 = vld [vmem:[%s342 + $0x4] sm:$0x1]
      %v345 = vunpack.c.l.bf16 %v343
      %v346 = vunpack.c.l.bf16 %v344
      %v347 = vlaneseq
      %v348 = vshrl.u32 %v347, 7
      %v349 = vsub.s32 0, %v348
      %v350 = vrot.slane %v337, %v349
      %v351 = vmul.f32 %v345, %v350
      %v352 = vmul.f32 %v346, %v350
      %v353 = vadd.f32 %v351, 0.0
      %v354 = vadd.f32 %v352, 0.0
      %v355 = vld [vmem:[%s342] sm:$0x3]
      %v356 = vld [vmem:[%s342 + $0x4] sm:$0x3]
      %v357 = vunpack.c.l.bf16 %v355
      %v358 = vunpack.c.l.bf16 %v356
      %v359 = vlaneseq
      %v360 = vshrl.u32 %v359, 7
      %v361 = vsub.s32 1, %v360
      %v362 = vrot.slane %v337, %v361
      %v363 = vmul.f32 %v357, %v362
      %v364 = vmul.f32 %v358, %v362
      %v367 = vrot.slane %v363, 1
      %v368 = vrot.slane %v364, 1
      %v371 = vadd.f32 %v353, %v367
      %v372 = vadd.f32 %v354, %v368
      %v373 = vld [vmem:[%s342] sm:$0x2]
      %v374 = vld [vmem:[%s342 + $0x4] sm:$0x2]
      %v375 = vunpack.c.l.bf16 %v373
      %v376 = vunpack.c.l.bf16 %v374
      %v377 = vlaneseq
      %v378 = vshrl.u32 %v377, 7
      %v379 = vsub.s32 2, %v378
      %v380 = vrot.slane %v337, %v379
      %v381 = vmul.f32 %v375, %v380
      %v382 = vmul.f32 %v376, %v380
      %v385 = vrot.slane %v381, 2
      %v386 = vrot.slane %v382, 2
      %v389 = vadd.f32 %v371, %v385
      %v390 = vadd.f32 %v372, %v386
      %v391 = vld [vmem:[%s342] sm:$0x6]
      %v392 = vld [vmem:[%s342 + $0x4] sm:$0x6]
      %v393 = vunpack.c.l.bf16 %v391
      %v394 = vunpack.c.l.bf16 %v392
      %v395 = vlaneseq
      %v396 = vshrl.u32 %v395, 7
      %v397 = vsub.s32 3, %v396
      %v398 = vrot.slane %v337, %v397
      %v399 = vmul.f32 %v393, %v398
      %v400 = vmul.f32 %v394, %v398
      %v403 = vrot.slane %v399, 3
      %v404 = vrot.slane %v400, 3
      %v407 = vadd.f32 %v389, %v403
      %v408 = vadd.f32 %v390, %v404
      %v409 = vld [vmem:[%s342] sm:$0x4]
      %v410 = vld [vmem:[%s342 + $0x4] sm:$0x4]
      %v411 = vunpack.c.l.bf16 %v409
      %v412 = vunpack.c.l.bf16 %v410
      %v413 = vlaneseq
      %v414 = vshrl.u32 %v413, 7
      %v415 = vsub.s32 4, %v414
      %v416 = vrot.slane %v337, %v415
      %v417 = vmul.f32 %v411, %v416
      %v418 = vmul.f32 %v412, %v416
      %v421 = vrot.slane %v417, 4
      %v422 = vrot.slane %v418, 4
      %v425 = vadd.f32 %v407, %v421
      %v426 = vadd.f32 %v408, %v422
      %s427 = sadd.s32 %s336, 1
      %s428 = smul.addr %s427, 4
      %s429 = scalar_lea.vmem %s323, %s428
      %v430 = vld [vmem:[%s429] sm:$0x1]
      %v431 = vld [vmem:[%s429 + $0x4] sm:$0x1]
      %v432 = vunpack.c.l.bf16 %v430
      %v433 = vunpack.c.l.bf16 %v431
      %v434 = vlaneseq
      %v435 = vshrl.u32 %v434, 7
      %v436 = vsub.s32 5, %v435
      %v437 = vrot.slane %v337, %v436
      %v438 = vmul.f32 %v432, %v437
      %v439 = vmul.f32 %v433, %v437
      %v440 = vadd.f32 %v425, %v438
      %v441 = vadd.f32 %v426, %v439
      %v442 = vld [vmem:[%s429] sm:$0x3]
      %v443 = vld [vmem:[%s429 + $0x4] sm:$0x3]
      %v444 = vunpack.c.l.bf16 %v442
      %v445 = vunpack.c.l.bf16 %v443
      %v446 = vlaneseq
      %v447 = vshrl.u32 %v446, 7
      %v448 = vsub.s32 6, %v447
      %v449 = vrot.slane %v337, %v448
      %v450 = vmul.f32 %v444, %v449
      %v451 = vmul.f32 %v445, %v449
      %v454 = vrot.slane %v450, 1
      %v455 = vrot.slane %v451, 1
      %v458 = vadd.f32 %v440, %v454
      %v459 = vadd.f32 %v441, %v455
      %v460 = vld [vmem:[%s429] sm:$0x2]
      %v461 = vld [vmem:[%s429 + $0x4] sm:$0x2]
      %v462 = vunpack.c.l.bf16 %v460
      %v463 = vunpack.c.l.bf16 %v461
      %v464 = vlaneseq
      %v465 = vshrl.u32 %v464, 7
      %v466 = vsub.s32 7, %v465
      %v467 = vrot.slane %v337, %v466
      %v468 = vmul.f32 %v462, %v467
      %v469 = vmul.f32 %v463, %v467
      %v472 = vrot.slane %v468, 2
      %v473 = vrot.slane %v469, 2
      %v476 = vadd.f32 %v458, %v472
      %v477 = vadd.f32 %v459, %v473
      %v478 = vld [vmem:[%s429] sm:$0x6]
      %v479 = vld [vmem:[%s429 + $0x4] sm:$0x6]
      %v480 = vunpack.c.l.bf16 %v478
      %v481 = vunpack.c.l.bf16 %v479
      %v482 = vlaneseq
      %v483 = vshrl.u32 %v482, 7
      %v484 = vsub.s32 0, %v483
      %v485 = vrot.slane %v338, %v484
      %v486 = vmul.f32 %v480, %v485
      %v487 = vmul.f32 %v481, %v485
      %v490 = vrot.slane %v486, 3
      %v491 = vrot.slane %v487, 3
      %v494 = vadd.f32 %v476, %v490
      %v495 = vadd.f32 %v477, %v491
      %v496 = vld [vmem:[%s429] sm:$0x4]
      %v497 = vld [vmem:[%s429 + $0x4] sm:$0x4]
      %v498 = vunpack.c.l.bf16 %v496
      %v499 = vunpack.c.l.bf16 %v497
      %v500 = vlaneseq
      %v501 = vshrl.u32 %v500, 7
      %v502 = vsub.s32 1, %v501
      %v503 = vrot.slane %v338, %v502
      %v504 = vmul.f32 %v498, %v503
      %v505 = vmul.f32 %v499, %v503
      %v508 = vrot.slane %v504, 4
      %v509 = vrot.slane %v505, 4
      %v512 = vadd.f32 %v494, %v508
      %v513 = vadd.f32 %v495, %v509
      %s514 = sadd.s32 %s336, 2
      %s515 = smul.addr %s514, 4
      %s516 = scalar_lea.vmem %s323, %s515
      %v517 = vld [vmem:[%s516] sm:$0x1]
      %v518 = vld [vmem:[%s516 + $0x4] sm:$0x1]
      %v519 = vunpack.c.l.bf16 %v517
      %v520 = vunpack.c.l.bf16 %v518
      %v521 = vlaneseq
      %v522 = vshrl.u32 %v521, 7
      %v523 = vsub.s32 2, %v522
      %v524 = vrot.slane %v338, %v523
      %v525 = vmul.f32 %v519, %v524
      %v526 = vmul.f32 %v520, %v524
      %v527 = vadd.f32 %v512, %v525
      %v528 = vadd.f32 %v513, %v526
      %v529 = vld [vmem:[%s516] sm:$0x3]
      %v530 = vld [vmem:[%s516 + $0x4] sm:$0x3]
      %v531 = vunpack.c.l.bf16 %v529
      %v532 = vunpack.c.l.bf16 %v530
      %v533 = vlaneseq
      %v534 = vshrl.u32 %v533, 7
      %v535 = vsub.s32 3, %v534
      %v536 = vrot.slane %v338, %v535
      %v537 = vmul.f32 %v531, %v536
      %v538 = vmul.f32 %v532, %v536
      %v541 = vrot.slane %v537, 1
      %v542 = vrot.slane %v538, 1
      %v545 = vadd.f32 %v527, %v541
      %v546 = vadd.f32 %v528, %v542
      %v547 = vld [vmem:[%s516] sm:$0x2]
      %v548 = vld [vmem:[%s516 + $0x4] sm:$0x2]
      %v549 = vunpack.c.l.bf16 %v547
      %v550 = vunpack.c.l.bf16 %v548
      %v551 = vlaneseq
      %v552 = vshrl.u32 %v551, 7
      %v553 = vsub.s32 4, %v552
      %v554 = vrot.slane %v338, %v553
      %v555 = vmul.f32 %v549, %v554
      %v556 = vmul.f32 %v550, %v554
      %v559 = vrot.slane %v555, 2
      %v560 = vrot.slane %v556, 2
      %v563 = vadd.f32 %v545, %v559
      %v564 = vadd.f32 %v546, %v560
      %v565 = vld [vmem:[%s516] sm:$0x6]
      %v566 = vld [vmem:[%s516 + $0x4] sm:$0x6]
      %v567 = vunpack.c.l.bf16 %v565
      %v568 = vunpack.c.l.bf16 %v566
      %v569 = vlaneseq
      %v570 = vshrl.u32 %v569, 7
      %v571 = vsub.s32 5, %v570
      %v572 = vrot.slane %v338, %v571
      %v573 = vmul.f32 %v567, %v572
      %v574 = vmul.f32 %v568, %v572
      %v577 = vrot.slane %v573, 3
      %v578 = vrot.slane %v574, 3
      %v581 = vadd.f32 %v563, %v577
      %v582 = vadd.f32 %v564, %v578
      %v583 = vld [vmem:[%s516] sm:$0x4]
      %v584 = vld [vmem:[%s516 + $0x4] sm:$0x4]
      %v585 = vunpack.c.l.bf16 %v583
      %v586 = vunpack.c.l.bf16 %v584
      %v587 = vlaneseq
      %v588 = vshrl.u32 %v587, 7
      %v589 = vsub.s32 6, %v588
      %v590 = vrot.slane %v338, %v589
      %v591 = vmul.f32 %v585, %v590
      %v592 = vmul.f32 %v586, %v590
      %v595 = vrot.slane %v591, 4
      %v596 = vrot.slane %v592, 4
      %v599 = vadd.f32 %v581, %v595
      %v600 = vadd.f32 %v582, %v596
      %s601 = sadd.s32 %s336, 3
      %s602 = smul.addr %s601, 4
      %s603 = scalar_lea.vmem %s323, %s602
      %v604 = vld [vmem:[%s603] sm:$0x1]
      %v605 = vld [vmem:[%s603 + $0x4] sm:$0x1]
      %v606 = vunpack.c.l.bf16 %v604
      %v607 = vunpack.c.l.bf16 %v605
      %v608 = vlaneseq
      %v609 = vshrl.u32 %v608, 7
      %v610 = vsub.s32 7, %v609
      %v611 = vrot.slane %v338, %v610
      %v612 = vmul.f32 %v606, %v611
      %v613 = vmul.f32 %v607, %v611
      %v614 = vadd.f32 %v599, %v612
      %v615 = vadd.f32 %v600, %v613
      %v616 = vld [vmem:[%s603] sm:$0x3]
      %v617 = vld [vmem:[%s603 + $0x4] sm:$0x3]
      %v618 = vunpack.c.l.bf16 %v616
      %v619 = vunpack.c.l.bf16 %v617
      %v620 = vlaneseq
      %v621 = vshrl.u32 %v620, 7
      %v622 = vsub.s32 0, %v621
      %v623 = vrot.slane %v339, %v622
      %v624 = vmul.f32 %v618, %v623
      %v625 = vmul.f32 %v619, %v623
      %v628 = vrot.slane %v624, 1
      %v629 = vrot.slane %v625, 1
      %v632 = vadd.f32 %v614, %v628
      %v633 = vadd.f32 %v615, %v629
      %v634 = vld [vmem:[%s603] sm:$0x2]
      %v635 = vld [vmem:[%s603 + $0x4] sm:$0x2]
      %v636 = vunpack.c.l.bf16 %v634
      %v637 = vunpack.c.l.bf16 %v635
      %v638 = vlaneseq
      %v639 = vshrl.u32 %v638, 7
      %v640 = vsub.s32 1, %v639
      %v641 = vrot.slane %v339, %v640
      %v642 = vmul.f32 %v636, %v641
      %v643 = vmul.f32 %v637, %v641
      %v646 = vrot.slane %v642, 2
      %v647 = vrot.slane %v643, 2
      %v650 = vadd.f32 %v632, %v646
      %v651 = vadd.f32 %v633, %v647
      %v652 = vld [vmem:[%s603] sm:$0x6]
      %v653 = vld [vmem:[%s603 + $0x4] sm:$0x6]
      %v654 = vunpack.c.l.bf16 %v652
      %v655 = vunpack.c.l.bf16 %v653
      %v656 = vlaneseq
      %v657 = vshrl.u32 %v656, 7
      %v658 = vsub.s32 2, %v657
      %v659 = vrot.slane %v339, %v658
      %v660 = vmul.f32 %v654, %v659
      %v661 = vmul.f32 %v655, %v659
      %v664 = vrot.slane %v660, 3
      %v665 = vrot.slane %v661, 3
      %v668 = vadd.f32 %v650, %v664
      %v669 = vadd.f32 %v651, %v665
      %v670 = vld [vmem:[%s603] sm:$0x4]
      %v671 = vld [vmem:[%s603 + $0x4] sm:$0x4]
      %v672 = vunpack.c.l.bf16 %v670
      %v673 = vunpack.c.l.bf16 %v671
      %v674 = vlaneseq
      %v675 = vshrl.u32 %v674, 7
      %v676 = vsub.s32 3, %v675
      %v677 = vrot.slane %v339, %v676
      %v678 = vmul.f32 %v672, %v677
      %v679 = vmul.f32 %v673, %v677
      %v682 = vrot.slane %v678, 4
      %v683 = vrot.slane %v679, 4
      %v686 = vadd.f32 %v668, %v682
      %v687 = vadd.f32 %v669, %v683
      %s688 = sadd.s32 %s336, 4
      %s689 = smul.addr %s688, 4
      %s690 = scalar_lea.vmem %s323, %s689
      %v691 = vld [vmem:[%s690] sm:$0x1]
      %v692 = vld [vmem:[%s690 + $0x4] sm:$0x1]
      %v693 = vunpack.c.l.bf16 %v691
      %v694 = vunpack.c.l.bf16 %v692
      %v695 = vlaneseq
      %v696 = vshrl.u32 %v695, 7
      %v697 = vsub.s32 4, %v696
      %v698 = vrot.slane %v339, %v697
      %v699 = vmul.f32 %v693, %v698
      %v700 = vmul.f32 %v694, %v698
      %v701 = vadd.f32 %v686, %v699
      %v702 = vadd.f32 %v687, %v700
      %v703 = vld [vmem:[%s690] sm:$0x3]
      %v704 = vld [vmem:[%s690 + $0x4] sm:$0x3]
      %v705 = vunpack.c.l.bf16 %v703
      %v706 = vunpack.c.l.bf16 %v704
      %v707 = vlaneseq
      %v708 = vshrl.u32 %v707, 7
      %v709 = vsub.s32 5, %v708
      %v710 = vrot.slane %v339, %v709
      %v711 = vmul.f32 %v705, %v710
      %v712 = vmul.f32 %v706, %v710
      %v715 = vrot.slane %v711, 1
      %v716 = vrot.slane %v712, 1
      %v719 = vadd.f32 %v701, %v715
      %v720 = vadd.f32 %v702, %v716
      %v721 = vld [vmem:[%s690] sm:$0x2]
      %v722 = vld [vmem:[%s690 + $0x4] sm:$0x2]
      %v723 = vunpack.c.l.bf16 %v721
      %v724 = vunpack.c.l.bf16 %v722
      %v725 = vlaneseq
      %v726 = vshrl.u32 %v725, 7
      %v727 = vsub.s32 6, %v726
      %v728 = vrot.slane %v339, %v727
      %v729 = vmul.f32 %v723, %v728
      %v730 = vmul.f32 %v724, %v728
      %v733 = vrot.slane %v729, 2
      %v734 = vrot.slane %v730, 2
      %v737 = vadd.f32 %v719, %v733
      %v738 = vadd.f32 %v720, %v734
      %v739 = vld [vmem:[%s690] sm:$0x6]
      %v740 = vld [vmem:[%s690 + $0x4] sm:$0x6]
      %v741 = vunpack.c.l.bf16 %v739
      %v742 = vunpack.c.l.bf16 %v740
      %v743 = vlaneseq
      %v744 = vshrl.u32 %v743, 7
      %v745 = vsub.s32 7, %v744
      %v746 = vrot.slane %v339, %v745
      %v747 = vmul.f32 %v741, %v746
      %v748 = vmul.f32 %v742, %v746
      %v751 = vrot.slane %v747, 3
      %v752 = vrot.slane %v748, 3
      %v755 = vadd.f32 %v737, %v751
      %v756 = vadd.f32 %v738, %v752
      %v757 = vld [vmem:[%s690] sm:$0x4]
      %v758 = vld [vmem:[%s690 + $0x4] sm:$0x4]
      %v759 = vunpack.c.l.bf16 %v757
      %v760 = vunpack.c.l.bf16 %v758
      %v761 = vlaneseq
      %v762 = vshrl.u32 %v761, 7
      %v763 = vsub.s32 0, %v762
      %v764 = vrot.slane %v340, %v763
      %v765 = vmul.f32 %v759, %v764
      %v766 = vmul.f32 %v760, %v764
      %v769 = vrot.slane %v765, 4
      %v770 = vrot.slane %v766, 4
      %v773 = vadd.f32 %v755, %v769
      %v774 = vadd.f32 %v756, %v770
      %v775 = vld [vmem:[%s2] sm:$0x1]
      %v777 = vlaneseq
      %v778 = vshrl.u32 %v777, 7
      %v779 = vsub.s32 0, %v778
      %v780 = vrot.slane %v775, %v779
      %v782 = vadd.f32 %v773, %v780
      %v783 = vadd.f32 %v774, %v780
      %v784 = vpack.c.bf16 %v782, %v782
      %v785 = vpack.c.bf16 %v783, %v783
      %vm786 = vcmask 581632
      %787 = vst.msk [vmem:[%s331] sm:$0x1] %vm786, %v784
      %788 = vst.msk [vmem:[%s331 + $0x1] sm:$0x1] %vm786, %v785
      %p789 = scmp.eq.s32.totalorder %s25, 0
      // Predicated region
      $region49: #{_lambda_.17} parent=47 // pred_check
        %p790 = pneg %p789
      $region50: #{_lambda_.17} parent=47 // pred_check_branch
        %792 = sbr.rel (%p790) target = $region52
      $region51: #{_lambda_.17} parent=47 // pred_region
        %793 = vst.msk [vmem:[%s335] sm:$0x1] %vm786, 0.0
      $region52: #{_lambda_.17} parent=47 // pred_fallthru
        _
      %v794 = vld [vmem:[%s335] sm:$0x1]
      %vm795 = vcmask 582656
      %v796 = vsel %vm795, %v782, 0.0
      %v797 = vsel %vm795, %v783, 0.0
      %v798 = vadd.f32 %v796, %v797
      %v799 = vrot.slane %v798, 4
      %v800 = vadd.f32 %v798, %v799
      %v801 = vrot.slane %v800, 2
      %v802 = vadd.f32 %v800, %v801
      %v803 = vrot.slane %v802, 1
      %v804 = vadd.f32 %v802, %v803
      %v805 = vadd.f32 %v794, %v804
      %806 = vst.msk [vmem:[%s335] sm:$0x1] %vm786, %v805
      // Predicated region
      $region53: #{_lambda_.17} parent=47 // pred_check
        %p807 = pneg %p789
      $region54: #{_lambda_.17} parent=47 // pred_check_branch
        %809 = sbr.rel (%p807) target = $region56
      $region55: #{_lambda_.17} parent=47 // pred_region
        %v810 = vld [vmem:[%s335] sm:$0x1]
        %v811 = vmul.f32 %v810, 0.25
        %v812 = vld [vmem:[%s3] sm:$0xff]
        %v813 = vld [vmem:[%s3 + $0x8] sm:$0xff]
        %v814 = vld [vmem:[%s3 + $0x10] sm:$0xff]
        %v815 = vld [vmem:[%s3 + $0x18] sm:$0xff]
        %v816 = vld [vmem:[%s3 + $0x20] sm:$0xff]
        %v817 = vld [vmem:[%s3 + $0x28] sm:$0xff]
        %v818 = vld [vmem:[%s3 + $0x30] sm:$0xff]
        %v819 = vld [vmem:[%s3 + $0x38] sm:$0xff]
        %v820 = vld [vmem:[%s3 + $0x40] sm:$0xff]
        %v821 = vld [vmem:[%s4] sm:$0x1]
        %vm822 = vcmask 588800
        %v824 = vsel %vm822, %v811, 0
        %826 = vmatprep.subr.mxu0 0.0
        %827 = vmatpush1.msra.mxu0 0.0
        %828 = vmatprep.subr.mxu0 0.0
        %829 = vmatpush1.msra.mxu0 0.0
        %830 = vmatprep.subr.mxu0 0.0
        %831 = vmatpush1.msra.mxu0 0.0
        %832 = vmatprep.subr.mxu0 0.0
        %833 = vmatpush1.msra.mxu0 0.0
        %834 = vmatprep.subr.mxu0 0.0
        %835 = vmatpush1.msra.mxu0 0.0
        %836 = vmatprep.subr.mxu0 0.0
        %837 = vmatpush1.msra.mxu0 0.0
        %838 = vmatprep.subr.mxu0 0.0
        %839 = vmatpush1.msra.mxu0 0.0
        %840 = vmatprep.subr.mxu0 0.0
        %841 = vmatpush1.msra.mxu0 %v820
        %842 = vmatprep.subr.mxu0 0.0
        %843 = vmatpush1.msra.mxu0 %v819
        %844 = vmatprep.subr.mxu0 0.0
        %845 = vmatpush1.msra.mxu0 %v818
        %846 = vmatprep.subr.mxu0 0.0
        %847 = vmatpush1.msra.mxu0 %v817
        %848 = vmatprep.subr.mxu0 0.0
        %849 = vmatpush1.msra.mxu0 %v816
        %850 = vmatprep.subr.mxu0 0.0
        %851 = vmatpush1.msra.mxu0 %v815
        %852 = vmatprep.subr.mxu0 0.0
        %853 = vmatpush1.msra.mxu0 %v814
        %854 = vmatprep.subr.mxu0 0.0
        %855 = vmatpush1.msra.mxu0 %v813
        %856 = vmatprep.subr.mxu0 0.0
        %857 = vmatpush1.msra.mxu0 %v812
        %858 = vmatprep.subr.mxu0 0.0
        %859 = vmatpush2.msra.mxu0 0.0
        %860 = vmatprep.subr.mxu0 0.0
        %861 = vmatpush2.msra.mxu0 0.0
        %862 = vmatprep.subr.mxu0 0.0
        %863 = vmatpush2.msra.mxu0 0.0
        %864 = vmatprep.subr.mxu0 0.0
        %865 = vmatpush2.msra.mxu0 0.0
        %866 = vmatprep.subr.mxu0 0.0
        %867 = vmatpush2.msra.mxu0 0.0
        %868 = vmatprep.subr.mxu0 0.0
        %869 = vmatpush2.msra.mxu0 0.0
        %870 = vmatprep.subr.mxu0 0.0
        %871 = vmatpush2.msra.mxu0 0.0
        %872 = vmatprep.subr.mxu0 0.0
        %873 = vmatpush2.msra.mxu0 0.0
        %874 = vmatprep.subr.mxu0 0.0
        %875 = vmatpush2.msra.mxu0 0.0
        %876 = vmatprep.subr.mxu0 0.0
        %877 = vmatpush2.msra.mxu0 0.0
        %878 = vmatprep.subr.mxu0 0.0
        %879 = vmatpush2.msra.mxu0 0.0
        %880 = vmatprep.subr.mxu0 0.0
        %881 = vmatpush2.msra.mxu0 0.0
        %882 = vmatprep.subr.mxu0 0.0
        %883 = vmatpush2.msra.mxu0 0.0
        %884 = vmatprep.subr.mxu0 0.0
        %885 = vmatpush2.msra.mxu0 0.0
        %886 = vmatprep.subr.mxu0 0.0
        %887 = vmatpush2.msra.mxu0 0.0
        %888 = vmatprep.subr.mxu0 0.0
        %889 = vmatpush2.msra.mxu0 0.0
        %890 = vmatprep.mubr.f32.mxu0 0.0
        %891 = vmatmul.mubr.f32.gmra.mxu0 %v824
        %v892 = vpop.f32.mrf.mxu0
        %v893 = vadd.f32 %v821, %v892
        %v894 = vpop.f32.mrf.mxu0
        %895 = vdwg.mxu0
        %v896 = vmax.f32 %v893, 0.0
        %v897 = vld [vmem:[%s5] sm:$0xff]
        %v898 = vld [vmem:[%s5 + $0x8] sm:$0xff]
        %v899 = vld [vmem:[%s5 + $0x10] sm:$0xff]
        %v900 = vld [vmem:[%s6] sm:$0x1]
        %vm901 = vcmask 195584
        %v903 = vsel %vm901, %v896, 0
        %905 = vmatprep.subr.mxu0 0.0
        %906 = vmatpush1.msra.mxu0 0.0
        %907 = vmatprep.subr.mxu0 0.0
        %908 = vmatpush1.msra.mxu0 0.0
        %909 = vmatprep.subr.mxu0 0.0
        %910 = vmatpush1.msra.mxu0 0.0
        %911 = vmatprep.subr.mxu0 0.0
        %912 = vmatpush1.msra.mxu0 0.0
        %913 = vmatprep.subr.mxu0 0.0
        %914 = vmatpush1.msra.mxu0 0.0
        %915 = vmatprep.subr.mxu0 0.0
        %916 = vmatpush1.msra.mxu0 0.0
        %917 = vmatprep.subr.mxu0 0.0
        %918 = vmatpush1.msra.mxu0 0.0
        %919 = vmatprep.subr.mxu0 0.0
        %920 = vmatpush1.msra.mxu0 0.0
        %921 = vmatprep.subr.mxu0 0.0
        %922 = vmatpush1.msra.mxu0 0.0
        %923 = vmatprep.subr.mxu0 0.0
        %924 = vmatpush1.msra.mxu0 0.0
        %925 = vmatprep.subr.mxu0 0.0
        %926 = vmatpush1.msra.mxu0 0.0
        %927 = vmatprep.subr.mxu0 0.0
        %928 = vmatpush1.msra.mxu0 0.0
        %929 = vmatprep.subr.mxu0 0.0
        %930 = vmatpush1.msra.mxu0 0.0
        %931 = vmatprep.subr.mxu0 0.0
        %932 = vmatpush1.msra.mxu0 %v899
        %933 = vmatprep.subr.mxu0 0.0
        %934 = vmatpush1.msra.mxu0 %v898
        %935 = vmatprep.subr.mxu0 0.0
        %936 = vmatpush1.msra.mxu0 %v897
        %937 = vmatprep.subr.mxu0 0.0
        %938 = vmatpush2.msra.mxu0 0.0
        %939 = vmatprep.subr.mxu0 0.0
        %940 = vmatpush2.msra.mxu0 0.0
        %941 = vmatprep.subr.mxu0 0.0
        %942 = vmatpush2.msra.mxu0 0.0
        %943 = vmatprep.subr.mxu0 0.0
        %944 = vmatpush2.msra.mxu0 0.0
        %945 = vmatprep.subr.mxu0 0.0
        %946 = vmatpush2.msra.mxu0 0.0
        %947 = vmatprep.subr.mxu0 0.0
        %948 = vmatpush2.msra.mxu0 0.0
        %949 = vmatprep.subr.mxu0 0.0
        %950 = vmatpush2.msra.mxu0 0.0
        %951 = vmatprep.subr.mxu0 0.0
        %952 = vmatpush2.msra.mxu0 0.0
        %953 = vmatprep.subr.mxu0 0.0
        %954 = vmatpush2.msra.mxu0 0.0
        %955 = vmatprep.subr.mxu0 0.0
        %956 = vmatpush2.msra.mxu0 0.0
        %957 = vmatprep.subr.mxu0 0.0
        %958 = vmatpush2.msra.mxu0 0.0
        %959 = vmatprep.subr.mxu0 0.0
        %960 = vmatpush2.msra.mxu0 0.0
        %961 = vmatprep.subr.mxu0 0.0
        %962 = vmatpush2.msra.mxu0 0.0
        %963 = vmatprep.subr.mxu0 0.0
        %964 = vmatpush2.msra.mxu0 0.0
        %965 = vmatprep.subr.mxu0 0.0
        %966 = vmatpush2.msra.mxu0 0.0
        %967 = vmatprep.subr.mxu0 0.0
        %968 = vmatpush2.msra.mxu0 0.0
        %969 = vmatprep.mubr.f32.mxu0 0.0
        %970 = vmatmul.mubr.f32.gmra.mxu0 %v903
        %v971 = vpop.f32.mrf.mxu0
        %v972 = vadd.f32 %v900, %v971
        %v973 = vpop.f32.mrf.mxu0
        %974 = vdwg.mxu0
        %v975 = vadd.f32 %v972, 3.0
        %v976 = vmax.f32 %v975, 0.0
        %v977 = vmin.f32 %v976, 6.0
        %v978 = vrcp.pop 6.0
        %v979 = vmul.f32 %v977, %v978
        %980 = vst.msk [vmem:[%s335] sm:$0x1] %vm786, %v979
      $region56: #{_lambda_.17} parent=47 // pred_fallthru
        _
      %s981 = smul.u32 2, %s25
      %p982 = scmp.lt.s32.totalorder %s24, 1
      %s983 = scalar_select %p982, %s24, 1
      %p984 = scmp.lt.s32.totalorder %s981, 1
      %s985 = scalar_select %p984, %s981, 1
      %s986 = smul.addr %s983, 2
      %s987 = sadd.s32 %s985, %s986
      %s988 = scalar_lea.vmem %s7, %s987
      %p989 = scmp.lt.s32.totalorder %s24, 1
      %s990 = scalar_select %p989, %s24, 1
      %s991 = scalar_lea.vmem %s8, %s990
      // Predicated region
      $region57: #{_lambda_.17} parent=47 // pred_check
        %p992 = pneg %p204
      $region58: #{_lambda_.17} parent=47 // pred_check_branch
        %994 = sbr.rel (%p992) target = $region60
      $region59: #{_lambda_.17} parent=47 // pred_region
        %s995 = smul.u32 2, %s25
      $region60: #{_lambda_.17} parent=47 // pred_fallthru
        _
      // Predicated region
      $region61: #{_lambda_.17} parent=47 // pred_check
        %p996 = pneg %p230
      $region62: #{_lambda_.17} parent=47 // pred_check_branch
        %998 = sbr.rel (%p996) target = $region64
      $region63: #{_lambda_.17} parent=47 // pred_region
        _
      $region64: #{_lambda_.17} parent=47 // pred_fallthru
        _
    $region48: #{_lambda_.17} parent=5 // pred_fallthru
      _
    %p999 = scmp.le.s32.totalorder 2, %s15
    // Predicated region
    $region65: #{_lambda_.17} parent=5 // pred_check
      %p1000 = pneg %p999
    $region66: #{_lambda_.17} parent=5 // pred_check_branch
      %1002 = sbr.rel (%p1000) target = $region68
    $region67: #{_lambda_.17} parent=5 // pred_region
      %s1003 = ssub.s32 %s15, 2
      // Predicated region
      $region69: #{_lambda_.17} parent=67 // pred_check
        %p1004 = pneg %p210
      $region70: #{_lambda_.17} parent=67 // pred_check_branch
        %1006 = sbr.rel (%p1004) target = $region72
      $region71: #{_lambda_.17} parent=67 // pred_region
        %s1007 = smul.u32 2, %s27
        %p1008 = scmp.lt.s32.totalorder %s26, 1
        %s1009 = scalar_select %p1008, %s26, 1
        %p1010 = scmp.lt.s32.totalorder %s1007, 1
        %s1011 = scalar_select %p1010, %s1007, 1
        %s1012 = smul.addr %s1009, 2
        %s1013 = sadd.s32 %s1011, %s1012
        %s1014 = scalar_lea.vmem %s7, %s1013
      $region72: #{_lambda_.17} parent=67 // pred_fallthru
        _
      // Predicated region
      $region73: #{_lambda_.17} parent=67 // pred_check
        %p1015 = pneg %p236
      $region74: #{_lambda_.17} parent=67 // pred_check_branch
        %1017 = sbr.rel (%p1015) target = $region76
      $region75: #{_lambda_.17} parent=67 // pred_region
        %p1018 = scmp.lt.s32.totalorder %s26, 1
        %s1019 = scalar_select %p1018, %s26, 1
        %s1020 = scalar_lea.vmem %s8, %s1019
      $region76: #{_lambda_.17} parent=67 // pred_fallthru
        _
    $region68: #{_lambda_.17} parent=5 // pred_fallthru
      _
  $region6: #{_lambda_.17} parent=0 // loop_footer
    %s19 = sadd.s32 1, %s15
  $region7: #{_lambda_.17} parent=0 // loop_footer_branch
    %14 = sbr.rel target = $region3
  $region8: #{_lambda_.17} parent=0 // loop_exit
    _

</llo_original>
